<compile_context>
chip_gen: v7x
topology: tpu7x:2x2x1
jax: 0.10.0
libtpu: 0.0.40
codegen_flags: <defaults>
</compile_context>

<pallas_src>
import functools

import jax
import jax.numpy as jnp
from jax.experimental import pallas as pl
from jax.experimental.pallas import tpu as pltpu


def _attention_kernel(x_ref, w_ref, rel_ref, mask_ref, o_ref, *, H, W, C, K, pad):
    # x_ref    : (1, N, Cin)   flattened NHWC input rows for one batch element
    # w_ref    : (Cin, 3*C)    [Wq | Wk | Wv] fused 1x1-conv weights
    # rel_ref  : (K*K, C)      per-tap relative positional term
    # mask_ref : (N, K)        horizontal-tap validity mask (1 inside image, 0 at border)
    # o_ref    : (1, N, C)
    N = H * W
    x = x_ref[0]                                                        # (N, Cin)

    # Fused Q/K/V projection: one lane-dense MXU matmul.
    qkv = jnp.dot(x, w_ref[...], preferred_element_type=jnp.float32)    # (N, 3C)
    q = qkv[:, 0:C]

    # Zero-extend k/v along the flat row axis so every window tap is a static
    # row-shifted slice; the zero rows also realise the top/bottom spatial
    # padding (bias=False => conv of zero padding is zero).  P is rounded up
    # to a sublane multiple so the concatenation stays tile-aligned.
    P = pad * (W + 1)
    P = ((P + 7) // 8) * 8
    zpad = jnp.zeros((P, C), jnp.float32)
    k_ext = jnp.concatenate([zpad, qkv[:, C:2 * C], zpad], axis=0)       # (N+2P, C)
    v_ext = jnp.concatenate([zpad, qkv[:, 2 * C:3 * C], zpad], axis=0)   # (N+2P, C)

    rel = rel_ref[...]                                                   # (K*K, C)
    mask = mask_ref[...]                                                 # (N, K)

    # Online softmax over the K*K taps (per element, per channel).
    m = l = acc = None
    t = 0
    for kh in range(K):
        dh = kh - pad
        for kw in range(K):
            dw = kw - pad
            s = dh * W + dw
            mcol = mask[:, kw:kw + 1]                                    # (N, 1)
            k_t = k_ext[P + s:P + s + N, :] * mcol + rel[t:t + 1, :]
            v_t = v_ext[P + s:P + s + N, :] * mcol
            logit = q * k_t
            if t == 0:
                m = logit
                l = jnp.ones_like(logit)
                acc = v_t
            else:
                m_new = jnp.maximum(m, logit)
                alpha = jnp.exp(m - m_new)
                p = jnp.exp(logit - m_new)
                l = l * alpha + p
                acc = acc * alpha + p * v_t
                m = m_new
            t += 1

    o_ref[0] = acc * pl.reciprocal(l, approx=True)


def attention_forward(params, x_nchw, *, kernel_size, padding):
    """Forward pass matching Attention.forward (NCHW in, NCHW out)."""
    B, Cin, H, W = x_nchw.shape
    K, pad = kernel_size, padding
    assert 2 * pad == K - 1, "reference forward() requires 2*padding == kernel_size-1"
    C = params["w_qkv"].shape[1] // 3
    N = H * W

    # NCHW -> flattened NHWC rows (channels on TPU lanes).
    x = jnp.transpose(x_nchw, (0, 2, 3, 1)).reshape(B, N, Cin).astype(jnp.float32)

    # Horizontal-tap validity mask; constant-folded by XLA.
    col = jnp.arange(W, dtype=jnp.int32)
    wmask = jnp.stack(
        [((col + (kw - pad) >= 0) & (col + (kw - pad) < W)).astype(jnp.float32)
         for kw in range(K)], axis=1)                                    # (W, K)
    wmask = jnp.tile(wmask, (H, 1))                                      # (N, K)

    kern = functools.partial(_attention_kernel, H=H, W=W, C=C, K=K, pad=pad)
    out = pl.pallas_call(
        kern,
        out_shape=jax.ShapeDtypeStruct((B, N, C), jnp.float32),
        grid=(B,),
        in_specs=[
            pl.BlockSpec((1, N, Cin), lambda b: (b, 0, 0)),
            pl.BlockSpec((Cin, 3 * C), lambda b: (0, 0)),
            pl.BlockSpec((K * K, C), lambda b: (0, 0)),
            pl.BlockSpec((N, K), lambda b: (0, 0)),
        ],
        out_specs=pl.BlockSpec((1, N, C), lambda b: (b, 0, 0)),
        compiler_params=pltpu.CompilerParams(dimension_semantics=("parallel",)),
    )(x, params["w_qkv"], params["rel"], wmask)

    return out.reshape(B, H, W, C).transpose(0, 3, 1, 2)                 # back to NCHW


def init_params(key, in_channels, out_channels, kernel_size):
    kq, kk, kv, krh, krw = jax.random.split(key, 5)
    std = (1.0 / in_channels) ** 0.5

    def w(k):
        return (std * jax.random.normal(k, (in_channels, out_channels))).astype(jnp.float32)

    # Fused [Wq | Wk | Wv] for the 1x1 convolutions (bias=False, module default).
    w_qkv = jnp.concatenate([w(kq), w(kk), w(kv)], axis=1)               # (Cin, 3*Cout)

    # rel_h: (Cout/2, 1, 1, K, 1) -> rel_h[c, kh];  rel_w: (Cout/2, 1, 1, 1, K) -> rel_w[c, kw]
    half = out_channels // 2
    rel_h = jax.random.normal(krh, (half, kernel_size), dtype=jnp.float32)
    rel_w = jax.random.normal(krw, (half, kernel_size), dtype=jnp.float32)
    rel_first = jnp.broadcast_to(rel_h[:, :, None], (half, kernel_size, kernel_size))
    rel_second = jnp.broadcast_to(rel_w[:, None, :], (half, kernel_size, kernel_size))
    rel_full = jnp.concatenate([rel_first, rel_second], axis=0)          # (Cout, kh, kw)
    rel_taps = rel_full.transpose(1, 2, 0).reshape(kernel_size * kernel_size, out_channels)
    return {"w_qkv": w_qkv, "rel": rel_taps}


if __name__ == "__main__":
    key = jax.random.PRNGKey(0)
    pkey, xkey = jax.random.split(key)

    B, in_channels, H, W = 2, 8, 16, 16
    out_channels, kernel_size, padding = 64, 3, 1

    params = init_params(pkey, in_channels, out_channels, kernel_size)
    x = jax.random.normal(xkey, (B, in_channels, H, W), dtype=jnp.float32)

    fwd = jax.jit(functools.partial(attention_forward,
                                    kernel_size=kernel_size, padding=padding))
    out = fwd(params, x)
    jax.block_until_ready(out)

    assert out.shape == (B, out_channels, H, W)
    assert bool(jnp.all(jnp.isfinite(out)))
    print("KERNEL_OK")
</pallas_src>

<mosaic_0001>
module attributes {stable_mosaic.version = 11 : i64} {
  func.func @_attention_kernel(%arg0: i32, %arg1: memref<1x256x8xf32, #tpu.memory_space<vmem>>, %arg2: memref<8x192xf32, #tpu.memory_space<vmem>>, %arg3: memref<9x64xf32, #tpu.memory_space<vmem>>, %arg4: memref<256x3xf32, #tpu.memory_space<vmem>>, %arg5: memref<1x256x64xf32, #tpu.memory_space<vmem>>) attributes {dimension_semantics = [#tpu.dimension_semantics<parallel>], iteration_bounds = array<i64: 2>, scalar_prefetch = 0 : i64, scratch_operands = 0 : i64, tpu.core_type = #tpu.core_type<tc>, window_params = [{transform_indices = @transform_0, window_bounds = array<i64: 1, 256, 8>}, {pipeline_mode = #tpu.pipeline_mode<synchronous>, transform_indices = @transform_1, window_bounds = array<i64: 8, 192>}, {pipeline_mode = #tpu.pipeline_mode<synchronous>, transform_indices = @transform_2, window_bounds = array<i64: 9, 64>}, {pipeline_mode = #tpu.pipeline_mode<synchronous>, transform_indices = @transform_3, window_bounds = array<i64: 256, 3>}, {transform_indices = @transform_4, window_bounds = array<i64: 1, 256, 64>}]} {
    %c0 = arith.constant 0 : index
    %c0_0 = arith.constant 0 : index
    %c0_1 = arith.constant 0 : index
    %0 = vector.load %arg1[%c0, %c0_0, %c0_1] : memref<1x256x8xf32, #tpu.memory_space<vmem>>, vector<1x256x8xf32>
    %1 = vector.shape_cast %0 : vector<1x256x8xf32> to vector<256x8xf32>
    %c0_2 = arith.constant 0 : index
    %c0_3 = arith.constant 0 : index
    %2 = vector.load %arg2[%c0_2, %c0_3] : memref<8x192xf32, #tpu.memory_space<vmem>>, vector<8x192xf32>
    %cst = arith.constant dense<0.000000e+00> : vector<256x192xf32>
    %3 = tpu.matmul %1, %2, %cst {dimension_numbers = #tpu.dot_dimension_numbers<[1], [0], [0], [1], [0, 0, 1, 1], [], []>} : vector<256x8xf32>, vector<8x192xf32>, vector<256x192xf32> -> vector<256x192xf32>
    %4 = vector.extract_strided_slice %3 {offsets = [0, 0], sizes = [256, 64], strides = [1, 1]} : vector<256x192xf32> to vector<256x64xf32>
    %cst_4 = arith.constant 0.000000e+00 : f32
    %5 = vector.broadcast %cst_4 : f32 to vector<24x64xf32>
    %6 = vector.extract_strided_slice %3 {offsets = [0, 64], sizes = [256, 64], strides = [1, 1]} : vector<256x192xf32> to vector<256x64xf32>
    %7 = tpu.concatenate %5, %6, %5 in 0 : vector<24x64xf32>, vector<256x64xf32>, vector<24x64xf32> -> vector<304x64xf32>
    %8 = vector.extract_strided_slice %3 {offsets = [0, 128], sizes = [256, 64], strides = [1, 1]} : vector<256x192xf32> to vector<256x64xf32>
    %9 = tpu.concatenate %5, %8, %5 in 0 : vector<24x64xf32>, vector<256x64xf32>, vector<24x64xf32> -> vector<304x64xf32>
    %c0_5 = arith.constant 0 : index
    %c0_6 = arith.constant 0 : index
    %10 = vector.load %arg3[%c0_5, %c0_6] : memref<9x64xf32, #tpu.memory_space<vmem>>, vector<9x64xf32>
    %c0_7 = arith.constant 0 : index
    %c0_8 = arith.constant 0 : index
    %11 = vector.load %arg4[%c0_7, %c0_8] : memref<256x3xf32, #tpu.memory_space<vmem>>, vector<256x3xf32>
    %12 = vector.extract_strided_slice %11 {offsets = [0, 0], sizes = [256, 1], strides = [1, 1]} : vector<256x3xf32> to vector<256x1xf32>
    %13 = vector.extract_strided_slice %7 {offsets = [7, 0], sizes = [256, 64], strides = [1, 1]} : vector<304x64xf32> to vector<256x64xf32>
    %14 = vector.broadcast %12 : vector<256x1xf32> to vector<256x64xf32>
    %15 = arith.mulf %13, %14 : vector<256x64xf32>
    %16 = vector.extract_strided_slice %10 {offsets = [0, 0], sizes = [1, 64], strides = [1, 1]} : vector<9x64xf32> to vector<1x64xf32>
    %17 = vector.broadcast %16 : vector<1x64xf32> to vector<256x64xf32>
    %18 = arith.addf %15, %17 : vector<256x64xf32>
    %19 = vector.extract_strided_slice %9 {offsets = [7, 0], sizes = [256, 64], strides = [1, 1]} : vector<304x64xf32> to vector<256x64xf32>
    %20 = vector.broadcast %12 : vector<256x1xf32> to vector<256x64xf32>
    %21 = arith.mulf %19, %20 : vector<256x64xf32>
    %22 = arith.mulf %4, %18 : vector<256x64xf32>
    %cst_9 = arith.constant 1.000000e+00 : f32
    %23 = vector.broadcast %cst_9 : f32 to vector<256x64xf32>
    %24 = vector.extract_strided_slice %11 {offsets = [0, 1], sizes = [256, 1], strides = [1, 1]} : vector<256x3xf32> to vector<256x1xf32>
    %25 = vector.extract_strided_slice %7 {offsets = [8, 0], sizes = [256, 64], strides = [1, 1]} : vector<304x64xf32> to vector<256x64xf32>
    %26 = vector.broadcast %24 : vector<256x1xf32> to vector<256x64xf32>
    %27 = arith.mulf %25, %26 : vector<256x64xf32>
    %28 = vector.extract_strided_slice %10 {offsets = [1, 0], sizes = [1, 64], strides = [1, 1]} : vector<9x64xf32> to vector<1x64xf32>
    %29 = vector.broadcast %28 : vector<1x64xf32> to vector<256x64xf32>
    %30 = arith.addf %27, %29 : vector<256x64xf32>
    %31 = vector.extract_strided_slice %9 {offsets = [8, 0], sizes = [256, 64], strides = [1, 1]} : vector<304x64xf32> to vector<256x64xf32>
    %32 = vector.broadcast %24 : vector<256x1xf32> to vector<256x64xf32>
    %33 = arith.mulf %31, %32 : vector<256x64xf32>
    %34 = arith.mulf %4, %30 : vector<256x64xf32>
    %35 = arith.maximumf %22, %34 : vector<256x64xf32>
    %36 = arith.subf %22, %35 : vector<256x64xf32>
    %37 = math.exp %36 : vector<256x64xf32>
    %38 = arith.subf %34, %35 : vector<256x64xf32>
    %39 = math.exp %38 : vector<256x64xf32>
    %40 = arith.mulf %23, %37 : vector<256x64xf32>
    %41 = arith.addf %40, %39 : vector<256x64xf32>
    %42 = arith.mulf %21, %37 : vector<256x64xf32>
    %43 = arith.mulf %39, %33 : vector<256x64xf32>
    %44 = arith.addf %42, %43 : vector<256x64xf32>
    %45 = vector.extract_strided_slice %11 {offsets = [0, 2], sizes = [256, 1], strides = [1, 1]} : vector<256x3xf32> to vector<256x1xf32>
    %46 = vector.extract_strided_slice %7 {offsets = [9, 0], sizes = [256, 64], strides = [1, 1]} : vector<304x64xf32> to vector<256x64xf32>
    %47 = vector.broadcast %45 : vector<256x1xf32> to vector<256x64xf32>
    %48 = arith.mulf %46, %47 : vector<256x64xf32>
    %49 = vector.extract_strided_slice %10 {offsets = [2, 0], sizes = [1, 64], strides = [1, 1]} : vector<9x64xf32> to vector<1x64xf32>
    %50 = vector.broadcast %49 : vector<1x64xf32> to vector<256x64xf32>
    %51 = arith.addf %48, %50 : vector<256x64xf32>
    %52 = vector.extract_strided_slice %9 {offsets = [9, 0], sizes = [256, 64], strides = [1, 1]} : vector<304x64xf32> to vector<256x64xf32>
    %53 = vector.broadcast %45 : vector<256x1xf32> to vector<256x64xf32>
    %54 = arith.mulf %52, %53 : vector<256x64xf32>
    %55 = arith.mulf %4, %51 : vector<256x64xf32>
    %56 = arith.maximumf %35, %55 : vector<256x64xf32>
    %57 = arith.subf %35, %56 : vector<256x64xf32>
    %58 = math.exp %57 : vector<256x64xf32>
    %59 = arith.subf %55, %56 : vector<256x64xf32>
    %60 = math.exp %59 : vector<256x64xf32>
    %61 = arith.mulf %41, %58 : vector<256x64xf32>
    %62 = arith.addf %61, %60 : vector<256x64xf32>
    %63 = arith.mulf %44, %58 : vector<256x64xf32>
    %64 = arith.mulf %60, %54 : vector<256x64xf32>
    %65 = arith.addf %63, %64 : vector<256x64xf32>
    %66 = vector.extract_strided_slice %11 {offsets = [0, 0], sizes = [256, 1], strides = [1, 1]} : vector<256x3xf32> to vector<256x1xf32>
    %67 = vector.extract_strided_slice %7 {offsets = [23, 0], sizes = [256, 64], strides = [1, 1]} : vector<304x64xf32> to vector<256x64xf32>
    %68 = vector.broadcast %66 : vector<256x1xf32> to vector<256x64xf32>
    %69 = arith.mulf %67, %68 : vector<256x64xf32>
    %70 = vector.extract_strided_slice %10 {offsets = [3, 0], sizes = [1, 64], strides = [1, 1]} : vector<9x64xf32> to vector<1x64xf32>
    %71 = vector.broadcast %70 : vector<1x64xf32> to vector<256x64xf32>
    %72 = arith.addf %69, %71 : vector<256x64xf32>
    %73 = vector.extract_strided_slice %9 {offsets = [23, 0], sizes = [256, 64], strides = [1, 1]} : vector<304x64xf32> to vector<256x64xf32>
    %74 = vector.broadcast %66 : vector<256x1xf32> to vector<256x64xf32>
    %75 = arith.mulf %73, %74 : vector<256x64xf32>
    %76 = arith.mulf %4, %72 : vector<256x64xf32>
    %77 = arith.maximumf %56, %76 : vector<256x64xf32>
    %78 = arith.subf %56, %77 : vector<256x64xf32>
    %79 = math.exp %78 : vector<256x64xf32>
    %80 = arith.subf %76, %77 : vector<256x64xf32>
    %81 = math.exp %80 : vector<256x64xf32>
    %82 = arith.mulf %62, %79 : vector<256x64xf32>
    %83 = arith.addf %82, %81 : vector<256x64xf32>
    %84 = arith.mulf %65, %79 : vector<256x64xf32>
    %85 = arith.mulf %81, %75 : vector<256x64xf32>
    %86 = arith.addf %84, %85 : vector<256x64xf32>
    %87 = vector.extract_strided_slice %11 {offsets = [0, 1], sizes = [256, 1], strides = [1, 1]} : vector<256x3xf32> to vector<256x1xf32>
    %88 = vector.extract_strided_slice %7 {offsets = [24, 0], sizes = [256, 64], strides = [1, 1]} : vector<304x64xf32> to vector<256x64xf32>
    %89 = vector.broadcast %87 : vector<256x1xf32> to vector<256x64xf32>
    %90 = arith.mulf %88, %89 : vector<256x64xf32>
    %91 = vector.extract_strided_slice %10 {offsets = [4, 0], sizes = [1, 64], strides = [1, 1]} : vector<9x64xf32> to vector<1x64xf32>
    %92 = vector.broadcast %91 : vector<1x64xf32> to vector<256x64xf32>
    %93 = arith.addf %90, %92 : vector<256x64xf32>
    %94 = vector.extract_strided_slice %9 {offsets = [24, 0], sizes = [256, 64], strides = [1, 1]} : vector<304x64xf32> to vector<256x64xf32>
    %95 = vector.broadcast %87 : vector<256x1xf32> to vector<256x64xf32>
    %96 = arith.mulf %94, %95 : vector<256x64xf32>
    %97 = arith.mulf %4, %93 : vector<256x64xf32>
    %98 = arith.maximumf %77, %97 : vector<256x64xf32>
    %99 = arith.subf %77, %98 : vector<256x64xf32>
    %100 = math.exp %99 : vector<256x64xf32>
    %101 = arith.subf %97, %98 : vector<256x64xf32>
    %102 = math.exp %101 : vector<256x64xf32>
    %103 = arith.mulf %83, %100 : vector<256x64xf32>
    %104 = arith.addf %103, %102 : vector<256x64xf32>
    %105 = arith.mulf %86, %100 : vector<256x64xf32>
    %106 = arith.mulf %102, %96 : vector<256x64xf32>
    %107 = arith.addf %105, %106 : vector<256x64xf32>
    %108 = vector.extract_strided_slice %11 {offsets = [0, 2], sizes = [256, 1], strides = [1, 1]} : vector<256x3xf32> to vector<256x1xf32>
    %109 = vector.extract_strided_slice %7 {offsets = [25, 0], sizes = [256, 64], strides = [1, 1]} : vector<304x64xf32> to vector<256x64xf32>
    %110 = vector.broadcast %108 : vector<256x1xf32> to vector<256x64xf32>
    %111 = arith.mulf %109, %110 : vector<256x64xf32>
    %112 = vector.extract_strided_slice %10 {offsets = [5, 0], sizes = [1, 64], strides = [1, 1]} : vector<9x64xf32> to vector<1x64xf32>
    %113 = vector.broadcast %112 : vector<1x64xf32> to vector<256x64xf32>
    %114 = arith.addf %111, %113 : vector<256x64xf32>
    %115 = vector.extract_strided_slice %9 {offsets = [25, 0], sizes = [256, 64], strides = [1, 1]} : vector<304x64xf32> to vector<256x64xf32>
    %116 = vector.broadcast %108 : vector<256x1xf32> to vector<256x64xf32>
    %117 = arith.mulf %115, %116 : vector<256x64xf32>
    %118 = arith.mulf %4, %114 : vector<256x64xf32>
    %119 = arith.maximumf %98, %118 : vector<256x64xf32>
    %120 = arith.subf %98, %119 : vector<256x64xf32>
    %121 = math.exp %120 : vector<256x64xf32>
    %122 = arith.subf %118, %119 : vector<256x64xf32>
    %123 = math.exp %122 : vector<256x64xf32>
    %124 = arith.mulf %104, %121 : vector<256x64xf32>
    %125 = arith.addf %124, %123 : vector<256x64xf32>
    %126 = arith.mulf %107, %121 : vector<256x64xf32>
    %127 = arith.mulf %123, %117 : vector<256x64xf32>
    %128 = arith.addf %126, %127 : vector<256x64xf32>
    %129 = vector.extract_strided_slice %11 {offsets = [0, 0], sizes = [256, 1], strides = [1, 1]} : vector<256x3xf32> to vector<256x1xf32>
    %130 = vector.extract_strided_slice %7 {offsets = [39, 0], sizes = [256, 64], strides = [1, 1]} : vector<304x64xf32> to vector<256x64xf32>
    %131 = vector.broadcast %129 : vector<256x1xf32> to vector<256x64xf32>
    %132 = arith.mulf %130, %131 : vector<256x64xf32>
    %133 = vector.extract_strided_slice %10 {offsets = [6, 0], sizes = [1, 64], strides = [1, 1]} : vector<9x64xf32> to vector<1x64xf32>
    %134 = vector.broadcast %133 : vector<1x64xf32> to vector<256x64xf32>
    %135 = arith.addf %132, %134 : vector<256x64xf32>
    %136 = vector.extract_strided_slice %9 {offsets = [39, 0], sizes = [256, 64], strides = [1, 1]} : vector<304x64xf32> to vector<256x64xf32>
    %137 = vector.broadcast %129 : vector<256x1xf32> to vector<256x64xf32>
    %138 = arith.mulf %136, %137 : vector<256x64xf32>
    %139 = arith.mulf %4, %135 : vector<256x64xf32>
    %140 = arith.maximumf %119, %139 : vector<256x64xf32>
    %141 = arith.subf %119, %140 : vector<256x64xf32>
    %142 = math.exp %141 : vector<256x64xf32>
    %143 = arith.subf %139, %140 : vector<256x64xf32>
    %144 = math.exp %143 : vector<256x64xf32>
    %145 = arith.mulf %125, %142 : vector<256x64xf32>
    %146 = arith.addf %145, %144 : vector<256x64xf32>
    %147 = arith.mulf %128, %142 : vector<256x64xf32>
    %148 = arith.mulf %144, %138 : vector<256x64xf32>
    %149 = arith.addf %147, %148 : vector<256x64xf32>
    %150 = vector.extract_strided_slice %11 {offsets = [0, 1], sizes = [256, 1], strides = [1, 1]} : vector<256x3xf32> to vector<256x1xf32>
    %151 = vector.extract_strided_slice %7 {offsets = [40, 0], sizes = [256, 64], strides = [1, 1]} : vector<304x64xf32> to vector<256x64xf32>
    %152 = vector.broadcast %150 : vector<256x1xf32> to vector<256x64xf32>
    %153 = arith.mulf %151, %152 : vector<256x64xf32>
    %154 = vector.extract_strided_slice %10 {offsets = [7, 0], sizes = [1, 64], strides = [1, 1]} : vector<9x64xf32> to vector<1x64xf32>
    %155 = vector.broadcast %154 : vector<1x64xf32> to vector<256x64xf32>
    %156 = arith.addf %153, %155 : vector<256x64xf32>
    %157 = vector.extract_strided_slice %9 {offsets = [40, 0], sizes = [256, 64], strides = [1, 1]} : vector<304x64xf32> to vector<256x64xf32>
    %158 = vector.broadcast %150 : vector<256x1xf32> to vector<256x64xf32>
    %159 = arith.mulf %157, %158 : vector<256x64xf32>
    %160 = arith.mulf %4, %156 : vector<256x64xf32>
    %161 = arith.maximumf %140, %160 : vector<256x64xf32>
    %162 = arith.subf %140, %161 : vector<256x64xf32>
    %163 = math.exp %162 : vector<256x64xf32>
    %164 = arith.subf %160, %161 : vector<256x64xf32>
    %165 = math.exp %164 : vector<256x64xf32>
    %166 = arith.mulf %146, %163 : vector<256x64xf32>
    %167 = arith.addf %166, %165 : vector<256x64xf32>
    %168 = arith.mulf %149, %163 : vector<256x64xf32>
    %169 = arith.mulf %165, %159 : vector<256x64xf32>
    %170 = arith.addf %168, %169 : vector<256x64xf32>
    %171 = vector.extract_strided_slice %11 {offsets = [0, 2], sizes = [256, 1], strides = [1, 1]} : vector<256x3xf32> to vector<256x1xf32>
    %172 = vector.extract_strided_slice %7 {offsets = [41, 0], sizes = [256, 64], strides = [1, 1]} : vector<304x64xf32> to vector<256x64xf32>
    %173 = vector.broadcast %171 : vector<256x1xf32> to vector<256x64xf32>
    %174 = arith.mulf %172, %173 : vector<256x64xf32>
    %175 = vector.extract_strided_slice %10 {offsets = [8, 0], sizes = [1, 64], strides = [1, 1]} : vector<9x64xf32> to vector<1x64xf32>
    %176 = vector.broadcast %175 : vector<1x64xf32> to vector<256x64xf32>
    %177 = arith.addf %174, %176 : vector<256x64xf32>
    %178 = vector.extract_strided_slice %9 {offsets = [41, 0], sizes = [256, 64], strides = [1, 1]} : vector<304x64xf32> to vector<256x64xf32>
    %179 = vector.broadcast %171 : vector<256x1xf32> to vector<256x64xf32>
    %180 = arith.mulf %178, %179 : vector<256x64xf32>
    %181 = arith.mulf %4, %177 : vector<256x64xf32>
    %182 = arith.maximumf %161, %181 : vector<256x64xf32>
    %183 = arith.subf %161, %182 : vector<256x64xf32>
    %184 = math.exp %183 : vector<256x64xf32>
    %185 = arith.subf %181, %182 : vector<256x64xf32>
    %186 = math.exp %185 : vector<256x64xf32>
    %187 = arith.mulf %167, %184 : vector<256x64xf32>
    %188 = arith.addf %187, %186 : vector<256x64xf32>
    %189 = arith.mulf %170, %184 : vector<256x64xf32>
    %190 = arith.mulf %186, %180 : vector<256x64xf32>
    %191 = arith.addf %189, %190 : vector<256x64xf32>
    %192 = tpu.reciprocal %188 {approx = true} : vector<256x64xf32> -> vector<256x64xf32>
    %193 = arith.mulf %191, %192 : vector<256x64xf32>
    %c0_10 = arith.constant 0 : index
    %c0_11 = arith.constant 0 : index
    %c0_12 = arith.constant 0 : index
    %194 = vector.load %arg5[%c0_10, %c0_11, %c0_12] : memref<1x256x64xf32, #tpu.memory_space<vmem>>, vector<1x256x64xf32>
    %195 = vector.shape_cast %194 : vector<1x256x64xf32> to vector<256x64xf32>
    %196 = vector.shape_cast %193 : vector<256x64xf32> to vector<1x256x64xf32>
    tpu.vector_store %arg5[%c0_10, %c0_11, %c0_12], %196 {strides = array<i32>} : memref<1x256x64xf32, #tpu.memory_space<vmem>>, vector<1x256x64xf32>,
    return
  }
  func.func @transform_0(%arg0: i32) -> (i32, i32, i32) {
    %c0_i32 = arith.constant 0 : i32
    %c0_i32_0 = arith.constant 0 : i32
    %c0_i32_1 = arith.constant 0 : i32
    return %arg0, %c0_i32, %c0_i32_0 : i32, i32, i32
  }
  func.func @transform_1(%arg0: i32) -> (i32, i32) {
    %c0_i32 = arith.constant 0 : i32
    %c0_i32_0 = arith.constant 0 : i32
    %c0_i32_1 = arith.constant 0 : i32
    return %c0_i32, %c0_i32_0 : i32, i32
  }
  func.func @transform_2(%arg0: i32) -> (i32, i32) {
    %c0_i32 = arith.constant 0 : i32
    %c0_i32_0 = arith.constant 0 : i32
    %c0_i32_1 = arith.constant 0 : i32
    return %c0_i32, %c0_i32_0 : i32, i32
  }
  func.func @transform_3(%arg0: i32) -> (i32, i32) {
    %c0_i32 = arith.constant 0 : i32
    %c0_i32_0 = arith.constant 0 : i32
    %c0_i32_1 = arith.constant 0 : i32
    return %c0_i32, %c0_i32_0 : i32, i32
  }
  func.func @transform_4(%arg0: i32) -> (i32, i32, i32) {
    %c0_i32 = arith.constant 0 : i32
    %c0_i32_0 = arith.constant 0 : i32
    %c0_i32_1 = arith.constant 0 : i32
    return %arg0, %c0_i32, %c0_i32_0 : i32, i32, i32
  }
}

</mosaic_0001>

<llo_original>
// kernel: attention_forward.1
$region0: #{attention_forward.1}
  #allocation0 [shape = 'u32[]', space=smem, size = 0x4, offset = 0x4, fixed_abs, tag = 'smem constant byte address 0x4 - core index']
  #allocation1 [shape = 'u32[144,128]{1,0:T(1,128)}', space=vmem, size = 0x12000, scoped, tag = 'internal scratch']
  %s0 = inlined_call_operand.vmem [shape: f32[2,256,8], index: 0, kind: input, shape index: {}]
  %s1 = inlined_call_operand.vmem [shape: f32[8,192], index: 1, kind: input, shape index: {}]
  %s2 = inlined_call_operand.vmem [shape: f32[9,64], index: 2, kind: input, shape index: {}]
  %s3 = inlined_call_operand.vmem [shape: f32[256,3], index: 3, kind: input, shape index: {}]
  %s4 = inlined_call_operand.hbm [shape: f32[2,256,64], index: 4, kind: output, shape index: {}]
  %s5 = sld [smem:[#allocation0]]
  $region49: #{attention_forward.1} parent=0
    _
  %s7 = ssub.s32 1, %s5
  %s8 = scalar_select 0, %s7, %s5
  $region1: #{attention_forward.1} parent=0
    #allocation2 [shape = 'u8[262144]{0}', space=vmem, size = 0x40000, scoped, tag = 'output window, operand 0']
    #allocation3 [shape = 's32[2]{0}', space=sflag, size = 0x8, scoped, tag = 'scoped memory for attention_forward.1']
    %9 = vsyncpa [#allocation3], 0
    %s10 = scalar_lea.sflag [#allocation3], 1
    %11 = vsyncpa %s10, 0
    loop: start=0, step=1, limit=4
    $region2: #{attention_forward.1} parent=1 // loop_pre_header
      _
    $region3: #{attention_forward.1} parent=1 // loop_header
      %s13 = sphi 0, %s17
      %p14 = scmp.ge.s32.totalorder %s13, 4
      %s23 = sphi 0, %s25
      %s26 = sphi 0, %s23
      %s27 = sphi 0, %s26
      %s43 = sphi 0, %s27
      %s47 = sphi 0, %s47
      %s49 = sphi 0, %s47
      %s50 = sphi 0, %s49
      %s64 = sphi 0, %s50
      %s68 = sphi 0, %s68
      %s70 = sphi 0, %s68
      %s71 = sphi 0, %s70
      %s85 = sphi 0, %s71
      %s89 = sphi 0, %s89
      %s91 = sphi 0, %s89
      %s92 = sphi 0, %s91
      %s106 = sphi 0, %s92
      %s112 = sphi 0, %s114
      %s115 = sphi 0, %s112
      %s116 = sphi 0, %s115
      %s132 = sphi 0, %s116
    $region4: #{attention_forward.1} parent=1 // loop_header_branch
      %16 = sbr.rel (%p14) target = $region8
    $region5: #{attention_forward.1} parent=1 // loop_body
      %s18 = ssub.s32 %s13, 1
      %s19 = ssub.s32 %s13, 2
      %s20 = sadd.s32 %s13, 1
      %s21 = ssub.s32 %s13, %s20
      %p22 = scmp.eq.s32.totalorder %s21, 0
      %s24 = sadd.s32 %s23, 1
      %s25 = scalar_select %p22, %s23, %s24
      %p28 = pneg %p22
      %p29 = scmp.eq.s32.totalorder %s13, 1
      %p30 = por %p28, %p29
      %p31 = scmp.ne.s32.totalorder %s23, %s26
      %p32 = scmp.eq.s32.totalorder %s13, 0
      %p33 = por %p31, %p32
      %p34 = scmp.ne.s32.totalorder %s23, %s26
      %p35 = scmp.eq.s32.totalorder %s18, 1
      %p36 = por %p34, %p35
      %p37 = scmp.ne.s32.totalorder %s26, %s27
      %p38 = scmp.eq.s32.totalorder %s18, 0
      %p39 = por %p37, %p38
      %p40 = scmp.ne.s32.totalorder %s26, %s27
      %p41 = scmp.eq.s32.totalorder %s19, 1
      %p42 = por %p40, %p41
      %p44 = scmp.ne.s32.totalorder %s27, %s43
      %p45 = scmp.eq.s32.totalorder %s19, 0
      %p46 = por %p44, %p45
      %s48 = sadd.s32 %s47, 1
      %p51 = scmp.eq.s32.totalorder %s13, 1
      %p52 = scmp.ne.s32.totalorder %s47, %s49
      %p53 = scmp.eq.s32.totalorder %s13, 0
      %p54 = por %p52, %p53
      %p55 = scmp.ne.s32.totalorder %s47, %s49
      %p56 = scmp.eq.s32.totalorder %s18, 1
      %p57 = por %p55, %p56
      %p58 = scmp.ne.s32.totalorder %s49, %s50
      %p59 = scmp.eq.s32.totalorder %s18, 0
      %p60 = por %p58, %p59
      %p61 = scmp.ne.s32.totalorder %s49, %s50
      %p62 = scmp.eq.s32.totalorder %s19, 1
      %p63 = por %p61, %p62
      %p65 = scmp.ne.s32.totalorder %s50, %s64
      %p66 = scmp.eq.s32.totalorder %s19, 0
      %p67 = por %p65, %p66
      %s69 = sadd.s32 %s68, 1
      %p72 = scmp.eq.s32.totalorder %s13, 1
      %p73 = scmp.ne.s32.totalorder %s68, %s70
      %p74 = scmp.eq.s32.totalorder %s13, 0
      %p75 = por %p73, %p74
      %p76 = scmp.ne.s32.totalorder %s68, %s70
      %p77 = scmp.eq.s32.totalorder %s18, 1
      %p78 = por %p76, %p77
      %p79 = scmp.ne.s32.totalorder %s70, %s71
      %p80 = scmp.eq.s32.totalorder %s18, 0
      %p81 = por %p79, %p80
      %p82 = scmp.ne.s32.totalorder %s70, %s71
      %p83 = scmp.eq.s32.totalorder %s19, 1
      %p84 = por %p82, %p83
      %p86 = scmp.ne.s32.totalorder %s71, %s85
      %p87 = scmp.eq.s32.totalorder %s19, 0
      %p88 = por %p86, %p87
      %s90 = sadd.s32 %s89, 1
      %p93 = scmp.eq.s32.totalorder %s13, 1
      %p94 = scmp.ne.s32.totalorder %s89, %s91
      %p95 = scmp.eq.s32.totalorder %s13, 0
      %p96 = por %p94, %p95
      %p97 = scmp.ne.s32.totalorder %s89, %s91
      %p98 = scmp.eq.s32.totalorder %s18, 1
      %p99 = por %p97, %p98
      %p100 = scmp.ne.s32.totalorder %s91, %s92
      %p101 = scmp.eq.s32.totalorder %s18, 0
      %p102 = por %p100, %p101
      %p103 = scmp.ne.s32.totalorder %s91, %s92
      %p104 = scmp.eq.s32.totalorder %s19, 1
      %p105 = por %p103, %p104
      %p107 = scmp.ne.s32.totalorder %s92, %s106
      %p108 = scmp.eq.s32.totalorder %s19, 0
      %p109 = por %p107, %p108
      %s110 = ssub.s32 %s13, %s20
      %p111 = scmp.eq.s32.totalorder %s110, 0
      %s113 = sadd.s32 %s112, 1
      %s114 = scalar_select %p111, %s112, %s113
      %p117 = pneg %p111
      %p118 = scmp.eq.s32.totalorder %s13, 1
      %p119 = por %p117, %p118
      %p120 = scmp.ne.s32.totalorder %s112, %s115
      %p121 = scmp.eq.s32.totalorder %s13, 0
      %p122 = por %p120, %p121
      %p123 = scmp.ne.s32.totalorder %s112, %s115
      %p124 = scmp.eq.s32.totalorder %s18, 1
      %p125 = por %p123, %p124
      %p126 = scmp.ne.s32.totalorder %s115, %s116
      %p127 = scmp.eq.s32.totalorder %s18, 0
      %p128 = por %p126, %p127
      %p129 = scmp.ne.s32.totalorder %s115, %s116
      %p130 = scmp.eq.s32.totalorder %s19, 1
      %p131 = por %p129, %p130
      %p133 = scmp.ne.s32.totalorder %s116, %s132
      %p134 = scmp.eq.s32.totalorder %s19, 0
      %p135 = por %p133, %p134
      %p136 = scmp.le.s32.totalorder 1, %s13
      %p137 = scmp.lt.s32.totalorder %s13, 3
      %p138 = pnand %p136, %p137
      %p139 = pneg %p138
      // Predicated region
      $region9: #{attention_forward.1} parent=5 // pred_check
        _
      $region10: #{attention_forward.1} parent=5 // pred_check_branch
        %141 = sbr.rel (%p138) target = $region12
      $region11: #{attention_forward.1} parent=5 // pred_region
        %s142 = ssub.s32 %s13, 1
        // Predicated region
        $region13: #{attention_forward.1} parent=11 // pred_check
          %p143 = pneg %p60
        $region14: #{attention_forward.1} parent=11 // pred_check_branch
          %145 = sbr.rel (%p143) target = $region16
        $region15: #{attention_forward.1} parent=11 // pred_region
          _
        $region16: #{attention_forward.1} parent=11 // pred_fallthru
          _
        // Predicated region
        $region17: #{attention_forward.1} parent=11 // pred_check
          %p146 = pneg %p81
        $region18: #{attention_forward.1} parent=11 // pred_check_branch
          %148 = sbr.rel (%p146) target = $region20
        $region19: #{attention_forward.1} parent=11 // pred_region
          _
        $region20: #{attention_forward.1} parent=11 // pred_fallthru
          _
        // Predicated region
        $region21: #{attention_forward.1} parent=11 // pred_check
          %p149 = pneg %p102
        $region22: #{attention_forward.1} parent=11 // pred_check_branch
          %151 = sbr.rel (%p149) target = $region24
        $region23: #{attention_forward.1} parent=11 // pred_region
          _
        $region24: #{attention_forward.1} parent=11 // pred_fallthru
          _
      $region12: #{attention_forward.1} parent=5 // pred_fallthru
        _
      %p152 = scmp.lt.s32.totalorder %s13, 2
      // Predicated region
      $region25: #{attention_forward.1} parent=5 // pred_check
        %p153 = pneg %p152
      $region26: #{attention_forward.1} parent=5 // pred_check_branch
        %155 = sbr.rel (%p153) target = $region28
      $region27: #{attention_forward.1} parent=5 // pred_region
        // Predicated region
        $region29: #{attention_forward.1} parent=27 // pred_check
          %p156 = pneg %p33
        $region30: #{attention_forward.1} parent=27 // pred_check_branch
          %158 = sbr.rel (%p156) target = $region32
        $region31: #{attention_forward.1} parent=27 // pred_region
          %p159 = scmp.lt.s32.totalorder %s13, 1
          %s160 = scalar_select %p159, %s13, 1
          %s161 = smul.addr %s160, 32
          %s162 = smul.addr %s161, 8
          %s163 = scalar_lea.vmem %s0, %s162
        $region32: #{attention_forward.1} parent=27 // pred_fallthru
          _
      $region28: #{attention_forward.1} parent=5 // pred_fallthru
        _
      %p164 = scmp.le.s32.totalorder 1, %s13
      %p165 = scmp.lt.s32.totalorder %s13, 3
      %p166 = pnand %p164, %p165
      %p167 = pneg %p166
      // Predicated region
      $region33: #{attention_forward.1} parent=5 // pred_check
        _
      $region34: #{attention_forward.1} parent=5 // pred_check_branch
        %169 = sbr.rel (%p166) target = $region36
      $region35: #{attention_forward.1} parent=5 // pred_region
        %s170 = ssub.s32 %s13, 1
        %p171 = scmp.lt.s32.totalorder %s18, 1
        %s172 = scalar_select %p171, %s18, 1
        %s173 = smul.addr %s172, 32
        %s174 = smul.addr %s173, 8
        %s175 = scalar_lea.vmem %s0, %s174
        %p176 = pneg %p39
        %p177 = pneg %p36
        %p178 = pneg %p60
        %p179 = pneg %p57
        %p180 = pneg %p81
        %p181 = pneg %p78
        %p182 = pneg %p102
        %p183 = pneg %p99
        %p184 = pneg %p128
        %p185 = pneg %p125
        %s186 = sand.u32 %s115, 1
        %s187 = scalar_lea.sflag [#allocation3], %s186
        %s188 = sand.u32 %s115, 1
        %s189 = smul.addr %s188, 256
        %s190 = scalar_lea.vmem [#allocation2], %s189
        %p191 = scmp.lt.s32.totalorder %s18, 1
        %s192 = scalar_select %p191, %s18, 1
        %s193 = smul.addr %s192, 32
        %s194 = smul.addr %s193, 8
        %s195 = scalar_lea.vmem %s0, %s194
        %v196 = vld [vmem:[%s195] sm:$0xff]
        %v197 = vld [vmem:[%s195 + $0x8] sm:$0xff]
        %v198 = vld [vmem:[%s195 + $0x10] sm:$0xff]
        %v199 = vld [vmem:[%s195 + $0x18] sm:$0xff]
        %v200 = vld [vmem:[%s195 + $0x20] sm:$0xff]
        %v201 = vld [vmem:[%s195 + $0x28] sm:$0xff]
        %v202 = vld [vmem:[%s195 + $0x30] sm:$0xff]
        %v203 = vld [vmem:[%s195 + $0x38] sm:$0xff]
        %v204 = vld [vmem:[%s195 + $0x40] sm:$0xff]
        %v205 = vld [vmem:[%s195 + $0x48] sm:$0xff]
        %v206 = vld [vmem:[%s195 + $0x50] sm:$0xff]
        %v207 = vld [vmem:[%s195 + $0x58] sm:$0xff]
        %v208 = vld [vmem:[%s195 + $0x60] sm:$0xff]
        %v209 = vld [vmem:[%s195 + $0x68] sm:$0xff]
        %v210 = vld [vmem:[%s195 + $0x70] sm:$0xff]
        %v211 = vld [vmem:[%s195 + $0x78] sm:$0xff]
        %v212 = vld [vmem:[%s195 + $0x80] sm:$0xff]
        %v213 = vld [vmem:[%s195 + $0x88] sm:$0xff]
        %v214 = vld [vmem:[%s195 + $0x90] sm:$0xff]
        %v215 = vld [vmem:[%s195 + $0x98] sm:$0xff]
        %v216 = vld [vmem:[%s195 + $0xa0] sm:$0xff]
        %v217 = vld [vmem:[%s195 + $0xa8] sm:$0xff]
        %v218 = vld [vmem:[%s195 + $0xb0] sm:$0xff]
        %v219 = vld [vmem:[%s195 + $0xb8] sm:$0xff]
        %v220 = vld [vmem:[%s195 + $0xc0] sm:$0xff]
        %v221 = vld [vmem:[%s195 + $0xc8] sm:$0xff]
        %v222 = vld [vmem:[%s195 + $0xd0] sm:$0xff]
        %v223 = vld [vmem:[%s195 + $0xd8] sm:$0xff]
        %v224 = vld [vmem:[%s195 + $0xe0] sm:$0xff]
        %v225 = vld [vmem:[%s195 + $0xe8] sm:$0xff]
        %v226 = vld [vmem:[%s195 + $0xf0] sm:$0xff]
        %v227 = vld [vmem:[%s195 + $0xf8] sm:$0xff]
        %v228 = vld [vmem:[%s1] sm:$0xff]
        %v229 = vld [vmem:[%s1 + $0x8] sm:$0xff]
        %vm230 = vcmask 64512
        %v232 = vsel %vm230, %v196, 0
        %v235 = vsel %vm230, %v197, 0
        %v238 = vsel %vm230, %v198, 0
        %v241 = vsel %vm230, %v199, 0
        %v244 = vsel %vm230, %v200, 0
        %v247 = vsel %vm230, %v201, 0
        %v250 = vsel %vm230, %v202, 0
        %v253 = vsel %vm230, %v203, 0
        %v256 = vsel %vm230, %v204, 0
        %v259 = vsel %vm230, %v205, 0
        %v262 = vsel %vm230, %v206, 0
        %v265 = vsel %vm230, %v207, 0
        %v268 = vsel %vm230, %v208, 0
        %v271 = vsel %vm230, %v209, 0
        %v274 = vsel %vm230, %v210, 0
        %v277 = vsel %vm230, %v211, 0
        %v280 = vsel %vm230, %v212, 0
        %v283 = vsel %vm230, %v213, 0
        %v286 = vsel %vm230, %v214, 0
        %v289 = vsel %vm230, %v215, 0
        %v292 = vsel %vm230, %v216, 0
        %v295 = vsel %vm230, %v217, 0
        %v298 = vsel %vm230, %v218, 0
        %v301 = vsel %vm230, %v219, 0
        %v304 = vsel %vm230, %v220, 0
        %v307 = vsel %vm230, %v221, 0
        %v310 = vsel %vm230, %v222, 0
        %v313 = vsel %vm230, %v223, 0
        %v316 = vsel %vm230, %v224, 0
        %v319 = vsel %vm230, %v225, 0
        %v322 = vsel %vm230, %v226, 0
        %v325 = vsel %vm230, %v227, 0
        %327 = vmatprep.subr.mxu0 %v229
        %328 = vmatpush1.msra.mxu0 %v228
        %329 = vmatprep.subr.mxu0 0.0
        %330 = vmatpush1.msra.mxu0 0.0
        %331 = vmatprep.subr.mxu0 0.0
        %332 = vmatpush1.msra.mxu0 0.0
        %333 = vmatprep.subr.mxu0 0.0
        %334 = vmatpush1.msra.mxu0 0.0
        %335 = vmatprep.subr.mxu0 0.0
        %336 = vmatpush1.msra.mxu0 0.0
        %337 = vmatprep.subr.mxu0 0.0
        %338 = vmatpush1.msra.mxu0 0.0
        %339 = vmatprep.subr.mxu0 0.0
        %340 = vmatpush1.msra.mxu0 0.0
        %341 = vmatprep.subr.mxu0 0.0
        %342 = vmatpush1.msra.mxu0 0.0
        %343 = vmatprep.subr.mxu0 0.0
        %344 = vmatpush1.msra.mxu0 0.0
        %345 = vmatprep.subr.mxu0 0.0
        %346 = vmatpush1.msra.mxu0 0.0
        %347 = vmatprep.subr.mxu0 0.0
        %348 = vmatpush1.msra.mxu0 0.0
        %349 = vmatprep.subr.mxu0 0.0
        %350 = vmatpush1.msra.mxu0 0.0
        %351 = vmatprep.subr.mxu0 0.0
        %352 = vmatpush1.msra.mxu0 0.0
        %353 = vmatprep.subr.mxu0 0.0
        %354 = vmatpush1.msra.mxu0 0.0
        %355 = vmatprep.subr.mxu0 0.0
        %356 = vmatpush1.msra.mxu0 0.0
        %357 = vmatprep.subr.mxu0 0.0
        %358 = vmatpush1.msra.mxu0 0.0
        %359 = vmatprep.subr.mxu0 0.0
        %360 = vmatpush1.msra.mxu0 0.0
        %361 = vmatprep.subr.mxu0 0.0
        %362 = vmatpush1.msra.mxu0 0.0
        %363 = vmatprep.subr.mxu0 0.0
        %364 = vmatpush1.msra.mxu0 0.0
        %365 = vmatprep.subr.mxu0 0.0
        %366 = vmatpush1.msra.mxu0 0.0
        %367 = vmatprep.subr.mxu0 0.0
        %368 = vmatpush1.msra.mxu0 0.0
        %369 = vmatprep.subr.mxu0 0.0
        %370 = vmatpush1.msra.mxu0 0.0
        %371 = vmatprep.subr.mxu0 0.0
        %372 = vmatpush1.msra.mxu0 0.0
        %373 = vmatprep.subr.mxu0 0.0
        %374 = vmatpush1.msra.mxu0 0.0
        %375 = vmatprep.subr.mxu0 0.0
        %376 = vmatpush1.msra.mxu0 0.0
        %377 = vmatprep.subr.mxu0 0.0
        %378 = vmatpush1.msra.mxu0 0.0
        %379 = vmatprep.subr.mxu0 0.0
        %380 = vmatpush1.msra.mxu0 0.0
        %381 = vmatprep.subr.mxu0 0.0
        %382 = vmatpush1.msra.mxu0 0.0
        %383 = vmatprep.subr.mxu0 0.0
        %384 = vmatpush1.msra.mxu0 0.0
        %385 = vmatprep.subr.mxu0 0.0
        %386 = vmatpush1.msra.mxu0 0.0
        %387 = vmatprep.subr.mxu0 0.0
        %388 = vmatpush1.msra.mxu0 0.0
        %389 = vmatprep.subr.mxu0 0.0
        %390 = vmatpush1.msra.mxu0 0.0
        %391 = vmatprep.mubr.f32.mxu0 0.0
        %392 = vmatmul.mubr.f32.gmra.mrb[0].mxu0 %v232
        %v393 = vpop.f32.mrb[0].mxu0
        %v394 = vadd.f32 0.0, %v393
        %v395 = vpop.f32.mrb[0].mxu0
        %v396 = vadd.f32 0.0, %v395
        %397 = vmatprep.mubr.f32.mxu0 0.0
        %398 = vmatmul.mubr.f32.gmra.mrb[0].mxu0 %v235
        %v399 = vpop.f32.mrb[0].mxu0
        %v400 = vadd.f32 0.0, %v399
        %v401 = vpop.f32.mrb[0].mxu0
        %v402 = vadd.f32 0.0, %v401
        %403 = vmatprep.mubr.f32.mxu0 0.0
        %404 = vmatmul.mubr.f32.gmra.mrb[0].mxu0 %v238
        %v405 = vpop.f32.mrb[0].mxu0
        %v406 = vadd.f32 0.0, %v405
        %v407 = vpop.f32.mrb[0].mxu0
        %v408 = vadd.f32 0.0, %v407
        %409 = vmatprep.mubr.f32.mxu0 0.0
        %410 = vmatmul.mubr.f32.gmra.mrb[0].mxu0 %v241
        %v411 = vpop.f32.mrb[0].mxu0
        %v412 = vadd.f32 0.0, %v411
        %v413 = vpop.f32.mrb[0].mxu0
        %v414 = vadd.f32 0.0, %v413
        %415 = vmatprep.mubr.f32.mxu0 0.0
        %416 = vmatmul.mubr.f32.gmra.mrb[0].mxu0 %v244
        %v417 = vpop.f32.mrb[0].mxu0
        %v418 = vadd.f32 0.0, %v417
        %v419 = vpop.f32.mrb[0].mxu0
        %v420 = vadd.f32 0.0, %v419
        %421 = vmatprep.mubr.f32.mxu0 0.0
        %422 = vmatmul.mubr.f32.gmra.mrb[0].mxu0 %v247
        %v423 = vpop.f32.mrb[0].mxu0
        %v424 = vadd.f32 0.0, %v423
        %v425 = vpop.f32.mrb[0].mxu0
        %v426 = vadd.f32 0.0, %v425
        %427 = vmatprep.mubr.f32.mxu0 0.0
        %428 = vmatmul.mubr.f32.gmra.mrb[0].mxu0 %v250
        %v429 = vpop.f32.mrb[0].mxu0
        %v430 = vadd.f32 0.0, %v429
        %v431 = vpop.f32.mrb[0].mxu0
        %v432 = vadd.f32 0.0, %v431
        %433 = vmatprep.mubr.f32.mxu0 0.0
        %434 = vmatmul.mubr.f32.gmra.mrb[0].mxu0 %v253
        %v435 = vpop.f32.mrb[0].mxu0
        %v436 = vadd.f32 0.0, %v435
        %v437 = vpop.f32.mrb[0].mxu0
        %v438 = vadd.f32 0.0, %v437
        %439 = vmatprep.mubr.f32.mxu0 0.0
        %440 = vmatmul.mubr.f32.gmra.mrb[0].mxu0 %v256
        %v441 = vpop.f32.mrb[0].mxu0
        %v442 = vadd.f32 0.0, %v441
        %v443 = vpop.f32.mrb[0].mxu0
        %v444 = vadd.f32 0.0, %v443
        %445 = vmatprep.mubr.f32.mxu0 0.0
        %446 = vmatmul.mubr.f32.gmra.mrb[0].mxu0 %v259
        %v447 = vpop.f32.mrb[0].mxu0
        %v448 = vadd.f32 0.0, %v447
        %v449 = vpop.f32.mrb[0].mxu0
        %v450 = vadd.f32 0.0, %v449
        %451 = vmatprep.mubr.f32.mxu0 0.0
        %452 = vmatmul.mubr.f32.gmra.mrb[0].mxu0 %v262
        %v453 = vpop.f32.mrb[0].mxu0
        %v454 = vadd.f32 0.0, %v453
        %v455 = vpop.f32.mrb[0].mxu0
        %v456 = vadd.f32 0.0, %v455
        %457 = vmatprep.mubr.f32.mxu0 0.0
        %458 = vmatmul.mubr.f32.gmra.mrb[0].mxu0 %v265
        %v459 = vpop.f32.mrb[0].mxu0
        %v460 = vadd.f32 0.0, %v459
        %v461 = vpop.f32.mrb[0].mxu0
        %v462 = vadd.f32 0.0, %v461
        %463 = vmatprep.mubr.f32.mxu0 0.0
        %464 = vmatmul.mubr.f32.gmra.mrb[0].mxu0 %v268
        %v465 = vpop.f32.mrb[0].mxu0
        %v466 = vadd.f32 0.0, %v465
        %v467 = vpop.f32.mrb[0].mxu0
        %v468 = vadd.f32 0.0, %v467
        %469 = vmatprep.mubr.f32.mxu0 0.0
        %470 = vmatmul.mubr.f32.gmra.mrb[0].mxu0 %v271
        %v471 = vpop.f32.mrb[0].mxu0
        %v472 = vadd.f32 0.0, %v471
        %v473 = vpop.f32.mrb[0].mxu0
        %v474 = vadd.f32 0.0, %v473
        %475 = vmatprep.mubr.f32.mxu0 0.0
        %476 = vmatmul.mubr.f32.gmra.mrb[0].mxu0 %v274
        %v477 = vpop.f32.mrb[0].mxu0
        %v478 = vadd.f32 0.0, %v477
        %v479 = vpop.f32.mrb[0].mxu0
        %v480 = vadd.f32 0.0, %v479
        %481 = vmatprep.mubr.f32.mxu0 0.0
        %482 = vmatmul.mubr.f32.gmra.mrb[0].mxu0 %v277
        %v483 = vpop.f32.mrb[0].mxu0
        %v484 = vadd.f32 0.0, %v483
        %v485 = vpop.f32.mrb[0].mxu0
        %v486 = vadd.f32 0.0, %v485
        %487 = vmatprep.mubr.f32.mxu0 0.0
        %488 = vmatmul.mubr.f32.gmra.mrb[0].mxu0 %v280
        %v489 = vpop.f32.mrb[0].mxu0
        %v490 = vadd.f32 0.0, %v489
        %v491 = vpop.f32.mrb[0].mxu0
        %v492 = vadd.f32 0.0, %v491
        %493 = vmatprep.mubr.f32.mxu0 0.0
        %494 = vmatmul.mubr.f32.gmra.mrb[0].mxu0 %v283
        %v495 = vpop.f32.mrb[0].mxu0
        %v496 = vadd.f32 0.0, %v495
        %v497 = vpop.f32.mrb[0].mxu0
        %v498 = vadd.f32 0.0, %v497
        %499 = vmatprep.mubr.f32.mxu0 0.0
        %500 = vmatmul.mubr.f32.gmra.mrb[0].mxu0 %v286
        %v501 = vpop.f32.mrb[0].mxu0
        %v502 = vadd.f32 0.0, %v501
        %v503 = vpop.f32.mrb[0].mxu0
        %v504 = vadd.f32 0.0, %v503
        %505 = vmatprep.mubr.f32.mxu0 0.0
        %506 = vmatmul.mubr.f32.gmra.mrb[0].mxu0 %v289
        %v507 = vpop.f32.mrb[0].mxu0
        %v508 = vadd.f32 0.0, %v507
        %v509 = vpop.f32.mrb[0].mxu0
        %v510 = vadd.f32 0.0, %v509
        %511 = vmatprep.mubr.f32.mxu0 0.0
        %512 = vmatmul.mubr.f32.gmra.mrb[0].mxu0 %v292
        %v513 = vpop.f32.mrb[0].mxu0
        %v514 = vadd.f32 0.0, %v513
        %v515 = vpop.f32.mrb[0].mxu0
        %v516 = vadd.f32 0.0, %v515
        %517 = vmatprep.mubr.f32.mxu0 0.0
        %518 = vmatmul.mubr.f32.gmra.mrb[0].mxu0 %v295
        %v519 = vpop.f32.mrb[0].mxu0
        %v520 = vadd.f32 0.0, %v519
        %v521 = vpop.f32.mrb[0].mxu0
        %v522 = vadd.f32 0.0, %v521
        %523 = vmatprep.mubr.f32.mxu0 0.0
        %524 = vmatmul.mubr.f32.gmra.mrb[0].mxu0 %v298
        %v525 = vpop.f32.mrb[0].mxu0
        %v526 = vadd.f32 0.0, %v525
        %v527 = vpop.f32.mrb[0].mxu0
        %v528 = vadd.f32 0.0, %v527
        %529 = vmatprep.mubr.f32.mxu0 0.0
        %530 = vmatmul.mubr.f32.gmra.mrb[0].mxu0 %v301
        %v531 = vpop.f32.mrb[0].mxu0
        %v532 = vadd.f32 0.0, %v531
        %v533 = vpop.f32.mrb[0].mxu0
        %v534 = vadd.f32 0.0, %v533
        %535 = vmatprep.mubr.f32.mxu0 0.0
        %536 = vmatmul.mubr.f32.gmra.mrb[0].mxu0 %v304
        %v537 = vpop.f32.mrb[0].mxu0
        %v538 = vadd.f32 0.0, %v537
        %v539 = vpop.f32.mrb[0].mxu0
        %v540 = vadd.f32 0.0, %v539
        %541 = vmatprep.mubr.f32.mxu0 0.0
        %542 = vmatmul.mubr.f32.gmra.mrb[0].mxu0 %v307
        %v543 = vpop.f32.mrb[0].mxu0
        %v544 = vadd.f32 0.0, %v543
        %v545 = vpop.f32.mrb[0].mxu0
        %v546 = vadd.f32 0.0, %v545
        %547 = vmatprep.mubr.f32.mxu0 0.0
        %548 = vmatmul.mubr.f32.gmra.mrb[0].mxu0 %v310
        %v549 = vpop.f32.mrb[0].mxu0
        %v550 = vadd.f32 0.0, %v549
        %v551 = vpop.f32.mrb[0].mxu0
        %v552 = vadd.f32 0.0, %v551
        %553 = vmatprep.mubr.f32.mxu0 0.0
        %554 = vmatmul.mubr.f32.gmra.mrb[0].mxu0 %v313
        %v555 = vpop.f32.mrb[0].mxu0
        %v556 = vadd.f32 0.0, %v555
        %v557 = vpop.f32.mrb[0].mxu0
        %v558 = vadd.f32 0.0, %v557
        %559 = vmatprep.mubr.f32.mxu0 0.0
        %560 = vmatmul.mubr.f32.gmra.mrb[0].mxu0 %v316
        %v561 = vpop.f32.mrb[0].mxu0
        %v562 = vadd.f32 0.0, %v561
        %v563 = vpop.f32.mrb[0].mxu0
        %v564 = vadd.f32 0.0, %v563
        %565 = vmatprep.mubr.f32.mxu0 0.0
        %566 = vmatmul.mubr.f32.gmra.mrb[0].mxu0 %v319
        %v567 = vpop.f32.mrb[0].mxu0
        %v568 = vadd.f32 0.0, %v567
        %v569 = vpop.f32.mrb[0].mxu0
        %v570 = vadd.f32 0.0, %v569
        %571 = vmatprep.mubr.f32.mxu0 0.0
        %572 = vmatmul.mubr.f32.gmra.mrb[0].mxu0 %v322
        %v573 = vpop.f32.mrb[0].mxu0
        %v574 = vadd.f32 0.0, %v573
        %v575 = vpop.f32.mrb[0].mxu0
        %v576 = vadd.f32 0.0, %v575
        %577 = vmatprep.mubr.f32.mxu0 0.0
        %578 = vmatmul.mubr.f32.gmra.mrb[0].mxu0 %v325
        %v579 = vpop.f32.mrb[0].mxu0
        %v580 = vadd.f32 0.0, %v579
        %v581 = vpop.f32.mrb[0].mxu0
        %v582 = vadd.f32 0.0, %v581
        %583 = vdwg.mxu0
        %616 = vrot.lane.b32.xlu0 %v394, 64
        %v617 = vpop.permute.xlu0 %616
        %618 = vrot.lane.b32.xlu0 %v400, 64
        %v619 = vpop.permute.xlu0 %618
        %620 = vrot.lane.b32.xlu0 %v406, 64
        %v621 = vpop.permute.xlu0 %620
        %622 = vrot.lane.b32.xlu0 %v412, 64
        %v623 = vpop.permute.xlu0 %622
        %624 = vrot.lane.b32.xlu0 %v418, 64
        %v625 = vpop.permute.xlu0 %624
        %626 = vrot.lane.b32.xlu0 %v424, 64
        %v627 = vpop.permute.xlu0 %626
        %628 = vrot.lane.b32.xlu0 %v430, 64
        %v629 = vpop.permute.xlu0 %628
        %630 = vrot.lane.b32.xlu0 %v436, 64
        %v631 = vpop.permute.xlu0 %630
        %632 = vrot.lane.b32.xlu0 %v442, 64
        %v633 = vpop.permute.xlu0 %632
        %634 = vrot.lane.b32.xlu0 %v448, 64
        %v635 = vpop.permute.xlu0 %634
        %636 = vrot.lane.b32.xlu0 %v454, 64
        %v637 = vpop.permute.xlu0 %636
        %638 = vrot.lane.b32.xlu0 %v460, 64
        %v639 = vpop.permute.xlu0 %638
        %640 = vrot.lane.b32.xlu0 %v466, 64
        %v641 = vpop.permute.xlu0 %640
        %642 = vrot.lane.b32.xlu0 %v472, 64
        %v643 = vpop.permute.xlu0 %642
        %644 = vrot.lane.b32.xlu0 %v478, 64
        %v645 = vpop.permute.xlu0 %644
        %646 = vrot.lane.b32.xlu0 %v484, 64
        %v647 = vpop.permute.xlu0 %646
        %648 = vrot.lane.b32.xlu0 %v490, 64
        %v649 = vpop.permute.xlu0 %648
        %650 = vrot.lane.b32.xlu0 %v496, 64
        %v651 = vpop.permute.xlu0 %650
        %652 = vrot.lane.b32.xlu0 %v502, 64
        %v653 = vpop.permute.xlu0 %652
        %654 = vrot.lane.b32.xlu0 %v508, 64
        %v655 = vpop.permute.xlu0 %654
        %656 = vrot.lane.b32.xlu0 %v514, 64
        %v657 = vpop.permute.xlu0 %656
        %658 = vrot.lane.b32.xlu0 %v520, 64
        %v659 = vpop.permute.xlu0 %658
        %660 = vrot.lane.b32.xlu0 %v526, 64
        %v661 = vpop.permute.xlu0 %660
        %662 = vrot.lane.b32.xlu0 %v532, 64
        %v663 = vpop.permute.xlu0 %662
        %664 = vrot.lane.b32.xlu0 %v538, 64
        %v665 = vpop.permute.xlu0 %664
        %666 = vrot.lane.b32.xlu0 %v544, 64
        %v667 = vpop.permute.xlu0 %666
        %668 = vrot.lane.b32.xlu0 %v550, 64
        %v669 = vpop.permute.xlu0 %668
        %670 = vrot.lane.b32.xlu0 %v556, 64
        %v671 = vpop.permute.xlu0 %670
        %672 = vrot.lane.b32.xlu0 %v562, 64
        %v673 = vpop.permute.xlu0 %672
        %674 = vrot.lane.b32.xlu0 %v568, 64
        %v675 = vpop.permute.xlu0 %674
        %676 = vrot.lane.b32.xlu0 %v574, 64
        %v677 = vpop.permute.xlu0 %676
        %678 = vrot.lane.b32.xlu0 %v580, 64
        %v679 = vpop.permute.xlu0 %678
        %v712 = vld [vmem:[%s2] sm:$0xff]
        %v713 = vld [vmem:[%s2 + $0x8] sm:$0x1]
        %v714 = vld [vmem:[%s3] sm:$0xff]
        %v715 = vld [vmem:[%s3 + $0x8] sm:$0xff]
        %v716 = vld [vmem:[%s3 + $0x10] sm:$0xff]
        %v717 = vld [vmem:[%s3 + $0x18] sm:$0xff]
        %v718 = vld [vmem:[%s3 + $0x20] sm:$0xff]
        %v719 = vld [vmem:[%s3 + $0x28] sm:$0xff]
        %v720 = vld [vmem:[%s3 + $0x30] sm:$0xff]
        %v721 = vld [vmem:[%s3 + $0x38] sm:$0xff]
        %v722 = vld [vmem:[%s3 + $0x40] sm:$0xff]
        %v723 = vld [vmem:[%s3 + $0x48] sm:$0xff]
        %v724 = vld [vmem:[%s3 + $0x50] sm:$0xff]
        %v725 = vld [vmem:[%s3 + $0x58] sm:$0xff]
        %v726 = vld [vmem:[%s3 + $0x60] sm:$0xff]
        %v727 = vld [vmem:[%s3 + $0x68] sm:$0xff]
        %v728 = vld [vmem:[%s3 + $0x70] sm:$0xff]
        %v729 = vld [vmem:[%s3 + $0x78] sm:$0xff]
        %v730 = vld [vmem:[%s3 + $0x80] sm:$0xff]
        %v731 = vld [vmem:[%s3 + $0x88] sm:$0xff]
        %v732 = vld [vmem:[%s3 + $0x90] sm:$0xff]
        %v733 = vld [vmem:[%s3 + $0x98] sm:$0xff]
        %v734 = vld [vmem:[%s3 + $0xa0] sm:$0xff]
        %v735 = vld [vmem:[%s3 + $0xa8] sm:$0xff]
        %v736 = vld [vmem:[%s3 + $0xb0] sm:$0xff]
        %v737 = vld [vmem:[%s3 + $0xb8] sm:$0xff]
        %v738 = vld [vmem:[%s3 + $0xc0] sm:$0xff]
        %v739 = vld [vmem:[%s3 + $0xc8] sm:$0xff]
        %v740 = vld [vmem:[%s3 + $0xd0] sm:$0xff]
        %v741 = vld [vmem:[%s3 + $0xd8] sm:$0xff]
        %v742 = vld [vmem:[%s3 + $0xe0] sm:$0xff]
        %v743 = vld [vmem:[%s3 + $0xe8] sm:$0xff]
        %v744 = vld [vmem:[%s3 + $0xf0] sm:$0xff]
        %v745 = vld [vmem:[%s3 + $0xf8] sm:$0xff]
        %747 = vset.pattern.permute.xlu0 0
        %748 = vperm.xlu0 %747, %v714
        %v749 = vpop.permute.xlu0 %748
        %751 = vset.pattern.permute.xlu0 0
        %752 = vperm.xlu0 %751, %v715
        %v753 = vpop.permute.xlu0 %752
        %755 = vset.pattern.permute.xlu0 0
        %756 = vperm.xlu0 %755, %v716
        %v757 = vpop.permute.xlu0 %756
        %759 = vset.pattern.permute.xlu0 0
        %760 = vperm.xlu0 %759, %v717
        %v761 = vpop.permute.xlu0 %760
        %763 = vset.pattern.permute.xlu0 0
        %764 = vperm.xlu0 %763, %v718
        %v765 = vpop.permute.xlu0 %764
        %767 = vset.pattern.permute.xlu0 0
        %768 = vperm.xlu0 %767, %v719
        %v769 = vpop.permute.xlu0 %768
        %771 = vset.pattern.permute.xlu0 0
        %772 = vperm.xlu0 %771, %v720
        %v773 = vpop.permute.xlu0 %772
        %775 = vset.pattern.permute.xlu0 0
        %776 = vperm.xlu0 %775, %v721
        %v777 = vpop.permute.xlu0 %776
        %779 = vset.pattern.permute.xlu0 0
        %780 = vperm.xlu0 %779, %v722
        %v781 = vpop.permute.xlu0 %780
        %783 = vset.pattern.permute.xlu0 0
        %784 = vperm.xlu0 %783, %v723
        %v785 = vpop.permute.xlu0 %784
        %787 = vset.pattern.permute.xlu0 0
        %788 = vperm.xlu0 %787, %v724
        %v789 = vpop.permute.xlu0 %788
        %791 = vset.pattern.permute.xlu0 0
        %792 = vperm.xlu0 %791, %v725
        %v793 = vpop.permute.xlu0 %792
        %795 = vset.pattern.permute.xlu0 0
        %796 = vperm.xlu0 %795, %v726
        %v797 = vpop.permute.xlu0 %796
        %799 = vset.pattern.permute.xlu0 0
        %800 = vperm.xlu0 %799, %v727
        %v801 = vpop.permute.xlu0 %800
        %803 = vset.pattern.permute.xlu0 0
        %804 = vperm.xlu0 %803, %v728
        %v805 = vpop.permute.xlu0 %804
        %807 = vset.pattern.permute.xlu0 0
        %808 = vperm.xlu0 %807, %v729
        %v809 = vpop.permute.xlu0 %808
        %811 = vset.pattern.permute.xlu0 0
        %812 = vperm.xlu0 %811, %v730
        %v813 = vpop.permute.xlu0 %812
        %815 = vset.pattern.permute.xlu0 0
        %816 = vperm.xlu0 %815, %v731
        %v817 = vpop.permute.xlu0 %816
        %819 = vset.pattern.permute.xlu0 0
        %820 = vperm.xlu0 %819, %v732
        %v821 = vpop.permute.xlu0 %820
        %823 = vset.pattern.permute.xlu0 0
        %824 = vperm.xlu0 %823, %v733
        %v825 = vpop.permute.xlu0 %824
        %827 = vset.pattern.permute.xlu0 0
        %828 = vperm.xlu0 %827, %v734
        %v829 = vpop.permute.xlu0 %828
        %831 = vset.pattern.permute.xlu0 0
        %832 = vperm.xlu0 %831, %v735
        %v833 = vpop.permute.xlu0 %832
        %835 = vset.pattern.permute.xlu0 0
        %836 = vperm.xlu0 %835, %v736
        %v837 = vpop.permute.xlu0 %836
        %839 = vset.pattern.permute.xlu0 0
        %840 = vperm.xlu0 %839, %v737
        %v841 = vpop.permute.xlu0 %840
        %843 = vset.pattern.permute.xlu0 0
        %844 = vperm.xlu0 %843, %v738
        %v845 = vpop.permute.xlu0 %844
        %847 = vset.pattern.permute.xlu0 0
        %848 = vperm.xlu0 %847, %v739
        %v849 = vpop.permute.xlu0 %848
        %851 = vset.pattern.permute.xlu0 0
        %852 = vperm.xlu0 %851, %v740
        %v853 = vpop.permute.xlu0 %852
        %855 = vset.pattern.permute.xlu0 0
        %856 = vperm.xlu0 %855, %v741
        %v857 = vpop.permute.xlu0 %856
        %859 = vset.pattern.permute.xlu0 0
        %860 = vperm.xlu0 %859, %v742
        %v861 = vpop.permute.xlu0 %860
        %863 = vset.pattern.permute.xlu0 0
        %864 = vperm.xlu0 %863, %v743
        %v865 = vpop.permute.xlu0 %864
        %867 = vset.pattern.permute.xlu0 0
        %868 = vperm.xlu0 %867, %v744
        %v869 = vpop.permute.xlu0 %868
        %871 = vset.pattern.permute.xlu0 0
        %872 = vperm.xlu0 %871, %v745
        %v873 = vpop.permute.xlu0 %872
        %vm874 = vcmask 1046528
        %v875 = vrot.slane %v749, 1
        %v876 = vrot.slane %v753, 1
        %v877 = vsel %vm874, %v875, %v876
        %v878 = vrot.slane %v757, 1
        %v879 = vsel %vm874, %v876, %v878
        %v880 = vrot.slane %v761, 1
        %v881 = vsel %vm874, %v878, %v880
        %v882 = vrot.slane %v765, 1
        %v883 = vsel %vm874, %v880, %v882
        %v884 = vrot.slane %v769, 1
        %v885 = vsel %vm874, %v882, %v884
        %v886 = vrot.slane %v773, 1
        %v887 = vsel %vm874, %v884, %v886
        %v888 = vrot.slane %v777, 1
        %v889 = vsel %vm874, %v886, %v888
        %v890 = vrot.slane %v781, 1
        %v891 = vsel %vm874, %v888, %v890
        %v892 = vrot.slane %v785, 1
        %v893 = vsel %vm874, %v890, %v892
        %v894 = vrot.slane %v789, 1
        %v895 = vsel %vm874, %v892, %v894
        %v896 = vrot.slane %v793, 1
        %v897 = vsel %vm874, %v894, %v896
        %v898 = vrot.slane %v797, 1
        %v899 = vsel %vm874, %v896, %v898
        %v900 = vrot.slane %v801, 1
        %v901 = vsel %vm874, %v898, %v900
        %v902 = vrot.slane %v805, 1
        %v903 = vsel %vm874, %v900, %v902
        %v904 = vrot.slane %v809, 1
        %v905 = vsel %vm874, %v902, %v904
        %v906 = vrot.slane %v813, 1
        %v907 = vsel %vm874, %v904, %v906
        %v908 = vrot.slane %v817, 1
        %v909 = vsel %vm874, %v906, %v908
        %v910 = vrot.slane %v821, 1
        %v911 = vsel %vm874, %v908, %v910
        %v912 = vrot.slane %v825, 1
        %v913 = vsel %vm874, %v910, %v912
        %v914 = vrot.slane %v829, 1
        %v915 = vsel %vm874, %v912, %v914
        %v916 = vrot.slane %v833, 1
        %v917 = vsel %vm874, %v914, %v916
        %v918 = vrot.slane %v837, 1
        %v919 = vsel %vm874, %v916, %v918
        %v920 = vrot.slane %v841, 1
        %v921 = vsel %vm874, %v918, %v920
        %v922 = vrot.slane %v845, 1
        %v923 = vsel %vm874, %v920, %v922
        %v924 = vrot.slane %v849, 1
        %v925 = vsel %vm874, %v922, %v924
        %v926 = vrot.slane %v853, 1
        %v927 = vsel %vm874, %v924, %v926
        %v928 = vrot.slane %v857, 1
        %v929 = vsel %vm874, %v926, %v928
        %v930 = vrot.slane %v861, 1
        %v931 = vsel %vm874, %v928, %v930
        %v932 = vrot.slane %v865, 1
        %v933 = vsel %vm874, %v930, %v932
        %v934 = vrot.slane %v869, 1
        %v935 = vsel %vm874, %v932, %v934
        %v936 = vrot.slane %v873, 1
        %v937 = vsel %vm874, %v934, %v936
        %v971 = vmul.f32 %v875, 0.0
        %v972 = vmul.f32 %v877, 0.0
        %v973 = vmul.f32 %v879, 0.0
        %v974 = vmul.f32 %v617, %v881
        %v975 = vmul.f32 %v619, %v883
        %v976 = vmul.f32 %v621, %v885
        %v977 = vmul.f32 %v623, %v887
        %v978 = vmul.f32 %v625, %v889
        %v979 = vmul.f32 %v627, %v891
        %v980 = vmul.f32 %v629, %v893
        %v981 = vmul.f32 %v631, %v895
        %v982 = vmul.f32 %v633, %v897
        %v983 = vmul.f32 %v635, %v899
        %v984 = vmul.f32 %v637, %v901
        %v985 = vmul.f32 %v639, %v903
        %v986 = vmul.f32 %v641, %v905
        %v987 = vmul.f32 %v643, %v907
        %v988 = vmul.f32 %v645, %v909
        %v989 = vmul.f32 %v647, %v911
        %v990 = vmul.f32 %v649, %v913
        %v991 = vmul.f32 %v651, %v915
        %v992 = vmul.f32 %v653, %v917
        %v993 = vmul.f32 %v655, %v919
        %v994 = vmul.f32 %v657, %v921
        %v995 = vmul.f32 %v659, %v923
        %v996 = vmul.f32 %v661, %v925
        %v997 = vmul.f32 %v663, %v927
        %v998 = vmul.f32 %v665, %v929
        %v999 = vmul.f32 %v667, %v931
        %v1000 = vmul.f32 %v669, %v933
        %v1001 = vmul.f32 %v671, %v935
        %v1002 = vmul.f32 %v673, %v937
        %v1003 = vmul.f32 %v675, %v936
        %v1004 = vlaneseq
        %v1005 = vshrl.u32 %v1004, 7
        %v1006 = vsub.s32 0, %v1005
        %v1007 = vrot.slane %v712, %v1006
        %v1008 = vadd.f32 %v971, %v1007
        %v1009 = vadd.f32 %v972, %v1007
        %v1010 = vadd.f32 %v973, %v1007
        %v1011 = vadd.f32 %v974, %v1007
        %v1012 = vadd.f32 %v975, %v1007
        %v1013 = vadd.f32 %v976, %v1007
        %v1014 = vadd.f32 %v977, %v1007
        %v1015 = vadd.f32 %v978, %v1007
        %v1016 = vadd.f32 %v979, %v1007
        %v1017 = vadd.f32 %v980, %v1007
        %v1018 = vadd.f32 %v981, %v1007
        %v1019 = vadd.f32 %v982, %v1007
        %v1020 = vadd.f32 %v983, %v1007
        %v1021 = vadd.f32 %v984, %v1007
        %v1022 = vadd.f32 %v985, %v1007
        %v1023 = vadd.f32 %v986, %v1007
        %v1024 = vadd.f32 %v987, %v1007
        %v1025 = vadd.f32 %v988, %v1007
        %v1026 = vadd.f32 %v989, %v1007
        %v1027 = vadd.f32 %v990, %v1007
        %v1028 = vadd.f32 %v991, %v1007
        %v1029 = vadd.f32 %v992, %v1007
        %v1030 = vadd.f32 %v993, %v1007
        %v1031 = vadd.f32 %v994, %v1007
        %v1032 = vadd.f32 %v995, %v1007
        %v1033 = vadd.f32 %v996, %v1007
        %v1034 = vadd.f32 %v997, %v1007
        %v1035 = vadd.f32 %v998, %v1007
        %v1036 = vadd.f32 %v999, %v1007
        %v1037 = vadd.f32 %v1000, %v1007
        %v1038 = vadd.f32 %v1001, %v1007
        %v1039 = vadd.f32 %v1002, %v1007
        %v1040 = vadd.f32 %v1003, %v1007
        %v1041 = vmul.f32 %v396, %v881
        %v1042 = vmul.f32 %v402, %v883
        %v1043 = vmul.f32 %v408, %v885
        %v1044 = vmul.f32 %v414, %v887
        %v1045 = vmul.f32 %v420, %v889
        %v1046 = vmul.f32 %v426, %v891
        %v1047 = vmul.f32 %v432, %v893
        %v1048 = vmul.f32 %v438, %v895
        %v1049 = vmul.f32 %v444, %v897
        %v1050 = vmul.f32 %v450, %v899
        %v1051 = vmul.f32 %v456, %v901
        %v1052 = vmul.f32 %v462, %v903
        %v1053 = vmul.f32 %v468, %v905
        %v1054 = vmul.f32 %v474, %v907
        %v1055 = vmul.f32 %v480, %v909
        %v1056 = vmul.f32 %v486, %v911
        %v1057 = vmul.f32 %v492, %v913
        %v1058 = vmul.f32 %v498, %v915
        %v1059 = vmul.f32 %v504, %v917
        %v1060 = vmul.f32 %v510, %v919
        %v1061 = vmul.f32 %v516, %v921
        %v1062 = vmul.f32 %v522, %v923
        %v1063 = vmul.f32 %v528, %v925
        %v1064 = vmul.f32 %v534, %v927
        %v1065 = vmul.f32 %v540, %v929
        %v1066 = vmul.f32 %v546, %v931
        %v1067 = vmul.f32 %v552, %v933
        %v1068 = vmul.f32 %v558, %v935
        %v1069 = vmul.f32 %v564, %v937
        %v1070 = vmul.f32 %v570, %v936
        %vm1104 = vcmask 1040384
        %v1105 = vrot.slane %v1008, 7
        %v1106 = vrot.slane %v1009, 7
        %v1107 = vsel %vm1104, %v1105, %v1106
        %v1108 = vrot.slane %v1010, 7
        %v1109 = vsel %vm1104, %v1106, %v1108
        %v1110 = vrot.slane %v1011, 7
        %v1111 = vsel %vm1104, %v1108, %v1110
        %v1112 = vrot.slane %v1012, 7
        %v1113 = vsel %vm1104, %v1110, %v1112
        %v1114 = vrot.slane %v1013, 7
        %v1115 = vsel %vm1104, %v1112, %v1114
        %v1116 = vrot.slane %v1014, 7
        %v1117 = vsel %vm1104, %v1114, %v1116
        %v1118 = vrot.slane %v1015, 7
        %v1119 = vsel %vm1104, %v1116, %v1118
        %v1120 = vrot.slane %v1016, 7
        %v1121 = vsel %vm1104, %v1118, %v1120
        %v1122 = vrot.slane %v1017, 7
        %v1123 = vsel %vm1104, %v1120, %v1122
        %v1124 = vrot.slane %v1018, 7
        %v1125 = vsel %vm1104, %v1122, %v1124
        %v1126 = vrot.slane %v1019, 7
        %v1127 = vsel %vm1104, %v1124, %v1126
        %v1128 = vrot.slane %v1020, 7
        %v1129 = vsel %vm1104, %v1126, %v1128
        %v1130 = vrot.slane %v1021, 7
        %v1131 = vsel %vm1104, %v1128, %v1130
        %v1132 = vrot.slane %v1022, 7
        %v1133 = vsel %vm1104, %v1130, %v1132
        %v1134 = vrot.slane %v1023, 7
        %v1135 = vsel %vm1104, %v1132, %v1134
        %v1136 = vrot.slane %v1024, 7
        %v1137 = vsel %vm1104, %v1134, %v1136
        %v1138 = vrot.slane %v1025, 7
        %v1139 = vsel %vm1104, %v1136, %v1138
        %v1140 = vrot.slane %v1026, 7
        %v1141 = vsel %vm1104, %v1138, %v1140
        %v1142 = vrot.slane %v1027, 7
        %v1143 = vsel %vm1104, %v1140, %v1142
        %v1144 = vrot.slane %v1028, 7
        %v1145 = vsel %vm1104, %v1142, %v1144
        %v1146 = vrot.slane %v1029, 7
        %v1147 = vsel %vm1104, %v1144, %v1146
        %v1148 = vrot.slane %v1030, 7
        %v1149 = vsel %vm1104, %v1146, %v1148
        %v1150 = vrot.slane %v1031, 7
        %v1151 = vsel %vm1104, %v1148, %v1150
        %v1152 = vrot.slane %v1032, 7
        %v1153 = vsel %vm1104, %v1150, %v1152
        %v1154 = vrot.slane %v1033, 7
        %v1155 = vsel %vm1104, %v1152, %v1154
        %v1156 = vrot.slane %v1034, 7
        %v1157 = vsel %vm1104, %v1154, %v1156
        %v1158 = vrot.slane %v1035, 7
        %v1159 = vsel %vm1104, %v1156, %v1158
        %v1160 = vrot.slane %v1036, 7
        %v1161 = vsel %vm1104, %v1158, %v1160
        %v1162 = vrot.slane %v1037, 7
        %v1163 = vsel %vm1104, %v1160, %v1162
        %v1164 = vrot.slane %v1038, 7
        %v1165 = vsel %vm1104, %v1162, %v1164
        %v1166 = vrot.slane %v1039, 7
        %v1167 = vsel %vm1104, %v1164, %v1166
        %v1168 = vrot.slane %v1040, 7
        %v1169 = vsel %vm1104, %v1166, %v1168
        %v1202 = vmul.f32 %v394, %v1107
        %v1203 = vmul.f32 %v400, %v1109
        %v1204 = vmul.f32 %v406, %v1111
        %v1205 = vmul.f32 %v412, %v1113
        %v1206 = vmul.f32 %v418, %v1115
        %v1207 = vmul.f32 %v424, %v1117
        %v1208 = vmul.f32 %v430, %v1119
        %v1209 = vmul.f32 %v436, %v1121
        %v1210 = vmul.f32 %v442, %v1123
        %v1211 = vmul.f32 %v448, %v1125
        %v1212 = vmul.f32 %v454, %v1127
        %v1213 = vmul.f32 %v460, %v1129
        %v1214 = vmul.f32 %v466, %v1131
        %v1215 = vmul.f32 %v472, %v1133
        %v1216 = vmul.f32 %v478, %v1135
        %v1217 = vmul.f32 %v484, %v1137
        %v1218 = vmul.f32 %v490, %v1139
        %v1219 = vmul.f32 %v496, %v1141
        %v1220 = vmul.f32 %v502, %v1143
        %v1221 = vmul.f32 %v508, %v1145
        %v1222 = vmul.f32 %v514, %v1147
        %v1223 = vmul.f32 %v520, %v1149
        %v1224 = vmul.f32 %v526, %v1151
        %v1225 = vmul.f32 %v532, %v1153
        %v1226 = vmul.f32 %v538, %v1155
        %v1227 = vmul.f32 %v544, %v1157
        %v1228 = vmul.f32 %v550, %v1159
        %v1229 = vmul.f32 %v556, %v1161
        %v1230 = vmul.f32 %v562, %v1163
        %v1231 = vmul.f32 %v568, %v1165
        %v1232 = vmul.f32 %v574, %v1167
        %v1233 = vmul.f32 %v580, %v1169
        %1234 = vset.pattern.permute.xlu0 1
        %1235 = vperm.xlu0 %1234, %v714
        %v1236 = vpop.permute.xlu0 %1235
        %1238 = vset.pattern.permute.xlu0 1
        %1239 = vperm.xlu0 %1238, %v715
        %v1240 = vpop.permute.xlu0 %1239
        %1242 = vset.pattern.permute.xlu0 1
        %1243 = vperm.xlu0 %1242, %v716
        %v1244 = vpop.permute.xlu0 %1243
        %1246 = vset.pattern.permute.xlu0 1
        %1247 = vperm.xlu0 %1246, %v717
        %v1248 = vpop.permute.xlu0 %1247
        %1250 = vset.pattern.permute.xlu0 1
        %1251 = vperm.xlu0 %1250, %v718
        %v1252 = vpop.permute.xlu0 %1251
        %1254 = vset.pattern.permute.xlu0 1
        %1255 = vperm.xlu0 %1254, %v719
        %v1256 = vpop.permute.xlu0 %1255
        %1258 = vset.pattern.permute.xlu0 1
        %1259 = vperm.xlu0 %1258, %v720
        %v1260 = vpop.permute.xlu0 %1259
        %1262 = vset.pattern.permute.xlu0 1
        %1263 = vperm.xlu0 %1262, %v721
        %v1264 = vpop.permute.xlu0 %1263
        %1266 = vset.pattern.permute.xlu0 1
        %1267 = vperm.xlu0 %1266, %v722
        %v1268 = vpop.permute.xlu0 %1267
        %1270 = vset.pattern.permute.xlu0 1
        %1271 = vperm.xlu0 %1270, %v723
        %v1272 = vpop.permute.xlu0 %1271
        %1274 = vset.pattern.permute.xlu0 1
        %1275 = vperm.xlu0 %1274, %v724
        %v1276 = vpop.permute.xlu0 %1275
        %1278 = vset.pattern.permute.xlu0 1
        %1279 = vperm.xlu0 %1278, %v725
        %v1280 = vpop.permute.xlu0 %1279
        %1282 = vset.pattern.permute.xlu0 1
        %1283 = vperm.xlu0 %1282, %v726
        %v1284 = vpop.permute.xlu0 %1283
        %1286 = vset.pattern.permute.xlu0 1
        %1287 = vperm.xlu0 %1286, %v727
        %v1288 = vpop.permute.xlu0 %1287
        %1290 = vset.pattern.permute.xlu0 1
        %1291 = vperm.xlu0 %1290, %v728
        %v1292 = vpop.permute.xlu0 %1291
        %1294 = vset.pattern.permute.xlu0 1
        %1295 = vperm.xlu0 %1294, %v729
        %v1296 = vpop.permute.xlu0 %1295
        %1298 = vset.pattern.permute.xlu0 1
        %1299 = vperm.xlu0 %1298, %v730
        %v1300 = vpop.permute.xlu0 %1299
        %1302 = vset.pattern.permute.xlu0 1
        %1303 = vperm.xlu0 %1302, %v731
        %v1304 = vpop.permute.xlu0 %1303
        %1306 = vset.pattern.permute.xlu0 1
        %1307 = vperm.xlu0 %1306, %v732
        %v1308 = vpop.permute.xlu0 %1307
        %1310 = vset.pattern.permute.xlu0 1
        %1311 = vperm.xlu0 %1310, %v733
        %v1312 = vpop.permute.xlu0 %1311
        %1314 = vset.pattern.permute.xlu0 1
        %1315 = vperm.xlu0 %1314, %v734
        %v1316 = vpop.permute.xlu0 %1315
        %1318 = vset.pattern.permute.xlu0 1
        %1319 = vperm.xlu0 %1318, %v735
        %v1320 = vpop.permute.xlu0 %1319
        %1322 = vset.pattern.permute.xlu0 1
        %1323 = vperm.xlu0 %1322, %v736
        %v1324 = vpop.permute.xlu0 %1323
        %1326 = vset.pattern.permute.xlu0 1
        %1327 = vperm.xlu0 %1326, %v737
        %v1328 = vpop.permute.xlu0 %1327
        %1330 = vset.pattern.permute.xlu0 1
        %1331 = vperm.xlu0 %1330, %v738
        %v1332 = vpop.permute.xlu0 %1331
        %1334 = vset.pattern.permute.xlu0 1
        %1335 = vperm.xlu0 %1334, %v739
        %v1336 = vpop.permute.xlu0 %1335
        %1338 = vset.pattern.permute.xlu0 1
        %1339 = vperm.xlu0 %1338, %v740
        %v1340 = vpop.permute.xlu0 %1339
        %1342 = vset.pattern.permute.xlu0 1
        %1343 = vperm.xlu0 %1342, %v741
        %v1344 = vpop.permute.xlu0 %1343
        %1346 = vset.pattern.permute.xlu0 1
        %1347 = vperm.xlu0 %1346, %v742
        %v1348 = vpop.permute.xlu0 %1347
        %1350 = vset.pattern.permute.xlu0 1
        %1351 = vperm.xlu0 %1350, %v743
        %v1352 = vpop.permute.xlu0 %1351
        %1354 = vset.pattern.permute.xlu0 1
        %1355 = vperm.xlu0 %1354, %v744
        %v1356 = vpop.permute.xlu0 %1355
        %1358 = vset.pattern.permute.xlu0 1
        %1359 = vperm.xlu0 %1358, %v745
        %v1360 = vpop.permute.xlu0 %1359
        %v1362 = vmul.f32 %v1236, 0.0
        %v1363 = vmul.f32 %v1240, 0.0
        %v1364 = vmul.f32 %v617, %v1244
        %v1365 = vmul.f32 %v619, %v1248
        %v1366 = vmul.f32 %v621, %v1252
        %v1367 = vmul.f32 %v623, %v1256
        %v1368 = vmul.f32 %v625, %v1260
        %v1369 = vmul.f32 %v627, %v1264
        %v1370 = vmul.f32 %v629, %v1268
        %v1371 = vmul.f32 %v631, %v1272
        %v1372 = vmul.f32 %v633, %v1276
        %v1373 = vmul.f32 %v635, %v1280
        %v1374 = vmul.f32 %v637, %v1284
        %v1375 = vmul.f32 %v639, %v1288
        %v1376 = vmul.f32 %v641, %v1292
        %v1377 = vmul.f32 %v643, %v1296
        %v1378 = vmul.f32 %v645, %v1300
        %v1379 = vmul.f32 %v647, %v1304
        %v1380 = vmul.f32 %v649, %v1308
        %v1381 = vmul.f32 %v651, %v1312
        %v1382 = vmul.f32 %v653, %v1316
        %v1383 = vmul.f32 %v655, %v1320
        %v1384 = vmul.f32 %v657, %v1324
        %v1385 = vmul.f32 %v659, %v1328
        %v1386 = vmul.f32 %v661, %v1332
        %v1387 = vmul.f32 %v663, %v1336
        %v1388 = vmul.f32 %v665, %v1340
        %v1389 = vmul.f32 %v667, %v1344
        %v1390 = vmul.f32 %v669, %v1348
        %v1391 = vmul.f32 %v671, %v1352
        %v1392 = vmul.f32 %v673, %v1356
        %v1393 = vmul.f32 %v675, %v1360
        %v1394 = vlaneseq
        %v1395 = vshrl.u32 %v1394, 7
        %v1396 = vsub.s32 1, %v1395
        %v1397 = vrot.slane %v712, %v1396
        %v1398 = vadd.f32 %v1362, %v1397
        %v1399 = vadd.f32 %v1363, %v1397
        %v1400 = vadd.f32 %v1364, %v1397
        %v1401 = vadd.f32 %v1365, %v1397
        %v1402 = vadd.f32 %v1366, %v1397
        %v1403 = vadd.f32 %v1367, %v1397
        %v1404 = vadd.f32 %v1368, %v1397
        %v1405 = vadd.f32 %v1369, %v1397
        %v1406 = vadd.f32 %v1370, %v1397
        %v1407 = vadd.f32 %v1371, %v1397
        %v1408 = vadd.f32 %v1372, %v1397
        %v1409 = vadd.f32 %v1373, %v1397
        %v1410 = vadd.f32 %v1374, %v1397
        %v1411 = vadd.f32 %v1375, %v1397
        %v1412 = vadd.f32 %v1376, %v1397
        %v1413 = vadd.f32 %v1377, %v1397
        %v1414 = vadd.f32 %v1378, %v1397
        %v1415 = vadd.f32 %v1379, %v1397
        %v1416 = vadd.f32 %v1380, %v1397
        %v1417 = vadd.f32 %v1381, %v1397
        %v1418 = vadd.f32 %v1382, %v1397
        %v1419 = vadd.f32 %v1383, %v1397
        %v1420 = vadd.f32 %v1384, %v1397
        %v1421 = vadd.f32 %v1385, %v1397
        %v1422 = vadd.f32 %v1386, %v1397
        %v1423 = vadd.f32 %v1387, %v1397
        %v1424 = vadd.f32 %v1388, %v1397
        %v1425 = vadd.f32 %v1389, %v1397
        %v1426 = vadd.f32 %v1390, %v1397
        %v1427 = vadd.f32 %v1391, %v1397
        %v1428 = vadd.f32 %v1392, %v1397
        %v1429 = vadd.f32 %v1393, %v1397
        %v1430 = vmul.f32 %v396, %v1244
        %v1431 = vmul.f32 %v402, %v1248
        %v1432 = vmul.f32 %v408, %v1252
        %v1433 = vmul.f32 %v414, %v1256
        %v1434 = vmul.f32 %v420, %v1260
        %v1435 = vmul.f32 %v426, %v1264
        %v1436 = vmul.f32 %v432, %v1268
        %v1437 = vmul.f32 %v438, %v1272
        %v1438 = vmul.f32 %v444, %v1276
        %v1439 = vmul.f32 %v450, %v1280
        %v1440 = vmul.f32 %v456, %v1284
        %v1441 = vmul.f32 %v462, %v1288
        %v1442 = vmul.f32 %v468, %v1292
        %v1443 = vmul.f32 %v474, %v1296
        %v1444 = vmul.f32 %v480, %v1300
        %v1445 = vmul.f32 %v486, %v1304
        %v1446 = vmul.f32 %v492, %v1308
        %v1447 = vmul.f32 %v498, %v1312
        %v1448 = vmul.f32 %v504, %v1316
        %v1449 = vmul.f32 %v510, %v1320
        %v1450 = vmul.f32 %v516, %v1324
        %v1451 = vmul.f32 %v522, %v1328
        %v1452 = vmul.f32 %v528, %v1332
        %v1453 = vmul.f32 %v534, %v1336
        %v1454 = vmul.f32 %v540, %v1340
        %v1455 = vmul.f32 %v546, %v1344
        %v1456 = vmul.f32 %v552, %v1348
        %v1457 = vmul.f32 %v558, %v1352
        %v1458 = vmul.f32 %v564, %v1356
        %v1459 = vmul.f32 %v570, %v1360
        %v1460 = vmul.f32 %v394, %v1398
        %v1461 = vmul.f32 %v400, %v1399
        %v1462 = vmul.f32 %v406, %v1400
        %v1463 = vmul.f32 %v412, %v1401
        %v1464 = vmul.f32 %v418, %v1402
        %v1465 = vmul.f32 %v424, %v1403
        %v1466 = vmul.f32 %v430, %v1404
        %v1467 = vmul.f32 %v436, %v1405
        %v1468 = vmul.f32 %v442, %v1406
        %v1469 = vmul.f32 %v448, %v1407
        %v1470 = vmul.f32 %v454, %v1408
        %v1471 = vmul.f32 %v460, %v1409
        %v1472 = vmul.f32 %v466, %v1410
        %v1473 = vmul.f32 %v472, %v1411
        %v1474 = vmul.f32 %v478, %v1412
        %v1475 = vmul.f32 %v484, %v1413
        %v1476 = vmul.f32 %v490, %v1414
        %v1477 = vmul.f32 %v496, %v1415
        %v1478 = vmul.f32 %v502, %v1416
        %v1479 = vmul.f32 %v508, %v1417
        %v1480 = vmul.f32 %v514, %v1418
        %v1481 = vmul.f32 %v520, %v1419
        %v1482 = vmul.f32 %v526, %v1420
        %v1483 = vmul.f32 %v532, %v1421
        %v1484 = vmul.f32 %v538, %v1422
        %v1485 = vmul.f32 %v544, %v1423
        %v1486 = vmul.f32 %v550, %v1424
        %v1487 = vmul.f32 %v556, %v1425
        %v1488 = vmul.f32 %v562, %v1426
        %v1489 = vmul.f32 %v568, %v1427
        %v1490 = vmul.f32 %v574, %v1428
        %v1491 = vmul.f32 %v580, %v1429
        %v1492 = vmax.f32 %v1202, %v1460
        %v1493 = vmax.f32 %v1203, %v1461
        %v1494 = vmax.f32 %v1204, %v1462
        %v1495 = vmax.f32 %v1205, %v1463
        %v1496 = vmax.f32 %v1206, %v1464
        %v1497 = vmax.f32 %v1207, %v1465
        %v1498 = vmax.f32 %v1208, %v1466
        %v1499 = vmax.f32 %v1209, %v1467
        %v1500 = vmax.f32 %v1210, %v1468
        %v1501 = vmax.f32 %v1211, %v1469
        %v1502 = vmax.f32 %v1212, %v1470
        %v1503 = vmax.f32 %v1213, %v1471
        %v1504 = vmax.f32 %v1214, %v1472
        %v1505 = vmax.f32 %v1215, %v1473
        %v1506 = vmax.f32 %v1216, %v1474
        %v1507 = vmax.f32 %v1217, %v1475
        %v1508 = vmax.f32 %v1218, %v1476
        %v1509 = vmax.f32 %v1219, %v1477
        %v1510 = vmax.f32 %v1220, %v1478
        %v1511 = vmax.f32 %v1221, %v1479
        %v1512 = vmax.f32 %v1222, %v1480
        %v1513 = vmax.f32 %v1223, %v1481
        %v1514 = vmax.f32 %v1224, %v1482
        %v1515 = vmax.f32 %v1225, %v1483
        %v1516 = vmax.f32 %v1226, %v1484
        %v1517 = vmax.f32 %v1227, %v1485
        %v1518 = vmax.f32 %v1228, %v1486
        %v1519 = vmax.f32 %v1229, %v1487
        %v1520 = vmax.f32 %v1230, %v1488
        %v1521 = vmax.f32 %v1231, %v1489
        %v1522 = vmax.f32 %v1232, %v1490
        %v1523 = vmax.f32 %v1233, %v1491
        %v1524 = vsub.f32 %v1202, %v1492
        %v1525 = vsub.f32 %v1203, %v1493
        %v1526 = vsub.f32 %v1204, %v1494
        %v1527 = vsub.f32 %v1205, %v1495
        %v1528 = vsub.f32 %v1206, %v1496
        %v1529 = vsub.f32 %v1207, %v1497
        %v1530 = vsub.f32 %v1208, %v1498
        %v1531 = vsub.f32 %v1209, %v1499
        %v1532 = vsub.f32 %v1210, %v1500
        %v1533 = vsub.f32 %v1211, %v1501
        %v1534 = vsub.f32 %v1212, %v1502
        %v1535 = vsub.f32 %v1213, %v1503
        %v1536 = vsub.f32 %v1214, %v1504
        %v1537 = vsub.f32 %v1215, %v1505
        %v1538 = vsub.f32 %v1216, %v1506
        %v1539 = vsub.f32 %v1217, %v1507
        %v1540 = vsub.f32 %v1218, %v1508
        %v1541 = vsub.f32 %v1219, %v1509
        %v1542 = vsub.f32 %v1220, %v1510
        %v1543 = vsub.f32 %v1221, %v1511
        %v1544 = vsub.f32 %v1222, %v1512
        %v1545 = vsub.f32 %v1223, %v1513
        %v1546 = vsub.f32 %v1224, %v1514
        %v1547 = vsub.f32 %v1225, %v1515
        %v1548 = vsub.f32 %v1226, %v1516
        %v1549 = vsub.f32 %v1227, %v1517
        %v1550 = vsub.f32 %v1228, %v1518
        %v1551 = vsub.f32 %v1229, %v1519
        %v1552 = vsub.f32 %v1230, %v1520
        %v1553 = vsub.f32 %v1231, %v1521
        %v1554 = vsub.f32 %v1232, %v1522
        %v1555 = vsub.f32 %v1233, %v1523
        %v1556 = vmul.f32 %v1524, 1.442695
        %v1557 = vpow.pop %v1556
        %v1558 = vmul.f32 %v1525, 1.442695
        %v1559 = vpow.pop %v1558
        %v1560 = vmul.f32 %v1526, 1.442695
        %v1561 = vpow.pop %v1560
        %v1562 = vmul.f32 %v1527, 1.442695
        %v1563 = vpow.pop %v1562
        %v1564 = vmul.f32 %v1528, 1.442695
        %v1565 = vpow.pop %v1564
        %v1566 = vmul.f32 %v1529, 1.442695
        %v1567 = vpow.pop %v1566
        %v1568 = vmul.f32 %v1530, 1.442695
        %v1569 = vpow.pop %v1568
        %v1570 = vmul.f32 %v1531, 1.442695
        %v1571 = vpow.pop %v1570
        %v1572 = vmul.f32 %v1532, 1.442695
        %v1573 = vpow.pop %v1572
        %v1574 = vmul.f32 %v1533, 1.442695
        %v1575 = vpow.pop %v1574
        %v1576 = vmul.f32 %v1534, 1.442695
        %v1577 = vpow.pop %v1576
        %v1578 = vmul.f32 %v1535, 1.442695
        %v1579 = vpow.pop %v1578
        %v1580 = vmul.f32 %v1536, 1.442695
        %v1581 = vpow.pop %v1580
        %v1582 = vmul.f32 %v1537, 1.442695
        %v1583 = vpow.pop %v1582
        %v1584 = vmul.f32 %v1538, 1.442695
        %v1585 = vpow.pop %v1584
        %v1586 = vmul.f32 %v1539, 1.442695
        %v1587 = vpow.pop %v1586
        %v1588 = vmul.f32 %v1540, 1.442695
        %v1589 = vpow.pop %v1588
        %v1590 = vmul.f32 %v1541, 1.442695
        %v1591 = vpow.pop %v1590
        %v1592 = vmul.f32 %v1542, 1.442695
        %v1593 = vpow.pop %v1592
        %v1594 = vmul.f32 %v1543, 1.442695
        %v1595 = vpow.pop %v1594
        %v1596 = vmul.f32 %v1544, 1.442695
        %v1597 = vpow.pop %v1596
        %v1598 = vmul.f32 %v1545, 1.442695
        %v1599 = vpow.pop %v1598
        %v1600 = vmul.f32 %v1546, 1.442695
        %v1601 = vpow.pop %v1600
        %v1602 = vmul.f32 %v1547, 1.442695
        %v1603 = vpow.pop %v1602
        %v1604 = vmul.f32 %v1548, 1.442695
        %v1605 = vpow.pop %v1604
        %v1606 = vmul.f32 %v1549, 1.442695
        %v1607 = vpow.pop %v1606
        %v1608 = vmul.f32 %v1550, 1.442695
        %v1609 = vpow.pop %v1608
        %v1610 = vmul.f32 %v1551, 1.442695
        %v1611 = vpow.pop %v1610
        %v1612 = vmul.f32 %v1552, 1.442695
        %v1613 = vpow.pop %v1612
        %v1614 = vmul.f32 %v1553, 1.442695
        %v1615 = vpow.pop %v1614
        %v1616 = vmul.f32 %v1554, 1.442695
        %v1617 = vpow.pop %v1616
        %v1618 = vmul.f32 %v1555, 1.442695
        %v1619 = vpow.pop %v1618
        %v1620 = vsub.f32 %v1460, %v1492
        %v1621 = vsub.f32 %v1461, %v1493
        %v1622 = vsub.f32 %v1462, %v1494
        %v1623 = vsub.f32 %v1463, %v1495
        %v1624 = vsub.f32 %v1464, %v1496
        %v1625 = vsub.f32 %v1465, %v1497
        %v1626 = vsub.f32 %v1466, %v1498
        %v1627 = vsub.f32 %v1467, %v1499
        %v1628 = vsub.f32 %v1468, %v1500
        %v1629 = vsub.f32 %v1469, %v1501
        %v1630 = vsub.f32 %v1470, %v1502
        %v1631 = vsub.f32 %v1471, %v1503
        %v1632 = vsub.f32 %v1472, %v1504
        %v1633 = vsub.f32 %v1473, %v1505
        %v1634 = vsub.f32 %v1474, %v1506
        %v1635 = vsub.f32 %v1475, %v1507
        %v1636 = vsub.f32 %v1476, %v1508
        %v1637 = vsub.f32 %v1477, %v1509
        %v1638 = vsub.f32 %v1478, %v1510
        %v1639 = vsub.f32 %v1479, %v1511
        %v1640 = vsub.f32 %v1480, %v1512
        %v1641 = vsub.f32 %v1481, %v1513
        %v1642 = vsub.f32 %v1482, %v1514
        %v1643 = vsub.f32 %v1483, %v1515
        %v1644 = vsub.f32 %v1484, %v1516
        %v1645 = vsub.f32 %v1485, %v1517
        %v1646 = vsub.f32 %v1486, %v1518
        %v1647 = vsub.f32 %v1487, %v1519
        %v1648 = vsub.f32 %v1488, %v1520
        %v1649 = vsub.f32 %v1489, %v1521
        %v1650 = vsub.f32 %v1490, %v1522
        %v1651 = vsub.f32 %v1491, %v1523
        %v1652 = vmul.f32 %v1620, 1.442695
        %v1653 = vpow.pop %v1652
        %v1654 = vmul.f32 %v1621, 1.442695
        %v1655 = vpow.pop %v1654
        %v1656 = vmul.f32 %v1622, 1.442695
        %v1657 = vpow.pop %v1656
        %v1658 = vmul.f32 %v1623, 1.442695
        %v1659 = vpow.pop %v1658
        %v1660 = vmul.f32 %v1624, 1.442695
        %v1661 = vpow.pop %v1660
        %v1662 = vmul.f32 %v1625, 1.442695
        %v1663 = vpow.pop %v1662
        %v1664 = vmul.f32 %v1626, 1.442695
        %v1665 = vpow.pop %v1664
        %v1666 = vmul.f32 %v1627, 1.442695
        %v1667 = vpow.pop %v1666
        %v1668 = vmul.f32 %v1628, 1.442695
        %v1669 = vpow.pop %v1668
        %v1670 = vmul.f32 %v1629, 1.442695
        %v1671 = vpow.pop %v1670
        %v1672 = vmul.f32 %v1630, 1.442695
        %v1673 = vpow.pop %v1672
        %v1674 = vmul.f32 %v1631, 1.442695
        %v1675 = vpow.pop %v1674
        %v1676 = vmul.f32 %v1632, 1.442695
        %v1677 = vpow.pop %v1676
        %v1678 = vmul.f32 %v1633, 1.442695
        %v1679 = vpow.pop %v1678
        %v1680 = vmul.f32 %v1634, 1.442695
        %v1681 = vpow.pop %v1680
        %v1682 = vmul.f32 %v1635, 1.442695
        %v1683 = vpow.pop %v1682
        %v1684 = vmul.f32 %v1636, 1.442695
        %v1685 = vpow.pop %v1684
        %v1686 = vmul.f32 %v1637, 1.442695
        %v1687 = vpow.pop %v1686
        %v1688 = vmul.f32 %v1638, 1.442695
        %v1689 = vpow.pop %v1688
        %v1690 = vmul.f32 %v1639, 1.442695
        %v1691 = vpow.pop %v1690
        %v1692 = vmul.f32 %v1640, 1.442695
        %v1693 = vpow.pop %v1692
        %v1694 = vmul.f32 %v1641, 1.442695
        %v1695 = vpow.pop %v1694
        %v1696 = vmul.f32 %v1642, 1.442695
        %v1697 = vpow.pop %v1696
        %v1698 = vmul.f32 %v1643, 1.442695
        %v1699 = vpow.pop %v1698
        %v1700 = vmul.f32 %v1644, 1.442695
        %v1701 = vpow.pop %v1700
        %v1702 = vmul.f32 %v1645, 1.442695
        %v1703 = vpow.pop %v1702
        %v1704 = vmul.f32 %v1646, 1.442695
        %v1705 = vpow.pop %v1704
        %v1706 = vmul.f32 %v1647, 1.442695
        %v1707 = vpow.pop %v1706
        %v1708 = vmul.f32 %v1648, 1.442695
        %v1709 = vpow.pop %v1708
        %v1710 = vmul.f32 %v1649, 1.442695
        %v1711 = vpow.pop %v1710
        %v1712 = vmul.f32 %v1650, 1.442695
        %v1713 = vpow.pop %v1712
        %v1714 = vmul.f32 %v1651, 1.442695
        %v1715 = vpow.pop %v1714
        %v1716 = vadd.f32 %v1557, %v1653
        %v1717 = vadd.f32 %v1559, %v1655
        %v1718 = vadd.f32 %v1561, %v1657
        %v1719 = vadd.f32 %v1563, %v1659
        %v1720 = vadd.f32 %v1565, %v1661
        %v1721 = vadd.f32 %v1567, %v1663
        %v1722 = vadd.f32 %v1569, %v1665
        %v1723 = vadd.f32 %v1571, %v1667
        %v1724 = vadd.f32 %v1573, %v1669
        %v1725 = vadd.f32 %v1575, %v1671
        %v1726 = vadd.f32 %v1577, %v1673
        %v1727 = vadd.f32 %v1579, %v1675
        %v1728 = vadd.f32 %v1581, %v1677
        %v1729 = vadd.f32 %v1583, %v1679
        %v1730 = vadd.f32 %v1585, %v1681
        %v1731 = vadd.f32 %v1587, %v1683
        %v1732 = vadd.f32 %v1589, %v1685
        %v1733 = vadd.f32 %v1591, %v1687
        %v1734 = vadd.f32 %v1593, %v1689
        %v1735 = vadd.f32 %v1595, %v1691
        %v1736 = vadd.f32 %v1597, %v1693
        %v1737 = vadd.f32 %v1599, %v1695
        %v1738 = vadd.f32 %v1601, %v1697
        %v1739 = vadd.f32 %v1603, %v1699
        %v1740 = vadd.f32 %v1605, %v1701
        %v1741 = vadd.f32 %v1607, %v1703
        %v1742 = vadd.f32 %v1609, %v1705
        %v1743 = vadd.f32 %v1611, %v1707
        %v1744 = vadd.f32 %v1613, %v1709
        %v1745 = vadd.f32 %v1615, %v1711
        %v1746 = vadd.f32 %v1617, %v1713
        %v1747 = vadd.f32 %v1619, %v1715
        %v1780 = vrot.slane %v1557, 1
        %v1781 = vrot.slane %v1559, 1
        %v1782 = vsel %vm874, %v1780, %v1781
        %v1783 = vrot.slane %v1561, 1
        %v1784 = vsel %vm874, %v1781, %v1783
        %v1785 = vrot.slane %v1563, 1
        %v1786 = vsel %vm874, %v1783, %v1785
        %v1787 = vrot.slane %v1565, 1
        %v1788 = vsel %vm874, %v1785, %v1787
        %v1789 = vrot.slane %v1567, 1
        %v1790 = vsel %vm874, %v1787, %v1789
        %v1791 = vrot.slane %v1569, 1
        %v1792 = vsel %vm874, %v1789, %v1791
        %v1793 = vrot.slane %v1571, 1
        %v1794 = vsel %vm874, %v1791, %v1793
        %v1795 = vrot.slane %v1573, 1
        %v1796 = vsel %vm874, %v1793, %v1795
        %v1797 = vrot.slane %v1575, 1
        %v1798 = vsel %vm874, %v1795, %v1797
        %v1799 = vrot.slane %v1577, 1
        %v1800 = vsel %vm874, %v1797, %v1799
        %v1801 = vrot.slane %v1579, 1
        %v1802 = vsel %vm874, %v1799, %v1801
        %v1803 = vrot.slane %v1581, 1
        %v1804 = vsel %vm874, %v1801, %v1803
        %v1805 = vrot.slane %v1583, 1
        %v1806 = vsel %vm874, %v1803, %v1805
        %v1807 = vrot.slane %v1585, 1
        %v1808 = vsel %vm874, %v1805, %v1807
        %v1809 = vrot.slane %v1587, 1
        %v1810 = vsel %vm874, %v1807, %v1809
        %v1811 = vrot.slane %v1589, 1
        %v1812 = vsel %vm874, %v1809, %v1811
        %v1813 = vrot.slane %v1591, 1
        %v1814 = vsel %vm874, %v1811, %v1813
        %v1815 = vrot.slane %v1593, 1
        %v1816 = vsel %vm874, %v1813, %v1815
        %v1817 = vrot.slane %v1595, 1
        %v1818 = vsel %vm874, %v1815, %v1817
        %v1819 = vrot.slane %v1597, 1
        %v1820 = vsel %vm874, %v1817, %v1819
        %v1821 = vrot.slane %v1599, 1
        %v1822 = vsel %vm874, %v1819, %v1821
        %v1823 = vrot.slane %v1601, 1
        %v1824 = vsel %vm874, %v1821, %v1823
        %v1825 = vrot.slane %v1603, 1
        %v1826 = vsel %vm874, %v1823, %v1825
        %v1827 = vrot.slane %v1605, 1
        %v1828 = vsel %vm874, %v1825, %v1827
        %v1829 = vrot.slane %v1607, 1
        %v1830 = vsel %vm874, %v1827, %v1829
        %v1831 = vrot.slane %v1609, 1
        %v1832 = vsel %vm874, %v1829, %v1831
        %v1833 = vrot.slane %v1611, 1
        %v1834 = vsel %vm874, %v1831, %v1833
        %v1835 = vrot.slane %v1613, 1
        %v1836 = vsel %vm874, %v1833, %v1835
        %v1837 = vrot.slane %v1615, 1
        %v1838 = vsel %vm874, %v1835, %v1837
        %v1839 = vrot.slane %v1617, 1
        %v1840 = vsel %vm874, %v1837, %v1839
        %v1841 = vrot.slane %v1619, 1
        %v1842 = vsel %vm874, %v1839, %v1841
        %v1876 = vmul.f32 %v971, %v1780
        %v1877 = vmul.f32 %v972, %v1782
        %v1878 = vmul.f32 %v973, %v1784
        %v1879 = vmul.f32 %v1041, %v1786
        %v1880 = vmul.f32 %v1042, %v1788
        %v1881 = vmul.f32 %v1043, %v1790
        %v1882 = vmul.f32 %v1044, %v1792
        %v1883 = vmul.f32 %v1045, %v1794
        %v1884 = vmul.f32 %v1046, %v1796
        %v1885 = vmul.f32 %v1047, %v1798
        %v1886 = vmul.f32 %v1048, %v1800
        %v1887 = vmul.f32 %v1049, %v1802
        %v1888 = vmul.f32 %v1050, %v1804
        %v1889 = vmul.f32 %v1051, %v1806
        %v1890 = vmul.f32 %v1052, %v1808
        %v1891 = vmul.f32 %v1053, %v1810
        %v1892 = vmul.f32 %v1054, %v1812
        %v1893 = vmul.f32 %v1055, %v1814
        %v1894 = vmul.f32 %v1056, %v1816
        %v1895 = vmul.f32 %v1057, %v1818
        %v1896 = vmul.f32 %v1058, %v1820
        %v1897 = vmul.f32 %v1059, %v1822
        %v1898 = vmul.f32 %v1060, %v1824
        %v1899 = vmul.f32 %v1061, %v1826
        %v1900 = vmul.f32 %v1062, %v1828
        %v1901 = vmul.f32 %v1063, %v1830
        %v1902 = vmul.f32 %v1064, %v1832
        %v1903 = vmul.f32 %v1065, %v1834
        %v1904 = vmul.f32 %v1066, %v1836
        %v1905 = vmul.f32 %v1067, %v1838
        %v1906 = vmul.f32 %v1068, %v1840
        %v1907 = vmul.f32 %v1069, %v1842
        %v1908 = vmul.f32 %v1070, %v1841
        %v1909 = vmul.f32 %v1653, %v1362
        %v1910 = vmul.f32 %v1655, %v1363
        %v1911 = vmul.f32 %v1657, %v1430
        %v1912 = vmul.f32 %v1659, %v1431
        %v1913 = vmul.f32 %v1661, %v1432
        %v1914 = vmul.f32 %v1663, %v1433
        %v1915 = vmul.f32 %v1665, %v1434
        %v1916 = vmul.f32 %v1667, %v1435
        %v1917 = vmul.f32 %v1669, %v1436
        %v1918 = vmul.f32 %v1671, %v1437
        %v1919 = vmul.f32 %v1673, %v1438
        %v1920 = vmul.f32 %v1675, %v1439
        %v1921 = vmul.f32 %v1677, %v1440
        %v1922 = vmul.f32 %v1679, %v1441
        %v1923 = vmul.f32 %v1681, %v1442
        %v1924 = vmul.f32 %v1683, %v1443
        %v1925 = vmul.f32 %v1685, %v1444
        %v1926 = vmul.f32 %v1687, %v1445
        %v1927 = vmul.f32 %v1689, %v1446
        %v1928 = vmul.f32 %v1691, %v1447
        %v1929 = vmul.f32 %v1693, %v1448
        %v1930 = vmul.f32 %v1695, %v1449
        %v1931 = vmul.f32 %v1697, %v1450
        %v1932 = vmul.f32 %v1699, %v1451
        %v1933 = vmul.f32 %v1701, %v1452
        %v1934 = vmul.f32 %v1703, %v1453
        %v1935 = vmul.f32 %v1705, %v1454
        %v1936 = vmul.f32 %v1707, %v1455
        %v1937 = vmul.f32 %v1709, %v1456
        %v1938 = vmul.f32 %v1711, %v1457
        %v1939 = vmul.f32 %v1713, %v1458
        %v1940 = vmul.f32 %v1715, %v1459
        %v1973 = vrot.slane %v1909, 1
        %v1974 = vrot.slane %v1910, 1
        %v1975 = vsel %vm874, %v1973, %v1974
        %v1976 = vrot.slane %v1911, 1
        %v1977 = vsel %vm874, %v1974, %v1976
        %v1978 = vrot.slane %v1912, 1
        %v1979 = vsel %vm874, %v1976, %v1978
        %v1980 = vrot.slane %v1913, 1
        %v1981 = vsel %vm874, %v1978, %v1980
        %v1982 = vrot.slane %v1914, 1
        %v1983 = vsel %vm874, %v1980, %v1982
        %v1984 = vrot.slane %v1915, 1
        %v1985 = vsel %vm874, %v1982, %v1984
        %v1986 = vrot.slane %v1916, 1
        %v1987 = vsel %vm874, %v1984, %v1986
        %v1988 = vrot.slane %v1917, 1
        %v1989 = vsel %vm874, %v1986, %v1988
        %v1990 = vrot.slane %v1918, 1
        %v1991 = vsel %vm874, %v1988, %v1990
        %v1992 = vrot.slane %v1919, 1
        %v1993 = vsel %vm874, %v1990, %v1992
        %v1994 = vrot.slane %v1920, 1
        %v1995 = vsel %vm874, %v1992, %v1994
        %v1996 = vrot.slane %v1921, 1
        %v1997 = vsel %vm874, %v1994, %v1996
        %v1998 = vrot.slane %v1922, 1
        %v1999 = vsel %vm874, %v1996, %v1998
        %v2000 = vrot.slane %v1923, 1
        %v2001 = vsel %vm874, %v1998, %v2000
        %v2002 = vrot.slane %v1924, 1
        %v2003 = vsel %vm874, %v2000, %v2002
        %v2004 = vrot.slane %v1925, 1
        %v2005 = vsel %vm874, %v2002, %v2004
        %v2006 = vrot.slane %v1926, 1
        %v2007 = vsel %vm874, %v2004, %v2006
        %v2008 = vrot.slane %v1927, 1
        %v2009 = vsel %vm874, %v2006, %v2008
        %v2010 = vrot.slane %v1928, 1
        %v2011 = vsel %vm874, %v2008, %v2010
        %v2012 = vrot.slane %v1929, 1
        %v2013 = vsel %vm874, %v2010, %v2012
        %v2014 = vrot.slane %v1930, 1
        %v2015 = vsel %vm874, %v2012, %v2014
        %v2016 = vrot.slane %v1931, 1
        %v2017 = vsel %vm874, %v2014, %v2016
        %v2018 = vrot.slane %v1932, 1
        %v2019 = vsel %vm874, %v2016, %v2018
        %v2020 = vrot.slane %v1933, 1
        %v2021 = vsel %vm874, %v2018, %v2020
        %v2022 = vrot.slane %v1934, 1
        %v2023 = vsel %vm874, %v2020, %v2022
        %v2024 = vrot.slane %v1935, 1
        %v2025 = vsel %vm874, %v2022, %v2024
        %v2026 = vrot.slane %v1936, 1
        %v2027 = vsel %vm874, %v2024, %v2026
        %v2028 = vrot.slane %v1937, 1
        %v2029 = vsel %vm874, %v2026, %v2028
        %v2030 = vrot.slane %v1938, 1
        %v2031 = vsel %vm874, %v2028, %v2030
        %v2032 = vrot.slane %v1939, 1
        %v2033 = vsel %vm874, %v2030, %v2032
        %v2034 = vrot.slane %v1940, 1
        %v2035 = vsel %vm874, %v2032, %v2034
        %v2069 = vadd.f32 %v1876, %v1973
        %v2070 = vadd.f32 %v1877, %v1975
        %v2071 = vadd.f32 %v1878, %v1977
        %v2072 = vadd.f32 %v1879, %v1979
        %v2073 = vadd.f32 %v1880, %v1981
        %v2074 = vadd.f32 %v1881, %v1983
        %v2075 = vadd.f32 %v1882, %v1985
        %v2076 = vadd.f32 %v1883, %v1987
        %v2077 = vadd.f32 %v1884, %v1989
        %v2078 = vadd.f32 %v1885, %v1991
        %v2079 = vadd.f32 %v1886, %v1993
        %v2080 = vadd.f32 %v1887, %v1995
        %v2081 = vadd.f32 %v1888, %v1997
        %v2082 = vadd.f32 %v1889, %v1999
        %v2083 = vadd.f32 %v1890, %v2001
        %v2084 = vadd.f32 %v1891, %v2003
        %v2085 = vadd.f32 %v1892, %v2005
        %v2086 = vadd.f32 %v1893, %v2007
        %v2087 = vadd.f32 %v1894, %v2009
        %v2088 = vadd.f32 %v1895, %v2011
        %v2089 = vadd.f32 %v1896, %v2013
        %v2090 = vadd.f32 %v1897, %v2015
        %v2091 = vadd.f32 %v1898, %v2017
        %v2092 = vadd.f32 %v1899, %v2019
        %v2093 = vadd.f32 %v1900, %v2021
        %v2094 = vadd.f32 %v1901, %v2023
        %v2095 = vadd.f32 %v1902, %v2025
        %v2096 = vadd.f32 %v1903, %v2027
        %v2097 = vadd.f32 %v1904, %v2029
        %v2098 = vadd.f32 %v1905, %v2031
        %v2099 = vadd.f32 %v1906, %v2033
        %v2100 = vadd.f32 %v1907, %v2035
        %v2101 = vadd.f32 %v1908, %v2034
        %2102 = vset.pattern.permute.xlu0 2
        %2103 = vperm.xlu0 %2102, %v714
        %v2104 = vpop.permute.xlu0 %2103
        %2105 = vset.pattern.permute.xlu0 2
        %2106 = vperm.xlu0 %2105, %v715
        %v2107 = vpop.permute.xlu0 %2106
        %2108 = vset.pattern.permute.xlu0 2
        %2109 = vperm.xlu0 %2108, %v716
        %v2110 = vpop.permute.xlu0 %2109
        %2111 = vset.pattern.permute.xlu0 2
        %2112 = vperm.xlu0 %2111, %v717
        %v2113 = vpop.permute.xlu0 %2112
        %2114 = vset.pattern.permute.xlu0 2
        %2115 = vperm.xlu0 %2114, %v718
        %v2116 = vpop.permute.xlu0 %2115
        %2117 = vset.pattern.permute.xlu0 2
        %2118 = vperm.xlu0 %2117, %v719
        %v2119 = vpop.permute.xlu0 %2118
        %2120 = vset.pattern.permute.xlu0 2
        %2121 = vperm.xlu0 %2120, %v720
        %v2122 = vpop.permute.xlu0 %2121
        %2123 = vset.pattern.permute.xlu0 2
        %2124 = vperm.xlu0 %2123, %v721
        %v2125 = vpop.permute.xlu0 %2124
        %2126 = vset.pattern.permute.xlu0 2
        %2127 = vperm.xlu0 %2126, %v722
        %v2128 = vpop.permute.xlu0 %2127
        %2129 = vset.pattern.permute.xlu0 2
        %2130 = vperm.xlu0 %2129, %v723
        %v2131 = vpop.permute.xlu0 %2130
        %2132 = vset.pattern.permute.xlu0 2
        %2133 = vperm.xlu0 %2132, %v724
        %v2134 = vpop.permute.xlu0 %2133
        %2135 = vset.pattern.permute.xlu0 2
        %2136 = vperm.xlu0 %2135, %v725
        %v2137 = vpop.permute.xlu0 %2136
        %2138 = vset.pattern.permute.xlu0 2
        %2139 = vperm.xlu0 %2138, %v726
        %v2140 = vpop.permute.xlu0 %2139
        %2141 = vset.pattern.permute.xlu0 2
        %2142 = vperm.xlu0 %2141, %v727
        %v2143 = vpop.permute.xlu0 %2142
        %2144 = vset.pattern.permute.xlu0 2
        %2145 = vperm.xlu0 %2144, %v728
        %v2146 = vpop.permute.xlu0 %2145
        %2147 = vset.pattern.permute.xlu0 2
        %2148 = vperm.xlu0 %2147, %v729
        %v2149 = vpop.permute.xlu0 %2148
        %2150 = vset.pattern.permute.xlu0 2
        %2151 = vperm.xlu0 %2150, %v730
        %v2152 = vpop.permute.xlu0 %2151
        %2153 = vset.pattern.permute.xlu0 2
        %2154 = vperm.xlu0 %2153, %v731
        %v2155 = vpop.permute.xlu0 %2154
        %2156 = vset.pattern.permute.xlu0 2
        %2157 = vperm.xlu0 %2156, %v732
        %v2158 = vpop.permute.xlu0 %2157
        %2159 = vset.pattern.permute.xlu0 2
        %2160 = vperm.xlu0 %2159, %v733
        %v2161 = vpop.permute.xlu0 %2160
        %2162 = vset.pattern.permute.xlu0 2
        %2163 = vperm.xlu0 %2162, %v734
        %v2164 = vpop.permute.xlu0 %2163
        %2165 = vset.pattern.permute.xlu0 2
        %2166 = vperm.xlu0 %2165, %v735
        %v2167 = vpop.permute.xlu0 %2166
        %2168 = vset.pattern.permute.xlu0 2
        %2169 = vperm.xlu0 %2168, %v736
        %v2170 = vpop.permute.xlu0 %2169
        %2171 = vset.pattern.permute.xlu0 2
        %2172 = vperm.xlu0 %2171, %v737
        %v2173 = vpop.permute.xlu0 %2172
        %2174 = vset.pattern.permute.xlu0 2
        %2175 = vperm.xlu0 %2174, %v738
        %v2176 = vpop.permute.xlu0 %2175
        %2177 = vset.pattern.permute.xlu0 2
        %2178 = vperm.xlu0 %2177, %v739
        %v2179 = vpop.permute.xlu0 %2178
        %2180 = vset.pattern.permute.xlu0 2
        %2181 = vperm.xlu0 %2180, %v740
        %v2182 = vpop.permute.xlu0 %2181
        %2183 = vset.pattern.permute.xlu0 2
        %2184 = vperm.xlu0 %2183, %v741
        %v2185 = vpop.permute.xlu0 %2184
        %2186 = vset.pattern.permute.xlu0 2
        %2187 = vperm.xlu0 %2186, %v742
        %v2188 = vpop.permute.xlu0 %2187
        %2189 = vset.pattern.permute.xlu0 2
        %2190 = vperm.xlu0 %2189, %v743
        %v2191 = vpop.permute.xlu0 %2190
        %2192 = vset.pattern.permute.xlu0 2
        %2193 = vperm.xlu0 %2192, %v744
        %v2194 = vpop.permute.xlu0 %2193
        %2195 = vset.pattern.permute.xlu0 2
        %2196 = vperm.xlu0 %2195, %v745
        %v2197 = vpop.permute.xlu0 %2196
        %v2198 = vrot.slane %v2104, 7
        %v2199 = vrot.slane %v2107, 7
        %v2200 = vsel %vm1104, %v2198, %v2199
        %v2201 = vrot.slane %v2110, 7
        %v2202 = vsel %vm1104, %v2199, %v2201
        %v2203 = vrot.slane %v2113, 7
        %v2204 = vsel %vm1104, %v2201, %v2203
        %v2205 = vrot.slane %v2116, 7
        %v2206 = vsel %vm1104, %v2203, %v2205
        %v2207 = vrot.slane %v2119, 7
        %v2208 = vsel %vm1104, %v2205, %v2207
        %v2209 = vrot.slane %v2122, 7
        %v2210 = vsel %vm1104, %v2207, %v2209
        %v2211 = vrot.slane %v2125, 7
        %v2212 = vsel %vm1104, %v2209, %v2211
        %v2213 = vrot.slane %v2128, 7
        %v2214 = vsel %vm1104, %v2211, %v2213
        %v2215 = vrot.slane %v2131, 7
        %v2216 = vsel %vm1104, %v2213, %v2215
        %v2217 = vrot.slane %v2134, 7
        %v2218 = vsel %vm1104, %v2215, %v2217
        %v2219 = vrot.slane %v2137, 7
        %v2220 = vsel %vm1104, %v2217, %v2219
        %v2221 = vrot.slane %v2140, 7
        %v2222 = vsel %vm1104, %v2219, %v2221
        %v2223 = vrot.slane %v2143, 7
        %v2224 = vsel %vm1104, %v2221, %v2223
        %v2225 = vrot.slane %v2146, 7
        %v2226 = vsel %vm1104, %v2223, %v2225
        %v2227 = vrot.slane %v2149, 7
        %v2228 = vsel %vm1104, %v2225, %v2227
        %v2229 = vrot.slane %v2152, 7
        %v2230 = vsel %vm1104, %v2227, %v2229
        %v2231 = vrot.slane %v2155, 7
        %v2232 = vsel %vm1104, %v2229, %v2231
        %v2233 = vrot.slane %v2158, 7
        %v2234 = vsel %vm1104, %v2231, %v2233
        %v2235 = vrot.slane %v2161, 7
        %v2236 = vsel %vm1104, %v2233, %v2235
        %v2237 = vrot.slane %v2164, 7
        %v2238 = vsel %vm1104, %v2235, %v2237
        %v2239 = vrot.slane %v2167, 7
        %v2240 = vsel %vm1104, %v2237, %v2239
        %v2241 = vrot.slane %v2170, 7
        %v2242 = vsel %vm1104, %v2239, %v2241
        %v2243 = vrot.slane %v2173, 7
        %v2244 = vsel %vm1104, %v2241, %v2243
        %v2245 = vrot.slane %v2176, 7
        %v2246 = vsel %vm1104, %v2243, %v2245
        %v2247 = vrot.slane %v2179, 7
        %v2248 = vsel %vm1104, %v2245, %v2247
        %v2249 = vrot.slane %v2182, 7
        %v2250 = vsel %vm1104, %v2247, %v2249
        %v2251 = vrot.slane %v2185, 7
        %v2252 = vsel %vm1104, %v2249, %v2251
        %v2253 = vrot.slane %v2188, 7
        %v2254 = vsel %vm1104, %v2251, %v2253
        %v2255 = vrot.slane %v2191, 7
        %v2256 = vsel %vm1104, %v2253, %v2255
        %v2257 = vrot.slane %v2194, 7
        %v2258 = vsel %vm1104, %v2255, %v2257
        %v2259 = vrot.slane %v2197, 7
        %v2260 = vsel %vm1104, %v2257, %v2259
        %v2294 = vmul.f32 %v2198, 0.0
        %v2295 = vmul.f32 %v2200, 0.0
        %v2296 = vmul.f32 %v617, %v2202
        %v2297 = vmul.f32 %v619, %v2204
        %v2298 = vmul.f32 %v621, %v2206
        %v2299 = vmul.f32 %v623, %v2208
        %v2300 = vmul.f32 %v625, %v2210
        %v2301 = vmul.f32 %v627, %v2212
        %v2302 = vmul.f32 %v629, %v2214
        %v2303 = vmul.f32 %v631, %v2216
        %v2304 = vmul.f32 %v633, %v2218
        %v2305 = vmul.f32 %v635, %v2220
        %v2306 = vmul.f32 %v637, %v2222
        %v2307 = vmul.f32 %v639, %v2224
        %v2308 = vmul.f32 %v641, %v2226
        %v2309 = vmul.f32 %v643, %v2228
        %v2310 = vmul.f32 %v645, %v2230
        %v2311 = vmul.f32 %v647, %v2232
        %v2312 = vmul.f32 %v649, %v2234
        %v2313 = vmul.f32 %v651, %v2236
        %v2314 = vmul.f32 %v653, %v2238
        %v2315 = vmul.f32 %v655, %v2240
        %v2316 = vmul.f32 %v657, %v2242
        %v2317 = vmul.f32 %v659, %v2244
        %v2318 = vmul.f32 %v661, %v2246
        %v2319 = vmul.f32 %v663, %v2248
        %v2320 = vmul.f32 %v665, %v2250
        %v2321 = vmul.f32 %v667, %v2252
        %v2322 = vmul.f32 %v669, %v2254
        %v2323 = vmul.f32 %v671, %v2256
        %v2324 = vmul.f32 %v673, %v2258
        %v2325 = vmul.f32 %v675, %v2260
        %v2326 = vmul.f32 %v677, %v2259
        %v2327 = vlaneseq
        %v2328 = vshrl.u32 %v2327, 7
        %v2329 = vsub.s32 2, %v2328
        %v2330 = vrot.slane %v712, %v2329
        %v2331 = vadd.f32 %v2294, %v2330
        %v2332 = vadd.f32 %v2295, %v2330
        %v2333 = vadd.f32 %v2296, %v2330
        %v2334 = vadd.f32 %v2297, %v2330
        %v2335 = vadd.f32 %v2298, %v2330
        %v2336 = vadd.f32 %v2299, %v2330
        %v2337 = vadd.f32 %v2300, %v2330
        %v2338 = vadd.f32 %v2301, %v2330
        %v2339 = vadd.f32 %v2302, %v2330
        %v2340 = vadd.f32 %v2303, %v2330
        %v2341 = vadd.f32 %v2304, %v2330
        %v2342 = vadd.f32 %v2305, %v2330
        %v2343 = vadd.f32 %v2306, %v2330
        %v2344 = vadd.f32 %v2307, %v2330
        %v2345 = vadd.f32 %v2308, %v2330
        %v2346 = vadd.f32 %v2309, %v2330
        %v2347 = vadd.f32 %v2310, %v2330
        %v2348 = vadd.f32 %v2311, %v2330
        %v2349 = vadd.f32 %v2312, %v2330
        %v2350 = vadd.f32 %v2313, %v2330
        %v2351 = vadd.f32 %v2314, %v2330
        %v2352 = vadd.f32 %v2315, %v2330
        %v2353 = vadd.f32 %v2316, %v2330
        %v2354 = vadd.f32 %v2317, %v2330
        %v2355 = vadd.f32 %v2318, %v2330
        %v2356 = vadd.f32 %v2319, %v2330
        %v2357 = vadd.f32 %v2320, %v2330
        %v2358 = vadd.f32 %v2321, %v2330
        %v2359 = vadd.f32 %v2322, %v2330
        %v2360 = vadd.f32 %v2323, %v2330
        %v2361 = vadd.f32 %v2324, %v2330
        %v2362 = vadd.f32 %v2325, %v2330
        %v2363 = vadd.f32 %v2326, %v2330
        %v2364 = vmul.f32 %v396, %v2202
        %v2365 = vmul.f32 %v402, %v2204
        %v2366 = vmul.f32 %v408, %v2206
        %v2367 = vmul.f32 %v414, %v2208
        %v2368 = vmul.f32 %v420, %v2210
        %v2369 = vmul.f32 %v426, %v2212
        %v2370 = vmul.f32 %v432, %v2214
        %v2371 = vmul.f32 %v438, %v2216
        %v2372 = vmul.f32 %v444, %v2218
        %v2373 = vmul.f32 %v450, %v2220
        %v2374 = vmul.f32 %v456, %v2222
        %v2375 = vmul.f32 %v462, %v2224
        %v2376 = vmul.f32 %v468, %v2226
        %v2377 = vmul.f32 %v474, %v2228
        %v2378 = vmul.f32 %v480, %v2230
        %v2379 = vmul.f32 %v486, %v2232
        %v2380 = vmul.f32 %v492, %v2234
        %v2381 = vmul.f32 %v498, %v2236
        %v2382 = vmul.f32 %v504, %v2238
        %v2383 = vmul.f32 %v510, %v2240
        %v2384 = vmul.f32 %v516, %v2242
        %v2385 = vmul.f32 %v522, %v2244
        %v2386 = vmul.f32 %v528, %v2246
        %v2387 = vmul.f32 %v534, %v2248
        %v2388 = vmul.f32 %v540, %v2250
        %v2389 = vmul.f32 %v546, %v2252
        %v2390 = vmul.f32 %v552, %v2254
        %v2391 = vmul.f32 %v558, %v2256
        %v2392 = vmul.f32 %v564, %v2258
        %v2393 = vmul.f32 %v570, %v2260
        %v2394 = vmul.f32 %v576, %v2259
        %v2428 = vrot.slane %v2331, 1
        %v2429 = vrot.slane %v2332, 1
        %v2430 = vsel %vm874, %v2428, %v2429
        %v2431 = vrot.slane %v2333, 1
        %v2432 = vsel %vm874, %v2429, %v2431
        %v2433 = vrot.slane %v2334, 1
        %v2434 = vsel %vm874, %v2431, %v2433
        %v2435 = vrot.slane %v2335, 1
        %v2436 = vsel %vm874, %v2433, %v2435
        %v2437 = vrot.slane %v2336, 1
        %v2438 = vsel %vm874, %v2435, %v2437
        %v2439 = vrot.slane %v2337, 1
        %v2440 = vsel %vm874, %v2437, %v2439
        %v2441 = vrot.slane %v2338, 1
        %v2442 = vsel %vm874, %v2439, %v2441
        %v2443 = vrot.slane %v2339, 1
        %v2444 = vsel %vm874, %v2441, %v2443
        %v2445 = vrot.slane %v2340, 1
        %v2446 = vsel %vm874, %v2443, %v2445
        %v2447 = vrot.slane %v2341, 1
        %v2448 = vsel %vm874, %v2445, %v2447
        %v2449 = vrot.slane %v2342, 1
        %v2450 = vsel %vm874, %v2447, %v2449
        %v2451 = vrot.slane %v2343, 1
        %v2452 = vsel %vm874, %v2449, %v2451
        %v2453 = vrot.slane %v2344, 1
        %v2454 = vsel %vm874, %v2451, %v2453
        %v2455 = vrot.slane %v2345, 1
        %v2456 = vsel %vm874, %v2453, %v2455
        %v2457 = vrot.slane %v2346, 1
        %v2458 = vsel %vm874, %v2455, %v2457
        %v2459 = vrot.slane %v2347, 1
        %v2460 = vsel %vm874, %v2457, %v2459
        %v2461 = vrot.slane %v2348, 1
        %v2462 = vsel %vm874, %v2459, %v2461
        %v2463 = vrot.slane %v2349, 1
        %v2464 = vsel %vm874, %v2461, %v2463
        %v2465 = vrot.slane %v2350, 1
        %v2466 = vsel %vm874, %v2463, %v2465
        %v2467 = vrot.slane %v2351, 1
        %v2468 = vsel %vm874, %v2465, %v2467
        %v2469 = vrot.slane %v2352, 1
        %v2470 = vsel %vm874, %v2467, %v2469
        %v2471 = vrot.slane %v2353, 1
        %v2472 = vsel %vm874, %v2469, %v2471
        %v2473 = vrot.slane %v2354, 1
        %v2474 = vsel %vm874, %v2471, %v2473
        %v2475 = vrot.slane %v2355, 1
        %v2476 = vsel %vm874, %v2473, %v2475
        %v2477 = vrot.slane %v2356, 1
        %v2478 = vsel %vm874, %v2475, %v2477
        %v2479 = vrot.slane %v2357, 1
        %v2480 = vsel %vm874, %v2477, %v2479
        %v2481 = vrot.slane %v2358, 1
        %v2482 = vsel %vm874, %v2479, %v2481
        %v2483 = vrot.slane %v2359, 1
        %v2484 = vsel %vm874, %v2481, %v2483
        %v2485 = vrot.slane %v2360, 1
        %v2486 = vsel %vm874, %v2483, %v2485
        %v2487 = vrot.slane %v2361, 1
        %v2488 = vsel %vm874, %v2485, %v2487
        %v2489 = vrot.slane %v2362, 1
        %v2490 = vsel %vm874, %v2487, %v2489
        %v2491 = vrot.slane %v2363, 1
        %v2492 = vsel %vm874, %v2489, %v2491
        %v2525 = vmul.f32 %v394, %v2430
        %v2526 = vmul.f32 %v400, %v2432
        %v2527 = vmul.f32 %v406, %v2434
        %v2528 = vmul.f32 %v412, %v2436
        %v2529 = vmul.f32 %v418, %v2438
        %v2530 = vmul.f32 %v424, %v2440
        %v2531 = vmul.f32 %v430, %v2442
        %v2532 = vmul.f32 %v436, %v2444
        %v2533 = vmul.f32 %v442, %v2446
        %v2534 = vmul.f32 %v448, %v2448
        %v2535 = vmul.f32 %v454, %v2450
        %v2536 = vmul.f32 %v460, %v2452
        %v2537 = vmul.f32 %v466, %v2454
        %v2538 = vmul.f32 %v472, %v2456
        %v2539 = vmul.f32 %v478, %v2458
        %v2540 = vmul.f32 %v484, %v2460
        %v2541 = vmul.f32 %v490, %v2462
        %v2542 = vmul.f32 %v496, %v2464
        %v2543 = vmul.f32 %v502, %v2466
        %v2544 = vmul.f32 %v508, %v2468
        %v2545 = vmul.f32 %v514, %v2470
        %v2546 = vmul.f32 %v520, %v2472
        %v2547 = vmul.f32 %v526, %v2474
        %v2548 = vmul.f32 %v532, %v2476
        %v2549 = vmul.f32 %v538, %v2478
        %v2550 = vmul.f32 %v544, %v2480
        %v2551 = vmul.f32 %v550, %v2482
        %v2552 = vmul.f32 %v556, %v2484
        %v2553 = vmul.f32 %v562, %v2486
        %v2554 = vmul.f32 %v568, %v2488
        %v2555 = vmul.f32 %v574, %v2490
        %v2556 = vmul.f32 %v580, %v2492
        %v2557 = vmax.f32 %v1492, %v2525
        %v2558 = vmax.f32 %v1493, %v2526
        %v2559 = vmax.f32 %v1494, %v2527
        %v2560 = vmax.f32 %v1495, %v2528
        %v2561 = vmax.f32 %v1496, %v2529
        %v2562 = vmax.f32 %v1497, %v2530
        %v2563 = vmax.f32 %v1498, %v2531
        %v2564 = vmax.f32 %v1499, %v2532
        %v2565 = vmax.f32 %v1500, %v2533
        %v2566 = vmax.f32 %v1501, %v2534
        %v2567 = vmax.f32 %v1502, %v2535
        %v2568 = vmax.f32 %v1503, %v2536
        %v2569 = vmax.f32 %v1504, %v2537
        %v2570 = vmax.f32 %v1505, %v2538
        %v2571 = vmax.f32 %v1506, %v2539
        %v2572 = vmax.f32 %v1507, %v2540
        %v2573 = vmax.f32 %v1508, %v2541
        %v2574 = vmax.f32 %v1509, %v2542
        %v2575 = vmax.f32 %v1510, %v2543
        %v2576 = vmax.f32 %v1511, %v2544
        %v2577 = vmax.f32 %v1512, %v2545
        %v2578 = vmax.f32 %v1513, %v2546
        %v2579 = vmax.f32 %v1514, %v2547
        %v2580 = vmax.f32 %v1515, %v2548
        %v2581 = vmax.f32 %v1516, %v2549
        %v2582 = vmax.f32 %v1517, %v2550
        %v2583 = vmax.f32 %v1518, %v2551
        %v2584 = vmax.f32 %v1519, %v2552
        %v2585 = vmax.f32 %v1520, %v2553
        %v2586 = vmax.f32 %v1521, %v2554
        %v2587 = vmax.f32 %v1522, %v2555
        %v2588 = vmax.f32 %v1523, %v2556
        %v2589 = vsub.f32 %v1492, %v2557
        %v2590 = vsub.f32 %v1493, %v2558
        %v2591 = vsub.f32 %v1494, %v2559
        %v2592 = vsub.f32 %v1495, %v2560
        %v2593 = vsub.f32 %v1496, %v2561
        %v2594 = vsub.f32 %v1497, %v2562
        %v2595 = vsub.f32 %v1498, %v2563
        %v2596 = vsub.f32 %v1499, %v2564
        %v2597 = vsub.f32 %v1500, %v2565
        %v2598 = vsub.f32 %v1501, %v2566
        %v2599 = vsub.f32 %v1502, %v2567
        %v2600 = vsub.f32 %v1503, %v2568
        %v2601 = vsub.f32 %v1504, %v2569
        %v2602 = vsub.f32 %v1505, %v2570
        %v2603 = vsub.f32 %v1506, %v2571
        %v2604 = vsub.f32 %v1507, %v2572
        %v2605 = vsub.f32 %v1508, %v2573
        %v2606 = vsub.f32 %v1509, %v2574
        %v2607 = vsub.f32 %v1510, %v2575
        %v2608 = vsub.f32 %v1511, %v2576
        %v2609 = vsub.f32 %v1512, %v2577
        %v2610 = vsub.f32 %v1513, %v2578
        %v2611 = vsub.f32 %v1514, %v2579
        %v2612 = vsub.f32 %v1515, %v2580
        %v2613 = vsub.f32 %v1516, %v2581
        %v2614 = vsub.f32 %v1517, %v2582
        %v2615 = vsub.f32 %v1518, %v2583
        %v2616 = vsub.f32 %v1519, %v2584
        %v2617 = vsub.f32 %v1520, %v2585
        %v2618 = vsub.f32 %v1521, %v2586
        %v2619 = vsub.f32 %v1522, %v2587
        %v2620 = vsub.f32 %v1523, %v2588
        %v2621 = vmul.f32 %v2589, 1.442695
        %v2622 = vpow.pop %v2621
        %v2623 = vmul.f32 %v2590, 1.442695
        %v2624 = vpow.pop %v2623
        %v2625 = vmul.f32 %v2591, 1.442695
        %v2626 = vpow.pop %v2625
        %v2627 = vmul.f32 %v2592, 1.442695
        %v2628 = vpow.pop %v2627
        %v2629 = vmul.f32 %v2593, 1.442695
        %v2630 = vpow.pop %v2629
        %v2631 = vmul.f32 %v2594, 1.442695
        %v2632 = vpow.pop %v2631
        %v2633 = vmul.f32 %v2595, 1.442695
        %v2634 = vpow.pop %v2633
        %v2635 = vmul.f32 %v2596, 1.442695
        %v2636 = vpow.pop %v2635
        %v2637 = vmul.f32 %v2597, 1.442695
        %v2638 = vpow.pop %v2637
        %v2639 = vmul.f32 %v2598, 1.442695
        %v2640 = vpow.pop %v2639
        %v2641 = vmul.f32 %v2599, 1.442695
        %v2642 = vpow.pop %v2641
        %v2643 = vmul.f32 %v2600, 1.442695
        %v2644 = vpow.pop %v2643
        %v2645 = vmul.f32 %v2601, 1.442695
        %v2646 = vpow.pop %v2645
        %v2647 = vmul.f32 %v2602, 1.442695
        %v2648 = vpow.pop %v2647
        %v2649 = vmul.f32 %v2603, 1.442695
        %v2650 = vpow.pop %v2649
        %v2651 = vmul.f32 %v2604, 1.442695
        %v2652 = vpow.pop %v2651
        %v2653 = vmul.f32 %v2605, 1.442695
        %v2654 = vpow.pop %v2653
        %v2655 = vmul.f32 %v2606, 1.442695
        %v2656 = vpow.pop %v2655
        %v2657 = vmul.f32 %v2607, 1.442695
        %v2658 = vpow.pop %v2657
        %v2659 = vmul.f32 %v2608, 1.442695
        %v2660 = vpow.pop %v2659
        %v2661 = vmul.f32 %v2609, 1.442695
        %v2662 = vpow.pop %v2661
        %v2663 = vmul.f32 %v2610, 1.442695
        %v2664 = vpow.pop %v2663
        %v2665 = vmul.f32 %v2611, 1.442695
        %v2666 = vpow.pop %v2665
        %v2667 = vmul.f32 %v2612, 1.442695
        %v2668 = vpow.pop %v2667
        %v2669 = vmul.f32 %v2613, 1.442695
        %v2670 = vpow.pop %v2669
        %v2671 = vmul.f32 %v2614, 1.442695
        %v2672 = vpow.pop %v2671
        %v2673 = vmul.f32 %v2615, 1.442695
        %v2674 = vpow.pop %v2673
        %v2675 = vmul.f32 %v2616, 1.442695
        %v2676 = vpow.pop %v2675
        %v2677 = vmul.f32 %v2617, 1.442695
        %v2678 = vpow.pop %v2677
        %v2679 = vmul.f32 %v2618, 1.442695
        %v2680 = vpow.pop %v2679
        %v2681 = vmul.f32 %v2619, 1.442695
        %v2682 = vpow.pop %v2681
        %v2683 = vmul.f32 %v2620, 1.442695
        %v2684 = vpow.pop %v2683
        %v2685 = vsub.f32 %v2525, %v2557
        %v2686 = vsub.f32 %v2526, %v2558
        %v2687 = vsub.f32 %v2527, %v2559
        %v2688 = vsub.f32 %v2528, %v2560
        %v2689 = vsub.f32 %v2529, %v2561
        %v2690 = vsub.f32 %v2530, %v2562
        %v2691 = vsub.f32 %v2531, %v2563
        %v2692 = vsub.f32 %v2532, %v2564
        %v2693 = vsub.f32 %v2533, %v2565
        %v2694 = vsub.f32 %v2534, %v2566
        %v2695 = vsub.f32 %v2535, %v2567
        %v2696 = vsub.f32 %v2536, %v2568
        %v2697 = vsub.f32 %v2537, %v2569
        %v2698 = vsub.f32 %v2538, %v2570
        %v2699 = vsub.f32 %v2539, %v2571
        %v2700 = vsub.f32 %v2540, %v2572
        %v2701 = vsub.f32 %v2541, %v2573
        %v2702 = vsub.f32 %v2542, %v2574
        %v2703 = vsub.f32 %v2543, %v2575
        %v2704 = vsub.f32 %v2544, %v2576
        %v2705 = vsub.f32 %v2545, %v2577
        %v2706 = vsub.f32 %v2546, %v2578
        %v2707 = vsub.f32 %v2547, %v2579
        %v2708 = vsub.f32 %v2548, %v2580
        %v2709 = vsub.f32 %v2549, %v2581
        %v2710 = vsub.f32 %v2550, %v2582
        %v2711 = vsub.f32 %v2551, %v2583
        %v2712 = vsub.f32 %v2552, %v2584
        %v2713 = vsub.f32 %v2553, %v2585
        %v2714 = vsub.f32 %v2554, %v2586
        %v2715 = vsub.f32 %v2555, %v2587
        %v2716 = vsub.f32 %v2556, %v2588
        %v2717 = vmul.f32 %v2685, 1.442695
        %v2718 = vpow.pop %v2717
        %v2719 = vmul.f32 %v2686, 1.442695
        %v2720 = vpow.pop %v2719
        %v2721 = vmul.f32 %v2687, 1.442695
        %v2722 = vpow.pop %v2721
        %v2723 = vmul.f32 %v2688, 1.442695
        %v2724 = vpow.pop %v2723
        %v2725 = vmul.f32 %v2689, 1.442695
        %v2726 = vpow.pop %v2725
        %v2727 = vmul.f32 %v2690, 1.442695
        %v2728 = vpow.pop %v2727
        %v2729 = vmul.f32 %v2691, 1.442695
        %v2730 = vpow.pop %v2729
        %v2731 = vmul.f32 %v2692, 1.442695
        %v2732 = vpow.pop %v2731
        %v2733 = vmul.f32 %v2693, 1.442695
        %v2734 = vpow.pop %v2733
        %v2735 = vmul.f32 %v2694, 1.442695
        %v2736 = vpow.pop %v2735
        %v2737 = vmul.f32 %v2695, 1.442695
        %v2738 = vpow.pop %v2737
        %v2739 = vmul.f32 %v2696, 1.442695
        %v2740 = vpow.pop %v2739
        %v2741 = vmul.f32 %v2697, 1.442695
        %v2742 = vpow.pop %v2741
        %v2743 = vmul.f32 %v2698, 1.442695
        %v2744 = vpow.pop %v2743
        %v2745 = vmul.f32 %v2699, 1.442695
        %v2746 = vpow.pop %v2745
        %v2747 = vmul.f32 %v2700, 1.442695
        %v2748 = vpow.pop %v2747
        %v2749 = vmul.f32 %v2701, 1.442695
        %v2750 = vpow.pop %v2749
        %v2751 = vmul.f32 %v2702, 1.442695
        %v2752 = vpow.pop %v2751
        %v2753 = vmul.f32 %v2703, 1.442695
        %v2754 = vpow.pop %v2753
        %v2755 = vmul.f32 %v2704, 1.442695
        %v2756 = vpow.pop %v2755
        %v2757 = vmul.f32 %v2705, 1.442695
        %v2758 = vpow.pop %v2757
        %v2759 = vmul.f32 %v2706, 1.442695
        %v2760 = vpow.pop %v2759
        %v2761 = vmul.f32 %v2707, 1.442695
        %v2762 = vpow.pop %v2761
        %v2763 = vmul.f32 %v2708, 1.442695
        %v2764 = vpow.pop %v2763
        %v2765 = vmul.f32 %v2709, 1.442695
        %v2766 = vpow.pop %v2765
        %v2767 = vmul.f32 %v2710, 1.442695
        %v2768 = vpow.pop %v2767
        %v2769 = vmul.f32 %v2711, 1.442695
        %v2770 = vpow.pop %v2769
        %v2771 = vmul.f32 %v2712, 1.442695
        %v2772 = vpow.pop %v2771
        %v2773 = vmul.f32 %v2713, 1.442695
        %v2774 = vpow.pop %v2773
        %v2775 = vmul.f32 %v2714, 1.442695
        %v2776 = vpow.pop %v2775
        %v2777 = vmul.f32 %v2715, 1.442695
        %v2778 = vpow.pop %v2777
        %v2779 = vmul.f32 %v2716, 1.442695
        %v2780 = vpow.pop %v2779
        %v2781 = vmul.f32 %v1716, %v2622
        %v2782 = vmul.f32 %v1717, %v2624
        %v2783 = vmul.f32 %v1718, %v2626
        %v2784 = vmul.f32 %v1719, %v2628
        %v2785 = vmul.f32 %v1720, %v2630
        %v2786 = vmul.f32 %v1721, %v2632
        %v2787 = vmul.f32 %v1722, %v2634
        %v2788 = vmul.f32 %v1723, %v2636
        %v2789 = vmul.f32 %v1724, %v2638
        %v2790 = vmul.f32 %v1725, %v2640
        %v2791 = vmul.f32 %v1726, %v2642
        %v2792 = vmul.f32 %v1727, %v2644
        %v2793 = vmul.f32 %v1728, %v2646
        %v2794 = vmul.f32 %v1729, %v2648
        %v2795 = vmul.f32 %v1730, %v2650
        %v2796 = vmul.f32 %v1731, %v2652
        %v2797 = vmul.f32 %v1732, %v2654
        %v2798 = vmul.f32 %v1733, %v2656
        %v2799 = vmul.f32 %v1734, %v2658
        %v2800 = vmul.f32 %v1735, %v2660
        %v2801 = vmul.f32 %v1736, %v2662
        %v2802 = vmul.f32 %v1737, %v2664
        %v2803 = vmul.f32 %v1738, %v2666
        %v2804 = vmul.f32 %v1739, %v2668
        %v2805 = vmul.f32 %v1740, %v2670
        %v2806 = vmul.f32 %v1741, %v2672
        %v2807 = vmul.f32 %v1742, %v2674
        %v2808 = vmul.f32 %v1743, %v2676
        %v2809 = vmul.f32 %v1744, %v2678
        %v2810 = vmul.f32 %v1745, %v2680
        %v2811 = vmul.f32 %v1746, %v2682
        %v2812 = vmul.f32 %v1747, %v2684
        %v2813 = vadd.f32 %v2781, %v2718
        %v2814 = vadd.f32 %v2782, %v2720
        %v2815 = vadd.f32 %v2783, %v2722
        %v2816 = vadd.f32 %v2784, %v2724
        %v2817 = vadd.f32 %v2785, %v2726
        %v2818 = vadd.f32 %v2786, %v2728
        %v2819 = vadd.f32 %v2787, %v2730
        %v2820 = vadd.f32 %v2788, %v2732
        %v2821 = vadd.f32 %v2789, %v2734
        %v2822 = vadd.f32 %v2790, %v2736
        %v2823 = vadd.f32 %v2791, %v2738
        %v2824 = vadd.f32 %v2792, %v2740
        %v2825 = vadd.f32 %v2793, %v2742
        %v2826 = vadd.f32 %v2794, %v2744
        %v2827 = vadd.f32 %v2795, %v2746
        %v2828 = vadd.f32 %v2796, %v2748
        %v2829 = vadd.f32 %v2797, %v2750
        %v2830 = vadd.f32 %v2798, %v2752
        %v2831 = vadd.f32 %v2799, %v2754
        %v2832 = vadd.f32 %v2800, %v2756
        %v2833 = vadd.f32 %v2801, %v2758
        %v2834 = vadd.f32 %v2802, %v2760
        %v2835 = vadd.f32 %v2803, %v2762
        %v2836 = vadd.f32 %v2804, %v2764
        %v2837 = vadd.f32 %v2805, %v2766
        %v2838 = vadd.f32 %v2806, %v2768
        %v2839 = vadd.f32 %v2807, %v2770
        %v2840 = vadd.f32 %v2808, %v2772
        %v2841 = vadd.f32 %v2809, %v2774
        %v2842 = vadd.f32 %v2810, %v2776
        %v2843 = vadd.f32 %v2811, %v2778
        %v2844 = vadd.f32 %v2812, %v2780
        %v2877 = vrot.slane %v2622, 1
        %v2878 = vrot.slane %v2624, 1
        %v2879 = vsel %vm874, %v2877, %v2878
        %v2880 = vrot.slane %v2626, 1
        %v2881 = vsel %vm874, %v2878, %v2880
        %v2882 = vrot.slane %v2628, 1
        %v2883 = vsel %vm874, %v2880, %v2882
        %v2884 = vrot.slane %v2630, 1
        %v2885 = vsel %vm874, %v2882, %v2884
        %v2886 = vrot.slane %v2632, 1
        %v2887 = vsel %vm874, %v2884, %v2886
        %v2888 = vrot.slane %v2634, 1
        %v2889 = vsel %vm874, %v2886, %v2888
        %v2890 = vrot.slane %v2636, 1
        %v2891 = vsel %vm874, %v2888, %v2890
        %v2892 = vrot.slane %v2638, 1
        %v2893 = vsel %vm874, %v2890, %v2892
        %v2894 = vrot.slane %v2640, 1
        %v2895 = vsel %vm874, %v2892, %v2894
        %v2896 = vrot.slane %v2642, 1
        %v2897 = vsel %vm874, %v2894, %v2896
        %v2898 = vrot.slane %v2644, 1
        %v2899 = vsel %vm874, %v2896, %v2898
        %v2900 = vrot.slane %v2646, 1
        %v2901 = vsel %vm874, %v2898, %v2900
        %v2902 = vrot.slane %v2648, 1
        %v2903 = vsel %vm874, %v2900, %v2902
        %v2904 = vrot.slane %v2650, 1
        %v2905 = vsel %vm874, %v2902, %v2904
        %v2906 = vrot.slane %v2652, 1
        %v2907 = vsel %vm874, %v2904, %v2906
        %v2908 = vrot.slane %v2654, 1
        %v2909 = vsel %vm874, %v2906, %v2908
        %v2910 = vrot.slane %v2656, 1
        %v2911 = vsel %vm874, %v2908, %v2910
        %v2912 = vrot.slane %v2658, 1
        %v2913 = vsel %vm874, %v2910, %v2912
        %v2914 = vrot.slane %v2660, 1
        %v2915 = vsel %vm874, %v2912, %v2914
        %v2916 = vrot.slane %v2662, 1
        %v2917 = vsel %vm874, %v2914, %v2916
        %v2918 = vrot.slane %v2664, 1
        %v2919 = vsel %vm874, %v2916, %v2918
        %v2920 = vrot.slane %v2666, 1
        %v2921 = vsel %vm874, %v2918, %v2920
        %v2922 = vrot.slane %v2668, 1
        %v2923 = vsel %vm874, %v2920, %v2922
        %v2924 = vrot.slane %v2670, 1
        %v2925 = vsel %vm874, %v2922, %v2924
        %v2926 = vrot.slane %v2672, 1
        %v2927 = vsel %vm874, %v2924, %v2926
        %v2928 = vrot.slane %v2674, 1
        %v2929 = vsel %vm874, %v2926, %v2928
        %v2930 = vrot.slane %v2676, 1
        %v2931 = vsel %vm874, %v2928, %v2930
        %v2932 = vrot.slane %v2678, 1
        %v2933 = vsel %vm874, %v2930, %v2932
        %v2934 = vrot.slane %v2680, 1
        %v2935 = vsel %vm874, %v2932, %v2934
        %v2936 = vrot.slane %v2682, 1
        %v2937 = vsel %vm874, %v2934, %v2936
        %v2938 = vrot.slane %v2684, 1
        %v2939 = vsel %vm874, %v2936, %v2938
        %v2973 = vmul.f32 %v2069, %v2877
        %v2974 = vmul.f32 %v2070, %v2879
        %v2975 = vmul.f32 %v2071, %v2881
        %v2976 = vmul.f32 %v2072, %v2883
        %v2977 = vmul.f32 %v2073, %v2885
        %v2978 = vmul.f32 %v2074, %v2887
        %v2979 = vmul.f32 %v2075, %v2889
        %v2980 = vmul.f32 %v2076, %v2891
        %v2981 = vmul.f32 %v2077, %v2893
        %v2982 = vmul.f32 %v2078, %v2895
        %v2983 = vmul.f32 %v2079, %v2897
        %v2984 = vmul.f32 %v2080, %v2899
        %v2985 = vmul.f32 %v2081, %v2901
        %v2986 = vmul.f32 %v2082, %v2903
        %v2987 = vmul.f32 %v2083, %v2905
        %v2988 = vmul.f32 %v2084, %v2907
        %v2989 = vmul.f32 %v2085, %v2909
        %v2990 = vmul.f32 %v2086, %v2911
        %v2991 = vmul.f32 %v2087, %v2913
        %v2992 = vmul.f32 %v2088, %v2915
        %v2993 = vmul.f32 %v2089, %v2917
        %v2994 = vmul.f32 %v2090, %v2919
        %v2995 = vmul.f32 %v2091, %v2921
        %v2996 = vmul.f32 %v2092, %v2923
        %v2997 = vmul.f32 %v2093, %v2925
        %v2998 = vmul.f32 %v2094, %v2927
        %v2999 = vmul.f32 %v2095, %v2929
        %v3000 = vmul.f32 %v2096, %v2931
        %v3001 = vmul.f32 %v2097, %v2933
        %v3002 = vmul.f32 %v2098, %v2935
        %v3003 = vmul.f32 %v2099, %v2937
        %v3004 = vmul.f32 %v2100, %v2939
        %v3005 = vmul.f32 %v2101, %v2938
        %v3039 = vrot.slane %v2294, 1
        %v3040 = vrot.slane %v2295, 1
        %v3041 = vsel %vm874, %v3039, %v3040
        %v3042 = vrot.slane %v2364, 1
        %v3043 = vsel %vm874, %v3040, %v3042
        %v3044 = vrot.slane %v2365, 1
        %v3045 = vsel %vm874, %v3042, %v3044
        %v3046 = vrot.slane %v2366, 1
        %v3047 = vsel %vm874, %v3044, %v3046
        %v3048 = vrot.slane %v2367, 1
        %v3049 = vsel %vm874, %v3046, %v3048
        %v3050 = vrot.slane %v2368, 1
        %v3051 = vsel %vm874, %v3048, %v3050
        %v3052 = vrot.slane %v2369, 1
        %v3053 = vsel %vm874, %v3050, %v3052
        %v3054 = vrot.slane %v2370, 1
        %v3055 = vsel %vm874, %v3052, %v3054
        %v3056 = vrot.slane %v2371, 1
        %v3057 = vsel %vm874, %v3054, %v3056
        %v3058 = vrot.slane %v2372, 1
        %v3059 = vsel %vm874, %v3056, %v3058
        %v3060 = vrot.slane %v2373, 1
        %v3061 = vsel %vm874, %v3058, %v3060
        %v3062 = vrot.slane %v2374, 1
        %v3063 = vsel %vm874, %v3060, %v3062
        %v3064 = vrot.slane %v2375, 1
        %v3065 = vsel %vm874, %v3062, %v3064
        %v3066 = vrot.slane %v2376, 1
        %v3067 = vsel %vm874, %v3064, %v3066
        %v3068 = vrot.slane %v2377, 1
        %v3069 = vsel %vm874, %v3066, %v3068
        %v3070 = vrot.slane %v2378, 1
        %v3071 = vsel %vm874, %v3068, %v3070
        %v3072 = vrot.slane %v2379, 1
        %v3073 = vsel %vm874, %v3070, %v3072
        %v3074 = vrot.slane %v2380, 1
        %v3075 = vsel %vm874, %v3072, %v3074
        %v3076 = vrot.slane %v2381, 1
        %v3077 = vsel %vm874, %v3074, %v3076
        %v3078 = vrot.slane %v2382, 1
        %v3079 = vsel %vm874, %v3076, %v3078
        %v3080 = vrot.slane %v2383, 1
        %v3081 = vsel %vm874, %v3078, %v3080
        %v3082 = vrot.slane %v2384, 1
        %v3083 = vsel %vm874, %v3080, %v3082
        %v3084 = vrot.slane %v2385, 1
        %v3085 = vsel %vm874, %v3082, %v3084
        %v3086 = vrot.slane %v2386, 1
        %v3087 = vsel %vm874, %v3084, %v3086
        %v3088 = vrot.slane %v2387, 1
        %v3089 = vsel %vm874, %v3086, %v3088
        %v3090 = vrot.slane %v2388, 1
        %v3091 = vsel %vm874, %v3088, %v3090
        %v3092 = vrot.slane %v2389, 1
        %v3093 = vsel %vm874, %v3090, %v3092
        %v3094 = vrot.slane %v2390, 1
        %v3095 = vsel %vm874, %v3092, %v3094
        %v3096 = vrot.slane %v2391, 1
        %v3097 = vsel %vm874, %v3094, %v3096
        %v3098 = vrot.slane %v2392, 1
        %v3099 = vsel %vm874, %v3096, %v3098
        %v3100 = vrot.slane %v2393, 1
        %v3101 = vsel %vm874, %v3098, %v3100
        %v3102 = vrot.slane %v2394, 1
        %v3103 = vsel %vm874, %v3100, %v3102
        %v3136 = vmul.f32 %v2718, %v3041
        %v3137 = vmul.f32 %v2720, %v3043
        %v3138 = vmul.f32 %v2722, %v3045
        %v3139 = vmul.f32 %v2724, %v3047
        %v3140 = vmul.f32 %v2726, %v3049
        %v3141 = vmul.f32 %v2728, %v3051
        %v3142 = vmul.f32 %v2730, %v3053
        %v3143 = vmul.f32 %v2732, %v3055
        %v3144 = vmul.f32 %v2734, %v3057
        %v3145 = vmul.f32 %v2736, %v3059
        %v3146 = vmul.f32 %v2738, %v3061
        %v3147 = vmul.f32 %v2740, %v3063
        %v3148 = vmul.f32 %v2742, %v3065
        %v3149 = vmul.f32 %v2744, %v3067
        %v3150 = vmul.f32 %v2746, %v3069
        %v3151 = vmul.f32 %v2748, %v3071
        %v3152 = vmul.f32 %v2750, %v3073
        %v3153 = vmul.f32 %v2752, %v3075
        %v3154 = vmul.f32 %v2754, %v3077
        %v3155 = vmul.f32 %v2756, %v3079
        %v3156 = vmul.f32 %v2758, %v3081
        %v3157 = vmul.f32 %v2760, %v3083
        %v3158 = vmul.f32 %v2762, %v3085
        %v3159 = vmul.f32 %v2764, %v3087
        %v3160 = vmul.f32 %v2766, %v3089
        %v3161 = vmul.f32 %v2768, %v3091
        %v3162 = vmul.f32 %v2770, %v3093
        %v3163 = vmul.f32 %v2772, %v3095
        %v3164 = vmul.f32 %v2774, %v3097
        %v3165 = vmul.f32 %v2776, %v3099
        %v3166 = vmul.f32 %v2778, %v3101
        %v3167 = vmul.f32 %v2780, %v3103
        %v3200 = vrot.slane %v3136, 1
        %v3201 = vrot.slane %v3137, 1
        %v3202 = vsel %vm874, %v3200, %v3201
        %v3203 = vrot.slane %v3138, 1
        %v3204 = vsel %vm874, %v3201, %v3203
        %v3205 = vrot.slane %v3139, 1
        %v3206 = vsel %vm874, %v3203, %v3205
        %v3207 = vrot.slane %v3140, 1
        %v3208 = vsel %vm874, %v3205, %v3207
        %v3209 = vrot.slane %v3141, 1
        %v3210 = vsel %vm874, %v3207, %v3209
        %v3211 = vrot.slane %v3142, 1
        %v3212 = vsel %vm874, %v3209, %v3211
        %v3213 = vrot.slane %v3143, 1
        %v3214 = vsel %vm874, %v3211, %v3213
        %v3215 = vrot.slane %v3144, 1
        %v3216 = vsel %vm874, %v3213, %v3215
        %v3217 = vrot.slane %v3145, 1
        %v3218 = vsel %vm874, %v3215, %v3217
        %v3219 = vrot.slane %v3146, 1
        %v3220 = vsel %vm874, %v3217, %v3219
        %v3221 = vrot.slane %v3147, 1
        %v3222 = vsel %vm874, %v3219, %v3221
        %v3223 = vrot.slane %v3148, 1
        %v3224 = vsel %vm874, %v3221, %v3223
        %v3225 = vrot.slane %v3149, 1
        %v3226 = vsel %vm874, %v3223, %v3225
        %v3227 = vrot.slane %v3150, 1
        %v3228 = vsel %vm874, %v3225, %v3227
        %v3229 = vrot.slane %v3151, 1
        %v3230 = vsel %vm874, %v3227, %v3229
        %v3231 = vrot.slane %v3152, 1
        %v3232 = vsel %vm874, %v3229, %v3231
        %v3233 = vrot.slane %v3153, 1
        %v3234 = vsel %vm874, %v3231, %v3233
        %v3235 = vrot.slane %v3154, 1
        %v3236 = vsel %vm874, %v3233, %v3235
        %v3237 = vrot.slane %v3155, 1
        %v3238 = vsel %vm874, %v3235, %v3237
        %v3239 = vrot.slane %v3156, 1
        %v3240 = vsel %vm874, %v3237, %v3239
        %v3241 = vrot.slane %v3157, 1
        %v3242 = vsel %vm874, %v3239, %v3241
        %v3243 = vrot.slane %v3158, 1
        %v3244 = vsel %vm874, %v3241, %v3243
        %v3245 = vrot.slane %v3159, 1
        %v3246 = vsel %vm874, %v3243, %v3245
        %v3247 = vrot.slane %v3160, 1
        %v3248 = vsel %vm874, %v3245, %v3247
        %v3249 = vrot.slane %v3161, 1
        %v3250 = vsel %vm874, %v3247, %v3249
        %v3251 = vrot.slane %v3162, 1
        %v3252 = vsel %vm874, %v3249, %v3251
        %v3253 = vrot.slane %v3163, 1
        %v3254 = vsel %vm874, %v3251, %v3253
        %v3255 = vrot.slane %v3164, 1
        %v3256 = vsel %vm874, %v3253, %v3255
        %v3257 = vrot.slane %v3165, 1
        %v3258 = vsel %vm874, %v3255, %v3257
        %v3259 = vrot.slane %v3166, 1
        %v3260 = vsel %vm874, %v3257, %v3259
        %v3261 = vrot.slane %v3167, 1
        %v3262 = vsel %vm874, %v3259, %v3261
        %v3296 = vadd.f32 %v2973, %v3200
        %v3297 = vadd.f32 %v2974, %v3202
        %v3298 = vadd.f32 %v2975, %v3204
        %v3299 = vadd.f32 %v2976, %v3206
        %v3300 = vadd.f32 %v2977, %v3208
        %v3301 = vadd.f32 %v2978, %v3210
        %v3302 = vadd.f32 %v2979, %v3212
        %v3303 = vadd.f32 %v2980, %v3214
        %v3304 = vadd.f32 %v2981, %v3216
        %v3305 = vadd.f32 %v2982, %v3218
        %v3306 = vadd.f32 %v2983, %v3220
        %v3307 = vadd.f32 %v2984, %v3222
        %v3308 = vadd.f32 %v2985, %v3224
        %v3309 = vadd.f32 %v2986, %v3226
        %v3310 = vadd.f32 %v2987, %v3228
        %v3311 = vadd.f32 %v2988, %v3230
        %v3312 = vadd.f32 %v2989, %v3232
        %v3313 = vadd.f32 %v2990, %v3234
        %v3314 = vadd.f32 %v2991, %v3236
        %v3315 = vadd.f32 %v2992, %v3238
        %v3316 = vadd.f32 %v2993, %v3240
        %v3317 = vadd.f32 %v2994, %v3242
        %v3318 = vadd.f32 %v2995, %v3244
        %v3319 = vadd.f32 %v2996, %v3246
        %v3320 = vadd.f32 %v2997, %v3248
        %v3321 = vadd.f32 %v2998, %v3250
        %v3322 = vadd.f32 %v2999, %v3252
        %v3323 = vadd.f32 %v3000, %v3254
        %v3324 = vadd.f32 %v3001, %v3256
        %v3325 = vadd.f32 %v3002, %v3258
        %v3326 = vadd.f32 %v3003, %v3260
        %v3327 = vadd.f32 %v3004, %v3262
        %v3328 = vadd.f32 %v3005, %v3261
        %v3329 = vmul.f32 %v617, %v877
        %v3330 = vmul.f32 %v619, %v879
        %v3331 = vmul.f32 %v621, %v881
        %v3332 = vmul.f32 %v623, %v883
        %v3333 = vmul.f32 %v625, %v885
        %v3334 = vmul.f32 %v627, %v887
        %v3335 = vmul.f32 %v629, %v889
        %v3336 = vmul.f32 %v631, %v891
        %v3337 = vmul.f32 %v633, %v893
        %v3338 = vmul.f32 %v635, %v895
        %v3339 = vmul.f32 %v637, %v897
        %v3340 = vmul.f32 %v639, %v899
        %v3341 = vmul.f32 %v641, %v901
        %v3342 = vmul.f32 %v643, %v903
        %v3343 = vmul.f32 %v645, %v905
        %v3344 = vmul.f32 %v647, %v907
        %v3345 = vmul.f32 %v649, %v909
        %v3346 = vmul.f32 %v651, %v911
        %v3347 = vmul.f32 %v653, %v913
        %v3348 = vmul.f32 %v655, %v915
        %v3349 = vmul.f32 %v657, %v917
        %v3350 = vmul.f32 %v659, %v919
        %v3351 = vmul.f32 %v661, %v921
        %v3352 = vmul.f32 %v663, %v923
        %v3353 = vmul.f32 %v665, %v925
        %v3354 = vmul.f32 %v667, %v927
        %v3355 = vmul.f32 %v669, %v929
        %v3356 = vmul.f32 %v671, %v931
        %v3357 = vmul.f32 %v673, %v933
        %v3358 = vmul.f32 %v675, %v935
        %v3359 = vmul.f32 %v677, %v937
        %v3360 = vmul.f32 %v679, %v936
        %v3361 = vlaneseq
        %v3362 = vshrl.u32 %v3361, 7
        %v3363 = vsub.s32 3, %v3362
        %v3364 = vrot.slane %v712, %v3363
        %v3365 = vadd.f32 %v971, %v3364
        %v3366 = vadd.f32 %v3329, %v3364
        %v3367 = vadd.f32 %v3330, %v3364
        %v3368 = vadd.f32 %v3331, %v3364
        %v3369 = vadd.f32 %v3332, %v3364
        %v3370 = vadd.f32 %v3333, %v3364
        %v3371 = vadd.f32 %v3334, %v3364
        %v3372 = vadd.f32 %v3335, %v3364
        %v3373 = vadd.f32 %v3336, %v3364
        %v3374 = vadd.f32 %v3337, %v3364
        %v3375 = vadd.f32 %v3338, %v3364
        %v3376 = vadd.f32 %v3339, %v3364
        %v3377 = vadd.f32 %v3340, %v3364
        %v3378 = vadd.f32 %v3341, %v3364
        %v3379 = vadd.f32 %v3342, %v3364
        %v3380 = vadd.f32 %v3343, %v3364
        %v3381 = vadd.f32 %v3344, %v3364
        %v3382 = vadd.f32 %v3345, %v3364
        %v3383 = vadd.f32 %v3346, %v3364
        %v3384 = vadd.f32 %v3347, %v3364
        %v3385 = vadd.f32 %v3348, %v3364
        %v3386 = vadd.f32 %v3349, %v3364
        %v3387 = vadd.f32 %v3350, %v3364
        %v3388 = vadd.f32 %v3351, %v3364
        %v3389 = vadd.f32 %v3352, %v3364
        %v3390 = vadd.f32 %v3353, %v3364
        %v3391 = vadd.f32 %v3354, %v3364
        %v3392 = vadd.f32 %v3355, %v3364
        %v3393 = vadd.f32 %v3356, %v3364
        %v3394 = vadd.f32 %v3357, %v3364
        %v3395 = vadd.f32 %v3358, %v3364
        %v3396 = vadd.f32 %v3359, %v3364
        %v3397 = vadd.f32 %v3360, %v3364
        %v3398 = vmul.f32 %v396, %v877
        %v3399 = vmul.f32 %v402, %v879
        %v3400 = vmul.f32 %v408, %v881
        %v3401 = vmul.f32 %v414, %v883
        %v3402 = vmul.f32 %v420, %v885
        %v3403 = vmul.f32 %v426, %v887
        %v3404 = vmul.f32 %v432, %v889
        %v3405 = vmul.f32 %v438, %v891
        %v3406 = vmul.f32 %v444, %v893
        %v3407 = vmul.f32 %v450, %v895
        %v3408 = vmul.f32 %v456, %v897
        %v3409 = vmul.f32 %v462, %v899
        %v3410 = vmul.f32 %v468, %v901
        %v3411 = vmul.f32 %v474, %v903
        %v3412 = vmul.f32 %v480, %v905
        %v3413 = vmul.f32 %v486, %v907
        %v3414 = vmul.f32 %v492, %v909
        %v3415 = vmul.f32 %v498, %v911
        %v3416 = vmul.f32 %v504, %v913
        %v3417 = vmul.f32 %v510, %v915
        %v3418 = vmul.f32 %v516, %v917
        %v3419 = vmul.f32 %v522, %v919
        %v3420 = vmul.f32 %v528, %v921
        %v3421 = vmul.f32 %v534, %v923
        %v3422 = vmul.f32 %v540, %v925
        %v3423 = vmul.f32 %v546, %v927
        %v3424 = vmul.f32 %v552, %v929
        %v3425 = vmul.f32 %v558, %v931
        %v3426 = vmul.f32 %v564, %v933
        %v3427 = vmul.f32 %v570, %v935
        %v3428 = vmul.f32 %v576, %v937
        %v3429 = vmul.f32 %v582, %v936
        %v3463 = vrot.slane %v3365, 7
        %v3464 = vrot.slane %v3366, 7
        %v3465 = vsel %vm1104, %v3463, %v3464
        %v3466 = vrot.slane %v3367, 7
        %v3467 = vsel %vm1104, %v3464, %v3466
        %v3468 = vrot.slane %v3368, 7
        %v3469 = vsel %vm1104, %v3466, %v3468
        %v3470 = vrot.slane %v3369, 7
        %v3471 = vsel %vm1104, %v3468, %v3470
        %v3472 = vrot.slane %v3370, 7
        %v3473 = vsel %vm1104, %v3470, %v3472
        %v3474 = vrot.slane %v3371, 7
        %v3475 = vsel %vm1104, %v3472, %v3474
        %v3476 = vrot.slane %v3372, 7
        %v3477 = vsel %vm1104, %v3474, %v3476
        %v3478 = vrot.slane %v3373, 7
        %v3479 = vsel %vm1104, %v3476, %v3478
        %v3480 = vrot.slane %v3374, 7
        %v3481 = vsel %vm1104, %v3478, %v3480
        %v3482 = vrot.slane %v3375, 7
        %v3483 = vsel %vm1104, %v3480, %v3482
        %v3484 = vrot.slane %v3376, 7
        %v3485 = vsel %vm1104, %v3482, %v3484
        %v3486 = vrot.slane %v3377, 7
        %v3487 = vsel %vm1104, %v3484, %v3486
        %v3488 = vrot.slane %v3378, 7
        %v3489 = vsel %vm1104, %v3486, %v3488
        %v3490 = vrot.slane %v3379, 7
        %v3491 = vsel %vm1104, %v3488, %v3490
        %v3492 = vrot.slane %v3380, 7
        %v3493 = vsel %vm1104, %v3490, %v3492
        %v3494 = vrot.slane %v3381, 7
        %v3495 = vsel %vm1104, %v3492, %v3494
        %v3496 = vrot.slane %v3382, 7
        %v3497 = vsel %vm1104, %v3494, %v3496
        %v3498 = vrot.slane %v3383, 7
        %v3499 = vsel %vm1104, %v3496, %v3498
        %v3500 = vrot.slane %v3384, 7
        %v3501 = vsel %vm1104, %v3498, %v3500
        %v3502 = vrot.slane %v3385, 7
        %v3503 = vsel %vm1104, %v3500, %v3502
        %v3504 = vrot.slane %v3386, 7
        %v3505 = vsel %vm1104, %v3502, %v3504
        %v3506 = vrot.slane %v3387, 7
        %v3507 = vsel %vm1104, %v3504, %v3506
        %v3508 = vrot.slane %v3388, 7
        %v3509 = vsel %vm1104, %v3506, %v3508
        %v3510 = vrot.slane %v3389, 7
        %v3511 = vsel %vm1104, %v3508, %v3510
        %v3512 = vrot.slane %v3390, 7
        %v3513 = vsel %vm1104, %v3510, %v3512
        %v3514 = vrot.slane %v3391, 7
        %v3515 = vsel %vm1104, %v3512, %v3514
        %v3516 = vrot.slane %v3392, 7
        %v3517 = vsel %vm1104, %v3514, %v3516
        %v3518 = vrot.slane %v3393, 7
        %v3519 = vsel %vm1104, %v3516, %v3518
        %v3520 = vrot.slane %v3394, 7
        %v3521 = vsel %vm1104, %v3518, %v3520
        %v3522 = vrot.slane %v3395, 7
        %v3523 = vsel %vm1104, %v3520, %v3522
        %v3524 = vrot.slane %v3396, 7
        %v3525 = vsel %vm1104, %v3522, %v3524
        %v3526 = vrot.slane %v3397, 7
        %v3527 = vsel %vm1104, %v3524, %v3526
        %v3560 = vmul.f32 %v394, %v3465
        %v3561 = vmul.f32 %v400, %v3467
        %v3562 = vmul.f32 %v406, %v3469
        %v3563 = vmul.f32 %v412, %v3471
        %v3564 = vmul.f32 %v418, %v3473
        %v3565 = vmul.f32 %v424, %v3475
        %v3566 = vmul.f32 %v430, %v3477
        %v3567 = vmul.f32 %v436, %v3479
        %v3568 = vmul.f32 %v442, %v3481
        %v3569 = vmul.f32 %v448, %v3483
        %v3570 = vmul.f32 %v454, %v3485
        %v3571 = vmul.f32 %v460, %v3487
        %v3572 = vmul.f32 %v466, %v3489
        %v3573 = vmul.f32 %v472, %v3491
        %v3574 = vmul.f32 %v478, %v3493
        %v3575 = vmul.f32 %v484, %v3495
        %v3576 = vmul.f32 %v490, %v3497
        %v3577 = vmul.f32 %v496, %v3499
        %v3578 = vmul.f32 %v502, %v3501
        %v3579 = vmul.f32 %v508, %v3503
        %v3580 = vmul.f32 %v514, %v3505
        %v3581 = vmul.f32 %v520, %v3507
        %v3582 = vmul.f32 %v526, %v3509
        %v3583 = vmul.f32 %v532, %v3511
        %v3584 = vmul.f32 %v538, %v3513
        %v3585 = vmul.f32 %v544, %v3515
        %v3586 = vmul.f32 %v550, %v3517
        %v3587 = vmul.f32 %v556, %v3519
        %v3588 = vmul.f32 %v562, %v3521
        %v3589 = vmul.f32 %v568, %v3523
        %v3590 = vmul.f32 %v574, %v3525
        %v3591 = vmul.f32 %v580, %v3527
        %v3592 = vmax.f32 %v2557, %v3560
        %v3593 = vmax.f32 %v2558, %v3561
        %v3594 = vmax.f32 %v2559, %v3562
        %v3595 = vmax.f32 %v2560, %v3563
        %v3596 = vmax.f32 %v2561, %v3564
        %v3597 = vmax.f32 %v2562, %v3565
        %v3598 = vmax.f32 %v2563, %v3566
        %v3599 = vmax.f32 %v2564, %v3567
        %v3600 = vmax.f32 %v2565, %v3568
        %v3601 = vmax.f32 %v2566, %v3569
        %v3602 = vmax.f32 %v2567, %v3570
        %v3603 = vmax.f32 %v2568, %v3571
        %v3604 = vmax.f32 %v2569, %v3572
        %v3605 = vmax.f32 %v2570, %v3573
        %v3606 = vmax.f32 %v2571, %v3574
        %v3607 = vmax.f32 %v2572, %v3575
        %v3608 = vmax.f32 %v2573, %v3576
        %v3609 = vmax.f32 %v2574, %v3577
        %v3610 = vmax.f32 %v2575, %v3578
        %v3611 = vmax.f32 %v2576, %v3579
        %v3612 = vmax.f32 %v2577, %v3580
        %v3613 = vmax.f32 %v2578, %v3581
        %v3614 = vmax.f32 %v2579, %v3582
        %v3615 = vmax.f32 %v2580, %v3583
        %v3616 = vmax.f32 %v2581, %v3584
        %v3617 = vmax.f32 %v2582, %v3585
        %v3618 = vmax.f32 %v2583, %v3586
        %v3619 = vmax.f32 %v2584, %v3587
        %v3620 = vmax.f32 %v2585, %v3588
        %v3621 = vmax.f32 %v2586, %v3589
        %v3622 = vmax.f32 %v2587, %v3590
        %v3623 = vmax.f32 %v2588, %v3591
        %v3624 = vsub.f32 %v2557, %v3592
        %v3625 = vsub.f32 %v2558, %v3593
        %v3626 = vsub.f32 %v2559, %v3594
        %v3627 = vsub.f32 %v2560, %v3595
        %v3628 = vsub.f32 %v2561, %v3596
        %v3629 = vsub.f32 %v2562, %v3597
        %v3630 = vsub.f32 %v2563, %v3598
        %v3631 = vsub.f32 %v2564, %v3599
        %v3632 = vsub.f32 %v2565, %v3600
        %v3633 = vsub.f32 %v2566, %v3601
        %v3634 = vsub.f32 %v2567, %v3602
        %v3635 = vsub.f32 %v2568, %v3603
        %v3636 = vsub.f32 %v2569, %v3604
        %v3637 = vsub.f32 %v2570, %v3605
        %v3638 = vsub.f32 %v2571, %v3606
        %v3639 = vsub.f32 %v2572, %v3607
        %v3640 = vsub.f32 %v2573, %v3608
        %v3641 = vsub.f32 %v2574, %v3609
        %v3642 = vsub.f32 %v2575, %v3610
        %v3643 = vsub.f32 %v2576, %v3611
        %v3644 = vsub.f32 %v2577, %v3612
        %v3645 = vsub.f32 %v2578, %v3613
        %v3646 = vsub.f32 %v2579, %v3614
        %v3647 = vsub.f32 %v2580, %v3615
        %v3648 = vsub.f32 %v2581, %v3616
        %v3649 = vsub.f32 %v2582, %v3617
        %v3650 = vsub.f32 %v2583, %v3618
        %v3651 = vsub.f32 %v2584, %v3619
        %v3652 = vsub.f32 %v2585, %v3620
        %v3653 = vsub.f32 %v2586, %v3621
        %v3654 = vsub.f32 %v2587, %v3622
        %v3655 = vsub.f32 %v2588, %v3623
        %v3656 = vmul.f32 %v3624, 1.442695
        %v3657 = vpow.pop %v3656
        %v3658 = vmul.f32 %v3625, 1.442695
        %v3659 = vpow.pop %v3658
        %v3660 = vmul.f32 %v3626, 1.442695
        %v3661 = vpow.pop %v3660
        %v3662 = vmul.f32 %v3627, 1.442695
        %v3663 = vpow.pop %v3662
        %v3664 = vmul.f32 %v3628, 1.442695
        %v3665 = vpow.pop %v3664
        %v3666 = vmul.f32 %v3629, 1.442695
        %v3667 = vpow.pop %v3666
        %v3668 = vmul.f32 %v3630, 1.442695
        %v3669 = vpow.pop %v3668
        %v3670 = vmul.f32 %v3631, 1.442695
        %v3671 = vpow.pop %v3670
        %v3672 = vmul.f32 %v3632, 1.442695
        %v3673 = vpow.pop %v3672
        %v3674 = vmul.f32 %v3633, 1.442695
        %v3675 = vpow.pop %v3674
        %v3676 = vmul.f32 %v3634, 1.442695
        %v3677 = vpow.pop %v3676
        %v3678 = vmul.f32 %v3635, 1.442695
        %v3679 = vpow.pop %v3678
        %v3680 = vmul.f32 %v3636, 1.442695
        %v3681 = vpow.pop %v3680
        %v3682 = vmul.f32 %v3637, 1.442695
        %v3683 = vpow.pop %v3682
        %v3684 = vmul.f32 %v3638, 1.442695
        %v3685 = vpow.pop %v3684
        %v3686 = vmul.f32 %v3639, 1.442695
        %v3687 = vpow.pop %v3686
        %v3688 = vmul.f32 %v3640, 1.442695
        %v3689 = vpow.pop %v3688
        %v3690 = vmul.f32 %v3641, 1.442695
        %v3691 = vpow.pop %v3690
        %v3692 = vmul.f32 %v3642, 1.442695
        %v3693 = vpow.pop %v3692
        %v3694 = vmul.f32 %v3643, 1.442695
        %v3695 = vpow.pop %v3694
        %v3696 = vmul.f32 %v3644, 1.442695
        %v3697 = vpow.pop %v3696
        %v3698 = vmul.f32 %v3645, 1.442695
        %v3699 = vpow.pop %v3698
        %v3700 = vmul.f32 %v3646, 1.442695
        %v3701 = vpow.pop %v3700
        %v3702 = vmul.f32 %v3647, 1.442695
        %v3703 = vpow.pop %v3702
        %v3704 = vmul.f32 %v3648, 1.442695
        %v3705 = vpow.pop %v3704
        %v3706 = vmul.f32 %v3649, 1.442695
        %v3707 = vpow.pop %v3706
        %v3708 = vmul.f32 %v3650, 1.442695
        %v3709 = vpow.pop %v3708
        %v3710 = vmul.f32 %v3651, 1.442695
        %v3711 = vpow.pop %v3710
        %v3712 = vmul.f32 %v3652, 1.442695
        %v3713 = vpow.pop %v3712
        %v3714 = vmul.f32 %v3653, 1.442695
        %v3715 = vpow.pop %v3714
        %v3716 = vmul.f32 %v3654, 1.442695
        %v3717 = vpow.pop %v3716
        %v3718 = vmul.f32 %v3655, 1.442695
        %v3719 = vpow.pop %v3718
        %v3720 = vsub.f32 %v3560, %v3592
        %v3721 = vsub.f32 %v3561, %v3593
        %v3722 = vsub.f32 %v3562, %v3594
        %v3723 = vsub.f32 %v3563, %v3595
        %v3724 = vsub.f32 %v3564, %v3596
        %v3725 = vsub.f32 %v3565, %v3597
        %v3726 = vsub.f32 %v3566, %v3598
        %v3727 = vsub.f32 %v3567, %v3599
        %v3728 = vsub.f32 %v3568, %v3600
        %v3729 = vsub.f32 %v3569, %v3601
        %v3730 = vsub.f32 %v3570, %v3602
        %v3731 = vsub.f32 %v3571, %v3603
        %v3732 = vsub.f32 %v3572, %v3604
        %v3733 = vsub.f32 %v3573, %v3605
        %v3734 = vsub.f32 %v3574, %v3606
        %v3735 = vsub.f32 %v3575, %v3607
        %v3736 = vsub.f32 %v3576, %v3608
        %v3737 = vsub.f32 %v3577, %v3609
        %v3738 = vsub.f32 %v3578, %v3610
        %v3739 = vsub.f32 %v3579, %v3611
        %v3740 = vsub.f32 %v3580, %v3612
        %v3741 = vsub.f32 %v3581, %v3613
        %v3742 = vsub.f32 %v3582, %v3614
        %v3743 = vsub.f32 %v3583, %v3615
        %v3744 = vsub.f32 %v3584, %v3616
        %v3745 = vsub.f32 %v3585, %v3617
        %v3746 = vsub.f32 %v3586, %v3618
        %v3747 = vsub.f32 %v3587, %v3619
        %v3748 = vsub.f32 %v3588, %v3620
        %v3749 = vsub.f32 %v3589, %v3621
        %v3750 = vsub.f32 %v3590, %v3622
        %v3751 = vsub.f32 %v3591, %v3623
        %v3752 = vmul.f32 %v3720, 1.442695
        %v3753 = vpow.pop %v3752
        %v3754 = vmul.f32 %v3721, 1.442695
        %v3755 = vpow.pop %v3754
        %v3756 = vmul.f32 %v3722, 1.442695
        %v3757 = vpow.pop %v3756
        %v3758 = vmul.f32 %v3723, 1.442695
        %v3759 = vpow.pop %v3758
        %v3760 = vmul.f32 %v3724, 1.442695
        %v3761 = vpow.pop %v3760
        %v3762 = vmul.f32 %v3725, 1.442695
        %v3763 = vpow.pop %v3762
        %v3764 = vmul.f32 %v3726, 1.442695
        %v3765 = vpow.pop %v3764
        %v3766 = vmul.f32 %v3727, 1.442695
        %v3767 = vpow.pop %v3766
        %v3768 = vmul.f32 %v3728, 1.442695
        %v3769 = vpow.pop %v3768
        %v3770 = vmul.f32 %v3729, 1.442695
        %v3771 = vpow.pop %v3770
        %v3772 = vmul.f32 %v3730, 1.442695
        %v3773 = vpow.pop %v3772
        %v3774 = vmul.f32 %v3731, 1.442695
        %v3775 = vpow.pop %v3774
        %v3776 = vmul.f32 %v3732, 1.442695
        %v3777 = vpow.pop %v3776
        %v3778 = vmul.f32 %v3733, 1.442695
        %v3779 = vpow.pop %v3778
        %v3780 = vmul.f32 %v3734, 1.442695
        %v3781 = vpow.pop %v3780
        %v3782 = vmul.f32 %v3735, 1.442695
        %v3783 = vpow.pop %v3782
        %v3784 = vmul.f32 %v3736, 1.442695
        %v3785 = vpow.pop %v3784
        %v3786 = vmul.f32 %v3737, 1.442695
        %v3787 = vpow.pop %v3786
        %v3788 = vmul.f32 %v3738, 1.442695
        %v3789 = vpow.pop %v3788
        %v3790 = vmul.f32 %v3739, 1.442695
        %v3791 = vpow.pop %v3790
        %v3792 = vmul.f32 %v3740, 1.442695
        %v3793 = vpow.pop %v3792
        %v3794 = vmul.f32 %v3741, 1.442695
        %v3795 = vpow.pop %v3794
        %v3796 = vmul.f32 %v3742, 1.442695
        %v3797 = vpow.pop %v3796
        %v3798 = vmul.f32 %v3743, 1.442695
        %v3799 = vpow.pop %v3798
        %v3800 = vmul.f32 %v3744, 1.442695
        %v3801 = vpow.pop %v3800
        %v3802 = vmul.f32 %v3745, 1.442695
        %v3803 = vpow.pop %v3802
        %v3804 = vmul.f32 %v3746, 1.442695
        %v3805 = vpow.pop %v3804
        %v3806 = vmul.f32 %v3747, 1.442695
        %v3807 = vpow.pop %v3806
        %v3808 = vmul.f32 %v3748, 1.442695
        %v3809 = vpow.pop %v3808
        %v3810 = vmul.f32 %v3749, 1.442695
        %v3811 = vpow.pop %v3810
        %v3812 = vmul.f32 %v3750, 1.442695
        %v3813 = vpow.pop %v3812
        %v3814 = vmul.f32 %v3751, 1.442695
        %v3815 = vpow.pop %v3814
        %v3816 = vmul.f32 %v2813, %v3657
        %v3817 = vmul.f32 %v2814, %v3659
        %v3818 = vmul.f32 %v2815, %v3661
        %v3819 = vmul.f32 %v2816, %v3663
        %v3820 = vmul.f32 %v2817, %v3665
        %v3821 = vmul.f32 %v2818, %v3667
        %v3822 = vmul.f32 %v2819, %v3669
        %v3823 = vmul.f32 %v2820, %v3671
        %v3824 = vmul.f32 %v2821, %v3673
        %v3825 = vmul.f32 %v2822, %v3675
        %v3826 = vmul.f32 %v2823, %v3677
        %v3827 = vmul.f32 %v2824, %v3679
        %v3828 = vmul.f32 %v2825, %v3681
        %v3829 = vmul.f32 %v2826, %v3683
        %v3830 = vmul.f32 %v2827, %v3685
        %v3831 = vmul.f32 %v2828, %v3687
        %v3832 = vmul.f32 %v2829, %v3689
        %v3833 = vmul.f32 %v2830, %v3691
        %v3834 = vmul.f32 %v2831, %v3693
        %v3835 = vmul.f32 %v2832, %v3695
        %v3836 = vmul.f32 %v2833, %v3697
        %v3837 = vmul.f32 %v2834, %v3699
        %v3838 = vmul.f32 %v2835, %v3701
        %v3839 = vmul.f32 %v2836, %v3703
        %v3840 = vmul.f32 %v2837, %v3705
        %v3841 = vmul.f32 %v2838, %v3707
        %v3842 = vmul.f32 %v2839, %v3709
        %v3843 = vmul.f32 %v2840, %v3711
        %v3844 = vmul.f32 %v2841, %v3713
        %v3845 = vmul.f32 %v2842, %v3715
        %v3846 = vmul.f32 %v2843, %v3717
        %v3847 = vmul.f32 %v2844, %v3719
        %v3848 = vadd.f32 %v3816, %v3753
        %v3849 = vadd.f32 %v3817, %v3755
        %v3850 = vadd.f32 %v3818, %v3757
        %v3851 = vadd.f32 %v3819, %v3759
        %v3852 = vadd.f32 %v3820, %v3761
        %v3853 = vadd.f32 %v3821, %v3763
        %v3854 = vadd.f32 %v3822, %v3765
        %v3855 = vadd.f32 %v3823, %v3767
        %v3856 = vadd.f32 %v3824, %v3769
        %v3857 = vadd.f32 %v3825, %v3771
        %v3858 = vadd.f32 %v3826, %v3773
        %v3859 = vadd.f32 %v3827, %v3775
        %v3860 = vadd.f32 %v3828, %v3777
        %v3861 = vadd.f32 %v3829, %v3779
        %v3862 = vadd.f32 %v3830, %v3781
        %v3863 = vadd.f32 %v3831, %v3783
        %v3864 = vadd.f32 %v3832, %v3785
        %v3865 = vadd.f32 %v3833, %v3787
        %v3866 = vadd.f32 %v3834, %v3789
        %v3867 = vadd.f32 %v3835, %v3791
        %v3868 = vadd.f32 %v3836, %v3793
        %v3869 = vadd.f32 %v3837, %v3795
        %v3870 = vadd.f32 %v3838, %v3797
        %v3871 = vadd.f32 %v3839, %v3799
        %v3872 = vadd.f32 %v3840, %v3801
        %v3873 = vadd.f32 %v3841, %v3803
        %v3874 = vadd.f32 %v3842, %v3805
        %v3875 = vadd.f32 %v3843, %v3807
        %v3876 = vadd.f32 %v3844, %v3809
        %v3877 = vadd.f32 %v3845, %v3811
        %v3878 = vadd.f32 %v3846, %v3813
        %v3879 = vadd.f32 %v3847, %v3815
        %v3912 = vrot.slane %v3657, 1
        %v3913 = vrot.slane %v3659, 1
        %v3914 = vsel %vm874, %v3912, %v3913
        %v3915 = vrot.slane %v3661, 1
        %v3916 = vsel %vm874, %v3913, %v3915
        %v3917 = vrot.slane %v3663, 1
        %v3918 = vsel %vm874, %v3915, %v3917
        %v3919 = vrot.slane %v3665, 1
        %v3920 = vsel %vm874, %v3917, %v3919
        %v3921 = vrot.slane %v3667, 1
        %v3922 = vsel %vm874, %v3919, %v3921
        %v3923 = vrot.slane %v3669, 1
        %v3924 = vsel %vm874, %v3921, %v3923
        %v3925 = vrot.slane %v3671, 1
        %v3926 = vsel %vm874, %v3923, %v3925
        %v3927 = vrot.slane %v3673, 1
        %v3928 = vsel %vm874, %v3925, %v3927
        %v3929 = vrot.slane %v3675, 1
        %v3930 = vsel %vm874, %v3927, %v3929
        %v3931 = vrot.slane %v3677, 1
        %v3932 = vsel %vm874, %v3929, %v3931
        %v3933 = vrot.slane %v3679, 1
        %v3934 = vsel %vm874, %v3931, %v3933
        %v3935 = vrot.slane %v3681, 1
        %v3936 = vsel %vm874, %v3933, %v3935
        %v3937 = vrot.slane %v3683, 1
        %v3938 = vsel %vm874, %v3935, %v3937
        %v3939 = vrot.slane %v3685, 1
        %v3940 = vsel %vm874, %v3937, %v3939
        %v3941 = vrot.slane %v3687, 1
        %v3942 = vsel %vm874, %v3939, %v3941
        %v3943 = vrot.slane %v3689, 1
        %v3944 = vsel %vm874, %v3941, %v3943
        %v3945 = vrot.slane %v3691, 1
        %v3946 = vsel %vm874, %v3943, %v3945
        %v3947 = vrot.slane %v3693, 1
        %v3948 = vsel %vm874, %v3945, %v3947
        %v3949 = vrot.slane %v3695, 1
        %v3950 = vsel %vm874, %v3947, %v3949
        %v3951 = vrot.slane %v3697, 1
        %v3952 = vsel %vm874, %v3949, %v3951
        %v3953 = vrot.slane %v3699, 1
        %v3954 = vsel %vm874, %v3951, %v3953
        %v3955 = vrot.slane %v3701, 1
        %v3956 = vsel %vm874, %v3953, %v3955
        %v3957 = vrot.slane %v3703, 1
        %v3958 = vsel %vm874, %v3955, %v3957
        %v3959 = vrot.slane %v3705, 1
        %v3960 = vsel %vm874, %v3957, %v3959
        %v3961 = vrot.slane %v3707, 1
        %v3962 = vsel %vm874, %v3959, %v3961
        %v3963 = vrot.slane %v3709, 1
        %v3964 = vsel %vm874, %v3961, %v3963
        %v3965 = vrot.slane %v3711, 1
        %v3966 = vsel %vm874, %v3963, %v3965
        %v3967 = vrot.slane %v3713, 1
        %v3968 = vsel %vm874, %v3965, %v3967
        %v3969 = vrot.slane %v3715, 1
        %v3970 = vsel %vm874, %v3967, %v3969
        %v3971 = vrot.slane %v3717, 1
        %v3972 = vsel %vm874, %v3969, %v3971
        %v3973 = vrot.slane %v3719, 1
        %v3974 = vsel %vm874, %v3971, %v3973
        %v4008 = vmul.f32 %v3296, %v3912
        %v4009 = vmul.f32 %v3297, %v3914
        %v4010 = vmul.f32 %v3298, %v3916
        %v4011 = vmul.f32 %v3299, %v3918
        %v4012 = vmul.f32 %v3300, %v3920
        %v4013 = vmul.f32 %v3301, %v3922
        %v4014 = vmul.f32 %v3302, %v3924
        %v4015 = vmul.f32 %v3303, %v3926
        %v4016 = vmul.f32 %v3304, %v3928
        %v4017 = vmul.f32 %v3305, %v3930
        %v4018 = vmul.f32 %v3306, %v3932
        %v4019 = vmul.f32 %v3307, %v3934
        %v4020 = vmul.f32 %v3308, %v3936
        %v4021 = vmul.f32 %v3309, %v3938
        %v4022 = vmul.f32 %v3310, %v3940
        %v4023 = vmul.f32 %v3311, %v3942
        %v4024 = vmul.f32 %v3312, %v3944
        %v4025 = vmul.f32 %v3313, %v3946
        %v4026 = vmul.f32 %v3314, %v3948
        %v4027 = vmul.f32 %v3315, %v3950
        %v4028 = vmul.f32 %v3316, %v3952
        %v4029 = vmul.f32 %v3317, %v3954
        %v4030 = vmul.f32 %v3318, %v3956
        %v4031 = vmul.f32 %v3319, %v3958
        %v4032 = vmul.f32 %v3320, %v3960
        %v4033 = vmul.f32 %v3321, %v3962
        %v4034 = vmul.f32 %v3322, %v3964
        %v4035 = vmul.f32 %v3323, %v3966
        %v4036 = vmul.f32 %v3324, %v3968
        %v4037 = vmul.f32 %v3325, %v3970
        %v4038 = vmul.f32 %v3326, %v3972
        %v4039 = vmul.f32 %v3327, %v3974
        %v4040 = vmul.f32 %v3328, %v3973
        %v4074 = vrot.slane %v971, 7
        %v4075 = vrot.slane %v3398, 7
        %v4076 = vsel %vm1104, %v4074, %v4075
        %v4077 = vrot.slane %v3399, 7
        %v4078 = vsel %vm1104, %v4075, %v4077
        %v4079 = vrot.slane %v3400, 7
        %v4080 = vsel %vm1104, %v4077, %v4079
        %v4081 = vrot.slane %v3401, 7
        %v4082 = vsel %vm1104, %v4079, %v4081
        %v4083 = vrot.slane %v3402, 7
        %v4084 = vsel %vm1104, %v4081, %v4083
        %v4085 = vrot.slane %v3403, 7
        %v4086 = vsel %vm1104, %v4083, %v4085
        %v4087 = vrot.slane %v3404, 7
        %v4088 = vsel %vm1104, %v4085, %v4087
        %v4089 = vrot.slane %v3405, 7
        %v4090 = vsel %vm1104, %v4087, %v4089
        %v4091 = vrot.slane %v3406, 7
        %v4092 = vsel %vm1104, %v4089, %v4091
        %v4093 = vrot.slane %v3407, 7
        %v4094 = vsel %vm1104, %v4091, %v4093
        %v4095 = vrot.slane %v3408, 7
        %v4096 = vsel %vm1104, %v4093, %v4095
        %v4097 = vrot.slane %v3409, 7
        %v4098 = vsel %vm1104, %v4095, %v4097
        %v4099 = vrot.slane %v3410, 7
        %v4100 = vsel %vm1104, %v4097, %v4099
        %v4101 = vrot.slane %v3411, 7
        %v4102 = vsel %vm1104, %v4099, %v4101
        %v4103 = vrot.slane %v3412, 7
        %v4104 = vsel %vm1104, %v4101, %v4103
        %v4105 = vrot.slane %v3413, 7
        %v4106 = vsel %vm1104, %v4103, %v4105
        %v4107 = vrot.slane %v3414, 7
        %v4108 = vsel %vm1104, %v4105, %v4107
        %v4109 = vrot.slane %v3415, 7
        %v4110 = vsel %vm1104, %v4107, %v4109
        %v4111 = vrot.slane %v3416, 7
        %v4112 = vsel %vm1104, %v4109, %v4111
        %v4113 = vrot.slane %v3417, 7
        %v4114 = vsel %vm1104, %v4111, %v4113
        %v4115 = vrot.slane %v3418, 7
        %v4116 = vsel %vm1104, %v4113, %v4115
        %v4117 = vrot.slane %v3419, 7
        %v4118 = vsel %vm1104, %v4115, %v4117
        %v4119 = vrot.slane %v3420, 7
        %v4120 = vsel %vm1104, %v4117, %v4119
        %v4121 = vrot.slane %v3421, 7
        %v4122 = vsel %vm1104, %v4119, %v4121
        %v4123 = vrot.slane %v3422, 7
        %v4124 = vsel %vm1104, %v4121, %v4123
        %v4125 = vrot.slane %v3423, 7
        %v4126 = vsel %vm1104, %v4123, %v4125
        %v4127 = vrot.slane %v3424, 7
        %v4128 = vsel %vm1104, %v4125, %v4127
        %v4129 = vrot.slane %v3425, 7
        %v4130 = vsel %vm1104, %v4127, %v4129
        %v4131 = vrot.slane %v3426, 7
        %v4132 = vsel %vm1104, %v4129, %v4131
        %v4133 = vrot.slane %v3427, 7
        %v4134 = vsel %vm1104, %v4131, %v4133
        %v4135 = vrot.slane %v3428, 7
        %v4136 = vsel %vm1104, %v4133, %v4135
        %v4137 = vrot.slane %v3429, 7
        %v4138 = vsel %vm1104, %v4135, %v4137
        %v4171 = vmul.f32 %v3753, %v4076
        %v4172 = vmul.f32 %v3755, %v4078
        %v4173 = vmul.f32 %v3757, %v4080
        %v4174 = vmul.f32 %v3759, %v4082
        %v4175 = vmul.f32 %v3761, %v4084
        %v4176 = vmul.f32 %v3763, %v4086
        %v4177 = vmul.f32 %v3765, %v4088
        %v4178 = vmul.f32 %v3767, %v4090
        %v4179 = vmul.f32 %v3769, %v4092
        %v4180 = vmul.f32 %v3771, %v4094
        %v4181 = vmul.f32 %v3773, %v4096
        %v4182 = vmul.f32 %v3775, %v4098
        %v4183 = vmul.f32 %v3777, %v4100
        %v4184 = vmul.f32 %v3779, %v4102
        %v4185 = vmul.f32 %v3781, %v4104
        %v4186 = vmul.f32 %v3783, %v4106
        %v4187 = vmul.f32 %v3785, %v4108
        %v4188 = vmul.f32 %v3787, %v4110
        %v4189 = vmul.f32 %v3789, %v4112
        %v4190 = vmul.f32 %v3791, %v4114
        %v4191 = vmul.f32 %v3793, %v4116
        %v4192 = vmul.f32 %v3795, %v4118
        %v4193 = vmul.f32 %v3797, %v4120
        %v4194 = vmul.f32 %v3799, %v4122
        %v4195 = vmul.f32 %v3801, %v4124
        %v4196 = vmul.f32 %v3803, %v4126
        %v4197 = vmul.f32 %v3805, %v4128
        %v4198 = vmul.f32 %v3807, %v4130
        %v4199 = vmul.f32 %v3809, %v4132
        %v4200 = vmul.f32 %v3811, %v4134
        %v4201 = vmul.f32 %v3813, %v4136
        %v4202 = vmul.f32 %v3815, %v4138
        %v4235 = vrot.slane %v4171, 1
        %v4236 = vrot.slane %v4172, 1
        %v4237 = vsel %vm874, %v4235, %v4236
        %v4238 = vrot.slane %v4173, 1
        %v4239 = vsel %vm874, %v4236, %v4238
        %v4240 = vrot.slane %v4174, 1
        %v4241 = vsel %vm874, %v4238, %v4240
        %v4242 = vrot.slane %v4175, 1
        %v4243 = vsel %vm874, %v4240, %v4242
        %v4244 = vrot.slane %v4176, 1
        %v4245 = vsel %vm874, %v4242, %v4244
        %v4246 = vrot.slane %v4177, 1
        %v4247 = vsel %vm874, %v4244, %v4246
        %v4248 = vrot.slane %v4178, 1
        %v4249 = vsel %vm874, %v4246, %v4248
        %v4250 = vrot.slane %v4179, 1
        %v4251 = vsel %vm874, %v4248, %v4250
        %v4252 = vrot.slane %v4180, 1
        %v4253 = vsel %vm874, %v4250, %v4252
        %v4254 = vrot.slane %v4181, 1
        %v4255 = vsel %vm874, %v4252, %v4254
        %v4256 = vrot.slane %v4182, 1
        %v4257 = vsel %vm874, %v4254, %v4256
        %v4258 = vrot.slane %v4183, 1
        %v4259 = vsel %vm874, %v4256, %v4258
        %v4260 = vrot.slane %v4184, 1
        %v4261 = vsel %vm874, %v4258, %v4260
        %v4262 = vrot.slane %v4185, 1
        %v4263 = vsel %vm874, %v4260, %v4262
        %v4264 = vrot.slane %v4186, 1
        %v4265 = vsel %vm874, %v4262, %v4264
        %v4266 = vrot.slane %v4187, 1
        %v4267 = vsel %vm874, %v4264, %v4266
        %v4268 = vrot.slane %v4188, 1
        %v4269 = vsel %vm874, %v4266, %v4268
        %v4270 = vrot.slane %v4189, 1
        %v4271 = vsel %vm874, %v4268, %v4270
        %v4272 = vrot.slane %v4190, 1
        %v4273 = vsel %vm874, %v4270, %v4272
        %v4274 = vrot.slane %v4191, 1
        %v4275 = vsel %vm874, %v4272, %v4274
        %v4276 = vrot.slane %v4192, 1
        %v4277 = vsel %vm874, %v4274, %v4276
        %v4278 = vrot.slane %v4193, 1
        %v4279 = vsel %vm874, %v4276, %v4278
        %v4280 = vrot.slane %v4194, 1
        %v4281 = vsel %vm874, %v4278, %v4280
        %v4282 = vrot.slane %v4195, 1
        %v4283 = vsel %vm874, %v4280, %v4282
        %v4284 = vrot.slane %v4196, 1
        %v4285 = vsel %vm874, %v4282, %v4284
        %v4286 = vrot.slane %v4197, 1
        %v4287 = vsel %vm874, %v4284, %v4286
        %v4288 = vrot.slane %v4198, 1
        %v4289 = vsel %vm874, %v4286, %v4288
        %v4290 = vrot.slane %v4199, 1
        %v4291 = vsel %vm874, %v4288, %v4290
        %v4292 = vrot.slane %v4200, 1
        %v4293 = vsel %vm874, %v4290, %v4292
        %v4294 = vrot.slane %v4201, 1
        %v4295 = vsel %vm874, %v4292, %v4294
        %v4296 = vrot.slane %v4202, 1
        %v4297 = vsel %vm874, %v4294, %v4296
        %v4331 = vadd.f32 %v4008, %v4235
        %v4332 = vadd.f32 %v4009, %v4237
        %v4333 = vadd.f32 %v4010, %v4239
        %v4334 = vadd.f32 %v4011, %v4241
        %v4335 = vadd.f32 %v4012, %v4243
        %v4336 = vadd.f32 %v4013, %v4245
        %v4337 = vadd.f32 %v4014, %v4247
        %v4338 = vadd.f32 %v4015, %v4249
        %v4339 = vadd.f32 %v4016, %v4251
        %v4340 = vadd.f32 %v4017, %v4253
        %v4341 = vadd.f32 %v4018, %v4255
        %v4342 = vadd.f32 %v4019, %v4257
        %v4343 = vadd.f32 %v4020, %v4259
        %v4344 = vadd.f32 %v4021, %v4261
        %v4345 = vadd.f32 %v4022, %v4263
        %v4346 = vadd.f32 %v4023, %v4265
        %v4347 = vadd.f32 %v4024, %v4267
        %v4348 = vadd.f32 %v4025, %v4269
        %v4349 = vadd.f32 %v4026, %v4271
        %v4350 = vadd.f32 %v4027, %v4273
        %v4351 = vadd.f32 %v4028, %v4275
        %v4352 = vadd.f32 %v4029, %v4277
        %v4353 = vadd.f32 %v4030, %v4279
        %v4354 = vadd.f32 %v4031, %v4281
        %v4355 = vadd.f32 %v4032, %v4283
        %v4356 = vadd.f32 %v4033, %v4285
        %v4357 = vadd.f32 %v4034, %v4287
        %v4358 = vadd.f32 %v4035, %v4289
        %v4359 = vadd.f32 %v4036, %v4291
        %v4360 = vadd.f32 %v4037, %v4293
        %v4361 = vadd.f32 %v4038, %v4295
        %v4362 = vadd.f32 %v4039, %v4297
        %v4363 = vadd.f32 %v4040, %v4296
        %v4364 = vmul.f32 %v617, %v1236
        %v4365 = vmul.f32 %v619, %v1240
        %v4366 = vmul.f32 %v621, %v1244
        %v4367 = vmul.f32 %v623, %v1248
        %v4368 = vmul.f32 %v625, %v1252
        %v4369 = vmul.f32 %v627, %v1256
        %v4370 = vmul.f32 %v629, %v1260
        %v4371 = vmul.f32 %v631, %v1264
        %v4372 = vmul.f32 %v633, %v1268
        %v4373 = vmul.f32 %v635, %v1272
        %v4374 = vmul.f32 %v637, %v1276
        %v4375 = vmul.f32 %v639, %v1280
        %v4376 = vmul.f32 %v641, %v1284
        %v4377 = vmul.f32 %v643, %v1288
        %v4378 = vmul.f32 %v645, %v1292
        %v4379 = vmul.f32 %v647, %v1296
        %v4380 = vmul.f32 %v649, %v1300
        %v4381 = vmul.f32 %v651, %v1304
        %v4382 = vmul.f32 %v653, %v1308
        %v4383 = vmul.f32 %v655, %v1312
        %v4384 = vmul.f32 %v657, %v1316
        %v4385 = vmul.f32 %v659, %v1320
        %v4386 = vmul.f32 %v661, %v1324
        %v4387 = vmul.f32 %v663, %v1328
        %v4388 = vmul.f32 %v665, %v1332
        %v4389 = vmul.f32 %v667, %v1336
        %v4390 = vmul.f32 %v669, %v1340
        %v4391 = vmul.f32 %v671, %v1344
        %v4392 = vmul.f32 %v673, %v1348
        %v4393 = vmul.f32 %v675, %v1352
        %v4394 = vmul.f32 %v677, %v1356
        %v4395 = vmul.f32 %v679, %v1360
        %v4396 = vlaneseq
        %v4397 = vshrl.u32 %v4396, 7
        %v4398 = vsub.s32 4, %v4397
        %v4399 = vrot.slane %v712, %v4398
        %v4400 = vadd.f32 %v4364, %v4399
        %v4401 = vadd.f32 %v4365, %v4399
        %v4402 = vadd.f32 %v4366, %v4399
        %v4403 = vadd.f32 %v4367, %v4399
        %v4404 = vadd.f32 %v4368, %v4399
        %v4405 = vadd.f32 %v4369, %v4399
        %v4406 = vadd.f32 %v4370, %v4399
        %v4407 = vadd.f32 %v4371, %v4399
        %v4408 = vadd.f32 %v4372, %v4399
        %v4409 = vadd.f32 %v4373, %v4399
        %v4410 = vadd.f32 %v4374, %v4399
        %v4411 = vadd.f32 %v4375, %v4399
        %v4412 = vadd.f32 %v4376, %v4399
        %v4413 = vadd.f32 %v4377, %v4399
        %v4414 = vadd.f32 %v4378, %v4399
        %v4415 = vadd.f32 %v4379, %v4399
        %v4416 = vadd.f32 %v4380, %v4399
        %v4417 = vadd.f32 %v4381, %v4399
        %v4418 = vadd.f32 %v4382, %v4399
        %v4419 = vadd.f32 %v4383, %v4399
        %v4420 = vadd.f32 %v4384, %v4399
        %v4421 = vadd.f32 %v4385, %v4399
        %v4422 = vadd.f32 %v4386, %v4399
        %v4423 = vadd.f32 %v4387, %v4399
        %v4424 = vadd.f32 %v4388, %v4399
        %v4425 = vadd.f32 %v4389, %v4399
        %v4426 = vadd.f32 %v4390, %v4399
        %v4427 = vadd.f32 %v4391, %v4399
        %v4428 = vadd.f32 %v4392, %v4399
        %v4429 = vadd.f32 %v4393, %v4399
        %v4430 = vadd.f32 %v4394, %v4399
        %v4431 = vadd.f32 %v4395, %v4399
        %v4432 = vmul.f32 %v396, %v1236
        %v4433 = vmul.f32 %v402, %v1240
        %v4434 = vmul.f32 %v408, %v1244
        %v4435 = vmul.f32 %v414, %v1248
        %v4436 = vmul.f32 %v420, %v1252
        %v4437 = vmul.f32 %v426, %v1256
        %v4438 = vmul.f32 %v432, %v1260
        %v4439 = vmul.f32 %v438, %v1264
        %v4440 = vmul.f32 %v444, %v1268
        %v4441 = vmul.f32 %v450, %v1272
        %v4442 = vmul.f32 %v456, %v1276
        %v4443 = vmul.f32 %v462, %v1280
        %v4444 = vmul.f32 %v468, %v1284
        %v4445 = vmul.f32 %v474, %v1288
        %v4446 = vmul.f32 %v480, %v1292
        %v4447 = vmul.f32 %v486, %v1296
        %v4448 = vmul.f32 %v492, %v1300
        %v4449 = vmul.f32 %v498, %v1304
        %v4450 = vmul.f32 %v504, %v1308
        %v4451 = vmul.f32 %v510, %v1312
        %v4452 = vmul.f32 %v516, %v1316
        %v4453 = vmul.f32 %v522, %v1320
        %v4454 = vmul.f32 %v528, %v1324
        %v4455 = vmul.f32 %v534, %v1328
        %v4456 = vmul.f32 %v540, %v1332
        %v4457 = vmul.f32 %v546, %v1336
        %v4458 = vmul.f32 %v552, %v1340
        %v4459 = vmul.f32 %v558, %v1344
        %v4460 = vmul.f32 %v564, %v1348
        %v4461 = vmul.f32 %v570, %v1352
        %v4462 = vmul.f32 %v576, %v1356
        %v4463 = vmul.f32 %v582, %v1360
        %v4464 = vmul.f32 %v394, %v4400
        %v4465 = vmul.f32 %v400, %v4401
        %v4466 = vmul.f32 %v406, %v4402
        %v4467 = vmul.f32 %v412, %v4403
        %v4468 = vmul.f32 %v418, %v4404
        %v4469 = vmul.f32 %v424, %v4405
        %v4470 = vmul.f32 %v430, %v4406
        %v4471 = vmul.f32 %v436, %v4407
        %v4472 = vmul.f32 %v442, %v4408
        %v4473 = vmul.f32 %v448, %v4409
        %v4474 = vmul.f32 %v454, %v4410
        %v4475 = vmul.f32 %v460, %v4411
        %v4476 = vmul.f32 %v466, %v4412
        %v4477 = vmul.f32 %v472, %v4413
        %v4478 = vmul.f32 %v478, %v4414
        %v4479 = vmul.f32 %v484, %v4415
        %v4480 = vmul.f32 %v490, %v4416
        %v4481 = vmul.f32 %v496, %v4417
        %v4482 = vmul.f32 %v502, %v4418
        %v4483 = vmul.f32 %v508, %v4419
        %v4484 = vmul.f32 %v514, %v4420
        %v4485 = vmul.f32 %v520, %v4421
        %v4486 = vmul.f32 %v526, %v4422
        %v4487 = vmul.f32 %v532, %v4423
        %v4488 = vmul.f32 %v538, %v4424
        %v4489 = vmul.f32 %v544, %v4425
        %v4490 = vmul.f32 %v550, %v4426
        %v4491 = vmul.f32 %v556, %v4427
        %v4492 = vmul.f32 %v562, %v4428
        %v4493 = vmul.f32 %v568, %v4429
        %v4494 = vmul.f32 %v574, %v4430
        %v4495 = vmul.f32 %v580, %v4431
        %v4496 = vmax.f32 %v3592, %v4464
        %v4497 = vmax.f32 %v3593, %v4465
        %v4498 = vmax.f32 %v3594, %v4466
        %v4499 = vmax.f32 %v3595, %v4467
        %v4500 = vmax.f32 %v3596, %v4468
        %v4501 = vmax.f32 %v3597, %v4469
        %v4502 = vmax.f32 %v3598, %v4470
        %v4503 = vmax.f32 %v3599, %v4471
        %v4504 = vmax.f32 %v3600, %v4472
        %v4505 = vmax.f32 %v3601, %v4473
        %v4506 = vmax.f32 %v3602, %v4474
        %v4507 = vmax.f32 %v3603, %v4475
        %v4508 = vmax.f32 %v3604, %v4476
        %v4509 = vmax.f32 %v3605, %v4477
        %v4510 = vmax.f32 %v3606, %v4478
        %v4511 = vmax.f32 %v3607, %v4479
        %v4512 = vmax.f32 %v3608, %v4480
        %v4513 = vmax.f32 %v3609, %v4481
        %v4514 = vmax.f32 %v3610, %v4482
        %v4515 = vmax.f32 %v3611, %v4483
        %v4516 = vmax.f32 %v3612, %v4484
        %v4517 = vmax.f32 %v3613, %v4485
        %v4518 = vmax.f32 %v3614, %v4486
        %v4519 = vmax.f32 %v3615, %v4487
        %v4520 = vmax.f32 %v3616, %v4488
        %v4521 = vmax.f32 %v3617, %v4489
        %v4522 = vmax.f32 %v3618, %v4490
        %v4523 = vmax.f32 %v3619, %v4491
        %v4524 = vmax.f32 %v3620, %v4492
        %v4525 = vmax.f32 %v3621, %v4493
        %v4526 = vmax.f32 %v3622, %v4494
        %v4527 = vmax.f32 %v3623, %v4495
        %v4528 = vsub.f32 %v3592, %v4496
        %v4529 = vsub.f32 %v3593, %v4497
        %v4530 = vsub.f32 %v3594, %v4498
        %v4531 = vsub.f32 %v3595, %v4499
        %v4532 = vsub.f32 %v3596, %v4500
        %v4533 = vsub.f32 %v3597, %v4501
        %v4534 = vsub.f32 %v3598, %v4502
        %v4535 = vsub.f32 %v3599, %v4503
        %v4536 = vsub.f32 %v3600, %v4504
        %v4537 = vsub.f32 %v3601, %v4505
        %v4538 = vsub.f32 %v3602, %v4506
        %v4539 = vsub.f32 %v3603, %v4507
        %v4540 = vsub.f32 %v3604, %v4508
        %v4541 = vsub.f32 %v3605, %v4509
        %v4542 = vsub.f32 %v3606, %v4510
        %v4543 = vsub.f32 %v3607, %v4511
        %v4544 = vsub.f32 %v3608, %v4512
        %v4545 = vsub.f32 %v3609, %v4513
        %v4546 = vsub.f32 %v3610, %v4514
        %v4547 = vsub.f32 %v3611, %v4515
        %v4548 = vsub.f32 %v3612, %v4516
        %v4549 = vsub.f32 %v3613, %v4517
        %v4550 = vsub.f32 %v3614, %v4518
        %v4551 = vsub.f32 %v3615, %v4519
        %v4552 = vsub.f32 %v3616, %v4520
        %v4553 = vsub.f32 %v3617, %v4521
        %v4554 = vsub.f32 %v3618, %v4522
        %v4555 = vsub.f32 %v3619, %v4523
        %v4556 = vsub.f32 %v3620, %v4524
        %v4557 = vsub.f32 %v3621, %v4525
        %v4558 = vsub.f32 %v3622, %v4526
        %v4559 = vsub.f32 %v3623, %v4527
        %v4560 = vmul.f32 %v4528, 1.442695
        %v4561 = vpow.pop %v4560
        %v4562 = vmul.f32 %v4529, 1.442695
        %v4563 = vpow.pop %v4562
        %v4564 = vmul.f32 %v4530, 1.442695
        %v4565 = vpow.pop %v4564
        %v4566 = vmul.f32 %v4531, 1.442695
        %v4567 = vpow.pop %v4566
        %v4568 = vmul.f32 %v4532, 1.442695
        %v4569 = vpow.pop %v4568
        %v4570 = vmul.f32 %v4533, 1.442695
        %v4571 = vpow.pop %v4570
        %v4572 = vmul.f32 %v4534, 1.442695
        %v4573 = vpow.pop %v4572
        %v4574 = vmul.f32 %v4535, 1.442695
        %v4575 = vpow.pop %v4574
        %v4576 = vmul.f32 %v4536, 1.442695
        %v4577 = vpow.pop %v4576
        %v4578 = vmul.f32 %v4537, 1.442695
        %v4579 = vpow.pop %v4578
        %v4580 = vmul.f32 %v4538, 1.442695
        %v4581 = vpow.pop %v4580
        %v4582 = vmul.f32 %v4539, 1.442695
        %v4583 = vpow.pop %v4582
        %v4584 = vmul.f32 %v4540, 1.442695
        %v4585 = vpow.pop %v4584
        %v4586 = vmul.f32 %v4541, 1.442695
        %v4587 = vpow.pop %v4586
        %v4588 = vmul.f32 %v4542, 1.442695
        %v4589 = vpow.pop %v4588
        %v4590 = vmul.f32 %v4543, 1.442695
        %v4591 = vpow.pop %v4590
        %v4592 = vmul.f32 %v4544, 1.442695
        %v4593 = vpow.pop %v4592
        %v4594 = vmul.f32 %v4545, 1.442695
        %v4595 = vpow.pop %v4594
        %v4596 = vmul.f32 %v4546, 1.442695
        %v4597 = vpow.pop %v4596
        %v4598 = vmul.f32 %v4547, 1.442695
        %v4599 = vpow.pop %v4598
        %v4600 = vmul.f32 %v4548, 1.442695
        %v4601 = vpow.pop %v4600
        %v4602 = vmul.f32 %v4549, 1.442695
        %v4603 = vpow.pop %v4602
        %v4604 = vmul.f32 %v4550, 1.442695
        %v4605 = vpow.pop %v4604
        %v4606 = vmul.f32 %v4551, 1.442695
        %v4607 = vpow.pop %v4606
        %v4608 = vmul.f32 %v4552, 1.442695
        %v4609 = vpow.pop %v4608
        %v4610 = vmul.f32 %v4553, 1.442695
        %v4611 = vpow.pop %v4610
        %v4612 = vmul.f32 %v4554, 1.442695
        %v4613 = vpow.pop %v4612
        %v4614 = vmul.f32 %v4555, 1.442695
        %v4615 = vpow.pop %v4614
        %v4616 = vmul.f32 %v4556, 1.442695
        %v4617 = vpow.pop %v4616
        %v4618 = vmul.f32 %v4557, 1.442695
        %v4619 = vpow.pop %v4618
        %v4620 = vmul.f32 %v4558, 1.442695
        %v4621 = vpow.pop %v4620
        %v4622 = vmul.f32 %v4559, 1.442695
        %v4623 = vpow.pop %v4622
        %v4624 = vsub.f32 %v4464, %v4496
        %v4625 = vsub.f32 %v4465, %v4497
        %v4626 = vsub.f32 %v4466, %v4498
        %v4627 = vsub.f32 %v4467, %v4499
        %v4628 = vsub.f32 %v4468, %v4500
        %v4629 = vsub.f32 %v4469, %v4501
        %v4630 = vsub.f32 %v4470, %v4502
        %v4631 = vsub.f32 %v4471, %v4503
        %v4632 = vsub.f32 %v4472, %v4504
        %v4633 = vsub.f32 %v4473, %v4505
        %v4634 = vsub.f32 %v4474, %v4506
        %v4635 = vsub.f32 %v4475, %v4507
        %v4636 = vsub.f32 %v4476, %v4508
        %v4637 = vsub.f32 %v4477, %v4509
        %v4638 = vsub.f32 %v4478, %v4510
        %v4639 = vsub.f32 %v4479, %v4511
        %v4640 = vsub.f32 %v4480, %v4512
        %v4641 = vsub.f32 %v4481, %v4513
        %v4642 = vsub.f32 %v4482, %v4514
        %v4643 = vsub.f32 %v4483, %v4515
        %v4644 = vsub.f32 %v4484, %v4516
        %v4645 = vsub.f32 %v4485, %v4517
        %v4646 = vsub.f32 %v4486, %v4518
        %v4647 = vsub.f32 %v4487, %v4519
        %v4648 = vsub.f32 %v4488, %v4520
        %v4649 = vsub.f32 %v4489, %v4521
        %v4650 = vsub.f32 %v4490, %v4522
        %v4651 = vsub.f32 %v4491, %v4523
        %v4652 = vsub.f32 %v4492, %v4524
        %v4653 = vsub.f32 %v4493, %v4525
        %v4654 = vsub.f32 %v4494, %v4526
        %v4655 = vsub.f32 %v4495, %v4527
        %v4656 = vmul.f32 %v4624, 1.442695
        %v4657 = vpow.pop %v4656
        %v4658 = vmul.f32 %v4625, 1.442695
        %v4659 = vpow.pop %v4658
        %v4660 = vmul.f32 %v4626, 1.442695
        %v4661 = vpow.pop %v4660
        %v4662 = vmul.f32 %v4627, 1.442695
        %v4663 = vpow.pop %v4662
        %v4664 = vmul.f32 %v4628, 1.442695
        %v4665 = vpow.pop %v4664
        %v4666 = vmul.f32 %v4629, 1.442695
        %v4667 = vpow.pop %v4666
        %v4668 = vmul.f32 %v4630, 1.442695
        %v4669 = vpow.pop %v4668
        %v4670 = vmul.f32 %v4631, 1.442695
        %v4671 = vpow.pop %v4670
        %v4672 = vmul.f32 %v4632, 1.442695
        %v4673 = vpow.pop %v4672
        %v4674 = vmul.f32 %v4633, 1.442695
        %v4675 = vpow.pop %v4674
        %v4676 = vmul.f32 %v4634, 1.442695
        %v4677 = vpow.pop %v4676
        %v4678 = vmul.f32 %v4635, 1.442695
        %v4679 = vpow.pop %v4678
        %v4680 = vmul.f32 %v4636, 1.442695
        %v4681 = vpow.pop %v4680
        %v4682 = vmul.f32 %v4637, 1.442695
        %v4683 = vpow.pop %v4682
        %v4684 = vmul.f32 %v4638, 1.442695
        %v4685 = vpow.pop %v4684
        %v4686 = vmul.f32 %v4639, 1.442695
        %v4687 = vpow.pop %v4686
        %v4688 = vmul.f32 %v4640, 1.442695
        %v4689 = vpow.pop %v4688
        %v4690 = vmul.f32 %v4641, 1.442695
        %v4691 = vpow.pop %v4690
        %v4692 = vmul.f32 %v4642, 1.442695
        %v4693 = vpow.pop %v4692
        %v4694 = vmul.f32 %v4643, 1.442695
        %v4695 = vpow.pop %v4694
        %v4696 = vmul.f32 %v4644, 1.442695
        %v4697 = vpow.pop %v4696
        %v4698 = vmul.f32 %v4645, 1.442695
        %v4699 = vpow.pop %v4698
        %v4700 = vmul.f32 %v4646, 1.442695
        %v4701 = vpow.pop %v4700
        %v4702 = vmul.f32 %v4647, 1.442695
        %v4703 = vpow.pop %v4702
        %v4704 = vmul.f32 %v4648, 1.442695
        %v4705 = vpow.pop %v4704
        %v4706 = vmul.f32 %v4649, 1.442695
        %v4707 = vpow.pop %v4706
        %v4708 = vmul.f32 %v4650, 1.442695
        %v4709 = vpow.pop %v4708
        %v4710 = vmul.f32 %v4651, 1.442695
        %v4711 = vpow.pop %v4710
        %v4712 = vmul.f32 %v4652, 1.442695
        %v4713 = vpow.pop %v4712
        %v4714 = vmul.f32 %v4653, 1.442695
        %v4715 = vpow.pop %v4714
        %v4716 = vmul.f32 %v4654, 1.442695
        %v4717 = vpow.pop %v4716
        %v4718 = vmul.f32 %v4655, 1.442695
        %v4719 = vpow.pop %v4718
        %v4720 = vmul.f32 %v3848, %v4561
        %v4721 = vmul.f32 %v3849, %v4563
        %v4722 = vmul.f32 %v3850, %v4565
        %v4723 = vmul.f32 %v3851, %v4567
        %v4724 = vmul.f32 %v3852, %v4569
        %v4725 = vmul.f32 %v3853, %v4571
        %v4726 = vmul.f32 %v3854, %v4573
        %v4727 = vmul.f32 %v3855, %v4575
        %v4728 = vmul.f32 %v3856, %v4577
        %v4729 = vmul.f32 %v3857, %v4579
        %v4730 = vmul.f32 %v3858, %v4581
        %v4731 = vmul.f32 %v3859, %v4583
        %v4732 = vmul.f32 %v3860, %v4585
        %v4733 = vmul.f32 %v3861, %v4587
        %v4734 = vmul.f32 %v3862, %v4589
        %v4735 = vmul.f32 %v3863, %v4591
        %v4736 = vmul.f32 %v3864, %v4593
        %v4737 = vmul.f32 %v3865, %v4595
        %v4738 = vmul.f32 %v3866, %v4597
        %v4739 = vmul.f32 %v3867, %v4599
        %v4740 = vmul.f32 %v3868, %v4601
        %v4741 = vmul.f32 %v3869, %v4603
        %v4742 = vmul.f32 %v3870, %v4605
        %v4743 = vmul.f32 %v3871, %v4607
        %v4744 = vmul.f32 %v3872, %v4609
        %v4745 = vmul.f32 %v3873, %v4611
        %v4746 = vmul.f32 %v3874, %v4613
        %v4747 = vmul.f32 %v3875, %v4615
        %v4748 = vmul.f32 %v3876, %v4617
        %v4749 = vmul.f32 %v3877, %v4619
        %v4750 = vmul.f32 %v3878, %v4621
        %v4751 = vmul.f32 %v3879, %v4623
        %v4752 = vadd.f32 %v4720, %v4657
        %v4753 = vadd.f32 %v4721, %v4659
        %v4754 = vadd.f32 %v4722, %v4661
        %v4755 = vadd.f32 %v4723, %v4663
        %v4756 = vadd.f32 %v4724, %v4665
        %v4757 = vadd.f32 %v4725, %v4667
        %v4758 = vadd.f32 %v4726, %v4669
        %v4759 = vadd.f32 %v4727, %v4671
        %v4760 = vadd.f32 %v4728, %v4673
        %v4761 = vadd.f32 %v4729, %v4675
        %v4762 = vadd.f32 %v4730, %v4677
        %v4763 = vadd.f32 %v4731, %v4679
        %v4764 = vadd.f32 %v4732, %v4681
        %v4765 = vadd.f32 %v4733, %v4683
        %v4766 = vadd.f32 %v4734, %v4685
        %v4767 = vadd.f32 %v4735, %v4687
        %v4768 = vadd.f32 %v4736, %v4689
        %v4769 = vadd.f32 %v4737, %v4691
        %v4770 = vadd.f32 %v4738, %v4693
        %v4771 = vadd.f32 %v4739, %v4695
        %v4772 = vadd.f32 %v4740, %v4697
        %v4773 = vadd.f32 %v4741, %v4699
        %v4774 = vadd.f32 %v4742, %v4701
        %v4775 = vadd.f32 %v4743, %v4703
        %v4776 = vadd.f32 %v4744, %v4705
        %v4777 = vadd.f32 %v4745, %v4707
        %v4778 = vadd.f32 %v4746, %v4709
        %v4779 = vadd.f32 %v4747, %v4711
        %v4780 = vadd.f32 %v4748, %v4713
        %v4781 = vadd.f32 %v4749, %v4715
        %v4782 = vadd.f32 %v4750, %v4717
        %v4783 = vadd.f32 %v4751, %v4719
        %v4816 = vrot.slane %v4561, 1
        %v4817 = vrot.slane %v4563, 1
        %v4818 = vsel %vm874, %v4816, %v4817
        %v4819 = vrot.slane %v4565, 1
        %v4820 = vsel %vm874, %v4817, %v4819
        %v4821 = vrot.slane %v4567, 1
        %v4822 = vsel %vm874, %v4819, %v4821
        %v4823 = vrot.slane %v4569, 1
        %v4824 = vsel %vm874, %v4821, %v4823
        %v4825 = vrot.slane %v4571, 1
        %v4826 = vsel %vm874, %v4823, %v4825
        %v4827 = vrot.slane %v4573, 1
        %v4828 = vsel %vm874, %v4825, %v4827
        %v4829 = vrot.slane %v4575, 1
        %v4830 = vsel %vm874, %v4827, %v4829
        %v4831 = vrot.slane %v4577, 1
        %v4832 = vsel %vm874, %v4829, %v4831
        %v4833 = vrot.slane %v4579, 1
        %v4834 = vsel %vm874, %v4831, %v4833
        %v4835 = vrot.slane %v4581, 1
        %v4836 = vsel %vm874, %v4833, %v4835
        %v4837 = vrot.slane %v4583, 1
        %v4838 = vsel %vm874, %v4835, %v4837
        %v4839 = vrot.slane %v4585, 1
        %v4840 = vsel %vm874, %v4837, %v4839
        %v4841 = vrot.slane %v4587, 1
        %v4842 = vsel %vm874, %v4839, %v4841
        %v4843 = vrot.slane %v4589, 1
        %v4844 = vsel %vm874, %v4841, %v4843
        %v4845 = vrot.slane %v4591, 1
        %v4846 = vsel %vm874, %v4843, %v4845
        %v4847 = vrot.slane %v4593, 1
        %v4848 = vsel %vm874, %v4845, %v4847
        %v4849 = vrot.slane %v4595, 1
        %v4850 = vsel %vm874, %v4847, %v4849
        %v4851 = vrot.slane %v4597, 1
        %v4852 = vsel %vm874, %v4849, %v4851
        %v4853 = vrot.slane %v4599, 1
        %v4854 = vsel %vm874, %v4851, %v4853
        %v4855 = vrot.slane %v4601, 1
        %v4856 = vsel %vm874, %v4853, %v4855
        %v4857 = vrot.slane %v4603, 1
        %v4858 = vsel %vm874, %v4855, %v4857
        %v4859 = vrot.slane %v4605, 1
        %v4860 = vsel %vm874, %v4857, %v4859
        %v4861 = vrot.slane %v4607, 1
        %v4862 = vsel %vm874, %v4859, %v4861
        %v4863 = vrot.slane %v4609, 1
        %v4864 = vsel %vm874, %v4861, %v4863
        %v4865 = vrot.slane %v4611, 1
        %v4866 = vsel %vm874, %v4863, %v4865
        %v4867 = vrot.slane %v4613, 1
        %v4868 = vsel %vm874, %v4865, %v4867
        %v4869 = vrot.slane %v4615, 1
        %v4870 = vsel %vm874, %v4867, %v4869
        %v4871 = vrot.slane %v4617, 1
        %v4872 = vsel %vm874, %v4869, %v4871
        %v4873 = vrot.slane %v4619, 1
        %v4874 = vsel %vm874, %v4871, %v4873
        %v4875 = vrot.slane %v4621, 1
        %v4876 = vsel %vm874, %v4873, %v4875
        %v4877 = vrot.slane %v4623, 1
        %v4878 = vsel %vm874, %v4875, %v4877
        %v4912 = vmul.f32 %v4331, %v4816
        %v4913 = vmul.f32 %v4332, %v4818
        %v4914 = vmul.f32 %v4333, %v4820
        %v4915 = vmul.f32 %v4334, %v4822
        %v4916 = vmul.f32 %v4335, %v4824
        %v4917 = vmul.f32 %v4336, %v4826
        %v4918 = vmul.f32 %v4337, %v4828
        %v4919 = vmul.f32 %v4338, %v4830
        %v4920 = vmul.f32 %v4339, %v4832
        %v4921 = vmul.f32 %v4340, %v4834
        %v4922 = vmul.f32 %v4341, %v4836
        %v4923 = vmul.f32 %v4342, %v4838
        %v4924 = vmul.f32 %v4343, %v4840
        %v4925 = vmul.f32 %v4344, %v4842
        %v4926 = vmul.f32 %v4345, %v4844
        %v4927 = vmul.f32 %v4346, %v4846
        %v4928 = vmul.f32 %v4347, %v4848
        %v4929 = vmul.f32 %v4348, %v4850
        %v4930 = vmul.f32 %v4349, %v4852
        %v4931 = vmul.f32 %v4350, %v4854
        %v4932 = vmul.f32 %v4351, %v4856
        %v4933 = vmul.f32 %v4352, %v4858
        %v4934 = vmul.f32 %v4353, %v4860
        %v4935 = vmul.f32 %v4354, %v4862
        %v4936 = vmul.f32 %v4355, %v4864
        %v4937 = vmul.f32 %v4356, %v4866
        %v4938 = vmul.f32 %v4357, %v4868
        %v4939 = vmul.f32 %v4358, %v4870
        %v4940 = vmul.f32 %v4359, %v4872
        %v4941 = vmul.f32 %v4360, %v4874
        %v4942 = vmul.f32 %v4361, %v4876
        %v4943 = vmul.f32 %v4362, %v4878
        %v4944 = vmul.f32 %v4363, %v4877
        %v4945 = vmul.f32 %v4657, %v4432
        %v4946 = vmul.f32 %v4659, %v4433
        %v4947 = vmul.f32 %v4661, %v4434
        %v4948 = vmul.f32 %v4663, %v4435
        %v4949 = vmul.f32 %v4665, %v4436
        %v4950 = vmul.f32 %v4667, %v4437
        %v4951 = vmul.f32 %v4669, %v4438
        %v4952 = vmul.f32 %v4671, %v4439
        %v4953 = vmul.f32 %v4673, %v4440
        %v4954 = vmul.f32 %v4675, %v4441
        %v4955 = vmul.f32 %v4677, %v4442
        %v4956 = vmul.f32 %v4679, %v4443
        %v4957 = vmul.f32 %v4681, %v4444
        %v4958 = vmul.f32 %v4683, %v4445
        %v4959 = vmul.f32 %v4685, %v4446
        %v4960 = vmul.f32 %v4687, %v4447
        %v4961 = vmul.f32 %v4689, %v4448
        %v4962 = vmul.f32 %v4691, %v4449
        %v4963 = vmul.f32 %v4693, %v4450
        %v4964 = vmul.f32 %v4695, %v4451
        %v4965 = vmul.f32 %v4697, %v4452
        %v4966 = vmul.f32 %v4699, %v4453
        %v4967 = vmul.f32 %v4701, %v4454
        %v4968 = vmul.f32 %v4703, %v4455
        %v4969 = vmul.f32 %v4705, %v4456
        %v4970 = vmul.f32 %v4707, %v4457
        %v4971 = vmul.f32 %v4709, %v4458
        %v4972 = vmul.f32 %v4711, %v4459
        %v4973 = vmul.f32 %v4713, %v4460
        %v4974 = vmul.f32 %v4715, %v4461
        %v4975 = vmul.f32 %v4717, %v4462
        %v4976 = vmul.f32 %v4719, %v4463
        %v5009 = vrot.slane %v4945, 1
        %v5010 = vrot.slane %v4946, 1
        %v5011 = vsel %vm874, %v5009, %v5010
        %v5012 = vrot.slane %v4947, 1
        %v5013 = vsel %vm874, %v5010, %v5012
        %v5014 = vrot.slane %v4948, 1
        %v5015 = vsel %vm874, %v5012, %v5014
        %v5016 = vrot.slane %v4949, 1
        %v5017 = vsel %vm874, %v5014, %v5016
        %v5018 = vrot.slane %v4950, 1
        %v5019 = vsel %vm874, %v5016, %v5018
        %v5020 = vrot.slane %v4951, 1
        %v5021 = vsel %vm874, %v5018, %v5020
        %v5022 = vrot.slane %v4952, 1
        %v5023 = vsel %vm874, %v5020, %v5022
        %v5024 = vrot.slane %v4953, 1
        %v5025 = vsel %vm874, %v5022, %v5024
        %v5026 = vrot.slane %v4954, 1
        %v5027 = vsel %vm874, %v5024, %v5026
        %v5028 = vrot.slane %v4955, 1
        %v5029 = vsel %vm874, %v5026, %v5028
        %v5030 = vrot.slane %v4956, 1
        %v5031 = vsel %vm874, %v5028, %v5030
        %v5032 = vrot.slane %v4957, 1
        %v5033 = vsel %vm874, %v5030, %v5032
        %v5034 = vrot.slane %v4958, 1
        %v5035 = vsel %vm874, %v5032, %v5034
        %v5036 = vrot.slane %v4959, 1
        %v5037 = vsel %vm874, %v5034, %v5036
        %v5038 = vrot.slane %v4960, 1
        %v5039 = vsel %vm874, %v5036, %v5038
        %v5040 = vrot.slane %v4961, 1
        %v5041 = vsel %vm874, %v5038, %v5040
        %v5042 = vrot.slane %v4962, 1
        %v5043 = vsel %vm874, %v5040, %v5042
        %v5044 = vrot.slane %v4963, 1
        %v5045 = vsel %vm874, %v5042, %v5044
        %v5046 = vrot.slane %v4964, 1
        %v5047 = vsel %vm874, %v5044, %v5046
        %v5048 = vrot.slane %v4965, 1
        %v5049 = vsel %vm874, %v5046, %v5048
        %v5050 = vrot.slane %v4966, 1
        %v5051 = vsel %vm874, %v5048, %v5050
        %v5052 = vrot.slane %v4967, 1
        %v5053 = vsel %vm874, %v5050, %v5052
        %v5054 = vrot.slane %v4968, 1
        %v5055 = vsel %vm874, %v5052, %v5054
        %v5056 = vrot.slane %v4969, 1
        %v5057 = vsel %vm874, %v5054, %v5056
        %v5058 = vrot.slane %v4970, 1
        %v5059 = vsel %vm874, %v5056, %v5058
        %v5060 = vrot.slane %v4971, 1
        %v5061 = vsel %vm874, %v5058, %v5060
        %v5062 = vrot.slane %v4972, 1
        %v5063 = vsel %vm874, %v5060, %v5062
        %v5064 = vrot.slane %v4973, 1
        %v5065 = vsel %vm874, %v5062, %v5064
        %v5066 = vrot.slane %v4974, 1
        %v5067 = vsel %vm874, %v5064, %v5066
        %v5068 = vrot.slane %v4975, 1
        %v5069 = vsel %vm874, %v5066, %v5068
        %v5070 = vrot.slane %v4976, 1
        %v5071 = vsel %vm874, %v5068, %v5070
        %v5105 = vadd.f32 %v4912, %v5009
        %v5106 = vadd.f32 %v4913, %v5011
        %v5107 = vadd.f32 %v4914, %v5013
        %v5108 = vadd.f32 %v4915, %v5015
        %v5109 = vadd.f32 %v4916, %v5017
        %v5110 = vadd.f32 %v4917, %v5019
        %v5111 = vadd.f32 %v4918, %v5021
        %v5112 = vadd.f32 %v4919, %v5023
        %v5113 = vadd.f32 %v4920, %v5025
        %v5114 = vadd.f32 %v4921, %v5027
        %v5115 = vadd.f32 %v4922, %v5029
        %v5116 = vadd.f32 %v4923, %v5031
        %v5117 = vadd.f32 %v4924, %v5033
        %v5118 = vadd.f32 %v4925, %v5035
        %v5119 = vadd.f32 %v4926, %v5037
        %v5120 = vadd.f32 %v4927, %v5039
        %v5121 = vadd.f32 %v4928, %v5041
        %v5122 = vadd.f32 %v4929, %v5043
        %v5123 = vadd.f32 %v4930, %v5045
        %v5124 = vadd.f32 %v4931, %v5047
        %v5125 = vadd.f32 %v4932, %v5049
        %v5126 = vadd.f32 %v4933, %v5051
        %v5127 = vadd.f32 %v4934, %v5053
        %v5128 = vadd.f32 %v4935, %v5055
        %v5129 = vadd.f32 %v4936, %v5057
        %v5130 = vadd.f32 %v4937, %v5059
        %v5131 = vadd.f32 %v4938, %v5061
        %v5132 = vadd.f32 %v4939, %v5063
        %v5133 = vadd.f32 %v4940, %v5065
        %v5134 = vadd.f32 %v4941, %v5067
        %v5135 = vadd.f32 %v4942, %v5069
        %v5136 = vadd.f32 %v4943, %v5071
        %v5137 = vadd.f32 %v4944, %v5070
        %v5138 = vmul.f32 %v617, %v2198
        %v5139 = vmul.f32 %v619, %v2200
        %v5140 = vmul.f32 %v621, %v2202
        %v5141 = vmul.f32 %v623, %v2204
        %v5142 = vmul.f32 %v625, %v2206
        %v5143 = vmul.f32 %v627, %v2208
        %v5144 = vmul.f32 %v629, %v2210
        %v5145 = vmul.f32 %v631, %v2212
        %v5146 = vmul.f32 %v633, %v2214
        %v5147 = vmul.f32 %v635, %v2216
        %v5148 = vmul.f32 %v637, %v2218
        %v5149 = vmul.f32 %v639, %v2220
        %v5150 = vmul.f32 %v641, %v2222
        %v5151 = vmul.f32 %v643, %v2224
        %v5152 = vmul.f32 %v645, %v2226
        %v5153 = vmul.f32 %v647, %v2228
        %v5154 = vmul.f32 %v649, %v2230
        %v5155 = vmul.f32 %v651, %v2232
        %v5156 = vmul.f32 %v653, %v2234
        %v5157 = vmul.f32 %v655, %v2236
        %v5158 = vmul.f32 %v657, %v2238
        %v5159 = vmul.f32 %v659, %v2240
        %v5160 = vmul.f32 %v661, %v2242
        %v5161 = vmul.f32 %v663, %v2244
        %v5162 = vmul.f32 %v665, %v2246
        %v5163 = vmul.f32 %v667, %v2248
        %v5164 = vmul.f32 %v669, %v2250
        %v5165 = vmul.f32 %v671, %v2252
        %v5166 = vmul.f32 %v673, %v2254
        %v5167 = vmul.f32 %v675, %v2256
        %v5168 = vmul.f32 %v677, %v2258
        %v5169 = vmul.f32 %v679, %v2260
        %v5170 = vmul.f32 %v2259, 0.0
        %v5171 = vlaneseq
        %v5172 = vshrl.u32 %v5171, 7
        %v5173 = vsub.s32 5, %v5172
        %v5174 = vrot.slane %v712, %v5173
        %v5175 = vadd.f32 %v5138, %v5174
        %v5176 = vadd.f32 %v5139, %v5174
        %v5177 = vadd.f32 %v5140, %v5174
        %v5178 = vadd.f32 %v5141, %v5174
        %v5179 = vadd.f32 %v5142, %v5174
        %v5180 = vadd.f32 %v5143, %v5174
        %v5181 = vadd.f32 %v5144, %v5174
        %v5182 = vadd.f32 %v5145, %v5174
        %v5183 = vadd.f32 %v5146, %v5174
        %v5184 = vadd.f32 %v5147, %v5174
        %v5185 = vadd.f32 %v5148, %v5174
        %v5186 = vadd.f32 %v5149, %v5174
        %v5187 = vadd.f32 %v5150, %v5174
        %v5188 = vadd.f32 %v5151, %v5174
        %v5189 = vadd.f32 %v5152, %v5174
        %v5190 = vadd.f32 %v5153, %v5174
        %v5191 = vadd.f32 %v5154, %v5174
        %v5192 = vadd.f32 %v5155, %v5174
        %v5193 = vadd.f32 %v5156, %v5174
        %v5194 = vadd.f32 %v5157, %v5174
        %v5195 = vadd.f32 %v5158, %v5174
        %v5196 = vadd.f32 %v5159, %v5174
        %v5197 = vadd.f32 %v5160, %v5174
        %v5198 = vadd.f32 %v5161, %v5174
        %v5199 = vadd.f32 %v5162, %v5174
        %v5200 = vadd.f32 %v5163, %v5174
        %v5201 = vadd.f32 %v5164, %v5174
        %v5202 = vadd.f32 %v5165, %v5174
        %v5203 = vadd.f32 %v5166, %v5174
        %v5204 = vadd.f32 %v5167, %v5174
        %v5205 = vadd.f32 %v5168, %v5174
        %v5206 = vadd.f32 %v5169, %v5174
        %v5207 = vadd.f32 %v5170, %v5174
        %v5208 = vmul.f32 %v396, %v2198
        %v5209 = vmul.f32 %v402, %v2200
        %v5210 = vmul.f32 %v408, %v2202
        %v5211 = vmul.f32 %v414, %v2204
        %v5212 = vmul.f32 %v420, %v2206
        %v5213 = vmul.f32 %v426, %v2208
        %v5214 = vmul.f32 %v432, %v2210
        %v5215 = vmul.f32 %v438, %v2212
        %v5216 = vmul.f32 %v444, %v2214
        %v5217 = vmul.f32 %v450, %v2216
        %v5218 = vmul.f32 %v456, %v2218
        %v5219 = vmul.f32 %v462, %v2220
        %v5220 = vmul.f32 %v468, %v2222
        %v5221 = vmul.f32 %v474, %v2224
        %v5222 = vmul.f32 %v480, %v2226
        %v5223 = vmul.f32 %v486, %v2228
        %v5224 = vmul.f32 %v492, %v2230
        %v5225 = vmul.f32 %v498, %v2232
        %v5226 = vmul.f32 %v504, %v2234
        %v5227 = vmul.f32 %v510, %v2236
        %v5228 = vmul.f32 %v516, %v2238
        %v5229 = vmul.f32 %v522, %v2240
        %v5230 = vmul.f32 %v528, %v2242
        %v5231 = vmul.f32 %v534, %v2244
        %v5232 = vmul.f32 %v540, %v2246
        %v5233 = vmul.f32 %v546, %v2248
        %v5234 = vmul.f32 %v552, %v2250
        %v5235 = vmul.f32 %v558, %v2252
        %v5236 = vmul.f32 %v564, %v2254
        %v5237 = vmul.f32 %v570, %v2256
        %v5238 = vmul.f32 %v576, %v2258
        %v5239 = vmul.f32 %v582, %v2260
        %v5273 = vrot.slane %v5175, 1
        %v5274 = vrot.slane %v5176, 1
        %v5275 = vsel %vm874, %v5273, %v5274
        %v5276 = vrot.slane %v5177, 1
        %v5277 = vsel %vm874, %v5274, %v5276
        %v5278 = vrot.slane %v5178, 1
        %v5279 = vsel %vm874, %v5276, %v5278
        %v5280 = vrot.slane %v5179, 1
        %v5281 = vsel %vm874, %v5278, %v5280
        %v5282 = vrot.slane %v5180, 1
        %v5283 = vsel %vm874, %v5280, %v5282
        %v5284 = vrot.slane %v5181, 1
        %v5285 = vsel %vm874, %v5282, %v5284
        %v5286 = vrot.slane %v5182, 1
        %v5287 = vsel %vm874, %v5284, %v5286
        %v5288 = vrot.slane %v5183, 1
        %v5289 = vsel %vm874, %v5286, %v5288
        %v5290 = vrot.slane %v5184, 1
        %v5291 = vsel %vm874, %v5288, %v5290
        %v5292 = vrot.slane %v5185, 1
        %v5293 = vsel %vm874, %v5290, %v5292
        %v5294 = vrot.slane %v5186, 1
        %v5295 = vsel %vm874, %v5292, %v5294
        %v5296 = vrot.slane %v5187, 1
        %v5297 = vsel %vm874, %v5294, %v5296
        %v5298 = vrot.slane %v5188, 1
        %v5299 = vsel %vm874, %v5296, %v5298
        %v5300 = vrot.slane %v5189, 1
        %v5301 = vsel %vm874, %v5298, %v5300
        %v5302 = vrot.slane %v5190, 1
        %v5303 = vsel %vm874, %v5300, %v5302
        %v5304 = vrot.slane %v5191, 1
        %v5305 = vsel %vm874, %v5302, %v5304
        %v5306 = vrot.slane %v5192, 1
        %v5307 = vsel %vm874, %v5304, %v5306
        %v5308 = vrot.slane %v5193, 1
        %v5309 = vsel %vm874, %v5306, %v5308
        %v5310 = vrot.slane %v5194, 1
        %v5311 = vsel %vm874, %v5308, %v5310
        %v5312 = vrot.slane %v5195, 1
        %v5313 = vsel %vm874, %v5310, %v5312
        %v5314 = vrot.slane %v5196, 1
        %v5315 = vsel %vm874, %v5312, %v5314
        %v5316 = vrot.slane %v5197, 1
        %v5317 = vsel %vm874, %v5314, %v5316
        %v5318 = vrot.slane %v5198, 1
        %v5319 = vsel %vm874, %v5316, %v5318
        %v5320 = vrot.slane %v5199, 1
        %v5321 = vsel %vm874, %v5318, %v5320
        %v5322 = vrot.slane %v5200, 1
        %v5323 = vsel %vm874, %v5320, %v5322
        %v5324 = vrot.slane %v5201, 1
        %v5325 = vsel %vm874, %v5322, %v5324
        %v5326 = vrot.slane %v5202, 1
        %v5327 = vsel %vm874, %v5324, %v5326
        %v5328 = vrot.slane %v5203, 1
        %v5329 = vsel %vm874, %v5326, %v5328
        %v5330 = vrot.slane %v5204, 1
        %v5331 = vsel %vm874, %v5328, %v5330
        %v5332 = vrot.slane %v5205, 1
        %v5333 = vsel %vm874, %v5330, %v5332
        %v5334 = vrot.slane %v5206, 1
        %v5335 = vsel %vm874, %v5332, %v5334
        %v5336 = vrot.slane %v5207, 1
        %v5337 = vsel %vm874, %v5334, %v5336
        %v5370 = vmul.f32 %v394, %v5275
        %v5371 = vmul.f32 %v400, %v5277
        %v5372 = vmul.f32 %v406, %v5279
        %v5373 = vmul.f32 %v412, %v5281
        %v5374 = vmul.f32 %v418, %v5283
        %v5375 = vmul.f32 %v424, %v5285
        %v5376 = vmul.f32 %v430, %v5287
        %v5377 = vmul.f32 %v436, %v5289
        %v5378 = vmul.f32 %v442, %v5291
        %v5379 = vmul.f32 %v448, %v5293
        %v5380 = vmul.f32 %v454, %v5295
        %v5381 = vmul.f32 %v460, %v5297
        %v5382 = vmul.f32 %v466, %v5299
        %v5383 = vmul.f32 %v472, %v5301
        %v5384 = vmul.f32 %v478, %v5303
        %v5385 = vmul.f32 %v484, %v5305
        %v5386 = vmul.f32 %v490, %v5307
        %v5387 = vmul.f32 %v496, %v5309
        %v5388 = vmul.f32 %v502, %v5311
        %v5389 = vmul.f32 %v508, %v5313
        %v5390 = vmul.f32 %v514, %v5315
        %v5391 = vmul.f32 %v520, %v5317
        %v5392 = vmul.f32 %v526, %v5319
        %v5393 = vmul.f32 %v532, %v5321
        %v5394 = vmul.f32 %v538, %v5323
        %v5395 = vmul.f32 %v544, %v5325
        %v5396 = vmul.f32 %v550, %v5327
        %v5397 = vmul.f32 %v556, %v5329
        %v5398 = vmul.f32 %v562, %v5331
        %v5399 = vmul.f32 %v568, %v5333
        %v5400 = vmul.f32 %v574, %v5335
        %v5401 = vmul.f32 %v580, %v5337
        %v5402 = vmax.f32 %v4496, %v5370
        %v5403 = vmax.f32 %v4497, %v5371
        %v5404 = vmax.f32 %v4498, %v5372
        %v5405 = vmax.f32 %v4499, %v5373
        %v5406 = vmax.f32 %v4500, %v5374
        %v5407 = vmax.f32 %v4501, %v5375
        %v5408 = vmax.f32 %v4502, %v5376
        %v5409 = vmax.f32 %v4503, %v5377
        %v5410 = vmax.f32 %v4504, %v5378
        %v5411 = vmax.f32 %v4505, %v5379
        %v5412 = vmax.f32 %v4506, %v5380
        %v5413 = vmax.f32 %v4507, %v5381
        %v5414 = vmax.f32 %v4508, %v5382
        %v5415 = vmax.f32 %v4509, %v5383
        %v5416 = vmax.f32 %v4510, %v5384
        %v5417 = vmax.f32 %v4511, %v5385
        %v5418 = vmax.f32 %v4512, %v5386
        %v5419 = vmax.f32 %v4513, %v5387
        %v5420 = vmax.f32 %v4514, %v5388
        %v5421 = vmax.f32 %v4515, %v5389
        %v5422 = vmax.f32 %v4516, %v5390
        %v5423 = vmax.f32 %v4517, %v5391
        %v5424 = vmax.f32 %v4518, %v5392
        %v5425 = vmax.f32 %v4519, %v5393
        %v5426 = vmax.f32 %v4520, %v5394
        %v5427 = vmax.f32 %v4521, %v5395
        %v5428 = vmax.f32 %v4522, %v5396
        %v5429 = vmax.f32 %v4523, %v5397
        %v5430 = vmax.f32 %v4524, %v5398
        %v5431 = vmax.f32 %v4525, %v5399
        %v5432 = vmax.f32 %v4526, %v5400
        %v5433 = vmax.f32 %v4527, %v5401
        %v5434 = vsub.f32 %v4496, %v5402
        %v5435 = vsub.f32 %v4497, %v5403
        %v5436 = vsub.f32 %v4498, %v5404
        %v5437 = vsub.f32 %v4499, %v5405
        %v5438 = vsub.f32 %v4500, %v5406
        %v5439 = vsub.f32 %v4501, %v5407
        %v5440 = vsub.f32 %v4502, %v5408
        %v5441 = vsub.f32 %v4503, %v5409
        %v5442 = vsub.f32 %v4504, %v5410
        %v5443 = vsub.f32 %v4505, %v5411
        %v5444 = vsub.f32 %v4506, %v5412
        %v5445 = vsub.f32 %v4507, %v5413
        %v5446 = vsub.f32 %v4508, %v5414
        %v5447 = vsub.f32 %v4509, %v5415
        %v5448 = vsub.f32 %v4510, %v5416
        %v5449 = vsub.f32 %v4511, %v5417
        %v5450 = vsub.f32 %v4512, %v5418
        %v5451 = vsub.f32 %v4513, %v5419
        %v5452 = vsub.f32 %v4514, %v5420
        %v5453 = vsub.f32 %v4515, %v5421
        %v5454 = vsub.f32 %v4516, %v5422
        %v5455 = vsub.f32 %v4517, %v5423
        %v5456 = vsub.f32 %v4518, %v5424
        %v5457 = vsub.f32 %v4519, %v5425
        %v5458 = vsub.f32 %v4520, %v5426
        %v5459 = vsub.f32 %v4521, %v5427
        %v5460 = vsub.f32 %v4522, %v5428
        %v5461 = vsub.f32 %v4523, %v5429
        %v5462 = vsub.f32 %v4524, %v5430
        %v5463 = vsub.f32 %v4525, %v5431
        %v5464 = vsub.f32 %v4526, %v5432
        %v5465 = vsub.f32 %v4527, %v5433
        %v5466 = vmul.f32 %v5434, 1.442695
        %v5467 = vpow.pop %v5466
        %v5468 = vmul.f32 %v5435, 1.442695
        %v5469 = vpow.pop %v5468
        %v5470 = vmul.f32 %v5436, 1.442695
        %v5471 = vpow.pop %v5470
        %v5472 = vmul.f32 %v5437, 1.442695
        %v5473 = vpow.pop %v5472
        %v5474 = vmul.f32 %v5438, 1.442695
        %v5475 = vpow.pop %v5474
        %v5476 = vmul.f32 %v5439, 1.442695
        %v5477 = vpow.pop %v5476
        %v5478 = vmul.f32 %v5440, 1.442695
        %v5479 = vpow.pop %v5478
        %v5480 = vmul.f32 %v5441, 1.442695
        %v5481 = vpow.pop %v5480
        %v5482 = vmul.f32 %v5442, 1.442695
        %v5483 = vpow.pop %v5482
        %v5484 = vmul.f32 %v5443, 1.442695
        %v5485 = vpow.pop %v5484
        %v5486 = vmul.f32 %v5444, 1.442695
        %v5487 = vpow.pop %v5486
        %v5488 = vmul.f32 %v5445, 1.442695
        %v5489 = vpow.pop %v5488
        %v5490 = vmul.f32 %v5446, 1.442695
        %v5491 = vpow.pop %v5490
        %v5492 = vmul.f32 %v5447, 1.442695
        %v5493 = vpow.pop %v5492
        %v5494 = vmul.f32 %v5448, 1.442695
        %v5495 = vpow.pop %v5494
        %v5496 = vmul.f32 %v5449, 1.442695
        %v5497 = vpow.pop %v5496
        %v5498 = vmul.f32 %v5450, 1.442695
        %v5499 = vpow.pop %v5498
        %v5500 = vmul.f32 %v5451, 1.442695
        %v5501 = vpow.pop %v5500
        %v5502 = vmul.f32 %v5452, 1.442695
        %v5503 = vpow.pop %v5502
        %v5504 = vmul.f32 %v5453, 1.442695
        %v5505 = vpow.pop %v5504
        %v5506 = vmul.f32 %v5454, 1.442695
        %v5507 = vpow.pop %v5506
        %v5508 = vmul.f32 %v5455, 1.442695
        %v5509 = vpow.pop %v5508
        %v5510 = vmul.f32 %v5456, 1.442695
        %v5511 = vpow.pop %v5510
        %v5512 = vmul.f32 %v5457, 1.442695
        %v5513 = vpow.pop %v5512
        %v5514 = vmul.f32 %v5458, 1.442695
        %v5515 = vpow.pop %v5514
        %v5516 = vmul.f32 %v5459, 1.442695
        %v5517 = vpow.pop %v5516
        %v5518 = vmul.f32 %v5460, 1.442695
        %v5519 = vpow.pop %v5518
        %v5520 = vmul.f32 %v5461, 1.442695
        %v5521 = vpow.pop %v5520
        %v5522 = vmul.f32 %v5462, 1.442695
        %v5523 = vpow.pop %v5522
        %v5524 = vmul.f32 %v5463, 1.442695
        %v5525 = vpow.pop %v5524
        %v5526 = vmul.f32 %v5464, 1.442695
        %v5527 = vpow.pop %v5526
        %v5528 = vmul.f32 %v5465, 1.442695
        %v5529 = vpow.pop %v5528
        %v5530 = vsub.f32 %v5370, %v5402
        %v5531 = vsub.f32 %v5371, %v5403
        %v5532 = vsub.f32 %v5372, %v5404
        %v5533 = vsub.f32 %v5373, %v5405
        %v5534 = vsub.f32 %v5374, %v5406
        %v5535 = vsub.f32 %v5375, %v5407
        %v5536 = vsub.f32 %v5376, %v5408
        %v5537 = vsub.f32 %v5377, %v5409
        %v5538 = vsub.f32 %v5378, %v5410
        %v5539 = vsub.f32 %v5379, %v5411
        %v5540 = vsub.f32 %v5380, %v5412
        %v5541 = vsub.f32 %v5381, %v5413
        %v5542 = vsub.f32 %v5382, %v5414
        %v5543 = vsub.f32 %v5383, %v5415
        %v5544 = vsub.f32 %v5384, %v5416
        %v5545 = vsub.f32 %v5385, %v5417
        %v5546 = vsub.f32 %v5386, %v5418
        %v5547 = vsub.f32 %v5387, %v5419
        %v5548 = vsub.f32 %v5388, %v5420
        %v5549 = vsub.f32 %v5389, %v5421
        %v5550 = vsub.f32 %v5390, %v5422
        %v5551 = vsub.f32 %v5391, %v5423
        %v5552 = vsub.f32 %v5392, %v5424
        %v5553 = vsub.f32 %v5393, %v5425
        %v5554 = vsub.f32 %v5394, %v5426
        %v5555 = vsub.f32 %v5395, %v5427
        %v5556 = vsub.f32 %v5396, %v5428
        %v5557 = vsub.f32 %v5397, %v5429
        %v5558 = vsub.f32 %v5398, %v5430
        %v5559 = vsub.f32 %v5399, %v5431
        %v5560 = vsub.f32 %v5400, %v5432
        %v5561 = vsub.f32 %v5401, %v5433
        %v5562 = vmul.f32 %v5530, 1.442695
        %v5563 = vpow.pop %v5562
        %v5564 = vmul.f32 %v5531, 1.442695
        %v5565 = vpow.pop %v5564
        %v5566 = vmul.f32 %v5532, 1.442695
        %v5567 = vpow.pop %v5566
        %v5568 = vmul.f32 %v5533, 1.442695
        %v5569 = vpow.pop %v5568
        %v5570 = vmul.f32 %v5534, 1.442695
        %v5571 = vpow.pop %v5570
        %v5572 = vmul.f32 %v5535, 1.442695
        %v5573 = vpow.pop %v5572
        %v5574 = vmul.f32 %v5536, 1.442695
        %v5575 = vpow.pop %v5574
        %v5576 = vmul.f32 %v5537, 1.442695
        %v5577 = vpow.pop %v5576
        %v5578 = vmul.f32 %v5538, 1.442695
        %v5579 = vpow.pop %v5578
        %v5580 = vmul.f32 %v5539, 1.442695
        %v5581 = vpow.pop %v5580
        %v5582 = vmul.f32 %v5540, 1.442695
        %v5583 = vpow.pop %v5582
        %v5584 = vmul.f32 %v5541, 1.442695
        %v5585 = vpow.pop %v5584
        %v5586 = vmul.f32 %v5542, 1.442695
        %v5587 = vpow.pop %v5586
        %v5588 = vmul.f32 %v5543, 1.442695
        %v5589 = vpow.pop %v5588
        %v5590 = vmul.f32 %v5544, 1.442695
        %v5591 = vpow.pop %v5590
        %v5592 = vmul.f32 %v5545, 1.442695
        %v5593 = vpow.pop %v5592
        %v5594 = vmul.f32 %v5546, 1.442695
        %v5595 = vpow.pop %v5594
        %v5596 = vmul.f32 %v5547, 1.442695
        %v5597 = vpow.pop %v5596
        %v5598 = vmul.f32 %v5548, 1.442695
        %v5599 = vpow.pop %v5598
        %v5600 = vmul.f32 %v5549, 1.442695
        %v5601 = vpow.pop %v5600
        %v5602 = vmul.f32 %v5550, 1.442695
        %v5603 = vpow.pop %v5602
        %v5604 = vmul.f32 %v5551, 1.442695
        %v5605 = vpow.pop %v5604
        %v5606 = vmul.f32 %v5552, 1.442695
        %v5607 = vpow.pop %v5606
        %v5608 = vmul.f32 %v5553, 1.442695
        %v5609 = vpow.pop %v5608
        %v5610 = vmul.f32 %v5554, 1.442695
        %v5611 = vpow.pop %v5610
        %v5612 = vmul.f32 %v5555, 1.442695
        %v5613 = vpow.pop %v5612
        %v5614 = vmul.f32 %v5556, 1.442695
        %v5615 = vpow.pop %v5614
        %v5616 = vmul.f32 %v5557, 1.442695
        %v5617 = vpow.pop %v5616
        %v5618 = vmul.f32 %v5558, 1.442695
        %v5619 = vpow.pop %v5618
        %v5620 = vmul.f32 %v5559, 1.442695
        %v5621 = vpow.pop %v5620
        %v5622 = vmul.f32 %v5560, 1.442695
        %v5623 = vpow.pop %v5622
        %v5624 = vmul.f32 %v5561, 1.442695
        %v5625 = vpow.pop %v5624
        %v5626 = vmul.f32 %v4752, %v5467
        %v5627 = vmul.f32 %v4753, %v5469
        %v5628 = vmul.f32 %v4754, %v5471
        %v5629 = vmul.f32 %v4755, %v5473
        %v5630 = vmul.f32 %v4756, %v5475
        %v5631 = vmul.f32 %v4757, %v5477
        %v5632 = vmul.f32 %v4758, %v5479
        %v5633 = vmul.f32 %v4759, %v5481
        %v5634 = vmul.f32 %v4760, %v5483
        %v5635 = vmul.f32 %v4761, %v5485
        %v5636 = vmul.f32 %v4762, %v5487
        %v5637 = vmul.f32 %v4763, %v5489
        %v5638 = vmul.f32 %v4764, %v5491
        %v5639 = vmul.f32 %v4765, %v5493
        %v5640 = vmul.f32 %v4766, %v5495
        %v5641 = vmul.f32 %v4767, %v5497
        %v5642 = vmul.f32 %v4768, %v5499
        %v5643 = vmul.f32 %v4769, %v5501
        %v5644 = vmul.f32 %v4770, %v5503
        %v5645 = vmul.f32 %v4771, %v5505
        %v5646 = vmul.f32 %v4772, %v5507
        %v5647 = vmul.f32 %v4773, %v5509
        %v5648 = vmul.f32 %v4774, %v5511
        %v5649 = vmul.f32 %v4775, %v5513
        %v5650 = vmul.f32 %v4776, %v5515
        %v5651 = vmul.f32 %v4777, %v5517
        %v5652 = vmul.f32 %v4778, %v5519
        %v5653 = vmul.f32 %v4779, %v5521
        %v5654 = vmul.f32 %v4780, %v5523
        %v5655 = vmul.f32 %v4781, %v5525
        %v5656 = vmul.f32 %v4782, %v5527
        %v5657 = vmul.f32 %v4783, %v5529
        %v5658 = vadd.f32 %v5626, %v5563
        %v5659 = vadd.f32 %v5627, %v5565
        %v5660 = vadd.f32 %v5628, %v5567
        %v5661 = vadd.f32 %v5629, %v5569
        %v5662 = vadd.f32 %v5630, %v5571
        %v5663 = vadd.f32 %v5631, %v5573
        %v5664 = vadd.f32 %v5632, %v5575
        %v5665 = vadd.f32 %v5633, %v5577
        %v5666 = vadd.f32 %v5634, %v5579
        %v5667 = vadd.f32 %v5635, %v5581
        %v5668 = vadd.f32 %v5636, %v5583
        %v5669 = vadd.f32 %v5637, %v5585
        %v5670 = vadd.f32 %v5638, %v5587
        %v5671 = vadd.f32 %v5639, %v5589
        %v5672 = vadd.f32 %v5640, %v5591
        %v5673 = vadd.f32 %v5641, %v5593
        %v5674 = vadd.f32 %v5642, %v5595
        %v5675 = vadd.f32 %v5643, %v5597
        %v5676 = vadd.f32 %v5644, %v5599
        %v5677 = vadd.f32 %v5645, %v5601
        %v5678 = vadd.f32 %v5646, %v5603
        %v5679 = vadd.f32 %v5647, %v5605
        %v5680 = vadd.f32 %v5648, %v5607
        %v5681 = vadd.f32 %v5649, %v5609
        %v5682 = vadd.f32 %v5650, %v5611
        %v5683 = vadd.f32 %v5651, %v5613
        %v5684 = vadd.f32 %v5652, %v5615
        %v5685 = vadd.f32 %v5653, %v5617
        %v5686 = vadd.f32 %v5654, %v5619
        %v5687 = vadd.f32 %v5655, %v5621
        %v5688 = vadd.f32 %v5656, %v5623
        %v5689 = vadd.f32 %v5657, %v5625
        %v5722 = vrot.slane %v5467, 1
        %v5723 = vrot.slane %v5469, 1
        %v5724 = vsel %vm874, %v5722, %v5723
        %v5725 = vrot.slane %v5471, 1
        %v5726 = vsel %vm874, %v5723, %v5725
        %v5727 = vrot.slane %v5473, 1
        %v5728 = vsel %vm874, %v5725, %v5727
        %v5729 = vrot.slane %v5475, 1
        %v5730 = vsel %vm874, %v5727, %v5729
        %v5731 = vrot.slane %v5477, 1
        %v5732 = vsel %vm874, %v5729, %v5731
        %v5733 = vrot.slane %v5479, 1
        %v5734 = vsel %vm874, %v5731, %v5733
        %v5735 = vrot.slane %v5481, 1
        %v5736 = vsel %vm874, %v5733, %v5735
        %v5737 = vrot.slane %v5483, 1
        %v5738 = vsel %vm874, %v5735, %v5737
        %v5739 = vrot.slane %v5485, 1
        %v5740 = vsel %vm874, %v5737, %v5739
        %v5741 = vrot.slane %v5487, 1
        %v5742 = vsel %vm874, %v5739, %v5741
        %v5743 = vrot.slane %v5489, 1
        %v5744 = vsel %vm874, %v5741, %v5743
        %v5745 = vrot.slane %v5491, 1
        %v5746 = vsel %vm874, %v5743, %v5745
        %v5747 = vrot.slane %v5493, 1
        %v5748 = vsel %vm874, %v5745, %v5747
        %v5749 = vrot.slane %v5495, 1
        %v5750 = vsel %vm874, %v5747, %v5749
        %v5751 = vrot.slane %v5497, 1
        %v5752 = vsel %vm874, %v5749, %v5751
        %v5753 = vrot.slane %v5499, 1
        %v5754 = vsel %vm874, %v5751, %v5753
        %v5755 = vrot.slane %v5501, 1
        %v5756 = vsel %vm874, %v5753, %v5755
        %v5757 = vrot.slane %v5503, 1
        %v5758 = vsel %vm874, %v5755, %v5757
        %v5759 = vrot.slane %v5505, 1
        %v5760 = vsel %vm874, %v5757, %v5759
        %v5761 = vrot.slane %v5507, 1
        %v5762 = vsel %vm874, %v5759, %v5761
        %v5763 = vrot.slane %v5509, 1
        %v5764 = vsel %vm874, %v5761, %v5763
        %v5765 = vrot.slane %v5511, 1
        %v5766 = vsel %vm874, %v5763, %v5765
        %v5767 = vrot.slane %v5513, 1
        %v5768 = vsel %vm874, %v5765, %v5767
        %v5769 = vrot.slane %v5515, 1
        %v5770 = vsel %vm874, %v5767, %v5769
        %v5771 = vrot.slane %v5517, 1
        %v5772 = vsel %vm874, %v5769, %v5771
        %v5773 = vrot.slane %v5519, 1
        %v5774 = vsel %vm874, %v5771, %v5773
        %v5775 = vrot.slane %v5521, 1
        %v5776 = vsel %vm874, %v5773, %v5775
        %v5777 = vrot.slane %v5523, 1
        %v5778 = vsel %vm874, %v5775, %v5777
        %v5779 = vrot.slane %v5525, 1
        %v5780 = vsel %vm874, %v5777, %v5779
        %v5781 = vrot.slane %v5527, 1
        %v5782 = vsel %vm874, %v5779, %v5781
        %v5783 = vrot.slane %v5529, 1
        %v5784 = vsel %vm874, %v5781, %v5783
        %v5818 = vmul.f32 %v5105, %v5722
        %v5819 = vmul.f32 %v5106, %v5724
        %v5820 = vmul.f32 %v5107, %v5726
        %v5821 = vmul.f32 %v5108, %v5728
        %v5822 = vmul.f32 %v5109, %v5730
        %v5823 = vmul.f32 %v5110, %v5732
        %v5824 = vmul.f32 %v5111, %v5734
        %v5825 = vmul.f32 %v5112, %v5736
        %v5826 = vmul.f32 %v5113, %v5738
        %v5827 = vmul.f32 %v5114, %v5740
        %v5828 = vmul.f32 %v5115, %v5742
        %v5829 = vmul.f32 %v5116, %v5744
        %v5830 = vmul.f32 %v5117, %v5746
        %v5831 = vmul.f32 %v5118, %v5748
        %v5832 = vmul.f32 %v5119, %v5750
        %v5833 = vmul.f32 %v5120, %v5752
        %v5834 = vmul.f32 %v5121, %v5754
        %v5835 = vmul.f32 %v5122, %v5756
        %v5836 = vmul.f32 %v5123, %v5758
        %v5837 = vmul.f32 %v5124, %v5760
        %v5838 = vmul.f32 %v5125, %v5762
        %v5839 = vmul.f32 %v5126, %v5764
        %v5840 = vmul.f32 %v5127, %v5766
        %v5841 = vmul.f32 %v5128, %v5768
        %v5842 = vmul.f32 %v5129, %v5770
        %v5843 = vmul.f32 %v5130, %v5772
        %v5844 = vmul.f32 %v5131, %v5774
        %v5845 = vmul.f32 %v5132, %v5776
        %v5846 = vmul.f32 %v5133, %v5778
        %v5847 = vmul.f32 %v5134, %v5780
        %v5848 = vmul.f32 %v5135, %v5782
        %v5849 = vmul.f32 %v5136, %v5784
        %v5850 = vmul.f32 %v5137, %v5783
        %v5884 = vrot.slane %v5208, 1
        %v5885 = vrot.slane %v5209, 1
        %v5886 = vsel %vm874, %v5884, %v5885
        %v5887 = vrot.slane %v5210, 1
        %v5888 = vsel %vm874, %v5885, %v5887
        %v5889 = vrot.slane %v5211, 1
        %v5890 = vsel %vm874, %v5887, %v5889
        %v5891 = vrot.slane %v5212, 1
        %v5892 = vsel %vm874, %v5889, %v5891
        %v5893 = vrot.slane %v5213, 1
        %v5894 = vsel %vm874, %v5891, %v5893
        %v5895 = vrot.slane %v5214, 1
        %v5896 = vsel %vm874, %v5893, %v5895
        %v5897 = vrot.slane %v5215, 1
        %v5898 = vsel %vm874, %v5895, %v5897
        %v5899 = vrot.slane %v5216, 1
        %v5900 = vsel %vm874, %v5897, %v5899
        %v5901 = vrot.slane %v5217, 1
        %v5902 = vsel %vm874, %v5899, %v5901
        %v5903 = vrot.slane %v5218, 1
        %v5904 = vsel %vm874, %v5901, %v5903
        %v5905 = vrot.slane %v5219, 1
        %v5906 = vsel %vm874, %v5903, %v5905
        %v5907 = vrot.slane %v5220, 1
        %v5908 = vsel %vm874, %v5905, %v5907
        %v5909 = vrot.slane %v5221, 1
        %v5910 = vsel %vm874, %v5907, %v5909
        %v5911 = vrot.slane %v5222, 1
        %v5912 = vsel %vm874, %v5909, %v5911
        %v5913 = vrot.slane %v5223, 1
        %v5914 = vsel %vm874, %v5911, %v5913
        %v5915 = vrot.slane %v5224, 1
        %v5916 = vsel %vm874, %v5913, %v5915
        %v5917 = vrot.slane %v5225, 1
        %v5918 = vsel %vm874, %v5915, %v5917
        %v5919 = vrot.slane %v5226, 1
        %v5920 = vsel %vm874, %v5917, %v5919
        %v5921 = vrot.slane %v5227, 1
        %v5922 = vsel %vm874, %v5919, %v5921
        %v5923 = vrot.slane %v5228, 1
        %v5924 = vsel %vm874, %v5921, %v5923
        %v5925 = vrot.slane %v5229, 1
        %v5926 = vsel %vm874, %v5923, %v5925
        %v5927 = vrot.slane %v5230, 1
        %v5928 = vsel %vm874, %v5925, %v5927
        %v5929 = vrot.slane %v5231, 1
        %v5930 = vsel %vm874, %v5927, %v5929
        %v5931 = vrot.slane %v5232, 1
        %v5932 = vsel %vm874, %v5929, %v5931
        %v5933 = vrot.slane %v5233, 1
        %v5934 = vsel %vm874, %v5931, %v5933
        %v5935 = vrot.slane %v5234, 1
        %v5936 = vsel %vm874, %v5933, %v5935
        %v5937 = vrot.slane %v5235, 1
        %v5938 = vsel %vm874, %v5935, %v5937
        %v5939 = vrot.slane %v5236, 1
        %v5940 = vsel %vm874, %v5937, %v5939
        %v5941 = vrot.slane %v5237, 1
        %v5942 = vsel %vm874, %v5939, %v5941
        %v5943 = vrot.slane %v5238, 1
        %v5944 = vsel %vm874, %v5941, %v5943
        %v5945 = vrot.slane %v5239, 1
        %v5946 = vsel %vm874, %v5943, %v5945
        %v5947 = vrot.slane %v5170, 1
        %v5948 = vsel %vm874, %v5945, %v5947
        %v5981 = vmul.f32 %v5563, %v5886
        %v5982 = vmul.f32 %v5565, %v5888
        %v5983 = vmul.f32 %v5567, %v5890
        %v5984 = vmul.f32 %v5569, %v5892
        %v5985 = vmul.f32 %v5571, %v5894
        %v5986 = vmul.f32 %v5573, %v5896
        %v5987 = vmul.f32 %v5575, %v5898
        %v5988 = vmul.f32 %v5577, %v5900
        %v5989 = vmul.f32 %v5579, %v5902
        %v5990 = vmul.f32 %v5581, %v5904
        %v5991 = vmul.f32 %v5583, %v5906
        %v5992 = vmul.f32 %v5585, %v5908
        %v5993 = vmul.f32 %v5587, %v5910
        %v5994 = vmul.f32 %v5589, %v5912
        %v5995 = vmul.f32 %v5591, %v5914
        %v5996 = vmul.f32 %v5593, %v5916
        %v5997 = vmul.f32 %v5595, %v5918
        %v5998 = vmul.f32 %v5597, %v5920
        %v5999 = vmul.f32 %v5599, %v5922
        %v6000 = vmul.f32 %v5601, %v5924
        %v6001 = vmul.f32 %v5603, %v5926
        %v6002 = vmul.f32 %v5605, %v5928
        %v6003 = vmul.f32 %v5607, %v5930
        %v6004 = vmul.f32 %v5609, %v5932
        %v6005 = vmul.f32 %v5611, %v5934
        %v6006 = vmul.f32 %v5613, %v5936
        %v6007 = vmul.f32 %v5615, %v5938
        %v6008 = vmul.f32 %v5617, %v5940
        %v6009 = vmul.f32 %v5619, %v5942
        %v6010 = vmul.f32 %v5621, %v5944
        %v6011 = vmul.f32 %v5623, %v5946
        %v6012 = vmul.f32 %v5625, %v5948
        %v6045 = vrot.slane %v5981, 1
        %v6046 = vrot.slane %v5982, 1
        %v6047 = vsel %vm874, %v6045, %v6046
        %v6048 = vrot.slane %v5983, 1
        %v6049 = vsel %vm874, %v6046, %v6048
        %v6050 = vrot.slane %v5984, 1
        %v6051 = vsel %vm874, %v6048, %v6050
        %v6052 = vrot.slane %v5985, 1
        %v6053 = vsel %vm874, %v6050, %v6052
        %v6054 = vrot.slane %v5986, 1
        %v6055 = vsel %vm874, %v6052, %v6054
        %v6056 = vrot.slane %v5987, 1
        %v6057 = vsel %vm874, %v6054, %v6056
        %v6058 = vrot.slane %v5988, 1
        %v6059 = vsel %vm874, %v6056, %v6058
        %v6060 = vrot.slane %v5989, 1
        %v6061 = vsel %vm874, %v6058, %v6060
        %v6062 = vrot.slane %v5990, 1
        %v6063 = vsel %vm874, %v6060, %v6062
        %v6064 = vrot.slane %v5991, 1
        %v6065 = vsel %vm874, %v6062, %v6064
        %v6066 = vrot.slane %v5992, 1
        %v6067 = vsel %vm874, %v6064, %v6066
        %v6068 = vrot.slane %v5993, 1
        %v6069 = vsel %vm874, %v6066, %v6068
        %v6070 = vrot.slane %v5994, 1
        %v6071 = vsel %vm874, %v6068, %v6070
        %v6072 = vrot.slane %v5995, 1
        %v6073 = vsel %vm874, %v6070, %v6072
        %v6074 = vrot.slane %v5996, 1
        %v6075 = vsel %vm874, %v6072, %v6074
        %v6076 = vrot.slane %v5997, 1
        %v6077 = vsel %vm874, %v6074, %v6076
        %v6078 = vrot.slane %v5998, 1
        %v6079 = vsel %vm874, %v6076, %v6078
        %v6080 = vrot.slane %v5999, 1
        %v6081 = vsel %vm874, %v6078, %v6080
        %v6082 = vrot.slane %v6000, 1
        %v6083 = vsel %vm874, %v6080, %v6082
        %v6084 = vrot.slane %v6001, 1
        %v6085 = vsel %vm874, %v6082, %v6084
        %v6086 = vrot.slane %v6002, 1
        %v6087 = vsel %vm874, %v6084, %v6086
        %v6088 = vrot.slane %v6003, 1
        %v6089 = vsel %vm874, %v6086, %v6088
        %v6090 = vrot.slane %v6004, 1
        %v6091 = vsel %vm874, %v6088, %v6090
        %v6092 = vrot.slane %v6005, 1
        %v6093 = vsel %vm874, %v6090, %v6092
        %v6094 = vrot.slane %v6006, 1
        %v6095 = vsel %vm874, %v6092, %v6094
        %v6096 = vrot.slane %v6007, 1
        %v6097 = vsel %vm874, %v6094, %v6096
        %v6098 = vrot.slane %v6008, 1
        %v6099 = vsel %vm874, %v6096, %v6098
        %v6100 = vrot.slane %v6009, 1
        %v6101 = vsel %vm874, %v6098, %v6100
        %v6102 = vrot.slane %v6010, 1
        %v6103 = vsel %vm874, %v6100, %v6102
        %v6104 = vrot.slane %v6011, 1
        %v6105 = vsel %vm874, %v6102, %v6104
        %v6106 = vrot.slane %v6012, 1
        %v6107 = vsel %vm874, %v6104, %v6106
        %v6141 = vadd.f32 %v5818, %v6045
        %v6142 = vadd.f32 %v5819, %v6047
        %v6143 = vadd.f32 %v5820, %v6049
        %v6144 = vadd.f32 %v5821, %v6051
        %v6145 = vadd.f32 %v5822, %v6053
        %v6146 = vadd.f32 %v5823, %v6055
        %v6147 = vadd.f32 %v5824, %v6057
        %v6148 = vadd.f32 %v5825, %v6059
        %v6149 = vadd.f32 %v5826, %v6061
        %v6150 = vadd.f32 %v5827, %v6063
        %v6151 = vadd.f32 %v5828, %v6065
        %v6152 = vadd.f32 %v5829, %v6067
        %v6153 = vadd.f32 %v5830, %v6069
        %v6154 = vadd.f32 %v5831, %v6071
        %v6155 = vadd.f32 %v5832, %v6073
        %v6156 = vadd.f32 %v5833, %v6075
        %v6157 = vadd.f32 %v5834, %v6077
        %v6158 = vadd.f32 %v5835, %v6079
        %v6159 = vadd.f32 %v5836, %v6081
        %v6160 = vadd.f32 %v5837, %v6083
        %v6161 = vadd.f32 %v5838, %v6085
        %v6162 = vadd.f32 %v5839, %v6087
        %v6163 = vadd.f32 %v5840, %v6089
        %v6164 = vadd.f32 %v5841, %v6091
        %v6165 = vadd.f32 %v5842, %v6093
        %v6166 = vadd.f32 %v5843, %v6095
        %v6167 = vadd.f32 %v5844, %v6097
        %v6168 = vadd.f32 %v5845, %v6099
        %v6169 = vadd.f32 %v5846, %v6101
        %v6170 = vadd.f32 %v5847, %v6103
        %v6171 = vadd.f32 %v5848, %v6105
        %v6172 = vadd.f32 %v5849, %v6107
        %v6173 = vadd.f32 %v5850, %v6106
        %v6174 = vmul.f32 %v619, %v875
        %v6175 = vmul.f32 %v621, %v877
        %v6176 = vmul.f32 %v623, %v879
        %v6177 = vmul.f32 %v625, %v881
        %v6178 = vmul.f32 %v627, %v883
        %v6179 = vmul.f32 %v629, %v885
        %v6180 = vmul.f32 %v631, %v887
        %v6181 = vmul.f32 %v633, %v889
        %v6182 = vmul.f32 %v635, %v891
        %v6183 = vmul.f32 %v637, %v893
        %v6184 = vmul.f32 %v639, %v895
        %v6185 = vmul.f32 %v641, %v897
        %v6186 = vmul.f32 %v643, %v899
        %v6187 = vmul.f32 %v645, %v901
        %v6188 = vmul.f32 %v647, %v903
        %v6189 = vmul.f32 %v649, %v905
        %v6190 = vmul.f32 %v651, %v907
        %v6191 = vmul.f32 %v653, %v909
        %v6192 = vmul.f32 %v655, %v911
        %v6193 = vmul.f32 %v657, %v913
        %v6194 = vmul.f32 %v659, %v915
        %v6195 = vmul.f32 %v661, %v917
        %v6196 = vmul.f32 %v663, %v919
        %v6197 = vmul.f32 %v665, %v921
        %v6198 = vmul.f32 %v667, %v923
        %v6199 = vmul.f32 %v669, %v925
        %v6200 = vmul.f32 %v671, %v927
        %v6201 = vmul.f32 %v673, %v929
        %v6202 = vmul.f32 %v675, %v931
        %v6203 = vmul.f32 %v677, %v933
        %v6204 = vmul.f32 %v679, %v935
        %v6205 = vmul.f32 %v937, 0.0
        %v6206 = vmul.f32 %v936, 0.0
        %v6207 = vlaneseq
        %v6208 = vshrl.u32 %v6207, 7
        %v6209 = vsub.s32 6, %v6208
        %v6210 = vrot.slane %v712, %v6209
        %v6211 = vadd.f32 %v6174, %v6210
        %v6212 = vadd.f32 %v6175, %v6210
        %v6213 = vadd.f32 %v6176, %v6210
        %v6214 = vadd.f32 %v6177, %v6210
        %v6215 = vadd.f32 %v6178, %v6210
        %v6216 = vadd.f32 %v6179, %v6210
        %v6217 = vadd.f32 %v6180, %v6210
        %v6218 = vadd.f32 %v6181, %v6210
        %v6219 = vadd.f32 %v6182, %v6210
        %v6220 = vadd.f32 %v6183, %v6210
        %v6221 = vadd.f32 %v6184, %v6210
        %v6222 = vadd.f32 %v6185, %v6210
        %v6223 = vadd.f32 %v6186, %v6210
        %v6224 = vadd.f32 %v6187, %v6210
        %v6225 = vadd.f32 %v6188, %v6210
        %v6226 = vadd.f32 %v6189, %v6210
        %v6227 = vadd.f32 %v6190, %v6210
        %v6228 = vadd.f32 %v6191, %v6210
        %v6229 = vadd.f32 %v6192, %v6210
        %v6230 = vadd.f32 %v6193, %v6210
        %v6231 = vadd.f32 %v6194, %v6210
        %v6232 = vadd.f32 %v6195, %v6210
        %v6233 = vadd.f32 %v6196, %v6210
        %v6234 = vadd.f32 %v6197, %v6210
        %v6235 = vadd.f32 %v6198, %v6210
        %v6236 = vadd.f32 %v6199, %v6210
        %v6237 = vadd.f32 %v6200, %v6210
        %v6238 = vadd.f32 %v6201, %v6210
        %v6239 = vadd.f32 %v6202, %v6210
        %v6240 = vadd.f32 %v6203, %v6210
        %v6241 = vadd.f32 %v6204, %v6210
        %v6242 = vadd.f32 %v6205, %v6210
        %v6243 = vadd.f32 %v6206, %v6210
        %v6244 = vmul.f32 %v402, %v875
        %v6245 = vmul.f32 %v408, %v877
        %v6246 = vmul.f32 %v414, %v879
        %v6247 = vmul.f32 %v420, %v881
        %v6248 = vmul.f32 %v426, %v883
        %v6249 = vmul.f32 %v432, %v885
        %v6250 = vmul.f32 %v438, %v887
        %v6251 = vmul.f32 %v444, %v889
        %v6252 = vmul.f32 %v450, %v891
        %v6253 = vmul.f32 %v456, %v893
        %v6254 = vmul.f32 %v462, %v895
        %v6255 = vmul.f32 %v468, %v897
        %v6256 = vmul.f32 %v474, %v899
        %v6257 = vmul.f32 %v480, %v901
        %v6258 = vmul.f32 %v486, %v903
        %v6259 = vmul.f32 %v492, %v905
        %v6260 = vmul.f32 %v498, %v907
        %v6261 = vmul.f32 %v504, %v909
        %v6262 = vmul.f32 %v510, %v911
        %v6263 = vmul.f32 %v516, %v913
        %v6264 = vmul.f32 %v522, %v915
        %v6265 = vmul.f32 %v528, %v917
        %v6266 = vmul.f32 %v534, %v919
        %v6267 = vmul.f32 %v540, %v921
        %v6268 = vmul.f32 %v546, %v923
        %v6269 = vmul.f32 %v552, %v925
        %v6270 = vmul.f32 %v558, %v927
        %v6271 = vmul.f32 %v564, %v929
        %v6272 = vmul.f32 %v570, %v931
        %v6273 = vmul.f32 %v576, %v933
        %v6274 = vmul.f32 %v582, %v935
        %v6308 = vrot.slane %v6211, 7
        %v6309 = vrot.slane %v6212, 7
        %v6310 = vsel %vm1104, %v6308, %v6309
        %v6311 = vrot.slane %v6213, 7
        %v6312 = vsel %vm1104, %v6309, %v6311
        %v6313 = vrot.slane %v6214, 7
        %v6314 = vsel %vm1104, %v6311, %v6313
        %v6315 = vrot.slane %v6215, 7
        %v6316 = vsel %vm1104, %v6313, %v6315
        %v6317 = vrot.slane %v6216, 7
        %v6318 = vsel %vm1104, %v6315, %v6317
        %v6319 = vrot.slane %v6217, 7
        %v6320 = vsel %vm1104, %v6317, %v6319
        %v6321 = vrot.slane %v6218, 7
        %v6322 = vsel %vm1104, %v6319, %v6321
        %v6323 = vrot.slane %v6219, 7
        %v6324 = vsel %vm1104, %v6321, %v6323
        %v6325 = vrot.slane %v6220, 7
        %v6326 = vsel %vm1104, %v6323, %v6325
        %v6327 = vrot.slane %v6221, 7
        %v6328 = vsel %vm1104, %v6325, %v6327
        %v6329 = vrot.slane %v6222, 7
        %v6330 = vsel %vm1104, %v6327, %v6329
        %v6331 = vrot.slane %v6223, 7
        %v6332 = vsel %vm1104, %v6329, %v6331
        %v6333 = vrot.slane %v6224, 7
        %v6334 = vsel %vm1104, %v6331, %v6333
        %v6335 = vrot.slane %v6225, 7
        %v6336 = vsel %vm1104, %v6333, %v6335
        %v6337 = vrot.slane %v6226, 7
        %v6338 = vsel %vm1104, %v6335, %v6337
        %v6339 = vrot.slane %v6227, 7
        %v6340 = vsel %vm1104, %v6337, %v6339
        %v6341 = vrot.slane %v6228, 7
        %v6342 = vsel %vm1104, %v6339, %v6341
        %v6343 = vrot.slane %v6229, 7
        %v6344 = vsel %vm1104, %v6341, %v6343
        %v6345 = vrot.slane %v6230, 7
        %v6346 = vsel %vm1104, %v6343, %v6345
        %v6347 = vrot.slane %v6231, 7
        %v6348 = vsel %vm1104, %v6345, %v6347
        %v6349 = vrot.slane %v6232, 7
        %v6350 = vsel %vm1104, %v6347, %v6349
        %v6351 = vrot.slane %v6233, 7
        %v6352 = vsel %vm1104, %v6349, %v6351
        %v6353 = vrot.slane %v6234, 7
        %v6354 = vsel %vm1104, %v6351, %v6353
        %v6355 = vrot.slane %v6235, 7
        %v6356 = vsel %vm1104, %v6353, %v6355
        %v6357 = vrot.slane %v6236, 7
        %v6358 = vsel %vm1104, %v6355, %v6357
        %v6359 = vrot.slane %v6237, 7
        %v6360 = vsel %vm1104, %v6357, %v6359
        %v6361 = vrot.slane %v6238, 7
        %v6362 = vsel %vm1104, %v6359, %v6361
        %v6363 = vrot.slane %v6239, 7
        %v6364 = vsel %vm1104, %v6361, %v6363
        %v6365 = vrot.slane %v6240, 7
        %v6366 = vsel %vm1104, %v6363, %v6365
        %v6367 = vrot.slane %v6241, 7
        %v6368 = vsel %vm1104, %v6365, %v6367
        %v6369 = vrot.slane %v6242, 7
        %v6370 = vsel %vm1104, %v6367, %v6369
        %v6371 = vrot.slane %v6243, 7
        %v6372 = vsel %vm1104, %v6369, %v6371
        %v6405 = vmul.f32 %v394, %v6310
        %v6406 = vmul.f32 %v400, %v6312
        %v6407 = vmul.f32 %v406, %v6314
        %v6408 = vmul.f32 %v412, %v6316
        %v6409 = vmul.f32 %v418, %v6318
        %v6410 = vmul.f32 %v424, %v6320
        %v6411 = vmul.f32 %v430, %v6322
        %v6412 = vmul.f32 %v436, %v6324
        %v6413 = vmul.f32 %v442, %v6326
        %v6414 = vmul.f32 %v448, %v6328
        %v6415 = vmul.f32 %v454, %v6330
        %v6416 = vmul.f32 %v460, %v6332
        %v6417 = vmul.f32 %v466, %v6334
        %v6418 = vmul.f32 %v472, %v6336
        %v6419 = vmul.f32 %v478, %v6338
        %v6420 = vmul.f32 %v484, %v6340
        %v6421 = vmul.f32 %v490, %v6342
        %v6422 = vmul.f32 %v496, %v6344
        %v6423 = vmul.f32 %v502, %v6346
        %v6424 = vmul.f32 %v508, %v6348
        %v6425 = vmul.f32 %v514, %v6350
        %v6426 = vmul.f32 %v520, %v6352
        %v6427 = vmul.f32 %v526, %v6354
        %v6428 = vmul.f32 %v532, %v6356
        %v6429 = vmul.f32 %v538, %v6358
        %v6430 = vmul.f32 %v544, %v6360
        %v6431 = vmul.f32 %v550, %v6362
        %v6432 = vmul.f32 %v556, %v6364
        %v6433 = vmul.f32 %v562, %v6366
        %v6434 = vmul.f32 %v568, %v6368
        %v6435 = vmul.f32 %v574, %v6370
        %v6436 = vmul.f32 %v580, %v6372
        %v6437 = vmax.f32 %v5402, %v6405
        %v6438 = vmax.f32 %v5403, %v6406
        %v6439 = vmax.f32 %v5404, %v6407
        %v6440 = vmax.f32 %v5405, %v6408
        %v6441 = vmax.f32 %v5406, %v6409
        %v6442 = vmax.f32 %v5407, %v6410
        %v6443 = vmax.f32 %v5408, %v6411
        %v6444 = vmax.f32 %v5409, %v6412
        %v6445 = vmax.f32 %v5410, %v6413
        %v6446 = vmax.f32 %v5411, %v6414
        %v6447 = vmax.f32 %v5412, %v6415
        %v6448 = vmax.f32 %v5413, %v6416
        %v6449 = vmax.f32 %v5414, %v6417
        %v6450 = vmax.f32 %v5415, %v6418
        %v6451 = vmax.f32 %v5416, %v6419
        %v6452 = vmax.f32 %v5417, %v6420
        %v6453 = vmax.f32 %v5418, %v6421
        %v6454 = vmax.f32 %v5419, %v6422
        %v6455 = vmax.f32 %v5420, %v6423
        %v6456 = vmax.f32 %v5421, %v6424
        %v6457 = vmax.f32 %v5422, %v6425
        %v6458 = vmax.f32 %v5423, %v6426
        %v6459 = vmax.f32 %v5424, %v6427
        %v6460 = vmax.f32 %v5425, %v6428
        %v6461 = vmax.f32 %v5426, %v6429
        %v6462 = vmax.f32 %v5427, %v6430
        %v6463 = vmax.f32 %v5428, %v6431
        %v6464 = vmax.f32 %v5429, %v6432
        %v6465 = vmax.f32 %v5430, %v6433
        %v6466 = vmax.f32 %v5431, %v6434
        %v6467 = vmax.f32 %v5432, %v6435
        %v6468 = vmax.f32 %v5433, %v6436
        %v6469 = vsub.f32 %v5402, %v6437
        %v6470 = vsub.f32 %v5403, %v6438
        %v6471 = vsub.f32 %v5404, %v6439
        %v6472 = vsub.f32 %v5405, %v6440
        %v6473 = vsub.f32 %v5406, %v6441
        %v6474 = vsub.f32 %v5407, %v6442
        %v6475 = vsub.f32 %v5408, %v6443
        %v6476 = vsub.f32 %v5409, %v6444
        %v6477 = vsub.f32 %v5410, %v6445
        %v6478 = vsub.f32 %v5411, %v6446
        %v6479 = vsub.f32 %v5412, %v6447
        %v6480 = vsub.f32 %v5413, %v6448
        %v6481 = vsub.f32 %v5414, %v6449
        %v6482 = vsub.f32 %v5415, %v6450
        %v6483 = vsub.f32 %v5416, %v6451
        %v6484 = vsub.f32 %v5417, %v6452
        %v6485 = vsub.f32 %v5418, %v6453
        %v6486 = vsub.f32 %v5419, %v6454
        %v6487 = vsub.f32 %v5420, %v6455
        %v6488 = vsub.f32 %v5421, %v6456
        %v6489 = vsub.f32 %v5422, %v6457
        %v6490 = vsub.f32 %v5423, %v6458
        %v6491 = vsub.f32 %v5424, %v6459
        %v6492 = vsub.f32 %v5425, %v6460
        %v6493 = vsub.f32 %v5426, %v6461
        %v6494 = vsub.f32 %v5427, %v6462
        %v6495 = vsub.f32 %v5428, %v6463
        %v6496 = vsub.f32 %v5429, %v6464
        %v6497 = vsub.f32 %v5430, %v6465
        %v6498 = vsub.f32 %v5431, %v6466
        %v6499 = vsub.f32 %v5432, %v6467
        %v6500 = vsub.f32 %v5433, %v6468
        %v6501 = vmul.f32 %v6469, 1.442695
        %v6502 = vpow.pop %v6501
        %v6503 = vmul.f32 %v6470, 1.442695
        %v6504 = vpow.pop %v6503
        %v6505 = vmul.f32 %v6471, 1.442695
        %v6506 = vpow.pop %v6505
        %v6507 = vmul.f32 %v6472, 1.442695
        %v6508 = vpow.pop %v6507
        %v6509 = vmul.f32 %v6473, 1.442695
        %v6510 = vpow.pop %v6509
        %v6511 = vmul.f32 %v6474, 1.442695
        %v6512 = vpow.pop %v6511
        %v6513 = vmul.f32 %v6475, 1.442695
        %v6514 = vpow.pop %v6513
        %v6515 = vmul.f32 %v6476, 1.442695
        %v6516 = vpow.pop %v6515
        %v6517 = vmul.f32 %v6477, 1.442695
        %v6518 = vpow.pop %v6517
        %v6519 = vmul.f32 %v6478, 1.442695
        %v6520 = vpow.pop %v6519
        %v6521 = vmul.f32 %v6479, 1.442695
        %v6522 = vpow.pop %v6521
        %v6523 = vmul.f32 %v6480, 1.442695
        %v6524 = vpow.pop %v6523
        %v6525 = vmul.f32 %v6481, 1.442695
        %v6526 = vpow.pop %v6525
        %v6527 = vmul.f32 %v6482, 1.442695
        %v6528 = vpow.pop %v6527
        %v6529 = vmul.f32 %v6483, 1.442695
        %v6530 = vpow.pop %v6529
        %v6531 = vmul.f32 %v6484, 1.442695
        %v6532 = vpow.pop %v6531
        %v6533 = vmul.f32 %v6485, 1.442695
        %v6534 = vpow.pop %v6533
        %v6535 = vmul.f32 %v6486, 1.442695
        %v6536 = vpow.pop %v6535
        %v6537 = vmul.f32 %v6487, 1.442695
        %v6538 = vpow.pop %v6537
        %v6539 = vmul.f32 %v6488, 1.442695
        %v6540 = vpow.pop %v6539
        %v6541 = vmul.f32 %v6489, 1.442695
        %v6542 = vpow.pop %v6541
        %v6543 = vmul.f32 %v6490, 1.442695
        %v6544 = vpow.pop %v6543
        %v6545 = vmul.f32 %v6491, 1.442695
        %v6546 = vpow.pop %v6545
        %v6547 = vmul.f32 %v6492, 1.442695
        %v6548 = vpow.pop %v6547
        %v6549 = vmul.f32 %v6493, 1.442695
        %v6550 = vpow.pop %v6549
        %v6551 = vmul.f32 %v6494, 1.442695
        %v6552 = vpow.pop %v6551
        %v6553 = vmul.f32 %v6495, 1.442695
        %v6554 = vpow.pop %v6553
        %v6555 = vmul.f32 %v6496, 1.442695
        %v6556 = vpow.pop %v6555
        %v6557 = vmul.f32 %v6497, 1.442695
        %v6558 = vpow.pop %v6557
        %v6559 = vmul.f32 %v6498, 1.442695
        %v6560 = vpow.pop %v6559
        %v6561 = vmul.f32 %v6499, 1.442695
        %v6562 = vpow.pop %v6561
        %v6563 = vmul.f32 %v6500, 1.442695
        %v6564 = vpow.pop %v6563
        %v6565 = vsub.f32 %v6405, %v6437
        %v6566 = vsub.f32 %v6406, %v6438
        %v6567 = vsub.f32 %v6407, %v6439
        %v6568 = vsub.f32 %v6408, %v6440
        %v6569 = vsub.f32 %v6409, %v6441
        %v6570 = vsub.f32 %v6410, %v6442
        %v6571 = vsub.f32 %v6411, %v6443
        %v6572 = vsub.f32 %v6412, %v6444
        %v6573 = vsub.f32 %v6413, %v6445
        %v6574 = vsub.f32 %v6414, %v6446
        %v6575 = vsub.f32 %v6415, %v6447
        %v6576 = vsub.f32 %v6416, %v6448
        %v6577 = vsub.f32 %v6417, %v6449
        %v6578 = vsub.f32 %v6418, %v6450
        %v6579 = vsub.f32 %v6419, %v6451
        %v6580 = vsub.f32 %v6420, %v6452
        %v6581 = vsub.f32 %v6421, %v6453
        %v6582 = vsub.f32 %v6422, %v6454
        %v6583 = vsub.f32 %v6423, %v6455
        %v6584 = vsub.f32 %v6424, %v6456
        %v6585 = vsub.f32 %v6425, %v6457
        %v6586 = vsub.f32 %v6426, %v6458
        %v6587 = vsub.f32 %v6427, %v6459
        %v6588 = vsub.f32 %v6428, %v6460
        %v6589 = vsub.f32 %v6429, %v6461
        %v6590 = vsub.f32 %v6430, %v6462
        %v6591 = vsub.f32 %v6431, %v6463
        %v6592 = vsub.f32 %v6432, %v6464
        %v6593 = vsub.f32 %v6433, %v6465
        %v6594 = vsub.f32 %v6434, %v6466
        %v6595 = vsub.f32 %v6435, %v6467
        %v6596 = vsub.f32 %v6436, %v6468
        %v6597 = vmul.f32 %v6565, 1.442695
        %v6598 = vpow.pop %v6597
        %v6599 = vmul.f32 %v6566, 1.442695
        %v6600 = vpow.pop %v6599
        %v6601 = vmul.f32 %v6567, 1.442695
        %v6602 = vpow.pop %v6601
        %v6603 = vmul.f32 %v6568, 1.442695
        %v6604 = vpow.pop %v6603
        %v6605 = vmul.f32 %v6569, 1.442695
        %v6606 = vpow.pop %v6605
        %v6607 = vmul.f32 %v6570, 1.442695
        %v6608 = vpow.pop %v6607
        %v6609 = vmul.f32 %v6571, 1.442695
        %v6610 = vpow.pop %v6609
        %v6611 = vmul.f32 %v6572, 1.442695
        %v6612 = vpow.pop %v6611
        %v6613 = vmul.f32 %v6573, 1.442695
        %v6614 = vpow.pop %v6613
        %v6615 = vmul.f32 %v6574, 1.442695
        %v6616 = vpow.pop %v6615
        %v6617 = vmul.f32 %v6575, 1.442695
        %v6618 = vpow.pop %v6617
        %v6619 = vmul.f32 %v6576, 1.442695
        %v6620 = vpow.pop %v6619
        %v6621 = vmul.f32 %v6577, 1.442695
        %v6622 = vpow.pop %v6621
        %v6623 = vmul.f32 %v6578, 1.442695
        %v6624 = vpow.pop %v6623
        %v6625 = vmul.f32 %v6579, 1.442695
        %v6626 = vpow.pop %v6625
        %v6627 = vmul.f32 %v6580, 1.442695
        %v6628 = vpow.pop %v6627
        %v6629 = vmul.f32 %v6581, 1.442695
        %v6630 = vpow.pop %v6629
        %v6631 = vmul.f32 %v6582, 1.442695
        %v6632 = vpow.pop %v6631
        %v6633 = vmul.f32 %v6583, 1.442695
        %v6634 = vpow.pop %v6633
        %v6635 = vmul.f32 %v6584, 1.442695
        %v6636 = vpow.pop %v6635
        %v6637 = vmul.f32 %v6585, 1.442695
        %v6638 = vpow.pop %v6637
        %v6639 = vmul.f32 %v6586, 1.442695
        %v6640 = vpow.pop %v6639
        %v6641 = vmul.f32 %v6587, 1.442695
        %v6642 = vpow.pop %v6641
        %v6643 = vmul.f32 %v6588, 1.442695
        %v6644 = vpow.pop %v6643
        %v6645 = vmul.f32 %v6589, 1.442695
        %v6646 = vpow.pop %v6645
        %v6647 = vmul.f32 %v6590, 1.442695
        %v6648 = vpow.pop %v6647
        %v6649 = vmul.f32 %v6591, 1.442695
        %v6650 = vpow.pop %v6649
        %v6651 = vmul.f32 %v6592, 1.442695
        %v6652 = vpow.pop %v6651
        %v6653 = vmul.f32 %v6593, 1.442695
        %v6654 = vpow.pop %v6653
        %v6655 = vmul.f32 %v6594, 1.442695
        %v6656 = vpow.pop %v6655
        %v6657 = vmul.f32 %v6595, 1.442695
        %v6658 = vpow.pop %v6657
        %v6659 = vmul.f32 %v6596, 1.442695
        %v6660 = vpow.pop %v6659
        %v6661 = vmul.f32 %v5658, %v6502
        %v6662 = vmul.f32 %v5659, %v6504
        %v6663 = vmul.f32 %v5660, %v6506
        %v6664 = vmul.f32 %v5661, %v6508
        %v6665 = vmul.f32 %v5662, %v6510
        %v6666 = vmul.f32 %v5663, %v6512
        %v6667 = vmul.f32 %v5664, %v6514
        %v6668 = vmul.f32 %v5665, %v6516
        %v6669 = vmul.f32 %v5666, %v6518
        %v6670 = vmul.f32 %v5667, %v6520
        %v6671 = vmul.f32 %v5668, %v6522
        %v6672 = vmul.f32 %v5669, %v6524
        %v6673 = vmul.f32 %v5670, %v6526
        %v6674 = vmul.f32 %v5671, %v6528
        %v6675 = vmul.f32 %v5672, %v6530
        %v6676 = vmul.f32 %v5673, %v6532
        %v6677 = vmul.f32 %v5674, %v6534
        %v6678 = vmul.f32 %v5675, %v6536
        %v6679 = vmul.f32 %v5676, %v6538
        %v6680 = vmul.f32 %v5677, %v6540
        %v6681 = vmul.f32 %v5678, %v6542
        %v6682 = vmul.f32 %v5679, %v6544
        %v6683 = vmul.f32 %v5680, %v6546
        %v6684 = vmul.f32 %v5681, %v6548
        %v6685 = vmul.f32 %v5682, %v6550
        %v6686 = vmul.f32 %v5683, %v6552
        %v6687 = vmul.f32 %v5684, %v6554
        %v6688 = vmul.f32 %v5685, %v6556
        %v6689 = vmul.f32 %v5686, %v6558
        %v6690 = vmul.f32 %v5687, %v6560
        %v6691 = vmul.f32 %v5688, %v6562
        %v6692 = vmul.f32 %v5689, %v6564
        %v6693 = vadd.f32 %v6661, %v6598
        %v6694 = vadd.f32 %v6662, %v6600
        %v6695 = vadd.f32 %v6663, %v6602
        %v6696 = vadd.f32 %v6664, %v6604
        %v6697 = vadd.f32 %v6665, %v6606
        %v6698 = vadd.f32 %v6666, %v6608
        %v6699 = vadd.f32 %v6667, %v6610
        %v6700 = vadd.f32 %v6668, %v6612
        %v6701 = vadd.f32 %v6669, %v6614
        %v6702 = vadd.f32 %v6670, %v6616
        %v6703 = vadd.f32 %v6671, %v6618
        %v6704 = vadd.f32 %v6672, %v6620
        %v6705 = vadd.f32 %v6673, %v6622
        %v6706 = vadd.f32 %v6674, %v6624
        %v6707 = vadd.f32 %v6675, %v6626
        %v6708 = vadd.f32 %v6676, %v6628
        %v6709 = vadd.f32 %v6677, %v6630
        %v6710 = vadd.f32 %v6678, %v6632
        %v6711 = vadd.f32 %v6679, %v6634
        %v6712 = vadd.f32 %v6680, %v6636
        %v6713 = vadd.f32 %v6681, %v6638
        %v6714 = vadd.f32 %v6682, %v6640
        %v6715 = vadd.f32 %v6683, %v6642
        %v6716 = vadd.f32 %v6684, %v6644
        %v6717 = vadd.f32 %v6685, %v6646
        %v6718 = vadd.f32 %v6686, %v6648
        %v6719 = vadd.f32 %v6687, %v6650
        %v6720 = vadd.f32 %v6688, %v6652
        %v6721 = vadd.f32 %v6689, %v6654
        %v6722 = vadd.f32 %v6690, %v6656
        %v6723 = vadd.f32 %v6691, %v6658
        %v6724 = vadd.f32 %v6692, %v6660
        %v6757 = vrot.slane %v6502, 1
        %v6758 = vrot.slane %v6504, 1
        %v6759 = vsel %vm874, %v6757, %v6758
        %v6760 = vrot.slane %v6506, 1
        %v6761 = vsel %vm874, %v6758, %v6760
        %v6762 = vrot.slane %v6508, 1
        %v6763 = vsel %vm874, %v6760, %v6762
        %v6764 = vrot.slane %v6510, 1
        %v6765 = vsel %vm874, %v6762, %v6764
        %v6766 = vrot.slane %v6512, 1
        %v6767 = vsel %vm874, %v6764, %v6766
        %v6768 = vrot.slane %v6514, 1
        %v6769 = vsel %vm874, %v6766, %v6768
        %v6770 = vrot.slane %v6516, 1
        %v6771 = vsel %vm874, %v6768, %v6770
        %v6772 = vrot.slane %v6518, 1
        %v6773 = vsel %vm874, %v6770, %v6772
        %v6774 = vrot.slane %v6520, 1
        %v6775 = vsel %vm874, %v6772, %v6774
        %v6776 = vrot.slane %v6522, 1
        %v6777 = vsel %vm874, %v6774, %v6776
        %v6778 = vrot.slane %v6524, 1
        %v6779 = vsel %vm874, %v6776, %v6778
        %v6780 = vrot.slane %v6526, 1
        %v6781 = vsel %vm874, %v6778, %v6780
        %v6782 = vrot.slane %v6528, 1
        %v6783 = vsel %vm874, %v6780, %v6782
        %v6784 = vrot.slane %v6530, 1
        %v6785 = vsel %vm874, %v6782, %v6784
        %v6786 = vrot.slane %v6532, 1
        %v6787 = vsel %vm874, %v6784, %v6786
        %v6788 = vrot.slane %v6534, 1
        %v6789 = vsel %vm874, %v6786, %v6788
        %v6790 = vrot.slane %v6536, 1
        %v6791 = vsel %vm874, %v6788, %v6790
        %v6792 = vrot.slane %v6538, 1
        %v6793 = vsel %vm874, %v6790, %v6792
        %v6794 = vrot.slane %v6540, 1
        %v6795 = vsel %vm874, %v6792, %v6794
        %v6796 = vrot.slane %v6542, 1
        %v6797 = vsel %vm874, %v6794, %v6796
        %v6798 = vrot.slane %v6544, 1
        %v6799 = vsel %vm874, %v6796, %v6798
        %v6800 = vrot.slane %v6546, 1
        %v6801 = vsel %vm874, %v6798, %v6800
        %v6802 = vrot.slane %v6548, 1
        %v6803 = vsel %vm874, %v6800, %v6802
        %v6804 = vrot.slane %v6550, 1
        %v6805 = vsel %vm874, %v6802, %v6804
        %v6806 = vrot.slane %v6552, 1
        %v6807 = vsel %vm874, %v6804, %v6806
        %v6808 = vrot.slane %v6554, 1
        %v6809 = vsel %vm874, %v6806, %v6808
        %v6810 = vrot.slane %v6556, 1
        %v6811 = vsel %vm874, %v6808, %v6810
        %v6812 = vrot.slane %v6558, 1
        %v6813 = vsel %vm874, %v6810, %v6812
        %v6814 = vrot.slane %v6560, 1
        %v6815 = vsel %vm874, %v6812, %v6814
        %v6816 = vrot.slane %v6562, 1
        %v6817 = vsel %vm874, %v6814, %v6816
        %v6818 = vrot.slane %v6564, 1
        %v6819 = vsel %vm874, %v6816, %v6818
        %v6853 = vmul.f32 %v6141, %v6757
        %v6854 = vmul.f32 %v6142, %v6759
        %v6855 = vmul.f32 %v6143, %v6761
        %v6856 = vmul.f32 %v6144, %v6763
        %v6857 = vmul.f32 %v6145, %v6765
        %v6858 = vmul.f32 %v6146, %v6767
        %v6859 = vmul.f32 %v6147, %v6769
        %v6860 = vmul.f32 %v6148, %v6771
        %v6861 = vmul.f32 %v6149, %v6773
        %v6862 = vmul.f32 %v6150, %v6775
        %v6863 = vmul.f32 %v6151, %v6777
        %v6864 = vmul.f32 %v6152, %v6779
        %v6865 = vmul.f32 %v6153, %v6781
        %v6866 = vmul.f32 %v6154, %v6783
        %v6867 = vmul.f32 %v6155, %v6785
        %v6868 = vmul.f32 %v6156, %v6787
        %v6869 = vmul.f32 %v6157, %v6789
        %v6870 = vmul.f32 %v6158, %v6791
        %v6871 = vmul.f32 %v6159, %v6793
        %v6872 = vmul.f32 %v6160, %v6795
        %v6873 = vmul.f32 %v6161, %v6797
        %v6874 = vmul.f32 %v6162, %v6799
        %v6875 = vmul.f32 %v6163, %v6801
        %v6876 = vmul.f32 %v6164, %v6803
        %v6877 = vmul.f32 %v6165, %v6805
        %v6878 = vmul.f32 %v6166, %v6807
        %v6879 = vmul.f32 %v6167, %v6809
        %v6880 = vmul.f32 %v6168, %v6811
        %v6881 = vmul.f32 %v6169, %v6813
        %v6882 = vmul.f32 %v6170, %v6815
        %v6883 = vmul.f32 %v6171, %v6817
        %v6884 = vmul.f32 %v6172, %v6819
        %v6885 = vmul.f32 %v6173, %v6818
        %v6919 = vrot.slane %v6244, 7
        %v6920 = vrot.slane %v6245, 7
        %v6921 = vsel %vm1104, %v6919, %v6920
        %v6922 = vrot.slane %v6246, 7
        %v6923 = vsel %vm1104, %v6920, %v6922
        %v6924 = vrot.slane %v6247, 7
        %v6925 = vsel %vm1104, %v6922, %v6924
        %v6926 = vrot.slane %v6248, 7
        %v6927 = vsel %vm1104, %v6924, %v6926
        %v6928 = vrot.slane %v6249, 7
        %v6929 = vsel %vm1104, %v6926, %v6928
        %v6930 = vrot.slane %v6250, 7
        %v6931 = vsel %vm1104, %v6928, %v6930
        %v6932 = vrot.slane %v6251, 7
        %v6933 = vsel %vm1104, %v6930, %v6932
        %v6934 = vrot.slane %v6252, 7
        %v6935 = vsel %vm1104, %v6932, %v6934
        %v6936 = vrot.slane %v6253, 7
        %v6937 = vsel %vm1104, %v6934, %v6936
        %v6938 = vrot.slane %v6254, 7
        %v6939 = vsel %vm1104, %v6936, %v6938
        %v6940 = vrot.slane %v6255, 7
        %v6941 = vsel %vm1104, %v6938, %v6940
        %v6942 = vrot.slane %v6256, 7
        %v6943 = vsel %vm1104, %v6940, %v6942
        %v6944 = vrot.slane %v6257, 7
        %v6945 = vsel %vm1104, %v6942, %v6944
        %v6946 = vrot.slane %v6258, 7
        %v6947 = vsel %vm1104, %v6944, %v6946
        %v6948 = vrot.slane %v6259, 7
        %v6949 = vsel %vm1104, %v6946, %v6948
        %v6950 = vrot.slane %v6260, 7
        %v6951 = vsel %vm1104, %v6948, %v6950
        %v6952 = vrot.slane %v6261, 7
        %v6953 = vsel %vm1104, %v6950, %v6952
        %v6954 = vrot.slane %v6262, 7
        %v6955 = vsel %vm1104, %v6952, %v6954
        %v6956 = vrot.slane %v6263, 7
        %v6957 = vsel %vm1104, %v6954, %v6956
        %v6958 = vrot.slane %v6264, 7
        %v6959 = vsel %vm1104, %v6956, %v6958
        %v6960 = vrot.slane %v6265, 7
        %v6961 = vsel %vm1104, %v6958, %v6960
        %v6962 = vrot.slane %v6266, 7
        %v6963 = vsel %vm1104, %v6960, %v6962
        %v6964 = vrot.slane %v6267, 7
        %v6965 = vsel %vm1104, %v6962, %v6964
        %v6966 = vrot.slane %v6268, 7
        %v6967 = vsel %vm1104, %v6964, %v6966
        %v6968 = vrot.slane %v6269, 7
        %v6969 = vsel %vm1104, %v6966, %v6968
        %v6970 = vrot.slane %v6270, 7
        %v6971 = vsel %vm1104, %v6968, %v6970
        %v6972 = vrot.slane %v6271, 7
        %v6973 = vsel %vm1104, %v6970, %v6972
        %v6974 = vrot.slane %v6272, 7
        %v6975 = vsel %vm1104, %v6972, %v6974
        %v6976 = vrot.slane %v6273, 7
        %v6977 = vsel %vm1104, %v6974, %v6976
        %v6978 = vrot.slane %v6274, 7
        %v6979 = vsel %vm1104, %v6976, %v6978
        %v6980 = vrot.slane %v6205, 7
        %v6981 = vsel %vm1104, %v6978, %v6980
        %v6982 = vrot.slane %v6206, 7
        %v6983 = vsel %vm1104, %v6980, %v6982
        %v7016 = vmul.f32 %v6598, %v6921
        %v7017 = vmul.f32 %v6600, %v6923
        %v7018 = vmul.f32 %v6602, %v6925
        %v7019 = vmul.f32 %v6604, %v6927
        %v7020 = vmul.f32 %v6606, %v6929
        %v7021 = vmul.f32 %v6608, %v6931
        %v7022 = vmul.f32 %v6610, %v6933
        %v7023 = vmul.f32 %v6612, %v6935
        %v7024 = vmul.f32 %v6614, %v6937
        %v7025 = vmul.f32 %v6616, %v6939
        %v7026 = vmul.f32 %v6618, %v6941
        %v7027 = vmul.f32 %v6620, %v6943
        %v7028 = vmul.f32 %v6622, %v6945
        %v7029 = vmul.f32 %v6624, %v6947
        %v7030 = vmul.f32 %v6626, %v6949
        %v7031 = vmul.f32 %v6628, %v6951
        %v7032 = vmul.f32 %v6630, %v6953
        %v7033 = vmul.f32 %v6632, %v6955
        %v7034 = vmul.f32 %v6634, %v6957
        %v7035 = vmul.f32 %v6636, %v6959
        %v7036 = vmul.f32 %v6638, %v6961
        %v7037 = vmul.f32 %v6640, %v6963
        %v7038 = vmul.f32 %v6642, %v6965
        %v7039 = vmul.f32 %v6644, %v6967
        %v7040 = vmul.f32 %v6646, %v6969
        %v7041 = vmul.f32 %v6648, %v6971
        %v7042 = vmul.f32 %v6650, %v6973
        %v7043 = vmul.f32 %v6652, %v6975
        %v7044 = vmul.f32 %v6654, %v6977
        %v7045 = vmul.f32 %v6656, %v6979
        %v7046 = vmul.f32 %v6658, %v6981
        %v7047 = vmul.f32 %v6660, %v6983
        %v7080 = vrot.slane %v7016, 1
        %v7081 = vrot.slane %v7017, 1
        %v7082 = vsel %vm874, %v7080, %v7081
        %v7083 = vrot.slane %v7018, 1
        %v7084 = vsel %vm874, %v7081, %v7083
        %v7085 = vrot.slane %v7019, 1
        %v7086 = vsel %vm874, %v7083, %v7085
        %v7087 = vrot.slane %v7020, 1
        %v7088 = vsel %vm874, %v7085, %v7087
        %v7089 = vrot.slane %v7021, 1
        %v7090 = vsel %vm874, %v7087, %v7089
        %v7091 = vrot.slane %v7022, 1
        %v7092 = vsel %vm874, %v7089, %v7091
        %v7093 = vrot.slane %v7023, 1
        %v7094 = vsel %vm874, %v7091, %v7093
        %v7095 = vrot.slane %v7024, 1
        %v7096 = vsel %vm874, %v7093, %v7095
        %v7097 = vrot.slane %v7025, 1
        %v7098 = vsel %vm874, %v7095, %v7097
        %v7099 = vrot.slane %v7026, 1
        %v7100 = vsel %vm874, %v7097, %v7099
        %v7101 = vrot.slane %v7027, 1
        %v7102 = vsel %vm874, %v7099, %v7101
        %v7103 = vrot.slane %v7028, 1
        %v7104 = vsel %vm874, %v7101, %v7103
        %v7105 = vrot.slane %v7029, 1
        %v7106 = vsel %vm874, %v7103, %v7105
        %v7107 = vrot.slane %v7030, 1
        %v7108 = vsel %vm874, %v7105, %v7107
        %v7109 = vrot.slane %v7031, 1
        %v7110 = vsel %vm874, %v7107, %v7109
        %v7111 = vrot.slane %v7032, 1
        %v7112 = vsel %vm874, %v7109, %v7111
        %v7113 = vrot.slane %v7033, 1
        %v7114 = vsel %vm874, %v7111, %v7113
        %v7115 = vrot.slane %v7034, 1
        %v7116 = vsel %vm874, %v7113, %v7115
        %v7117 = vrot.slane %v7035, 1
        %v7118 = vsel %vm874, %v7115, %v7117
        %v7119 = vrot.slane %v7036, 1
        %v7120 = vsel %vm874, %v7117, %v7119
        %v7121 = vrot.slane %v7037, 1
        %v7122 = vsel %vm874, %v7119, %v7121
        %v7123 = vrot.slane %v7038, 1
        %v7124 = vsel %vm874, %v7121, %v7123
        %v7125 = vrot.slane %v7039, 1
        %v7126 = vsel %vm874, %v7123, %v7125
        %v7127 = vrot.slane %v7040, 1
        %v7128 = vsel %vm874, %v7125, %v7127
        %v7129 = vrot.slane %v7041, 1
        %v7130 = vsel %vm874, %v7127, %v7129
        %v7131 = vrot.slane %v7042, 1
        %v7132 = vsel %vm874, %v7129, %v7131
        %v7133 = vrot.slane %v7043, 1
        %v7134 = vsel %vm874, %v7131, %v7133
        %v7135 = vrot.slane %v7044, 1
        %v7136 = vsel %vm874, %v7133, %v7135
        %v7137 = vrot.slane %v7045, 1
        %v7138 = vsel %vm874, %v7135, %v7137
        %v7139 = vrot.slane %v7046, 1
        %v7140 = vsel %vm874, %v7137, %v7139
        %v7141 = vrot.slane %v7047, 1
        %v7142 = vsel %vm874, %v7139, %v7141
        %v7176 = vadd.f32 %v6853, %v7080
        %v7177 = vadd.f32 %v6854, %v7082
        %v7178 = vadd.f32 %v6855, %v7084
        %v7179 = vadd.f32 %v6856, %v7086
        %v7180 = vadd.f32 %v6857, %v7088
        %v7181 = vadd.f32 %v6858, %v7090
        %v7182 = vadd.f32 %v6859, %v7092
        %v7183 = vadd.f32 %v6860, %v7094
        %v7184 = vadd.f32 %v6861, %v7096
        %v7185 = vadd.f32 %v6862, %v7098
        %v7186 = vadd.f32 %v6863, %v7100
        %v7187 = vadd.f32 %v6864, %v7102
        %v7188 = vadd.f32 %v6865, %v7104
        %v7189 = vadd.f32 %v6866, %v7106
        %v7190 = vadd.f32 %v6867, %v7108
        %v7191 = vadd.f32 %v6868, %v7110
        %v7192 = vadd.f32 %v6869, %v7112
        %v7193 = vadd.f32 %v6870, %v7114
        %v7194 = vadd.f32 %v6871, %v7116
        %v7195 = vadd.f32 %v6872, %v7118
        %v7196 = vadd.f32 %v6873, %v7120
        %v7197 = vadd.f32 %v6874, %v7122
        %v7198 = vadd.f32 %v6875, %v7124
        %v7199 = vadd.f32 %v6876, %v7126
        %v7200 = vadd.f32 %v6877, %v7128
        %v7201 = vadd.f32 %v6878, %v7130
        %v7202 = vadd.f32 %v6879, %v7132
        %v7203 = vadd.f32 %v6880, %v7134
        %v7204 = vadd.f32 %v6881, %v7136
        %v7205 = vadd.f32 %v6882, %v7138
        %v7206 = vadd.f32 %v6883, %v7140
        %v7207 = vadd.f32 %v6884, %v7142
        %v7208 = vadd.f32 %v6885, %v7141
        %v7209 = vmul.f32 %v621, %v1236
        %v7210 = vmul.f32 %v623, %v1240
        %v7211 = vmul.f32 %v625, %v1244
        %v7212 = vmul.f32 %v627, %v1248
        %v7213 = vmul.f32 %v629, %v1252
        %v7214 = vmul.f32 %v631, %v1256
        %v7215 = vmul.f32 %v633, %v1260
        %v7216 = vmul.f32 %v635, %v1264
        %v7217 = vmul.f32 %v637, %v1268
        %v7218 = vmul.f32 %v639, %v1272
        %v7219 = vmul.f32 %v641, %v1276
        %v7220 = vmul.f32 %v643, %v1280
        %v7221 = vmul.f32 %v645, %v1284
        %v7222 = vmul.f32 %v647, %v1288
        %v7223 = vmul.f32 %v649, %v1292
        %v7224 = vmul.f32 %v651, %v1296
        %v7225 = vmul.f32 %v653, %v1300
        %v7226 = vmul.f32 %v655, %v1304
        %v7227 = vmul.f32 %v657, %v1308
        %v7228 = vmul.f32 %v659, %v1312
        %v7229 = vmul.f32 %v661, %v1316
        %v7230 = vmul.f32 %v663, %v1320
        %v7231 = vmul.f32 %v665, %v1324
        %v7232 = vmul.f32 %v667, %v1328
        %v7233 = vmul.f32 %v669, %v1332
        %v7234 = vmul.f32 %v671, %v1336
        %v7235 = vmul.f32 %v673, %v1340
        %v7236 = vmul.f32 %v675, %v1344
        %v7237 = vmul.f32 %v677, %v1348
        %v7238 = vmul.f32 %v679, %v1352
        %v7239 = vmul.f32 %v1356, 0.0
        %v7240 = vmul.f32 %v1360, 0.0
        %v7241 = vlaneseq
        %v7242 = vshrl.u32 %v7241, 7
        %v7243 = vsub.s32 7, %v7242
        %v7244 = vrot.slane %v712, %v7243
        %v7245 = vadd.f32 %v7209, %v7244
        %v7246 = vadd.f32 %v7210, %v7244
        %v7247 = vadd.f32 %v7211, %v7244
        %v7248 = vadd.f32 %v7212, %v7244
        %v7249 = vadd.f32 %v7213, %v7244
        %v7250 = vadd.f32 %v7214, %v7244
        %v7251 = vadd.f32 %v7215, %v7244
        %v7252 = vadd.f32 %v7216, %v7244
        %v7253 = vadd.f32 %v7217, %v7244
        %v7254 = vadd.f32 %v7218, %v7244
        %v7255 = vadd.f32 %v7219, %v7244
        %v7256 = vadd.f32 %v7220, %v7244
        %v7257 = vadd.f32 %v7221, %v7244
        %v7258 = vadd.f32 %v7222, %v7244
        %v7259 = vadd.f32 %v7223, %v7244
        %v7260 = vadd.f32 %v7224, %v7244
        %v7261 = vadd.f32 %v7225, %v7244
        %v7262 = vadd.f32 %v7226, %v7244
        %v7263 = vadd.f32 %v7227, %v7244
        %v7264 = vadd.f32 %v7228, %v7244
        %v7265 = vadd.f32 %v7229, %v7244
        %v7266 = vadd.f32 %v7230, %v7244
        %v7267 = vadd.f32 %v7231, %v7244
        %v7268 = vadd.f32 %v7232, %v7244
        %v7269 = vadd.f32 %v7233, %v7244
        %v7270 = vadd.f32 %v7234, %v7244
        %v7271 = vadd.f32 %v7235, %v7244
        %v7272 = vadd.f32 %v7236, %v7244
        %v7273 = vadd.f32 %v7237, %v7244
        %v7274 = vadd.f32 %v7238, %v7244
        %v7275 = vadd.f32 %v7239, %v7244
        %v7276 = vadd.f32 %v7240, %v7244
        %v7277 = vmul.f32 %v408, %v1236
        %v7278 = vmul.f32 %v414, %v1240
        %v7279 = vmul.f32 %v420, %v1244
        %v7280 = vmul.f32 %v426, %v1248
        %v7281 = vmul.f32 %v432, %v1252
        %v7282 = vmul.f32 %v438, %v1256
        %v7283 = vmul.f32 %v444, %v1260
        %v7284 = vmul.f32 %v450, %v1264
        %v7285 = vmul.f32 %v456, %v1268
        %v7286 = vmul.f32 %v462, %v1272
        %v7287 = vmul.f32 %v468, %v1276
        %v7288 = vmul.f32 %v474, %v1280
        %v7289 = vmul.f32 %v480, %v1284
        %v7290 = vmul.f32 %v486, %v1288
        %v7291 = vmul.f32 %v492, %v1292
        %v7292 = vmul.f32 %v498, %v1296
        %v7293 = vmul.f32 %v504, %v1300
        %v7294 = vmul.f32 %v510, %v1304
        %v7295 = vmul.f32 %v516, %v1308
        %v7296 = vmul.f32 %v522, %v1312
        %v7297 = vmul.f32 %v528, %v1316
        %v7298 = vmul.f32 %v534, %v1320
        %v7299 = vmul.f32 %v540, %v1324
        %v7300 = vmul.f32 %v546, %v1328
        %v7301 = vmul.f32 %v552, %v1332
        %v7302 = vmul.f32 %v558, %v1336
        %v7303 = vmul.f32 %v564, %v1340
        %v7304 = vmul.f32 %v570, %v1344
        %v7305 = vmul.f32 %v576, %v1348
        %v7306 = vmul.f32 %v582, %v1352
        %v7307 = vmul.f32 %v394, %v7245
        %v7308 = vmul.f32 %v400, %v7246
        %v7309 = vmul.f32 %v406, %v7247
        %v7310 = vmul.f32 %v412, %v7248
        %v7311 = vmul.f32 %v418, %v7249
        %v7312 = vmul.f32 %v424, %v7250
        %v7313 = vmul.f32 %v430, %v7251
        %v7314 = vmul.f32 %v436, %v7252
        %v7315 = vmul.f32 %v442, %v7253
        %v7316 = vmul.f32 %v448, %v7254
        %v7317 = vmul.f32 %v454, %v7255
        %v7318 = vmul.f32 %v460, %v7256
        %v7319 = vmul.f32 %v466, %v7257
        %v7320 = vmul.f32 %v472, %v7258
        %v7321 = vmul.f32 %v478, %v7259
        %v7322 = vmul.f32 %v484, %v7260
        %v7323 = vmul.f32 %v490, %v7261
        %v7324 = vmul.f32 %v496, %v7262
        %v7325 = vmul.f32 %v502, %v7263
        %v7326 = vmul.f32 %v508, %v7264
        %v7327 = vmul.f32 %v514, %v7265
        %v7328 = vmul.f32 %v520, %v7266
        %v7329 = vmul.f32 %v526, %v7267
        %v7330 = vmul.f32 %v532, %v7268
        %v7331 = vmul.f32 %v538, %v7269
        %v7332 = vmul.f32 %v544, %v7270
        %v7333 = vmul.f32 %v550, %v7271
        %v7334 = vmul.f32 %v556, %v7272
        %v7335 = vmul.f32 %v562, %v7273
        %v7336 = vmul.f32 %v568, %v7274
        %v7337 = vmul.f32 %v574, %v7275
        %v7338 = vmul.f32 %v580, %v7276
        %v7339 = vmax.f32 %v6437, %v7307
        %v7340 = vmax.f32 %v6438, %v7308
        %v7341 = vmax.f32 %v6439, %v7309
        %v7342 = vmax.f32 %v6440, %v7310
        %v7343 = vmax.f32 %v6441, %v7311
        %v7344 = vmax.f32 %v6442, %v7312
        %v7345 = vmax.f32 %v6443, %v7313
        %v7346 = vmax.f32 %v6444, %v7314
        %v7347 = vmax.f32 %v6445, %v7315
        %v7348 = vmax.f32 %v6446, %v7316
        %v7349 = vmax.f32 %v6447, %v7317
        %v7350 = vmax.f32 %v6448, %v7318
        %v7351 = vmax.f32 %v6449, %v7319
        %v7352 = vmax.f32 %v6450, %v7320
        %v7353 = vmax.f32 %v6451, %v7321
        %v7354 = vmax.f32 %v6452, %v7322
        %v7355 = vmax.f32 %v6453, %v7323
        %v7356 = vmax.f32 %v6454, %v7324
        %v7357 = vmax.f32 %v6455, %v7325
        %v7358 = vmax.f32 %v6456, %v7326
        %v7359 = vmax.f32 %v6457, %v7327
        %v7360 = vmax.f32 %v6458, %v7328
        %v7361 = vmax.f32 %v6459, %v7329
        %v7362 = vmax.f32 %v6460, %v7330
        %v7363 = vmax.f32 %v6461, %v7331
        %v7364 = vmax.f32 %v6462, %v7332
        %v7365 = vmax.f32 %v6463, %v7333
        %v7366 = vmax.f32 %v6464, %v7334
        %v7367 = vmax.f32 %v6465, %v7335
        %v7368 = vmax.f32 %v6466, %v7336
        %v7369 = vmax.f32 %v6467, %v7337
        %v7370 = vmax.f32 %v6468, %v7338
        %v7371 = vsub.f32 %v6437, %v7339
        %v7372 = vsub.f32 %v6438, %v7340
        %v7373 = vsub.f32 %v6439, %v7341
        %v7374 = vsub.f32 %v6440, %v7342
        %v7375 = vsub.f32 %v6441, %v7343
        %v7376 = vsub.f32 %v6442, %v7344
        %v7377 = vsub.f32 %v6443, %v7345
        %v7378 = vsub.f32 %v6444, %v7346
        %v7379 = vsub.f32 %v6445, %v7347
        %v7380 = vsub.f32 %v6446, %v7348
        %v7381 = vsub.f32 %v6447, %v7349
        %v7382 = vsub.f32 %v6448, %v7350
        %v7383 = vsub.f32 %v6449, %v7351
        %v7384 = vsub.f32 %v6450, %v7352
        %v7385 = vsub.f32 %v6451, %v7353
        %v7386 = vsub.f32 %v6452, %v7354
        %v7387 = vsub.f32 %v6453, %v7355
        %v7388 = vsub.f32 %v6454, %v7356
        %v7389 = vsub.f32 %v6455, %v7357
        %v7390 = vsub.f32 %v6456, %v7358
        %v7391 = vsub.f32 %v6457, %v7359
        %v7392 = vsub.f32 %v6458, %v7360
        %v7393 = vsub.f32 %v6459, %v7361
        %v7394 = vsub.f32 %v6460, %v7362
        %v7395 = vsub.f32 %v6461, %v7363
        %v7396 = vsub.f32 %v6462, %v7364
        %v7397 = vsub.f32 %v6463, %v7365
        %v7398 = vsub.f32 %v6464, %v7366
        %v7399 = vsub.f32 %v6465, %v7367
        %v7400 = vsub.f32 %v6466, %v7368
        %v7401 = vsub.f32 %v6467, %v7369
        %v7402 = vsub.f32 %v6468, %v7370
        %v7403 = vmul.f32 %v7371, 1.442695
        %v7404 = vpow.pop %v7403
        %v7405 = vmul.f32 %v7372, 1.442695
        %v7406 = vpow.pop %v7405
        %v7407 = vmul.f32 %v7373, 1.442695
        %v7408 = vpow.pop %v7407
        %v7409 = vmul.f32 %v7374, 1.442695
        %v7410 = vpow.pop %v7409
        %v7411 = vmul.f32 %v7375, 1.442695
        %v7412 = vpow.pop %v7411
        %v7413 = vmul.f32 %v7376, 1.442695
        %v7414 = vpow.pop %v7413
        %v7415 = vmul.f32 %v7377, 1.442695
        %v7416 = vpow.pop %v7415
        %v7417 = vmul.f32 %v7378, 1.442695
        %v7418 = vpow.pop %v7417
        %v7419 = vmul.f32 %v7379, 1.442695
        %v7420 = vpow.pop %v7419
        %v7421 = vmul.f32 %v7380, 1.442695
        %v7422 = vpow.pop %v7421
        %v7423 = vmul.f32 %v7381, 1.442695
        %v7424 = vpow.pop %v7423
        %v7425 = vmul.f32 %v7382, 1.442695
        %v7426 = vpow.pop %v7425
        %v7427 = vmul.f32 %v7383, 1.442695
        %v7428 = vpow.pop %v7427
        %v7429 = vmul.f32 %v7384, 1.442695
        %v7430 = vpow.pop %v7429
        %v7431 = vmul.f32 %v7385, 1.442695
        %v7432 = vpow.pop %v7431
        %v7433 = vmul.f32 %v7386, 1.442695
        %v7434 = vpow.pop %v7433
        %v7435 = vmul.f32 %v7387, 1.442695
        %v7436 = vpow.pop %v7435
        %v7437 = vmul.f32 %v7388, 1.442695
        %v7438 = vpow.pop %v7437
        %v7439 = vmul.f32 %v7389, 1.442695
        %v7440 = vpow.pop %v7439
        %v7441 = vmul.f32 %v7390, 1.442695
        %v7442 = vpow.pop %v7441
        %v7443 = vmul.f32 %v7391, 1.442695
        %v7444 = vpow.pop %v7443
        %v7445 = vmul.f32 %v7392, 1.442695
        %v7446 = vpow.pop %v7445
        %v7447 = vmul.f32 %v7393, 1.442695
        %v7448 = vpow.pop %v7447
        %v7449 = vmul.f32 %v7394, 1.442695
        %v7450 = vpow.pop %v7449
        %v7451 = vmul.f32 %v7395, 1.442695
        %v7452 = vpow.pop %v7451
        %v7453 = vmul.f32 %v7396, 1.442695
        %v7454 = vpow.pop %v7453
        %v7455 = vmul.f32 %v7397, 1.442695
        %v7456 = vpow.pop %v7455
        %v7457 = vmul.f32 %v7398, 1.442695
        %v7458 = vpow.pop %v7457
        %v7459 = vmul.f32 %v7399, 1.442695
        %v7460 = vpow.pop %v7459
        %v7461 = vmul.f32 %v7400, 1.442695
        %v7462 = vpow.pop %v7461
        %v7463 = vmul.f32 %v7401, 1.442695
        %v7464 = vpow.pop %v7463
        %v7465 = vmul.f32 %v7402, 1.442695
        %v7466 = vpow.pop %v7465
        %v7467 = vsub.f32 %v7307, %v7339
        %v7468 = vsub.f32 %v7308, %v7340
        %v7469 = vsub.f32 %v7309, %v7341
        %v7470 = vsub.f32 %v7310, %v7342
        %v7471 = vsub.f32 %v7311, %v7343
        %v7472 = vsub.f32 %v7312, %v7344
        %v7473 = vsub.f32 %v7313, %v7345
        %v7474 = vsub.f32 %v7314, %v7346
        %v7475 = vsub.f32 %v7315, %v7347
        %v7476 = vsub.f32 %v7316, %v7348
        %v7477 = vsub.f32 %v7317, %v7349
        %v7478 = vsub.f32 %v7318, %v7350
        %v7479 = vsub.f32 %v7319, %v7351
        %v7480 = vsub.f32 %v7320, %v7352
        %v7481 = vsub.f32 %v7321, %v7353
        %v7482 = vsub.f32 %v7322, %v7354
        %v7483 = vsub.f32 %v7323, %v7355
        %v7484 = vsub.f32 %v7324, %v7356
        %v7485 = vsub.f32 %v7325, %v7357
        %v7486 = vsub.f32 %v7326, %v7358
        %v7487 = vsub.f32 %v7327, %v7359
        %v7488 = vsub.f32 %v7328, %v7360
        %v7489 = vsub.f32 %v7329, %v7361
        %v7490 = vsub.f32 %v7330, %v7362
        %v7491 = vsub.f32 %v7331, %v7363
        %v7492 = vsub.f32 %v7332, %v7364
        %v7493 = vsub.f32 %v7333, %v7365
        %v7494 = vsub.f32 %v7334, %v7366
        %v7495 = vsub.f32 %v7335, %v7367
        %v7496 = vsub.f32 %v7336, %v7368
        %v7497 = vsub.f32 %v7337, %v7369
        %v7498 = vsub.f32 %v7338, %v7370
        %v7499 = vmul.f32 %v7467, 1.442695
        %v7500 = vpow.pop %v7499
        %v7501 = vmul.f32 %v7468, 1.442695
        %v7502 = vpow.pop %v7501
        %v7503 = vmul.f32 %v7469, 1.442695
        %v7504 = vpow.pop %v7503
        %v7505 = vmul.f32 %v7470, 1.442695
        %v7506 = vpow.pop %v7505
        %v7507 = vmul.f32 %v7471, 1.442695
        %v7508 = vpow.pop %v7507
        %v7509 = vmul.f32 %v7472, 1.442695
        %v7510 = vpow.pop %v7509
        %v7511 = vmul.f32 %v7473, 1.442695
        %v7512 = vpow.pop %v7511
        %v7513 = vmul.f32 %v7474, 1.442695
        %v7514 = vpow.pop %v7513
        %v7515 = vmul.f32 %v7475, 1.442695
        %v7516 = vpow.pop %v7515
        %v7517 = vmul.f32 %v7476, 1.442695
        %v7518 = vpow.pop %v7517
        %v7519 = vmul.f32 %v7477, 1.442695
        %v7520 = vpow.pop %v7519
        %v7521 = vmul.f32 %v7478, 1.442695
        %v7522 = vpow.pop %v7521
        %v7523 = vmul.f32 %v7479, 1.442695
        %v7524 = vpow.pop %v7523
        %v7525 = vmul.f32 %v7480, 1.442695
        %v7526 = vpow.pop %v7525
        %v7527 = vmul.f32 %v7481, 1.442695
        %v7528 = vpow.pop %v7527
        %v7529 = vmul.f32 %v7482, 1.442695
        %v7530 = vpow.pop %v7529
        %v7531 = vmul.f32 %v7483, 1.442695
        %v7532 = vpow.pop %v7531
        %v7533 = vmul.f32 %v7484, 1.442695
        %v7534 = vpow.pop %v7533
        %v7535 = vmul.f32 %v7485, 1.442695
        %v7536 = vpow.pop %v7535
        %v7537 = vmul.f32 %v7486, 1.442695
        %v7538 = vpow.pop %v7537
        %v7539 = vmul.f32 %v7487, 1.442695
        %v7540 = vpow.pop %v7539
        %v7541 = vmul.f32 %v7488, 1.442695
        %v7542 = vpow.pop %v7541
        %v7543 = vmul.f32 %v7489, 1.442695
        %v7544 = vpow.pop %v7543
        %v7545 = vmul.f32 %v7490, 1.442695
        %v7546 = vpow.pop %v7545
        %v7547 = vmul.f32 %v7491, 1.442695
        %v7548 = vpow.pop %v7547
        %v7549 = vmul.f32 %v7492, 1.442695
        %v7550 = vpow.pop %v7549
        %v7551 = vmul.f32 %v7493, 1.442695
        %v7552 = vpow.pop %v7551
        %v7553 = vmul.f32 %v7494, 1.442695
        %v7554 = vpow.pop %v7553
        %v7555 = vmul.f32 %v7495, 1.442695
        %v7556 = vpow.pop %v7555
        %v7557 = vmul.f32 %v7496, 1.442695
        %v7558 = vpow.pop %v7557
        %v7559 = vmul.f32 %v7497, 1.442695
        %v7560 = vpow.pop %v7559
        %v7561 = vmul.f32 %v7498, 1.442695
        %v7562 = vpow.pop %v7561
        %v7563 = vmul.f32 %v6693, %v7404
        %v7564 = vmul.f32 %v6694, %v7406
        %v7565 = vmul.f32 %v6695, %v7408
        %v7566 = vmul.f32 %v6696, %v7410
        %v7567 = vmul.f32 %v6697, %v7412
        %v7568 = vmul.f32 %v6698, %v7414
        %v7569 = vmul.f32 %v6699, %v7416
        %v7570 = vmul.f32 %v6700, %v7418
        %v7571 = vmul.f32 %v6701, %v7420
        %v7572 = vmul.f32 %v6702, %v7422
        %v7573 = vmul.f32 %v6703, %v7424
        %v7574 = vmul.f32 %v6704, %v7426
        %v7575 = vmul.f32 %v6705, %v7428
        %v7576 = vmul.f32 %v6706, %v7430
        %v7577 = vmul.f32 %v6707, %v7432
        %v7578 = vmul.f32 %v6708, %v7434
        %v7579 = vmul.f32 %v6709, %v7436
        %v7580 = vmul.f32 %v6710, %v7438
        %v7581 = vmul.f32 %v6711, %v7440
        %v7582 = vmul.f32 %v6712, %v7442
        %v7583 = vmul.f32 %v6713, %v7444
        %v7584 = vmul.f32 %v6714, %v7446
        %v7585 = vmul.f32 %v6715, %v7448
        %v7586 = vmul.f32 %v6716, %v7450
        %v7587 = vmul.f32 %v6717, %v7452
        %v7588 = vmul.f32 %v6718, %v7454
        %v7589 = vmul.f32 %v6719, %v7456
        %v7590 = vmul.f32 %v6720, %v7458
        %v7591 = vmul.f32 %v6721, %v7460
        %v7592 = vmul.f32 %v6722, %v7462
        %v7593 = vmul.f32 %v6723, %v7464
        %v7594 = vmul.f32 %v6724, %v7466
        %v7595 = vadd.f32 %v7563, %v7500
        %v7596 = vadd.f32 %v7564, %v7502
        %v7597 = vadd.f32 %v7565, %v7504
        %v7598 = vadd.f32 %v7566, %v7506
        %v7599 = vadd.f32 %v7567, %v7508
        %v7600 = vadd.f32 %v7568, %v7510
        %v7601 = vadd.f32 %v7569, %v7512
        %v7602 = vadd.f32 %v7570, %v7514
        %v7603 = vadd.f32 %v7571, %v7516
        %v7604 = vadd.f32 %v7572, %v7518
        %v7605 = vadd.f32 %v7573, %v7520
        %v7606 = vadd.f32 %v7574, %v7522
        %v7607 = vadd.f32 %v7575, %v7524
        %v7608 = vadd.f32 %v7576, %v7526
        %v7609 = vadd.f32 %v7577, %v7528
        %v7610 = vadd.f32 %v7578, %v7530
        %v7611 = vadd.f32 %v7579, %v7532
        %v7612 = vadd.f32 %v7580, %v7534
        %v7613 = vadd.f32 %v7581, %v7536
        %v7614 = vadd.f32 %v7582, %v7538
        %v7615 = vadd.f32 %v7583, %v7540
        %v7616 = vadd.f32 %v7584, %v7542
        %v7617 = vadd.f32 %v7585, %v7544
        %v7618 = vadd.f32 %v7586, %v7546
        %v7619 = vadd.f32 %v7587, %v7548
        %v7620 = vadd.f32 %v7588, %v7550
        %v7621 = vadd.f32 %v7589, %v7552
        %v7622 = vadd.f32 %v7590, %v7554
        %v7623 = vadd.f32 %v7591, %v7556
        %v7624 = vadd.f32 %v7592, %v7558
        %v7625 = vadd.f32 %v7593, %v7560
        %v7626 = vadd.f32 %v7594, %v7562
        %v7659 = vrot.slane %v7404, 1
        %v7660 = vrot.slane %v7406, 1
        %v7661 = vsel %vm874, %v7659, %v7660
        %v7662 = vrot.slane %v7408, 1
        %v7663 = vsel %vm874, %v7660, %v7662
        %v7664 = vrot.slane %v7410, 1
        %v7665 = vsel %vm874, %v7662, %v7664
        %v7666 = vrot.slane %v7412, 1
        %v7667 = vsel %vm874, %v7664, %v7666
        %v7668 = vrot.slane %v7414, 1
        %v7669 = vsel %vm874, %v7666, %v7668
        %v7670 = vrot.slane %v7416, 1
        %v7671 = vsel %vm874, %v7668, %v7670
        %v7672 = vrot.slane %v7418, 1
        %v7673 = vsel %vm874, %v7670, %v7672
        %v7674 = vrot.slane %v7420, 1
        %v7675 = vsel %vm874, %v7672, %v7674
        %v7676 = vrot.slane %v7422, 1
        %v7677 = vsel %vm874, %v7674, %v7676
        %v7678 = vrot.slane %v7424, 1
        %v7679 = vsel %vm874, %v7676, %v7678
        %v7680 = vrot.slane %v7426, 1
        %v7681 = vsel %vm874, %v7678, %v7680
        %v7682 = vrot.slane %v7428, 1
        %v7683 = vsel %vm874, %v7680, %v7682
        %v7684 = vrot.slane %v7430, 1
        %v7685 = vsel %vm874, %v7682, %v7684
        %v7686 = vrot.slane %v7432, 1
        %v7687 = vsel %vm874, %v7684, %v7686
        %v7688 = vrot.slane %v7434, 1
        %v7689 = vsel %vm874, %v7686, %v7688
        %v7690 = vrot.slane %v7436, 1
        %v7691 = vsel %vm874, %v7688, %v7690
        %v7692 = vrot.slane %v7438, 1
        %v7693 = vsel %vm874, %v7690, %v7692
        %v7694 = vrot.slane %v7440, 1
        %v7695 = vsel %vm874, %v7692, %v7694
        %v7696 = vrot.slane %v7442, 1
        %v7697 = vsel %vm874, %v7694, %v7696
        %v7698 = vrot.slane %v7444, 1
        %v7699 = vsel %vm874, %v7696, %v7698
        %v7700 = vrot.slane %v7446, 1
        %v7701 = vsel %vm874, %v7698, %v7700
        %v7702 = vrot.slane %v7448, 1
        %v7703 = vsel %vm874, %v7700, %v7702
        %v7704 = vrot.slane %v7450, 1
        %v7705 = vsel %vm874, %v7702, %v7704
        %v7706 = vrot.slane %v7452, 1
        %v7707 = vsel %vm874, %v7704, %v7706
        %v7708 = vrot.slane %v7454, 1
        %v7709 = vsel %vm874, %v7706, %v7708
        %v7710 = vrot.slane %v7456, 1
        %v7711 = vsel %vm874, %v7708, %v7710
        %v7712 = vrot.slane %v7458, 1
        %v7713 = vsel %vm874, %v7710, %v7712
        %v7714 = vrot.slane %v7460, 1
        %v7715 = vsel %vm874, %v7712, %v7714
        %v7716 = vrot.slane %v7462, 1
        %v7717 = vsel %vm874, %v7714, %v7716
        %v7718 = vrot.slane %v7464, 1
        %v7719 = vsel %vm874, %v7716, %v7718
        %v7720 = vrot.slane %v7466, 1
        %v7721 = vsel %vm874, %v7718, %v7720
        %v7755 = vmul.f32 %v7176, %v7659
        %v7756 = vmul.f32 %v7177, %v7661
        %v7757 = vmul.f32 %v7178, %v7663
        %v7758 = vmul.f32 %v7179, %v7665
        %v7759 = vmul.f32 %v7180, %v7667
        %v7760 = vmul.f32 %v7181, %v7669
        %v7761 = vmul.f32 %v7182, %v7671
        %v7762 = vmul.f32 %v7183, %v7673
        %v7763 = vmul.f32 %v7184, %v7675
        %v7764 = vmul.f32 %v7185, %v7677
        %v7765 = vmul.f32 %v7186, %v7679
        %v7766 = vmul.f32 %v7187, %v7681
        %v7767 = vmul.f32 %v7188, %v7683
        %v7768 = vmul.f32 %v7189, %v7685
        %v7769 = vmul.f32 %v7190, %v7687
        %v7770 = vmul.f32 %v7191, %v7689
        %v7771 = vmul.f32 %v7192, %v7691
        %v7772 = vmul.f32 %v7193, %v7693
        %v7773 = vmul.f32 %v7194, %v7695
        %v7774 = vmul.f32 %v7195, %v7697
        %v7775 = vmul.f32 %v7196, %v7699
        %v7776 = vmul.f32 %v7197, %v7701
        %v7777 = vmul.f32 %v7198, %v7703
        %v7778 = vmul.f32 %v7199, %v7705
        %v7779 = vmul.f32 %v7200, %v7707
        %v7780 = vmul.f32 %v7201, %v7709
        %v7781 = vmul.f32 %v7202, %v7711
        %v7782 = vmul.f32 %v7203, %v7713
        %v7783 = vmul.f32 %v7204, %v7715
        %v7784 = vmul.f32 %v7205, %v7717
        %v7785 = vmul.f32 %v7206, %v7719
        %v7786 = vmul.f32 %v7207, %v7721
        %v7787 = vmul.f32 %v7208, %v7720
        %v7788 = vmul.f32 %v7500, %v7277
        %v7789 = vmul.f32 %v7502, %v7278
        %v7790 = vmul.f32 %v7504, %v7279
        %v7791 = vmul.f32 %v7506, %v7280
        %v7792 = vmul.f32 %v7508, %v7281
        %v7793 = vmul.f32 %v7510, %v7282
        %v7794 = vmul.f32 %v7512, %v7283
        %v7795 = vmul.f32 %v7514, %v7284
        %v7796 = vmul.f32 %v7516, %v7285
        %v7797 = vmul.f32 %v7518, %v7286
        %v7798 = vmul.f32 %v7520, %v7287
        %v7799 = vmul.f32 %v7522, %v7288
        %v7800 = vmul.f32 %v7524, %v7289
        %v7801 = vmul.f32 %v7526, %v7290
        %v7802 = vmul.f32 %v7528, %v7291
        %v7803 = vmul.f32 %v7530, %v7292
        %v7804 = vmul.f32 %v7532, %v7293
        %v7805 = vmul.f32 %v7534, %v7294
        %v7806 = vmul.f32 %v7536, %v7295
        %v7807 = vmul.f32 %v7538, %v7296
        %v7808 = vmul.f32 %v7540, %v7297
        %v7809 = vmul.f32 %v7542, %v7298
        %v7810 = vmul.f32 %v7544, %v7299
        %v7811 = vmul.f32 %v7546, %v7300
        %v7812 = vmul.f32 %v7548, %v7301
        %v7813 = vmul.f32 %v7550, %v7302
        %v7814 = vmul.f32 %v7552, %v7303
        %v7815 = vmul.f32 %v7554, %v7304
        %v7816 = vmul.f32 %v7556, %v7305
        %v7817 = vmul.f32 %v7558, %v7306
        %v7818 = vmul.f32 %v7560, %v7239
        %v7819 = vmul.f32 %v7562, %v7240
        %v7852 = vrot.slane %v7788, 1
        %v7853 = vrot.slane %v7789, 1
        %v7854 = vsel %vm874, %v7852, %v7853
        %v7855 = vrot.slane %v7790, 1
        %v7856 = vsel %vm874, %v7853, %v7855
        %v7857 = vrot.slane %v7791, 1
        %v7858 = vsel %vm874, %v7855, %v7857
        %v7859 = vrot.slane %v7792, 1
        %v7860 = vsel %vm874, %v7857, %v7859
        %v7861 = vrot.slane %v7793, 1
        %v7862 = vsel %vm874, %v7859, %v7861
        %v7863 = vrot.slane %v7794, 1
        %v7864 = vsel %vm874, %v7861, %v7863
        %v7865 = vrot.slane %v7795, 1
        %v7866 = vsel %vm874, %v7863, %v7865
        %v7867 = vrot.slane %v7796, 1
        %v7868 = vsel %vm874, %v7865, %v7867
        %v7869 = vrot.slane %v7797, 1
        %v7870 = vsel %vm874, %v7867, %v7869
        %v7871 = vrot.slane %v7798, 1
        %v7872 = vsel %vm874, %v7869, %v7871
        %v7873 = vrot.slane %v7799, 1
        %v7874 = vsel %vm874, %v7871, %v7873
        %v7875 = vrot.slane %v7800, 1
        %v7876 = vsel %vm874, %v7873, %v7875
        %v7877 = vrot.slane %v7801, 1
        %v7878 = vsel %vm874, %v7875, %v7877
        %v7879 = vrot.slane %v7802, 1
        %v7880 = vsel %vm874, %v7877, %v7879
        %v7881 = vrot.slane %v7803, 1
        %v7882 = vsel %vm874, %v7879, %v7881
        %v7883 = vrot.slane %v7804, 1
        %v7884 = vsel %vm874, %v7881, %v7883
        %v7885 = vrot.slane %v7805, 1
        %v7886 = vsel %vm874, %v7883, %v7885
        %v7887 = vrot.slane %v7806, 1
        %v7888 = vsel %vm874, %v7885, %v7887
        %v7889 = vrot.slane %v7807, 1
        %v7890 = vsel %vm874, %v7887, %v7889
        %v7891 = vrot.slane %v7808, 1
        %v7892 = vsel %vm874, %v7889, %v7891
        %v7893 = vrot.slane %v7809, 1
        %v7894 = vsel %vm874, %v7891, %v7893
        %v7895 = vrot.slane %v7810, 1
        %v7896 = vsel %vm874, %v7893, %v7895
        %v7897 = vrot.slane %v7811, 1
        %v7898 = vsel %vm874, %v7895, %v7897
        %v7899 = vrot.slane %v7812, 1
        %v7900 = vsel %vm874, %v7897, %v7899
        %v7901 = vrot.slane %v7813, 1
        %v7902 = vsel %vm874, %v7899, %v7901
        %v7903 = vrot.slane %v7814, 1
        %v7904 = vsel %vm874, %v7901, %v7903
        %v7905 = vrot.slane %v7815, 1
        %v7906 = vsel %vm874, %v7903, %v7905
        %v7907 = vrot.slane %v7816, 1
        %v7908 = vsel %vm874, %v7905, %v7907
        %v7909 = vrot.slane %v7817, 1
        %v7910 = vsel %vm874, %v7907, %v7909
        %v7911 = vrot.slane %v7818, 1
        %v7912 = vsel %vm874, %v7909, %v7911
        %v7913 = vrot.slane %v7819, 1
        %v7914 = vsel %vm874, %v7911, %v7913
        %v7948 = vadd.f32 %v7755, %v7852
        %v7949 = vadd.f32 %v7756, %v7854
        %v7950 = vadd.f32 %v7757, %v7856
        %v7951 = vadd.f32 %v7758, %v7858
        %v7952 = vadd.f32 %v7759, %v7860
        %v7953 = vadd.f32 %v7760, %v7862
        %v7954 = vadd.f32 %v7761, %v7864
        %v7955 = vadd.f32 %v7762, %v7866
        %v7956 = vadd.f32 %v7763, %v7868
        %v7957 = vadd.f32 %v7764, %v7870
        %v7958 = vadd.f32 %v7765, %v7872
        %v7959 = vadd.f32 %v7766, %v7874
        %v7960 = vadd.f32 %v7767, %v7876
        %v7961 = vadd.f32 %v7768, %v7878
        %v7962 = vadd.f32 %v7769, %v7880
        %v7963 = vadd.f32 %v7770, %v7882
        %v7964 = vadd.f32 %v7771, %v7884
        %v7965 = vadd.f32 %v7772, %v7886
        %v7966 = vadd.f32 %v7773, %v7888
        %v7967 = vadd.f32 %v7774, %v7890
        %v7968 = vadd.f32 %v7775, %v7892
        %v7969 = vadd.f32 %v7776, %v7894
        %v7970 = vadd.f32 %v7777, %v7896
        %v7971 = vadd.f32 %v7778, %v7898
        %v7972 = vadd.f32 %v7779, %v7900
        %v7973 = vadd.f32 %v7780, %v7902
        %v7974 = vadd.f32 %v7781, %v7904
        %v7975 = vadd.f32 %v7782, %v7906
        %v7976 = vadd.f32 %v7783, %v7908
        %v7977 = vadd.f32 %v7784, %v7910
        %v7978 = vadd.f32 %v7785, %v7912
        %v7979 = vadd.f32 %v7786, %v7914
        %v7980 = vadd.f32 %v7787, %v7913
        %v7981 = vmul.f32 %v621, %v2198
        %v7982 = vmul.f32 %v623, %v2200
        %v7983 = vmul.f32 %v625, %v2202
        %v7984 = vmul.f32 %v627, %v2204
        %v7985 = vmul.f32 %v629, %v2206
        %v7986 = vmul.f32 %v631, %v2208
        %v7987 = vmul.f32 %v633, %v2210
        %v7988 = vmul.f32 %v635, %v2212
        %v7989 = vmul.f32 %v637, %v2214
        %v7990 = vmul.f32 %v639, %v2216
        %v7991 = vmul.f32 %v641, %v2218
        %v7992 = vmul.f32 %v643, %v2220
        %v7993 = vmul.f32 %v645, %v2222
        %v7994 = vmul.f32 %v647, %v2224
        %v7995 = vmul.f32 %v649, %v2226
        %v7996 = vmul.f32 %v651, %v2228
        %v7997 = vmul.f32 %v653, %v2230
        %v7998 = vmul.f32 %v655, %v2232
        %v7999 = vmul.f32 %v657, %v2234
        %v8000 = vmul.f32 %v659, %v2236
        %v8001 = vmul.f32 %v661, %v2238
        %v8002 = vmul.f32 %v663, %v2240
        %v8003 = vmul.f32 %v665, %v2242
        %v8004 = vmul.f32 %v667, %v2244
        %v8005 = vmul.f32 %v669, %v2246
        %v8006 = vmul.f32 %v671, %v2248
        %v8007 = vmul.f32 %v673, %v2250
        %v8008 = vmul.f32 %v675, %v2252
        %v8009 = vmul.f32 %v677, %v2254
        %v8010 = vmul.f32 %v679, %v2256
        %v8011 = vmul.f32 %v2258, 0.0
        %v8012 = vmul.f32 %v2260, 0.0
        %v8013 = vlaneseq
        %v8014 = vshrl.u32 %v8013, 7
        %v8015 = vsub.s32 0, %v8014
        %v8016 = vrot.slane %v713, %v8015
        %v8017 = vadd.f32 %v7981, %v8016
        %v8018 = vadd.f32 %v7982, %v8016
        %v8019 = vadd.f32 %v7983, %v8016
        %v8020 = vadd.f32 %v7984, %v8016
        %v8021 = vadd.f32 %v7985, %v8016
        %v8022 = vadd.f32 %v7986, %v8016
        %v8023 = vadd.f32 %v7987, %v8016
        %v8024 = vadd.f32 %v7988, %v8016
        %v8025 = vadd.f32 %v7989, %v8016
        %v8026 = vadd.f32 %v7990, %v8016
        %v8027 = vadd.f32 %v7991, %v8016
        %v8028 = vadd.f32 %v7992, %v8016
        %v8029 = vadd.f32 %v7993, %v8016
        %v8030 = vadd.f32 %v7994, %v8016
        %v8031 = vadd.f32 %v7995, %v8016
        %v8032 = vadd.f32 %v7996, %v8016
        %v8033 = vadd.f32 %v7997, %v8016
        %v8034 = vadd.f32 %v7998, %v8016
        %v8035 = vadd.f32 %v7999, %v8016
        %v8036 = vadd.f32 %v8000, %v8016
        %v8037 = vadd.f32 %v8001, %v8016
        %v8038 = vadd.f32 %v8002, %v8016
        %v8039 = vadd.f32 %v8003, %v8016
        %v8040 = vadd.f32 %v8004, %v8016
        %v8041 = vadd.f32 %v8005, %v8016
        %v8042 = vadd.f32 %v8006, %v8016
        %v8043 = vadd.f32 %v8007, %v8016
        %v8044 = vadd.f32 %v8008, %v8016
        %v8045 = vadd.f32 %v8009, %v8016
        %v8046 = vadd.f32 %v8010, %v8016
        %v8047 = vadd.f32 %v8011, %v8016
        %v8048 = vadd.f32 %v8012, %v8016
        %v8049 = vadd.f32 %v5170, %v8016
        %v8050 = vmul.f32 %v408, %v2198
        %v8051 = vmul.f32 %v414, %v2200
        %v8052 = vmul.f32 %v420, %v2202
        %v8053 = vmul.f32 %v426, %v2204
        %v8054 = vmul.f32 %v432, %v2206
        %v8055 = vmul.f32 %v438, %v2208
        %v8056 = vmul.f32 %v444, %v2210
        %v8057 = vmul.f32 %v450, %v2212
        %v8058 = vmul.f32 %v456, %v2214
        %v8059 = vmul.f32 %v462, %v2216
        %v8060 = vmul.f32 %v468, %v2218
        %v8061 = vmul.f32 %v474, %v2220
        %v8062 = vmul.f32 %v480, %v2222
        %v8063 = vmul.f32 %v486, %v2224
        %v8064 = vmul.f32 %v492, %v2226
        %v8065 = vmul.f32 %v498, %v2228
        %v8066 = vmul.f32 %v504, %v2230
        %v8067 = vmul.f32 %v510, %v2232
        %v8068 = vmul.f32 %v516, %v2234
        %v8069 = vmul.f32 %v522, %v2236
        %v8070 = vmul.f32 %v528, %v2238
        %v8071 = vmul.f32 %v534, %v2240
        %v8072 = vmul.f32 %v540, %v2242
        %v8073 = vmul.f32 %v546, %v2244
        %v8074 = vmul.f32 %v552, %v2246
        %v8075 = vmul.f32 %v558, %v2248
        %v8076 = vmul.f32 %v564, %v2250
        %v8077 = vmul.f32 %v570, %v2252
        %v8078 = vmul.f32 %v576, %v2254
        %v8079 = vmul.f32 %v582, %v2256
        %v8113 = vrot.slane %v8017, 1
        %v8114 = vrot.slane %v8018, 1
        %v8115 = vsel %vm874, %v8113, %v8114
        %v8116 = vrot.slane %v8019, 1
        %v8117 = vsel %vm874, %v8114, %v8116
        %v8118 = vrot.slane %v8020, 1
        %v8119 = vsel %vm874, %v8116, %v8118
        %v8120 = vrot.slane %v8021, 1
        %v8121 = vsel %vm874, %v8118, %v8120
        %v8122 = vrot.slane %v8022, 1
        %v8123 = vsel %vm874, %v8120, %v8122
        %v8124 = vrot.slane %v8023, 1
        %v8125 = vsel %vm874, %v8122, %v8124
        %v8126 = vrot.slane %v8024, 1
        %v8127 = vsel %vm874, %v8124, %v8126
        %v8128 = vrot.slane %v8025, 1
        %v8129 = vsel %vm874, %v8126, %v8128
        %v8130 = vrot.slane %v8026, 1
        %v8131 = vsel %vm874, %v8128, %v8130
        %v8132 = vrot.slane %v8027, 1
        %v8133 = vsel %vm874, %v8130, %v8132
        %v8134 = vrot.slane %v8028, 1
        %v8135 = vsel %vm874, %v8132, %v8134
        %v8136 = vrot.slane %v8029, 1
        %v8137 = vsel %vm874, %v8134, %v8136
        %v8138 = vrot.slane %v8030, 1
        %v8139 = vsel %vm874, %v8136, %v8138
        %v8140 = vrot.slane %v8031, 1
        %v8141 = vsel %vm874, %v8138, %v8140
        %v8142 = vrot.slane %v8032, 1
        %v8143 = vsel %vm874, %v8140, %v8142
        %v8144 = vrot.slane %v8033, 1
        %v8145 = vsel %vm874, %v8142, %v8144
        %v8146 = vrot.slane %v8034, 1
        %v8147 = vsel %vm874, %v8144, %v8146
        %v8148 = vrot.slane %v8035, 1
        %v8149 = vsel %vm874, %v8146, %v8148
        %v8150 = vrot.slane %v8036, 1
        %v8151 = vsel %vm874, %v8148, %v8150
        %v8152 = vrot.slane %v8037, 1
        %v8153 = vsel %vm874, %v8150, %v8152
        %v8154 = vrot.slane %v8038, 1
        %v8155 = vsel %vm874, %v8152, %v8154
        %v8156 = vrot.slane %v8039, 1
        %v8157 = vsel %vm874, %v8154, %v8156
        %v8158 = vrot.slane %v8040, 1
        %v8159 = vsel %vm874, %v8156, %v8158
        %v8160 = vrot.slane %v8041, 1
        %v8161 = vsel %vm874, %v8158, %v8160
        %v8162 = vrot.slane %v8042, 1
        %v8163 = vsel %vm874, %v8160, %v8162
        %v8164 = vrot.slane %v8043, 1
        %v8165 = vsel %vm874, %v8162, %v8164
        %v8166 = vrot.slane %v8044, 1
        %v8167 = vsel %vm874, %v8164, %v8166
        %v8168 = vrot.slane %v8045, 1
        %v8169 = vsel %vm874, %v8166, %v8168
        %v8170 = vrot.slane %v8046, 1
        %v8171 = vsel %vm874, %v8168, %v8170
        %v8172 = vrot.slane %v8047, 1
        %v8173 = vsel %vm874, %v8170, %v8172
        %v8174 = vrot.slane %v8048, 1
        %v8175 = vsel %vm874, %v8172, %v8174
        %v8176 = vrot.slane %v8049, 1
        %v8177 = vsel %vm874, %v8174, %v8176
        %v8210 = vmul.f32 %v394, %v8115
        %v8211 = vmul.f32 %v400, %v8117
        %v8212 = vmul.f32 %v406, %v8119
        %v8213 = vmul.f32 %v412, %v8121
        %v8214 = vmul.f32 %v418, %v8123
        %v8215 = vmul.f32 %v424, %v8125
        %v8216 = vmul.f32 %v430, %v8127
        %v8217 = vmul.f32 %v436, %v8129
        %v8218 = vmul.f32 %v442, %v8131
        %v8219 = vmul.f32 %v448, %v8133
        %v8220 = vmul.f32 %v454, %v8135
        %v8221 = vmul.f32 %v460, %v8137
        %v8222 = vmul.f32 %v466, %v8139
        %v8223 = vmul.f32 %v472, %v8141
        %v8224 = vmul.f32 %v478, %v8143
        %v8225 = vmul.f32 %v484, %v8145
        %v8226 = vmul.f32 %v490, %v8147
        %v8227 = vmul.f32 %v496, %v8149
        %v8228 = vmul.f32 %v502, %v8151
        %v8229 = vmul.f32 %v508, %v8153
        %v8230 = vmul.f32 %v514, %v8155
        %v8231 = vmul.f32 %v520, %v8157
        %v8232 = vmul.f32 %v526, %v8159
        %v8233 = vmul.f32 %v532, %v8161
        %v8234 = vmul.f32 %v538, %v8163
        %v8235 = vmul.f32 %v544, %v8165
        %v8236 = vmul.f32 %v550, %v8167
        %v8237 = vmul.f32 %v556, %v8169
        %v8238 = vmul.f32 %v562, %v8171
        %v8239 = vmul.f32 %v568, %v8173
        %v8240 = vmul.f32 %v574, %v8175
        %v8241 = vmul.f32 %v580, %v8177
        %v8242 = vmax.f32 %v7339, %v8210
        %v8243 = vmax.f32 %v7340, %v8211
        %v8244 = vmax.f32 %v7341, %v8212
        %v8245 = vmax.f32 %v7342, %v8213
        %v8246 = vmax.f32 %v7343, %v8214
        %v8247 = vmax.f32 %v7344, %v8215
        %v8248 = vmax.f32 %v7345, %v8216
        %v8249 = vmax.f32 %v7346, %v8217
        %v8250 = vmax.f32 %v7347, %v8218
        %v8251 = vmax.f32 %v7348, %v8219
        %v8252 = vmax.f32 %v7349, %v8220
        %v8253 = vmax.f32 %v7350, %v8221
        %v8254 = vmax.f32 %v7351, %v8222
        %v8255 = vmax.f32 %v7352, %v8223
        %v8256 = vmax.f32 %v7353, %v8224
        %v8257 = vmax.f32 %v7354, %v8225
        %v8258 = vmax.f32 %v7355, %v8226
        %v8259 = vmax.f32 %v7356, %v8227
        %v8260 = vmax.f32 %v7357, %v8228
        %v8261 = vmax.f32 %v7358, %v8229
        %v8262 = vmax.f32 %v7359, %v8230
        %v8263 = vmax.f32 %v7360, %v8231
        %v8264 = vmax.f32 %v7361, %v8232
        %v8265 = vmax.f32 %v7362, %v8233
        %v8266 = vmax.f32 %v7363, %v8234
        %v8267 = vmax.f32 %v7364, %v8235
        %v8268 = vmax.f32 %v7365, %v8236
        %v8269 = vmax.f32 %v7366, %v8237
        %v8270 = vmax.f32 %v7367, %v8238
        %v8271 = vmax.f32 %v7368, %v8239
        %v8272 = vmax.f32 %v7369, %v8240
        %v8273 = vmax.f32 %v7370, %v8241
        %v8274 = vsub.f32 %v7339, %v8242
        %v8275 = vsub.f32 %v7340, %v8243
        %v8276 = vsub.f32 %v7341, %v8244
        %v8277 = vsub.f32 %v7342, %v8245
        %v8278 = vsub.f32 %v7343, %v8246
        %v8279 = vsub.f32 %v7344, %v8247
        %v8280 = vsub.f32 %v7345, %v8248
        %v8281 = vsub.f32 %v7346, %v8249
        %v8282 = vsub.f32 %v7347, %v8250
        %v8283 = vsub.f32 %v7348, %v8251
        %v8284 = vsub.f32 %v7349, %v8252
        %v8285 = vsub.f32 %v7350, %v8253
        %v8286 = vsub.f32 %v7351, %v8254
        %v8287 = vsub.f32 %v7352, %v8255
        %v8288 = vsub.f32 %v7353, %v8256
        %v8289 = vsub.f32 %v7354, %v8257
        %v8290 = vsub.f32 %v7355, %v8258
        %v8291 = vsub.f32 %v7356, %v8259
        %v8292 = vsub.f32 %v7357, %v8260
        %v8293 = vsub.f32 %v7358, %v8261
        %v8294 = vsub.f32 %v7359, %v8262
        %v8295 = vsub.f32 %v7360, %v8263
        %v8296 = vsub.f32 %v7361, %v8264
        %v8297 = vsub.f32 %v7362, %v8265
        %v8298 = vsub.f32 %v7363, %v8266
        %v8299 = vsub.f32 %v7364, %v8267
        %v8300 = vsub.f32 %v7365, %v8268
        %v8301 = vsub.f32 %v7366, %v8269
        %v8302 = vsub.f32 %v7367, %v8270
        %v8303 = vsub.f32 %v7368, %v8271
        %v8304 = vsub.f32 %v7369, %v8272
        %v8305 = vsub.f32 %v7370, %v8273
        %v8306 = vmul.f32 %v8274, 1.442695
        %v8307 = vpow.pop %v8306
        %v8308 = vmul.f32 %v8275, 1.442695
        %v8309 = vpow.pop %v8308
        %v8310 = vmul.f32 %v8276, 1.442695
        %v8311 = vpow.pop %v8310
        %v8312 = vmul.f32 %v8277, 1.442695
        %v8313 = vpow.pop %v8312
        %v8314 = vmul.f32 %v8278, 1.442695
        %v8315 = vpow.pop %v8314
        %v8316 = vmul.f32 %v8279, 1.442695
        %v8317 = vpow.pop %v8316
        %v8318 = vmul.f32 %v8280, 1.442695
        %v8319 = vpow.pop %v8318
        %v8320 = vmul.f32 %v8281, 1.442695
        %v8321 = vpow.pop %v8320
        %v8322 = vmul.f32 %v8282, 1.442695
        %v8323 = vpow.pop %v8322
        %v8324 = vmul.f32 %v8283, 1.442695
        %v8325 = vpow.pop %v8324
        %v8326 = vmul.f32 %v8284, 1.442695
        %v8327 = vpow.pop %v8326
        %v8328 = vmul.f32 %v8285, 1.442695
        %v8329 = vpow.pop %v8328
        %v8330 = vmul.f32 %v8286, 1.442695
        %v8331 = vpow.pop %v8330
        %v8332 = vmul.f32 %v8287, 1.442695
        %v8333 = vpow.pop %v8332
        %v8334 = vmul.f32 %v8288, 1.442695
        %v8335 = vpow.pop %v8334
        %v8336 = vmul.f32 %v8289, 1.442695
        %v8337 = vpow.pop %v8336
        %v8338 = vmul.f32 %v8290, 1.442695
        %v8339 = vpow.pop %v8338
        %v8340 = vmul.f32 %v8291, 1.442695
        %v8341 = vpow.pop %v8340
        %v8342 = vmul.f32 %v8292, 1.442695
        %v8343 = vpow.pop %v8342
        %v8344 = vmul.f32 %v8293, 1.442695
        %v8345 = vpow.pop %v8344
        %v8346 = vmul.f32 %v8294, 1.442695
        %v8347 = vpow.pop %v8346
        %v8348 = vmul.f32 %v8295, 1.442695
        %v8349 = vpow.pop %v8348
        %v8350 = vmul.f32 %v8296, 1.442695
        %v8351 = vpow.pop %v8350
        %v8352 = vmul.f32 %v8297, 1.442695
        %v8353 = vpow.pop %v8352
        %v8354 = vmul.f32 %v8298, 1.442695
        %v8355 = vpow.pop %v8354
        %v8356 = vmul.f32 %v8299, 1.442695
        %v8357 = vpow.pop %v8356
        %v8358 = vmul.f32 %v8300, 1.442695
        %v8359 = vpow.pop %v8358
        %v8360 = vmul.f32 %v8301, 1.442695
        %v8361 = vpow.pop %v8360
        %v8362 = vmul.f32 %v8302, 1.442695
        %v8363 = vpow.pop %v8362
        %v8364 = vmul.f32 %v8303, 1.442695
        %v8365 = vpow.pop %v8364
        %v8366 = vmul.f32 %v8304, 1.442695
        %v8367 = vpow.pop %v8366
        %v8368 = vmul.f32 %v8305, 1.442695
        %v8369 = vpow.pop %v8368
        %v8370 = vsub.f32 %v8210, %v8242
        %v8371 = vsub.f32 %v8211, %v8243
        %v8372 = vsub.f32 %v8212, %v8244
        %v8373 = vsub.f32 %v8213, %v8245
        %v8374 = vsub.f32 %v8214, %v8246
        %v8375 = vsub.f32 %v8215, %v8247
        %v8376 = vsub.f32 %v8216, %v8248
        %v8377 = vsub.f32 %v8217, %v8249
        %v8378 = vsub.f32 %v8218, %v8250
        %v8379 = vsub.f32 %v8219, %v8251
        %v8380 = vsub.f32 %v8220, %v8252
        %v8381 = vsub.f32 %v8221, %v8253
        %v8382 = vsub.f32 %v8222, %v8254
        %v8383 = vsub.f32 %v8223, %v8255
        %v8384 = vsub.f32 %v8224, %v8256
        %v8385 = vsub.f32 %v8225, %v8257
        %v8386 = vsub.f32 %v8226, %v8258
        %v8387 = vsub.f32 %v8227, %v8259
        %v8388 = vsub.f32 %v8228, %v8260
        %v8389 = vsub.f32 %v8229, %v8261
        %v8390 = vsub.f32 %v8230, %v8262
        %v8391 = vsub.f32 %v8231, %v8263
        %v8392 = vsub.f32 %v8232, %v8264
        %v8393 = vsub.f32 %v8233, %v8265
        %v8394 = vsub.f32 %v8234, %v8266
        %v8395 = vsub.f32 %v8235, %v8267
        %v8396 = vsub.f32 %v8236, %v8268
        %v8397 = vsub.f32 %v8237, %v8269
        %v8398 = vsub.f32 %v8238, %v8270
        %v8399 = vsub.f32 %v8239, %v8271
        %v8400 = vsub.f32 %v8240, %v8272
        %v8401 = vsub.f32 %v8241, %v8273
        %v8402 = vmul.f32 %v8370, 1.442695
        %v8403 = vpow.pop %v8402
        %v8404 = vmul.f32 %v8371, 1.442695
        %v8405 = vpow.pop %v8404
        %v8406 = vmul.f32 %v8372, 1.442695
        %v8407 = vpow.pop %v8406
        %v8408 = vmul.f32 %v8373, 1.442695
        %v8409 = vpow.pop %v8408
        %v8410 = vmul.f32 %v8374, 1.442695
        %v8411 = vpow.pop %v8410
        %v8412 = vmul.f32 %v8375, 1.442695
        %v8413 = vpow.pop %v8412
        %v8414 = vmul.f32 %v8376, 1.442695
        %v8415 = vpow.pop %v8414
        %v8416 = vmul.f32 %v8377, 1.442695
        %v8417 = vpow.pop %v8416
        %v8418 = vmul.f32 %v8378, 1.442695
        %v8419 = vpow.pop %v8418
        %v8420 = vmul.f32 %v8379, 1.442695
        %v8421 = vpow.pop %v8420
        %v8422 = vmul.f32 %v8380, 1.442695
        %v8423 = vpow.pop %v8422
        %v8424 = vmul.f32 %v8381, 1.442695
        %v8425 = vpow.pop %v8424
        %v8426 = vmul.f32 %v8382, 1.442695
        %v8427 = vpow.pop %v8426
        %v8428 = vmul.f32 %v8383, 1.442695
        %v8429 = vpow.pop %v8428
        %v8430 = vmul.f32 %v8384, 1.442695
        %v8431 = vpow.pop %v8430
        %v8432 = vmul.f32 %v8385, 1.442695
        %v8433 = vpow.pop %v8432
        %v8434 = vmul.f32 %v8386, 1.442695
        %v8435 = vpow.pop %v8434
        %v8436 = vmul.f32 %v8387, 1.442695
        %v8437 = vpow.pop %v8436
        %v8438 = vmul.f32 %v8388, 1.442695
        %v8439 = vpow.pop %v8438
        %v8440 = vmul.f32 %v8389, 1.442695
        %v8441 = vpow.pop %v8440
        %v8442 = vmul.f32 %v8390, 1.442695
        %v8443 = vpow.pop %v8442
        %v8444 = vmul.f32 %v8391, 1.442695
        %v8445 = vpow.pop %v8444
        %v8446 = vmul.f32 %v8392, 1.442695
        %v8447 = vpow.pop %v8446
        %v8448 = vmul.f32 %v8393, 1.442695
        %v8449 = vpow.pop %v8448
        %v8450 = vmul.f32 %v8394, 1.442695
        %v8451 = vpow.pop %v8450
        %v8452 = vmul.f32 %v8395, 1.442695
        %v8453 = vpow.pop %v8452
        %v8454 = vmul.f32 %v8396, 1.442695
        %v8455 = vpow.pop %v8454
        %v8456 = vmul.f32 %v8397, 1.442695
        %v8457 = vpow.pop %v8456
        %v8458 = vmul.f32 %v8398, 1.442695
        %v8459 = vpow.pop %v8458
        %v8460 = vmul.f32 %v8399, 1.442695
        %v8461 = vpow.pop %v8460
        %v8462 = vmul.f32 %v8400, 1.442695
        %v8463 = vpow.pop %v8462
        %v8464 = vmul.f32 %v8401, 1.442695
        %v8465 = vpow.pop %v8464
        %v8466 = vmul.f32 %v7595, %v8307
        %v8467 = vmul.f32 %v7596, %v8309
        %v8468 = vmul.f32 %v7597, %v8311
        %v8469 = vmul.f32 %v7598, %v8313
        %v8470 = vmul.f32 %v7599, %v8315
        %v8471 = vmul.f32 %v7600, %v8317
        %v8472 = vmul.f32 %v7601, %v8319
        %v8473 = vmul.f32 %v7602, %v8321
        %v8474 = vmul.f32 %v7603, %v8323
        %v8475 = vmul.f32 %v7604, %v8325
        %v8476 = vmul.f32 %v7605, %v8327
        %v8477 = vmul.f32 %v7606, %v8329
        %v8478 = vmul.f32 %v7607, %v8331
        %v8479 = vmul.f32 %v7608, %v8333
        %v8480 = vmul.f32 %v7609, %v8335
        %v8481 = vmul.f32 %v7610, %v8337
        %v8482 = vmul.f32 %v7611, %v8339
        %v8483 = vmul.f32 %v7612, %v8341
        %v8484 = vmul.f32 %v7613, %v8343
        %v8485 = vmul.f32 %v7614, %v8345
        %v8486 = vmul.f32 %v7615, %v8347
        %v8487 = vmul.f32 %v7616, %v8349
        %v8488 = vmul.f32 %v7617, %v8351
        %v8489 = vmul.f32 %v7618, %v8353
        %v8490 = vmul.f32 %v7619, %v8355
        %v8491 = vmul.f32 %v7620, %v8357
        %v8492 = vmul.f32 %v7621, %v8359
        %v8493 = vmul.f32 %v7622, %v8361
        %v8494 = vmul.f32 %v7623, %v8363
        %v8495 = vmul.f32 %v7624, %v8365
        %v8496 = vmul.f32 %v7625, %v8367
        %v8497 = vmul.f32 %v7626, %v8369
        %v8498 = vadd.f32 %v8466, %v8403
        %v8499 = vadd.f32 %v8467, %v8405
        %v8500 = vadd.f32 %v8468, %v8407
        %v8501 = vadd.f32 %v8469, %v8409
        %v8502 = vadd.f32 %v8470, %v8411
        %v8503 = vadd.f32 %v8471, %v8413
        %v8504 = vadd.f32 %v8472, %v8415
        %v8505 = vadd.f32 %v8473, %v8417
        %v8506 = vadd.f32 %v8474, %v8419
        %v8507 = vadd.f32 %v8475, %v8421
        %v8508 = vadd.f32 %v8476, %v8423
        %v8509 = vadd.f32 %v8477, %v8425
        %v8510 = vadd.f32 %v8478, %v8427
        %v8511 = vadd.f32 %v8479, %v8429
        %v8512 = vadd.f32 %v8480, %v8431
        %v8513 = vadd.f32 %v8481, %v8433
        %v8514 = vadd.f32 %v8482, %v8435
        %v8515 = vadd.f32 %v8483, %v8437
        %v8516 = vadd.f32 %v8484, %v8439
        %v8517 = vadd.f32 %v8485, %v8441
        %v8518 = vadd.f32 %v8486, %v8443
        %v8519 = vadd.f32 %v8487, %v8445
        %v8520 = vadd.f32 %v8488, %v8447
        %v8521 = vadd.f32 %v8489, %v8449
        %v8522 = vadd.f32 %v8490, %v8451
        %v8523 = vadd.f32 %v8491, %v8453
        %v8524 = vadd.f32 %v8492, %v8455
        %v8525 = vadd.f32 %v8493, %v8457
        %v8526 = vadd.f32 %v8494, %v8459
        %v8527 = vadd.f32 %v8495, %v8461
        %v8528 = vadd.f32 %v8496, %v8463
        %v8529 = vadd.f32 %v8497, %v8465
        %v8562 = vrot.slane %v8307, 1
        %v8563 = vrot.slane %v8309, 1
        %v8564 = vsel %vm874, %v8562, %v8563
        %v8565 = vrot.slane %v8311, 1
        %v8566 = vsel %vm874, %v8563, %v8565
        %v8567 = vrot.slane %v8313, 1
        %v8568 = vsel %vm874, %v8565, %v8567
        %v8569 = vrot.slane %v8315, 1
        %v8570 = vsel %vm874, %v8567, %v8569
        %v8571 = vrot.slane %v8317, 1
        %v8572 = vsel %vm874, %v8569, %v8571
        %v8573 = vrot.slane %v8319, 1
        %v8574 = vsel %vm874, %v8571, %v8573
        %v8575 = vrot.slane %v8321, 1
        %v8576 = vsel %vm874, %v8573, %v8575
        %v8577 = vrot.slane %v8323, 1
        %v8578 = vsel %vm874, %v8575, %v8577
        %v8579 = vrot.slane %v8325, 1
        %v8580 = vsel %vm874, %v8577, %v8579
        %v8581 = vrot.slane %v8327, 1
        %v8582 = vsel %vm874, %v8579, %v8581
        %v8583 = vrot.slane %v8329, 1
        %v8584 = vsel %vm874, %v8581, %v8583
        %v8585 = vrot.slane %v8331, 1
        %v8586 = vsel %vm874, %v8583, %v8585
        %v8587 = vrot.slane %v8333, 1
        %v8588 = vsel %vm874, %v8585, %v8587
        %v8589 = vrot.slane %v8335, 1
        %v8590 = vsel %vm874, %v8587, %v8589
        %v8591 = vrot.slane %v8337, 1
        %v8592 = vsel %vm874, %v8589, %v8591
        %v8593 = vrot.slane %v8339, 1
        %v8594 = vsel %vm874, %v8591, %v8593
        %v8595 = vrot.slane %v8341, 1
        %v8596 = vsel %vm874, %v8593, %v8595
        %v8597 = vrot.slane %v8343, 1
        %v8598 = vsel %vm874, %v8595, %v8597
        %v8599 = vrot.slane %v8345, 1
        %v8600 = vsel %vm874, %v8597, %v8599
        %v8601 = vrot.slane %v8347, 1
        %v8602 = vsel %vm874, %v8599, %v8601
        %v8603 = vrot.slane %v8349, 1
        %v8604 = vsel %vm874, %v8601, %v8603
        %v8605 = vrot.slane %v8351, 1
        %v8606 = vsel %vm874, %v8603, %v8605
        %v8607 = vrot.slane %v8353, 1
        %v8608 = vsel %vm874, %v8605, %v8607
        %v8609 = vrot.slane %v8355, 1
        %v8610 = vsel %vm874, %v8607, %v8609
        %v8611 = vrot.slane %v8357, 1
        %v8612 = vsel %vm874, %v8609, %v8611
        %v8613 = vrot.slane %v8359, 1
        %v8614 = vsel %vm874, %v8611, %v8613
        %v8615 = vrot.slane %v8361, 1
        %v8616 = vsel %vm874, %v8613, %v8615
        %v8617 = vrot.slane %v8363, 1
        %v8618 = vsel %vm874, %v8615, %v8617
        %v8619 = vrot.slane %v8365, 1
        %v8620 = vsel %vm874, %v8617, %v8619
        %v8621 = vrot.slane %v8367, 1
        %v8622 = vsel %vm874, %v8619, %v8621
        %v8623 = vrot.slane %v8369, 1
        %v8624 = vsel %vm874, %v8621, %v8623
        %v8658 = vmul.f32 %v7948, %v8562
        %v8659 = vmul.f32 %v7949, %v8564
        %v8660 = vmul.f32 %v7950, %v8566
        %v8661 = vmul.f32 %v7951, %v8568
        %v8662 = vmul.f32 %v7952, %v8570
        %v8663 = vmul.f32 %v7953, %v8572
        %v8664 = vmul.f32 %v7954, %v8574
        %v8665 = vmul.f32 %v7955, %v8576
        %v8666 = vmul.f32 %v7956, %v8578
        %v8667 = vmul.f32 %v7957, %v8580
        %v8668 = vmul.f32 %v7958, %v8582
        %v8669 = vmul.f32 %v7959, %v8584
        %v8670 = vmul.f32 %v7960, %v8586
        %v8671 = vmul.f32 %v7961, %v8588
        %v8672 = vmul.f32 %v7962, %v8590
        %v8673 = vmul.f32 %v7963, %v8592
        %v8674 = vmul.f32 %v7964, %v8594
        %v8675 = vmul.f32 %v7965, %v8596
        %v8676 = vmul.f32 %v7966, %v8598
        %v8677 = vmul.f32 %v7967, %v8600
        %v8678 = vmul.f32 %v7968, %v8602
        %v8679 = vmul.f32 %v7969, %v8604
        %v8680 = vmul.f32 %v7970, %v8606
        %v8681 = vmul.f32 %v7971, %v8608
        %v8682 = vmul.f32 %v7972, %v8610
        %v8683 = vmul.f32 %v7973, %v8612
        %v8684 = vmul.f32 %v7974, %v8614
        %v8685 = vmul.f32 %v7975, %v8616
        %v8686 = vmul.f32 %v7976, %v8618
        %v8687 = vmul.f32 %v7977, %v8620
        %v8688 = vmul.f32 %v7978, %v8622
        %v8689 = vmul.f32 %v7979, %v8624
        %v8690 = vmul.f32 %v7980, %v8623
        %v8723 = vrot.slane %v8050, 1
        %v8724 = vrot.slane %v8051, 1
        %v8725 = vsel %vm874, %v8723, %v8724
        %v8726 = vrot.slane %v8052, 1
        %v8727 = vsel %vm874, %v8724, %v8726
        %v8728 = vrot.slane %v8053, 1
        %v8729 = vsel %vm874, %v8726, %v8728
        %v8730 = vrot.slane %v8054, 1
        %v8731 = vsel %vm874, %v8728, %v8730
        %v8732 = vrot.slane %v8055, 1
        %v8733 = vsel %vm874, %v8730, %v8732
        %v8734 = vrot.slane %v8056, 1
        %v8735 = vsel %vm874, %v8732, %v8734
        %v8736 = vrot.slane %v8057, 1
        %v8737 = vsel %vm874, %v8734, %v8736
        %v8738 = vrot.slane %v8058, 1
        %v8739 = vsel %vm874, %v8736, %v8738
        %v8740 = vrot.slane %v8059, 1
        %v8741 = vsel %vm874, %v8738, %v8740
        %v8742 = vrot.slane %v8060, 1
        %v8743 = vsel %vm874, %v8740, %v8742
        %v8744 = vrot.slane %v8061, 1
        %v8745 = vsel %vm874, %v8742, %v8744
        %v8746 = vrot.slane %v8062, 1
        %v8747 = vsel %vm874, %v8744, %v8746
        %v8748 = vrot.slane %v8063, 1
        %v8749 = vsel %vm874, %v8746, %v8748
        %v8750 = vrot.slane %v8064, 1
        %v8751 = vsel %vm874, %v8748, %v8750
        %v8752 = vrot.slane %v8065, 1
        %v8753 = vsel %vm874, %v8750, %v8752
        %v8754 = vrot.slane %v8066, 1
        %v8755 = vsel %vm874, %v8752, %v8754
        %v8756 = vrot.slane %v8067, 1
        %v8757 = vsel %vm874, %v8754, %v8756
        %v8758 = vrot.slane %v8068, 1
        %v8759 = vsel %vm874, %v8756, %v8758
        %v8760 = vrot.slane %v8069, 1
        %v8761 = vsel %vm874, %v8758, %v8760
        %v8762 = vrot.slane %v8070, 1
        %v8763 = vsel %vm874, %v8760, %v8762
        %v8764 = vrot.slane %v8071, 1
        %v8765 = vsel %vm874, %v8762, %v8764
        %v8766 = vrot.slane %v8072, 1
        %v8767 = vsel %vm874, %v8764, %v8766
        %v8768 = vrot.slane %v8073, 1
        %v8769 = vsel %vm874, %v8766, %v8768
        %v8770 = vrot.slane %v8074, 1
        %v8771 = vsel %vm874, %v8768, %v8770
        %v8772 = vrot.slane %v8075, 1
        %v8773 = vsel %vm874, %v8770, %v8772
        %v8774 = vrot.slane %v8076, 1
        %v8775 = vsel %vm874, %v8772, %v8774
        %v8776 = vrot.slane %v8077, 1
        %v8777 = vsel %vm874, %v8774, %v8776
        %v8778 = vrot.slane %v8078, 1
        %v8779 = vsel %vm874, %v8776, %v8778
        %v8780 = vrot.slane %v8079, 1
        %v8781 = vsel %vm874, %v8778, %v8780
        %v8782 = vrot.slane %v8011, 1
        %v8783 = vsel %vm874, %v8780, %v8782
        %v8784 = vrot.slane %v8012, 1
        %v8785 = vsel %vm874, %v8782, %v8784
        %v8786 = vsel %vm874, %v8784, %v5947
        %v8819 = vmul.f32 %v8403, %v8725
        %v8820 = vmul.f32 %v8405, %v8727
        %v8821 = vmul.f32 %v8407, %v8729
        %v8822 = vmul.f32 %v8409, %v8731
        %v8823 = vmul.f32 %v8411, %v8733
        %v8824 = vmul.f32 %v8413, %v8735
        %v8825 = vmul.f32 %v8415, %v8737
        %v8826 = vmul.f32 %v8417, %v8739
        %v8827 = vmul.f32 %v8419, %v8741
        %v8828 = vmul.f32 %v8421, %v8743
        %v8829 = vmul.f32 %v8423, %v8745
        %v8830 = vmul.f32 %v8425, %v8747
        %v8831 = vmul.f32 %v8427, %v8749
        %v8832 = vmul.f32 %v8429, %v8751
        %v8833 = vmul.f32 %v8431, %v8753
        %v8834 = vmul.f32 %v8433, %v8755
        %v8835 = vmul.f32 %v8435, %v8757
        %v8836 = vmul.f32 %v8437, %v8759
        %v8837 = vmul.f32 %v8439, %v8761
        %v8838 = vmul.f32 %v8441, %v8763
        %v8839 = vmul.f32 %v8443, %v8765
        %v8840 = vmul.f32 %v8445, %v8767
        %v8841 = vmul.f32 %v8447, %v8769
        %v8842 = vmul.f32 %v8449, %v8771
        %v8843 = vmul.f32 %v8451, %v8773
        %v8844 = vmul.f32 %v8453, %v8775
        %v8845 = vmul.f32 %v8455, %v8777
        %v8846 = vmul.f32 %v8457, %v8779
        %v8847 = vmul.f32 %v8459, %v8781
        %v8848 = vmul.f32 %v8461, %v8783
        %v8849 = vmul.f32 %v8463, %v8785
        %v8850 = vmul.f32 %v8465, %v8786
        %v8883 = vrot.slane %v8819, 1
        %v8884 = vrot.slane %v8820, 1
        %v8885 = vsel %vm874, %v8883, %v8884
        %v8886 = vrot.slane %v8821, 1
        %v8887 = vsel %vm874, %v8884, %v8886
        %v8888 = vrot.slane %v8822, 1
        %v8889 = vsel %vm874, %v8886, %v8888
        %v8890 = vrot.slane %v8823, 1
        %v8891 = vsel %vm874, %v8888, %v8890
        %v8892 = vrot.slane %v8824, 1
        %v8893 = vsel %vm874, %v8890, %v8892
        %v8894 = vrot.slane %v8825, 1
        %v8895 = vsel %vm874, %v8892, %v8894
        %v8896 = vrot.slane %v8826, 1
        %v8897 = vsel %vm874, %v8894, %v8896
        %v8898 = vrot.slane %v8827, 1
        %v8899 = vsel %vm874, %v8896, %v8898
        %v8900 = vrot.slane %v8828, 1
        %v8901 = vsel %vm874, %v8898, %v8900
        %v8902 = vrot.slane %v8829, 1
        %v8903 = vsel %vm874, %v8900, %v8902
        %v8904 = vrot.slane %v8830, 1
        %v8905 = vsel %vm874, %v8902, %v8904
        %v8906 = vrot.slane %v8831, 1
        %v8907 = vsel %vm874, %v8904, %v8906
        %v8908 = vrot.slane %v8832, 1
        %v8909 = vsel %vm874, %v8906, %v8908
        %v8910 = vrot.slane %v8833, 1
        %v8911 = vsel %vm874, %v8908, %v8910
        %v8912 = vrot.slane %v8834, 1
        %v8913 = vsel %vm874, %v8910, %v8912
        %v8914 = vrot.slane %v8835, 1
        %v8915 = vsel %vm874, %v8912, %v8914
        %v8916 = vrot.slane %v8836, 1
        %v8917 = vsel %vm874, %v8914, %v8916
        %v8918 = vrot.slane %v8837, 1
        %v8919 = vsel %vm874, %v8916, %v8918
        %v8920 = vrot.slane %v8838, 1
        %v8921 = vsel %vm874, %v8918, %v8920
        %v8922 = vrot.slane %v8839, 1
        %v8923 = vsel %vm874, %v8920, %v8922
        %v8924 = vrot.slane %v8840, 1
        %v8925 = vsel %vm874, %v8922, %v8924
        %v8926 = vrot.slane %v8841, 1
        %v8927 = vsel %vm874, %v8924, %v8926
        %v8928 = vrot.slane %v8842, 1
        %v8929 = vsel %vm874, %v8926, %v8928
        %v8930 = vrot.slane %v8843, 1
        %v8931 = vsel %vm874, %v8928, %v8930
        %v8932 = vrot.slane %v8844, 1
        %v8933 = vsel %vm874, %v8930, %v8932
        %v8934 = vrot.slane %v8845, 1
        %v8935 = vsel %vm874, %v8932, %v8934
        %v8936 = vrot.slane %v8846, 1
        %v8937 = vsel %vm874, %v8934, %v8936
        %v8938 = vrot.slane %v8847, 1
        %v8939 = vsel %vm874, %v8936, %v8938
        %v8940 = vrot.slane %v8848, 1
        %v8941 = vsel %vm874, %v8938, %v8940
        %v8942 = vrot.slane %v8849, 1
        %v8943 = vsel %vm874, %v8940, %v8942
        %v8944 = vrot.slane %v8850, 1
        %v8945 = vsel %vm874, %v8942, %v8944
        %v8979 = vadd.f32 %v8658, %v8883
        %v8980 = vadd.f32 %v8659, %v8885
        %v8981 = vadd.f32 %v8660, %v8887
        %v8982 = vadd.f32 %v8661, %v8889
        %v8983 = vadd.f32 %v8662, %v8891
        %v8984 = vadd.f32 %v8663, %v8893
        %v8985 = vadd.f32 %v8664, %v8895
        %v8986 = vadd.f32 %v8665, %v8897
        %v8987 = vadd.f32 %v8666, %v8899
        %v8988 = vadd.f32 %v8667, %v8901
        %v8989 = vadd.f32 %v8668, %v8903
        %v8990 = vadd.f32 %v8669, %v8905
        %v8991 = vadd.f32 %v8670, %v8907
        %v8992 = vadd.f32 %v8671, %v8909
        %v8993 = vadd.f32 %v8672, %v8911
        %v8994 = vadd.f32 %v8673, %v8913
        %v8995 = vadd.f32 %v8674, %v8915
        %v8996 = vadd.f32 %v8675, %v8917
        %v8997 = vadd.f32 %v8676, %v8919
        %v8998 = vadd.f32 %v8677, %v8921
        %v8999 = vadd.f32 %v8678, %v8923
        %v9000 = vadd.f32 %v8679, %v8925
        %v9001 = vadd.f32 %v8680, %v8927
        %v9002 = vadd.f32 %v8681, %v8929
        %v9003 = vadd.f32 %v8682, %v8931
        %v9004 = vadd.f32 %v8683, %v8933
        %v9005 = vadd.f32 %v8684, %v8935
        %v9006 = vadd.f32 %v8685, %v8937
        %v9007 = vadd.f32 %v8686, %v8939
        %v9008 = vadd.f32 %v8687, %v8941
        %v9009 = vadd.f32 %v8688, %v8943
        %v9010 = vadd.f32 %v8689, %v8945
        %v9011 = vadd.f32 %v8690, %v8944
        %v9012 = vrcp.pop %v8498
        %v9013 = vrcp.pop %v8499
        %v9014 = vrcp.pop %v8500
        %v9015 = vrcp.pop %v8501
        %v9016 = vrcp.pop %v8502
        %v9017 = vrcp.pop %v8503
        %v9018 = vrcp.pop %v8504
        %v9019 = vrcp.pop %v8505
        %v9020 = vrcp.pop %v8506
        %v9021 = vrcp.pop %v8507
        %v9022 = vrcp.pop %v8508
        %v9023 = vrcp.pop %v8509
        %v9024 = vrcp.pop %v8510
        %v9025 = vrcp.pop %v8511
        %v9026 = vrcp.pop %v8512
        %v9027 = vrcp.pop %v8513
        %v9028 = vrcp.pop %v8514
        %v9029 = vrcp.pop %v8515
        %v9030 = vrcp.pop %v8516
        %v9031 = vrcp.pop %v8517
        %v9032 = vrcp.pop %v8518
        %v9033 = vrcp.pop %v8519
        %v9034 = vrcp.pop %v8520
        %v9035 = vrcp.pop %v8521
        %v9036 = vrcp.pop %v8522
        %v9037 = vrcp.pop %v8523
        %v9038 = vrcp.pop %v8524
        %v9039 = vrcp.pop %v8525
        %v9040 = vrcp.pop %v8526
        %v9041 = vrcp.pop %v8527
        %v9042 = vrcp.pop %v8528
        %v9043 = vrcp.pop %v8529
        %v9076 = vrot.slane %v9012, 1
        %v9077 = vrot.slane %v9013, 1
        %v9078 = vsel %vm874, %v9076, %v9077
        %v9079 = vrot.slane %v9014, 1
        %v9080 = vsel %vm874, %v9077, %v9079
        %v9081 = vrot.slane %v9015, 1
        %v9082 = vsel %vm874, %v9079, %v9081
        %v9083 = vrot.slane %v9016, 1
        %v9084 = vsel %vm874, %v9081, %v9083
        %v9085 = vrot.slane %v9017, 1
        %v9086 = vsel %vm874, %v9083, %v9085
        %v9087 = vrot.slane %v9018, 1
        %v9088 = vsel %vm874, %v9085, %v9087
        %v9089 = vrot.slane %v9019, 1
        %v9090 = vsel %vm874, %v9087, %v9089
        %v9091 = vrot.slane %v9020, 1
        %v9092 = vsel %vm874, %v9089, %v9091
        %v9093 = vrot.slane %v9021, 1
        %v9094 = vsel %vm874, %v9091, %v9093
        %v9095 = vrot.slane %v9022, 1
        %v9096 = vsel %vm874, %v9093, %v9095
        %v9097 = vrot.slane %v9023, 1
        %v9098 = vsel %vm874, %v9095, %v9097
        %v9099 = vrot.slane %v9024, 1
        %v9100 = vsel %vm874, %v9097, %v9099
        %v9101 = vrot.slane %v9025, 1
        %v9102 = vsel %vm874, %v9099, %v9101
        %v9103 = vrot.slane %v9026, 1
        %v9104 = vsel %vm874, %v9101, %v9103
        %v9105 = vrot.slane %v9027, 1
        %v9106 = vsel %vm874, %v9103, %v9105
        %v9107 = vrot.slane %v9028, 1
        %v9108 = vsel %vm874, %v9105, %v9107
        %v9109 = vrot.slane %v9029, 1
        %v9110 = vsel %vm874, %v9107, %v9109
        %v9111 = vrot.slane %v9030, 1
        %v9112 = vsel %vm874, %v9109, %v9111
        %v9113 = vrot.slane %v9031, 1
        %v9114 = vsel %vm874, %v9111, %v9113
        %v9115 = vrot.slane %v9032, 1
        %v9116 = vsel %vm874, %v9113, %v9115
        %v9117 = vrot.slane %v9033, 1
        %v9118 = vsel %vm874, %v9115, %v9117
        %v9119 = vrot.slane %v9034, 1
        %v9120 = vsel %vm874, %v9117, %v9119
        %v9121 = vrot.slane %v9035, 1
        %v9122 = vsel %vm874, %v9119, %v9121
        %v9123 = vrot.slane %v9036, 1
        %v9124 = vsel %vm874, %v9121, %v9123
        %v9125 = vrot.slane %v9037, 1
        %v9126 = vsel %vm874, %v9123, %v9125
        %v9127 = vrot.slane %v9038, 1
        %v9128 = vsel %vm874, %v9125, %v9127
        %v9129 = vrot.slane %v9039, 1
        %v9130 = vsel %vm874, %v9127, %v9129
        %v9131 = vrot.slane %v9040, 1
        %v9132 = vsel %vm874, %v9129, %v9131
        %v9133 = vrot.slane %v9041, 1
        %v9134 = vsel %vm874, %v9131, %v9133
        %v9135 = vrot.slane %v9042, 1
        %v9136 = vsel %vm874, %v9133, %v9135
        %v9137 = vrot.slane %v9043, 1
        %v9138 = vsel %vm874, %v9135, %v9137
        %v9172 = vmul.f32 %v8979, %v9076
        %v9173 = vmul.f32 %v8980, %v9078
        %v9174 = vmul.f32 %v8981, %v9080
        %v9175 = vmul.f32 %v8982, %v9082
        %v9176 = vmul.f32 %v8983, %v9084
        %v9177 = vmul.f32 %v8984, %v9086
        %v9178 = vmul.f32 %v8985, %v9088
        %v9179 = vmul.f32 %v8986, %v9090
        %v9180 = vmul.f32 %v8987, %v9092
        %v9181 = vmul.f32 %v8988, %v9094
        %v9182 = vmul.f32 %v8989, %v9096
        %v9183 = vmul.f32 %v8990, %v9098
        %v9184 = vmul.f32 %v8991, %v9100
        %v9185 = vmul.f32 %v8992, %v9102
        %v9186 = vmul.f32 %v8993, %v9104
        %v9187 = vmul.f32 %v8994, %v9106
        %v9188 = vmul.f32 %v8995, %v9108
        %v9189 = vmul.f32 %v8996, %v9110
        %v9190 = vmul.f32 %v8997, %v9112
        %v9191 = vmul.f32 %v8998, %v9114
        %v9192 = vmul.f32 %v8999, %v9116
        %v9193 = vmul.f32 %v9000, %v9118
        %v9194 = vmul.f32 %v9001, %v9120
        %v9195 = vmul.f32 %v9002, %v9122
        %v9196 = vmul.f32 %v9003, %v9124
        %v9197 = vmul.f32 %v9004, %v9126
        %v9198 = vmul.f32 %v9005, %v9128
        %v9199 = vmul.f32 %v9006, %v9130
        %v9200 = vmul.f32 %v9007, %v9132
        %v9201 = vmul.f32 %v9008, %v9134
        %v9202 = vmul.f32 %v9009, %v9136
        %v9203 = vmul.f32 %v9010, %v9138
        %v9204 = vmul.f32 %v9011, %v9137
        %vm9205 = vcmask 523271
        %9206 = vst.msk [vmem:[%s190 - $0x7] sm:$0x80] %vm9205, %v9172
        %vm9207 = vcmask 523264
        %9208 = vst.msk [vmem:[%s190 + $0x1] sm:$0xff] %vm9207, %v9173
        %9209 = vst.msk [vmem:[%s190 + $0x9] sm:$0xff] %vm9207, %v9174
        %9210 = vst.msk [vmem:[%s190 + $0x11] sm:$0xff] %vm9207, %v9175
        %9211 = vst.msk [vmem:[%s190 + $0x19] sm:$0xff] %vm9207, %v9176
        %9212 = vst.msk [vmem:[%s190 + $0x21] sm:$0xff] %vm9207, %v9177
        %9213 = vst.msk [vmem:[%s190 + $0x29] sm:$0xff] %vm9207, %v9178
        %9214 = vst.msk [vmem:[%s190 + $0x31] sm:$0xff] %vm9207, %v9179
        %9215 = vst.msk [vmem:[%s190 + $0x39] sm:$0xff] %vm9207, %v9180
        %9216 = vst.msk [vmem:[%s190 + $0x41] sm:$0xff] %vm9207, %v9181
        %9217 = vst.msk [vmem:[%s190 + $0x49] sm:$0xff] %vm9207, %v9182
        %9218 = vst.msk [vmem:[%s190 + $0x51] sm:$0xff] %vm9207, %v9183
        %9219 = vst.msk [vmem:[%s190 + $0x59] sm:$0xff] %vm9207, %v9184
        %9220 = vst.msk [vmem:[%s190 + $0x61] sm:$0xff] %vm9207, %v9185
        %9221 = vst.msk [vmem:[%s190 + $0x69] sm:$0xff] %vm9207, %v9186
        %9222 = vst.msk [vmem:[%s190 + $0x71] sm:$0xff] %vm9207, %v9187
        %9223 = vst.msk [vmem:[%s190 + $0x79] sm:$0xff] %vm9207, %v9188
        %9224 = vst.msk [vmem:[%s190 + $0x81] sm:$0xff] %vm9207, %v9189
        %9225 = vst.msk [vmem:[%s190 + $0x89] sm:$0xff] %vm9207, %v9190
        %9226 = vst.msk [vmem:[%s190 + $0x91] sm:$0xff] %vm9207, %v9191
        %9227 = vst.msk [vmem:[%s190 + $0x99] sm:$0xff] %vm9207, %v9192
        %9228 = vst.msk [vmem:[%s190 + $0xa1] sm:$0xff] %vm9207, %v9193
        %9229 = vst.msk [vmem:[%s190 + $0xa9] sm:$0xff] %vm9207, %v9194
        %9230 = vst.msk [vmem:[%s190 + $0xb1] sm:$0xff] %vm9207, %v9195
        %9231 = vst.msk [vmem:[%s190 + $0xb9] sm:$0xff] %vm9207, %v9196
        %9232 = vst.msk [vmem:[%s190 + $0xc1] sm:$0xff] %vm9207, %v9197
        %9233 = vst.msk [vmem:[%s190 + $0xc9] sm:$0xff] %vm9207, %v9198
        %9234 = vst.msk [vmem:[%s190 + $0xd1] sm:$0xff] %vm9207, %v9199
        %9235 = vst.msk [vmem:[%s190 + $0xd9] sm:$0xff] %vm9207, %v9200
        %9236 = vst.msk [vmem:[%s190 + $0xe1] sm:$0xff] %vm9207, %v9201
        %9237 = vst.msk [vmem:[%s190 + $0xe9] sm:$0xff] %vm9207, %v9202
        %9238 = vst.msk [vmem:[%s190 + $0xf1] sm:$0xff] %vm9207, %v9203
        %vm9239 = vcmask 522240
        %9240 = vst.msk [vmem:[%s190 + $0xf9] sm:$0x7f] %vm9239, %v9204
        %s9241 = sand.u32 %s115, 1
        %s9242 = scalar_lea.sflag [#allocation3], %s9241
        %s9243 = sand.u32 %s115, 1
        %s9244 = smul.addr %s9243, 256
        %s9245 = scalar_lea.vmem [#allocation2], %s9244
        // Predicated region
        $region37: #{attention_forward.1} parent=35 // pred_check
          %p9246 = pneg %p125
        $region38: #{attention_forward.1} parent=35 // pred_check_branch
          %9248 = sbr.rel (%p9246) target = $region40
        $region39: #{attention_forward.1} parent=35 // pred_region
          %s9250 = ssub.s32 4096, 4096
          %9251 = vsyncadd %s9242, %s9250
          %s9252 = smul.addr %s18, 32
          %s9253 = smul.addr %s9252, 128
          %s9254 = scalar_lea.hbm %s4, %s9253
          %s9255 = sshll.u32 %s9245, 4
          %s9256 = int_to_ptr.vmem [resolvable:$true] %s9255
          %9261 = dma.vmem_to_hbm [thread:$0]  %s9256, 4096, %s9254, %s9242, 128, 128, 8
        $region40: #{attention_forward.1} parent=35 // pred_fallthru
          _
      $region36: #{attention_forward.1} parent=5 // pred_fallthru
        _
      %p9262 = scmp.le.s32.totalorder 2, %s13
      // Predicated region
      $region41: #{attention_forward.1} parent=5 // pred_check
        %p9263 = pneg %p9262
      $region42: #{attention_forward.1} parent=5 // pred_check_branch
        %9265 = sbr.rel (%p9263) target = $region44
      $region43: #{attention_forward.1} parent=5 // pred_region
        %s9266 = ssub.s32 %s13, 2
        // Predicated region
        $region45: #{attention_forward.1} parent=43 // pred_check
          %p9267 = pneg %p131
        $region46: #{attention_forward.1} parent=43 // pred_check_branch
          %9269 = sbr.rel (%p9267) target = $region48
        $region47: #{attention_forward.1} parent=43 // pred_region
          %s9270 = sand.u32 %s116, 1
          %s9271 = scalar_lea.sflag [#allocation3], %s9270
          %s9272 = sand.u32 %s116, 1
          %s9273 = smul.addr %s9272, 256
          %s9274 = scalar_lea.vmem [#allocation2], %s9273
          %9275 = dma.done %s9271, 4096
        $region48: #{attention_forward.1} parent=43 // pred_fallthru
          _
      $region44: #{attention_forward.1} parent=5 // pred_fallthru
        _
    $region6: #{attention_forward.1} parent=1 // loop_footer
      %s17 = sadd.s32 1, %s13
    $region7: #{attention_forward.1} parent=1 // loop_footer_branch
      %12 = sbr.rel target = $region3
    $region8: #{attention_forward.1} parent=1 // loop_exit
      _
    %9276 = vsyncpa [#allocation3], 1
    %s9277 = scalar_lea.sflag [#allocation3], 1
    %9278 = vsyncpa %s9277, 1

</llo_original>
